<compile_context>
chip_gen: v5e
topology: v5e:2x2
jax: 0.10.0
libtpu: 0.0.40
codegen_flags: <defaults>
</compile_context>

<pallas_src>
import math

import jax
import jax.numpy as jnp
from jax.experimental import pallas as pl
from jax.experimental.pallas import tpu as pltpu


# ----------------------------------------------------------------------------
# Fused kernel: QKV projection + H causal-softmax heads + output projection.
# One batch element per grid step.
# ----------------------------------------------------------------------------
def _make_mha_kernel(num_heads, head_size):
    H, hs = num_heads, head_size
    C = H * hs

    def kernel(x_ref, wqkv_ref, wproj_ref, b_ref, o_ref, qkv_ref, cat_ref):
        T = x_ref.shape[1]

        # ---- QKV projection: one wide (T,C)@(C,3C) bf16 MXU GEMM ----------
        # x arrives f32; the in-register cast is cheaper than a separate XLA
        # cast op + extra HBM round trip in the wrapper.
        x = x_ref[0].astype(jnp.bfloat16)                      # (T, C) bf16
        qkv_ref[...] = jnp.dot(
            x, wqkv_ref[...], preferred_element_type=jnp.float32
        ).astype(jnp.bfloat16)                                 # (T, 3C) bf16 scratch

        # ---- Causal mask: finite fill, NaN-safe even for fully-masked rows.
        row = jax.lax.broadcasted_iota(jnp.int32, (T, T), 0)
        col = jax.lax.broadcasted_iota(jnp.int32, (T, T), 1)
        causal = col <= row
        neg_big = jnp.float32(-1e30)

        # ---- H causal attention heads (H=6, unrolled at trace time). -------
        # The torch C**-0.5 scale (embed dim, NOT head_size) is already folded
        # into the Q columns of the packed wqkv at pack time.
        for h in range(H):
            q = qkv_ref[:, h * hs:(h + 1) * hs]                # (T, hs) bf16
            k = qkv_ref[:, C + h * hs: C + (h + 1) * hs]       # (T, hs) bf16
            v = qkv_ref[:, 2 * C + h * hs: 2 * C + (h + 1) * hs]

            # q @ k^T: contract over hs, f32 accumulation on the MXU.
            s = jax.lax.dot_general(
                q, k, dimension_numbers=(((1,), (1,)), ((), ())),
                preferred_element_type=jnp.float32)            # (T, T) f32
            s = jnp.where(causal, s, neg_big)

            # Numerically stable softmax in f32; normalize after the PV matmul
            # so the reciprocal-multiply is on (T, hs), not (T, T).
            s = s - jnp.max(s, axis=-1, keepdims=True)
            e = jnp.exp(s)                                     # f32 (EUP)
            rowsum = jnp.sum(e, axis=-1, keepdims=True)        # (T, 1) f32
            pv = jnp.dot(e.astype(jnp.bfloat16), v,
                         preferred_element_type=jnp.float32)   # (T, hs) f32
            out_h = pv * pl.reciprocal(rowsum, approx=True)

            # Store straight into the lane-dense (T, C) scratch (torch.cat order).
            cat_ref[:, h * hs:(h + 1) * hs] = out_h.astype(jnp.bfloat16)

        # ---- Output projection: (T,C)@(C,C) bf16 MXU GEMM + f32 bias. ------
        y = jnp.dot(cat_ref[...], wproj_ref[...],
                    preferred_element_type=jnp.float32)        # (T, C) f32
        y = y + b_ref[...]                                     # (1, C) broadcast
        o_ref[0] = y.astype(o_ref.dtype)                       # lane-dense store

    return kernel


# ----------------------------------------------------------------------------
# One-time parameter packing (hoisted out of the forward path).
# ----------------------------------------------------------------------------
def pack_mha_params(wq, wk, wv, w_proj, b_proj):
    """wq/wk/wv: (H, C, hs) per-head Linear weights (input-major: y = x @ W).
    w_proj: (C, C) input-major; b_proj: (C,).
    Returns (wqkv bf16 (C, 3C) with the C**-0.5 scale folded into Q,
             w_proj bf16 (C, C), bias f32 (1, C))."""
    H, C, hs = wq.shape
    assert H * hs == C

    def _pack(w):                       # (H, C, hs) -> (C, H*hs), head-major columns
        return jnp.transpose(w, (1, 0, 2)).reshape(C, H * hs)

    scale = jnp.float32(C) ** -0.5      # matches torch module (C, not head_size)
    wqkv = jnp.concatenate(
        [_pack(wq * scale), _pack(wk), _pack(wv)], axis=-1)    # (C, 3C) f32
    return (wqkv.astype(jnp.bfloat16),
            w_proj.astype(jnp.bfloat16),
            b_proj.reshape(1, C).astype(jnp.float32))


def multi_head_attention(x, wqkv, w_proj, b_proj2, *, num_heads):
    """x: (B, T, C) f32; wqkv: (C, 3C) bf16; w_proj: (C, C) bf16; b_proj2: (1, C) f32."""
    B, T, C = x.shape
    assert C % num_heads == 0
    head_size = C // num_heads
    kernel = _make_mha_kernel(num_heads, head_size)

    return pl.pallas_call(
        kernel,
        out_shape=jax.ShapeDtypeStruct((B, T, C), jnp.float32),
        grid_spec=pltpu.PrefetchScalarGridSpec(
            num_scalar_prefetch=0,
            grid=(B,),
            in_specs=[
                pl.BlockSpec((1, T, C), lambda b: (b, 0, 0)),      # x (f32)
                pl.BlockSpec((C, 3 * C), lambda b: (0, 0)),        # packed QKV (bf16)
                pl.BlockSpec((C, C), lambda b: (0, 0)),            # projection (bf16)
                pl.BlockSpec((1, C), lambda b: (0, 0)),            # bias (f32)
            ],
            out_specs=pl.BlockSpec((1, T, C), lambda b: (b, 0, 0)),
            scratch_shapes=[
                pltpu.VMEM((T, 3 * C), jnp.bfloat16),              # QKV result
                pltpu.VMEM((T, C), jnp.bfloat16),                  # concatenated heads
            ],
        ),
        compiler_params=pltpu.CompilerParams(
            dimension_semantics=("parallel",),
            vmem_limit_bytes=32 * 1024 * 1024,
        ),
    )(x, wqkv, w_proj, b_proj2)


# ----------------------------------------------------------------------------
# Pure-JAX reference (mirrors the PyTorch forward exactly) for validation.
# ----------------------------------------------------------------------------
def reference(x, wq, wk, wv, w_proj, b_proj):
    B, T, C = x.shape
    H = wq.shape[0]
    outs = []
    for h in range(H):
        q = x @ wq[h]
        k = x @ wk[h]
        v = x @ wv[h]
        wei = (q @ jnp.swapaxes(k, -2, -1)) * (C ** -0.5)
        mask = jnp.tril(jnp.ones((T, T), dtype=bool))
        wei = jnp.where(mask, wei, -jnp.inf)
        wei = jax.nn.softmax(wei, axis=-1)
        outs.append(wei @ v)
    cat = jnp.concatenate(outs, axis=-1)
    return cat @ w_proj + b_proj


if __name__ == "__main__":
    # Module constants: n_embed = 384, block_size = 256 (T <= block_size).
    n_embed = 384
    num_heads = 6
    head_size = n_embed // num_heads   # 64
    B, T = 2, 128

    key = jax.random.PRNGKey(0)
    kx, kq, kk, kv, kw, kb = jax.random.split(key, 6)

    x = jax.random.normal(kx, (B, T, n_embed), dtype=jnp.float32)

    # nn.Linear(n_embed, head_size, bias=False) per head -> stacked (H, C, hs)
    lin_bound = 1.0 / math.sqrt(n_embed)
    wq = jax.random.uniform(kq, (num_heads, n_embed, head_size),
                            minval=-lin_bound, maxval=lin_bound, dtype=jnp.float32)
    wk = jax.random.uniform(kk, (num_heads, n_embed, head_size),
                            minval=-lin_bound, maxval=lin_bound, dtype=jnp.float32)
    wv = jax.random.uniform(kv, (num_heads, n_embed, head_size),
                            minval=-lin_bound, maxval=lin_bound, dtype=jnp.float32)

    # nn.Linear(n_embed, n_embed) projection (stored input-major: y = x @ W + b)
    w_proj = jax.random.uniform(kw, (n_embed, n_embed),
                                minval=-lin_bound, maxval=lin_bound, dtype=jnp.float32)
    b_proj = jax.random.uniform(kb, (n_embed,),
                                minval=-lin_bound, maxval=lin_bound, dtype=jnp.float32)

    # Pack weights ONCE (scale fold + bf16 cast hoisted out of the forward path).
    wqkv_p, wproj_p, bias_p = jax.block_until_ready(
        pack_mha_params(wq, wk, wv, w_proj, b_proj))

    out = multi_head_attention(x, wqkv_p, wproj_p, bias_p, num_heads=num_heads)
    out = jax.block_until_ready(out)

    ref = reference(x, wq, wk, wv, w_proj, b_proj)
    assert out.shape == (B, T, n_embed)

    # Tolerance: bf16 MXU operands (documented decision per perf review) plus
    # the approximate EUP reciprocal; the f32 kernel used 2e-3, bf16 operands
    # put the worst-case error at the ~1e-2 level for this problem size.
    max_err = float(jnp.max(jnp.abs(out - ref)))
    assert jnp.allclose(out, ref, atol=3e-2, rtol=3e-2), \
        f"mismatch vs reference (max abs err {max_err:.3e})"

    print("KERNEL_OK")
</pallas_src>

<mosaic_0001>
module attributes {stable_mosaic.version = 11 : i64} {
  func.func @kernel(%arg0: i32, %arg1: memref<1x128x384xf32, #tpu.memory_space<vmem>>, %arg2: memref<384x1152xbf16, #tpu.memory_space<vmem>>, %arg3: memref<384x384xbf16, #tpu.memory_space<vmem>>, %arg4: memref<1x384xf32, #tpu.memory_space<vmem>>, %arg5: memref<1x128x384xf32, #tpu.memory_space<vmem>>, %arg6: memref<128x1152xbf16, #tpu.memory_space<vmem>>, %arg7: memref<128x384xbf16, #tpu.memory_space<vmem>>) attributes {dimension_semantics = [#tpu.dimension_semantics<parallel>], iteration_bounds = array<i64: 2>, scalar_prefetch = 0 : i64, scratch_operands = 2 : i64, tpu.core_type = #tpu.core_type<tc>, window_params = [{transform_indices = @transform_0, window_bounds = array<i64: 1, 128, 384>}, {pipeline_mode = #tpu.pipeline_mode<synchronous>, transform_indices = @transform_1, window_bounds = array<i64: 384, 1152>}, {pipeline_mode = #tpu.pipeline_mode<synchronous>, transform_indices = @transform_2, window_bounds = array<i64: 384, 384>}, {pipeline_mode = #tpu.pipeline_mode<synchronous>, transform_indices = @transform_3, window_bounds = array<i64: 1, 384>}, {transform_indices = @transform_4, window_bounds = array<i64: 1, 128, 384>}]} {
    %c0 = arith.constant 0 : index
    %c0_0 = arith.constant 0 : index
    %c0_1 = arith.constant 0 : index
    %0 = vector.load %arg1[%c0, %c0_0, %c0_1] : memref<1x128x384xf32, #tpu.memory_space<vmem>>, vector<1x128x384xf32>
    %1 = vector.shape_cast %0 : vector<1x128x384xf32> to vector<128x384xf32>
    %2 = arith.truncf %1 : vector<128x384xf32> to vector<128x384xbf16>
    %c0_2 = arith.constant 0 : index
    %c0_3 = arith.constant 0 : index
    %3 = vector.load %arg2[%c0_2, %c0_3] : memref<384x1152xbf16, #tpu.memory_space<vmem>>, vector<384x1152xbf16>
    %cst = arith.constant dense<0.000000e+00> : vector<128x1152xf32>
    %4 = tpu.matmul %2, %3, %cst {dimension_numbers = #tpu.dot_dimension_numbers<[1], [0], [0], [1], [0, 0, 1, 1], [], []>} : vector<128x384xbf16>, vector<384x1152xbf16>, vector<128x1152xf32> -> vector<128x1152xf32>
    %5 = arith.truncf %4 : vector<128x1152xf32> to vector<128x1152xbf16>
    %c0_4 = arith.constant 0 : index
    %c0_5 = arith.constant 0 : index
    %6 = vector.load %arg6[%c0_4, %c0_5] : memref<128x1152xbf16, #tpu.memory_space<vmem>>, vector<128x1152xbf16>
    tpu.vector_store %arg6[%c0_4, %c0_5], %5 {strides = array<i32>} : memref<128x1152xbf16, #tpu.memory_space<vmem>>, vector<128x1152xbf16>,
    %7 = tpu.iota {dimensions = array<i32: 0>} : vector<128x128xi32>
    %8 = tpu.iota {dimensions = array<i32: 1>} : vector<128x128xi32>
    %9 = arith.cmpi sle, %8, %7 : vector<128x128xi32>
    %c0_6 = arith.constant 0 : index
    %c0_7 = arith.constant 0 : index
    %10 = vector.load %arg6[%c0_6, %c0_7] : memref<128x1152xbf16, #tpu.memory_space<vmem>>, vector<128x64xbf16>
    %c0_8 = arith.constant 0 : index
    %c384 = arith.constant 384 : index
    %11 = vector.load %arg6[%c0_8, %c384] : memref<128x1152xbf16, #tpu.memory_space<vmem>>, vector<128x64xbf16>
    %c0_9 = arith.constant 0 : index
    %c768 = arith.constant 768 : index
    %12 = vector.load %arg6[%c0_9, %c768] : memref<128x1152xbf16, #tpu.memory_space<vmem>>, vector<128x64xbf16>
    %cst_10 = arith.constant dense<0.000000e+00> : vector<128x128xf32>
    %13 = tpu.matmul %10, %11, %cst_10 {dimension_numbers = #tpu.dot_dimension_numbers<[1], [1], [0], [0], [0, 0, 1, 0], [], []>} : vector<128x64xbf16>, vector<128x64xbf16>, vector<128x128xf32> -> vector<128x128xf32>
    %cst_11 = arith.constant -1.000000e+30 : f32
    %14 = vector.broadcast %cst_11 : f32 to vector<128x128xf32>
    %15 = arith.select %9, %13, %14 : vector<128x128xi1>, vector<128x128xf32>
    %cst_12 = arith.constant dense<0xFF800000> : vector<128xf32>
    %16 = vector.multi_reduction <maximumf>, %15, %cst_12 [1] : vector<128x128xf32> to vector<128xf32>
    %17 = vector.shape_cast %16 : vector<128xf32> to vector<128x1xf32>
    %18 = vector.broadcast %17 : vector<128x1xf32> to vector<128x128xf32>
    %19 = arith.subf %15, %18 : vector<128x128xf32>
    %20 = math.exp %19 : vector<128x128xf32>
    %cst_13 = arith.constant dense<0.000000e+00> : vector<128xf32>
    %21 = vector.multi_reduction <add>, %20, %cst_13 [1] : vector<128x128xf32> to vector<128xf32>
    %22 = vector.shape_cast %21 : vector<128xf32> to vector<128x1xf32>
    %23 = arith.truncf %20 : vector<128x128xf32> to vector<128x128xbf16>
    %cst_14 = arith.constant dense<0.000000e+00> : vector<128x64xf32>
    %24 = tpu.matmul %23, %12, %cst_14 {dimension_numbers = #tpu.dot_dimension_numbers<[1], [0], [0], [1], [0, 0, 1, 1], [], []>} : vector<128x128xbf16>, vector<128x64xbf16>, vector<128x64xf32> -> vector<128x64xf32>
    %25 = tpu.reciprocal %22 {approx = true} : vector<128x1xf32> -> vector<128x1xf32>
    %26 = vector.broadcast %25 : vector<128x1xf32> to vector<128x64xf32>
    %27 = arith.mulf %24, %26 : vector<128x64xf32>
    %28 = arith.truncf %27 : vector<128x64xf32> to vector<128x64xbf16>
    %c0_15 = arith.constant 0 : index
    %c0_16 = arith.constant 0 : index
    %29 = vector.load %arg7[%c0_15, %c0_16] : memref<128x384xbf16, #tpu.memory_space<vmem>>, vector<128x64xbf16>
    tpu.vector_store %arg7[%c0_15, %c0_16], %28 {strides = array<i32>} : memref<128x384xbf16, #tpu.memory_space<vmem>>, vector<128x64xbf16>,
    %c0_17 = arith.constant 0 : index
    %c64 = arith.constant 64 : index
    %30 = vector.load %arg6[%c0_17, %c64] : memref<128x1152xbf16, #tpu.memory_space<vmem>>, vector<128x64xbf16>
    %c0_18 = arith.constant 0 : index
    %c448 = arith.constant 448 : index
    %31 = vector.load %arg6[%c0_18, %c448] : memref<128x1152xbf16, #tpu.memory_space<vmem>>, vector<128x64xbf16>
    %c0_19 = arith.constant 0 : index
    %c832 = arith.constant 832 : index
    %32 = vector.load %arg6[%c0_19, %c832] : memref<128x1152xbf16, #tpu.memory_space<vmem>>, vector<128x64xbf16>
    %cst_20 = arith.constant dense<0.000000e+00> : vector<128x128xf32>
    %33 = tpu.matmul %30, %31, %cst_20 {dimension_numbers = #tpu.dot_dimension_numbers<[1], [1], [0], [0], [0, 0, 1, 0], [], []>} : vector<128x64xbf16>, vector<128x64xbf16>, vector<128x128xf32> -> vector<128x128xf32>
    %cst_21 = arith.constant -1.000000e+30 : f32
    %34 = vector.broadcast %cst_21 : f32 to vector<128x128xf32>
    %35 = arith.select %9, %33, %34 : vector<128x128xi1>, vector<128x128xf32>
    %cst_22 = arith.constant dense<0xFF800000> : vector<128xf32>
    %36 = vector.multi_reduction <maximumf>, %35, %cst_22 [1] : vector<128x128xf32> to vector<128xf32>
    %37 = vector.shape_cast %36 : vector<128xf32> to vector<128x1xf32>
    %38 = vector.broadcast %37 : vector<128x1xf32> to vector<128x128xf32>
    %39 = arith.subf %35, %38 : vector<128x128xf32>
    %40 = math.exp %39 : vector<128x128xf32>
    %cst_23 = arith.constant dense<0.000000e+00> : vector<128xf32>
    %41 = vector.multi_reduction <add>, %40, %cst_23 [1] : vector<128x128xf32> to vector<128xf32>
    %42 = vector.shape_cast %41 : vector<128xf32> to vector<128x1xf32>
    %43 = arith.truncf %40 : vector<128x128xf32> to vector<128x128xbf16>
    %cst_24 = arith.constant dense<0.000000e+00> : vector<128x64xf32>
    %44 = tpu.matmul %43, %32, %cst_24 {dimension_numbers = #tpu.dot_dimension_numbers<[1], [0], [0], [1], [0, 0, 1, 1], [], []>} : vector<128x128xbf16>, vector<128x64xbf16>, vector<128x64xf32> -> vector<128x64xf32>
    %45 = tpu.reciprocal %42 {approx = true} : vector<128x1xf32> -> vector<128x1xf32>
    %46 = vector.broadcast %45 : vector<128x1xf32> to vector<128x64xf32>
    %47 = arith.mulf %44, %46 : vector<128x64xf32>
    %48 = arith.truncf %47 : vector<128x64xf32> to vector<128x64xbf16>
    %c0_25 = arith.constant 0 : index
    %c64_26 = arith.constant 64 : index
    %49 = vector.load %arg7[%c0_25, %c64_26] : memref<128x384xbf16, #tpu.memory_space<vmem>>, vector<128x64xbf16>
    tpu.vector_store %arg7[%c0_25, %c64_26], %48 {strides = array<i32>} : memref<128x384xbf16, #tpu.memory_space<vmem>>, vector<128x64xbf16>,
    %c0_27 = arith.constant 0 : index
    %c128 = arith.constant 128 : index
    %50 = vector.load %arg6[%c0_27, %c128] : memref<128x1152xbf16, #tpu.memory_space<vmem>>, vector<128x64xbf16>
    %c0_28 = arith.constant 0 : index
    %c512 = arith.constant 512 : index
    %51 = vector.load %arg6[%c0_28, %c512] : memref<128x1152xbf16, #tpu.memory_space<vmem>>, vector<128x64xbf16>
    %c0_29 = arith.constant 0 : index
    %c896 = arith.constant 896 : index
    %52 = vector.load %arg6[%c0_29, %c896] : memref<128x1152xbf16, #tpu.memory_space<vmem>>, vector<128x64xbf16>
    %cst_30 = arith.constant dense<0.000000e+00> : vector<128x128xf32>
    %53 = tpu.matmul %50, %51, %cst_30 {dimension_numbers = #tpu.dot_dimension_numbers<[1], [1], [0], [0], [0, 0, 1, 0], [], []>} : vector<128x64xbf16>, vector<128x64xbf16>, vector<128x128xf32> -> vector<128x128xf32>
    %cst_31 = arith.constant -1.000000e+30 : f32
    %54 = vector.broadcast %cst_31 : f32 to vector<128x128xf32>
    %55 = arith.select %9, %53, %54 : vector<128x128xi1>, vector<128x128xf32>
    %cst_32 = arith.constant dense<0xFF800000> : vector<128xf32>
    %56 = vector.multi_reduction <maximumf>, %55, %cst_32 [1] : vector<128x128xf32> to vector<128xf32>
    %57 = vector.shape_cast %56 : vector<128xf32> to vector<128x1xf32>
    %58 = vector.broadcast %57 : vector<128x1xf32> to vector<128x128xf32>
    %59 = arith.subf %55, %58 : vector<128x128xf32>
    %60 = math.exp %59 : vector<128x128xf32>
    %cst_33 = arith.constant dense<0.000000e+00> : vector<128xf32>
    %61 = vector.multi_reduction <add>, %60, %cst_33 [1] : vector<128x128xf32> to vector<128xf32>
    %62 = vector.shape_cast %61 : vector<128xf32> to vector<128x1xf32>
    %63 = arith.truncf %60 : vector<128x128xf32> to vector<128x128xbf16>
    %cst_34 = arith.constant dense<0.000000e+00> : vector<128x64xf32>
    %64 = tpu.matmul %63, %52, %cst_34 {dimension_numbers = #tpu.dot_dimension_numbers<[1], [0], [0], [1], [0, 0, 1, 1], [], []>} : vector<128x128xbf16>, vector<128x64xbf16>, vector<128x64xf32> -> vector<128x64xf32>
    %65 = tpu.reciprocal %62 {approx = true} : vector<128x1xf32> -> vector<128x1xf32>
    %66 = vector.broadcast %65 : vector<128x1xf32> to vector<128x64xf32>
    %67 = arith.mulf %64, %66 : vector<128x64xf32>
    %68 = arith.truncf %67 : vector<128x64xf32> to vector<128x64xbf16>
    %c0_35 = arith.constant 0 : index
    %c128_36 = arith.constant 128 : index
    %69 = vector.load %arg7[%c0_35, %c128_36] : memref<128x384xbf16, #tpu.memory_space<vmem>>, vector<128x64xbf16>
    tpu.vector_store %arg7[%c0_35, %c128_36], %68 {strides = array<i32>} : memref<128x384xbf16, #tpu.memory_space<vmem>>, vector<128x64xbf16>,
    %c0_37 = arith.constant 0 : index
    %c192 = arith.constant 192 : index
    %70 = vector.load %arg6[%c0_37, %c192] : memref<128x1152xbf16, #tpu.memory_space<vmem>>, vector<128x64xbf16>
    %c0_38 = arith.constant 0 : index
    %c576 = arith.constant 576 : index
    %71 = vector.load %arg6[%c0_38, %c576] : memref<128x1152xbf16, #tpu.memory_space<vmem>>, vector<128x64xbf16>
    %c0_39 = arith.constant 0 : index
    %c960 = arith.constant 960 : index
    %72 = vector.load %arg6[%c0_39, %c960] : memref<128x1152xbf16, #tpu.memory_space<vmem>>, vector<128x64xbf16>
    %cst_40 = arith.constant dense<0.000000e+00> : vector<128x128xf32>
    %73 = tpu.matmul %70, %71, %cst_40 {dimension_numbers = #tpu.dot_dimension_numbers<[1], [1], [0], [0], [0, 0, 1, 0], [], []>} : vector<128x64xbf16>, vector<128x64xbf16>, vector<128x128xf32> -> vector<128x128xf32>
    %cst_41 = arith.constant -1.000000e+30 : f32
    %74 = vector.broadcast %cst_41 : f32 to vector<128x128xf32>
    %75 = arith.select %9, %73, %74 : vector<128x128xi1>, vector<128x128xf32>
    %cst_42 = arith.constant dense<0xFF800000> : vector<128xf32>
    %76 = vector.multi_reduction <maximumf>, %75, %cst_42 [1] : vector<128x128xf32> to vector<128xf32>
    %77 = vector.shape_cast %76 : vector<128xf32> to vector<128x1xf32>
    %78 = vector.broadcast %77 : vector<128x1xf32> to vector<128x128xf32>
    %79 = arith.subf %75, %78 : vector<128x128xf32>
    %80 = math.exp %79 : vector<128x128xf32>
    %cst_43 = arith.constant dense<0.000000e+00> : vector<128xf32>
    %81 = vector.multi_reduction <add>, %80, %cst_43 [1] : vector<128x128xf32> to vector<128xf32>
    %82 = vector.shape_cast %81 : vector<128xf32> to vector<128x1xf32>
    %83 = arith.truncf %80 : vector<128x128xf32> to vector<128x128xbf16>
    %cst_44 = arith.constant dense<0.000000e+00> : vector<128x64xf32>
    %84 = tpu.matmul %83, %72, %cst_44 {dimension_numbers = #tpu.dot_dimension_numbers<[1], [0], [0], [1], [0, 0, 1, 1], [], []>} : vector<128x128xbf16>, vector<128x64xbf16>, vector<128x64xf32> -> vector<128x64xf32>
    %85 = tpu.reciprocal %82 {approx = true} : vector<128x1xf32> -> vector<128x1xf32>
    %86 = vector.broadcast %85 : vector<128x1xf32> to vector<128x64xf32>
    %87 = arith.mulf %84, %86 : vector<128x64xf32>
    %88 = arith.truncf %87 : vector<128x64xf32> to vector<128x64xbf16>
    %c0_45 = arith.constant 0 : index
    %c192_46 = arith.constant 192 : index
    %89 = vector.load %arg7[%c0_45, %c192_46] : memref<128x384xbf16, #tpu.memory_space<vmem>>, vector<128x64xbf16>
    tpu.vector_store %arg7[%c0_45, %c192_46], %88 {strides = array<i32>} : memref<128x384xbf16, #tpu.memory_space<vmem>>, vector<128x64xbf16>,
    %c0_47 = arith.constant 0 : index
    %c256 = arith.constant 256 : index
    %90 = vector.load %arg6[%c0_47, %c256] : memref<128x1152xbf16, #tpu.memory_space<vmem>>, vector<128x64xbf16>
    %c0_48 = arith.constant 0 : index
    %c640 = arith.constant 640 : index
    %91 = vector.load %arg6[%c0_48, %c640] : memref<128x1152xbf16, #tpu.memory_space<vmem>>, vector<128x64xbf16>
    %c0_49 = arith.constant 0 : index
    %c1024 = arith.constant 1024 : index
    %92 = vector.load %arg6[%c0_49, %c1024] : memref<128x1152xbf16, #tpu.memory_space<vmem>>, vector<128x64xbf16>
    %cst_50 = arith.constant dense<0.000000e+00> : vector<128x128xf32>
    %93 = tpu.matmul %90, %91, %cst_50 {dimension_numbers = #tpu.dot_dimension_numbers<[1], [1], [0], [0], [0, 0, 1, 0], [], []>} : vector<128x64xbf16>, vector<128x64xbf16>, vector<128x128xf32> -> vector<128x128xf32>
    %cst_51 = arith.constant -1.000000e+30 : f32
    %94 = vector.broadcast %cst_51 : f32 to vector<128x128xf32>
    %95 = arith.select %9, %93, %94 : vector<128x128xi1>, vector<128x128xf32>
    %cst_52 = arith.constant dense<0xFF800000> : vector<128xf32>
    %96 = vector.multi_reduction <maximumf>, %95, %cst_52 [1] : vector<128x128xf32> to vector<128xf32>
    %97 = vector.shape_cast %96 : vector<128xf32> to vector<128x1xf32>
    %98 = vector.broadcast %97 : vector<128x1xf32> to vector<128x128xf32>
    %99 = arith.subf %95, %98 : vector<128x128xf32>
    %100 = math.exp %99 : vector<128x128xf32>
    %cst_53 = arith.constant dense<0.000000e+00> : vector<128xf32>
    %101 = vector.multi_reduction <add>, %100, %cst_53 [1] : vector<128x128xf32> to vector<128xf32>
    %102 = vector.shape_cast %101 : vector<128xf32> to vector<128x1xf32>
    %103 = arith.truncf %100 : vector<128x128xf32> to vector<128x128xbf16>
    %cst_54 = arith.constant dense<0.000000e+00> : vector<128x64xf32>
    %104 = tpu.matmul %103, %92, %cst_54 {dimension_numbers = #tpu.dot_dimension_numbers<[1], [0], [0], [1], [0, 0, 1, 1], [], []>} : vector<128x128xbf16>, vector<128x64xbf16>, vector<128x64xf32> -> vector<128x64xf32>
    %105 = tpu.reciprocal %102 {approx = true} : vector<128x1xf32> -> vector<128x1xf32>
    %106 = vector.broadcast %105 : vector<128x1xf32> to vector<128x64xf32>
    %107 = arith.mulf %104, %106 : vector<128x64xf32>
    %108 = arith.truncf %107 : vector<128x64xf32> to vector<128x64xbf16>
    %c0_55 = arith.constant 0 : index
    %c256_56 = arith.constant 256 : index
    %109 = vector.load %arg7[%c0_55, %c256_56] : memref<128x384xbf16, #tpu.memory_space<vmem>>, vector<128x64xbf16>
    tpu.vector_store %arg7[%c0_55, %c256_56], %108 {strides = array<i32>} : memref<128x384xbf16, #tpu.memory_space<vmem>>, vector<128x64xbf16>,
    %c0_57 = arith.constant 0 : index
    %c320 = arith.constant 320 : index
    %110 = vector.load %arg6[%c0_57, %c320] : memref<128x1152xbf16, #tpu.memory_space<vmem>>, vector<128x64xbf16>
    %c0_58 = arith.constant 0 : index
    %c704 = arith.constant 704 : index
    %111 = vector.load %arg6[%c0_58, %c704] : memref<128x1152xbf16, #tpu.memory_space<vmem>>, vector<128x64xbf16>
    %c0_59 = arith.constant 0 : index
    %c1088 = arith.constant 1088 : index
    %112 = vector.load %arg6[%c0_59, %c1088] : memref<128x1152xbf16, #tpu.memory_space<vmem>>, vector<128x64xbf16>
    %cst_60 = arith.constant dense<0.000000e+00> : vector<128x128xf32>
    %113 = tpu.matmul %110, %111, %cst_60 {dimension_numbers = #tpu.dot_dimension_numbers<[1], [1], [0], [0], [0, 0, 1, 0], [], []>} : vector<128x64xbf16>, vector<128x64xbf16>, vector<128x128xf32> -> vector<128x128xf32>
    %cst_61 = arith.constant -1.000000e+30 : f32
    %114 = vector.broadcast %cst_61 : f32 to vector<128x128xf32>
    %115 = arith.select %9, %113, %114 : vector<128x128xi1>, vector<128x128xf32>
    %cst_62 = arith.constant dense<0xFF800000> : vector<128xf32>
    %116 = vector.multi_reduction <maximumf>, %115, %cst_62 [1] : vector<128x128xf32> to vector<128xf32>
    %117 = vector.shape_cast %116 : vector<128xf32> to vector<128x1xf32>
    %118 = vector.broadcast %117 : vector<128x1xf32> to vector<128x128xf32>
    %119 = arith.subf %115, %118 : vector<128x128xf32>
    %120 = math.exp %119 : vector<128x128xf32>
    %cst_63 = arith.constant dense<0.000000e+00> : vector<128xf32>
    %121 = vector.multi_reduction <add>, %120, %cst_63 [1] : vector<128x128xf32> to vector<128xf32>
    %122 = vector.shape_cast %121 : vector<128xf32> to vector<128x1xf32>
    %123 = arith.truncf %120 : vector<128x128xf32> to vector<128x128xbf16>
    %cst_64 = arith.constant dense<0.000000e+00> : vector<128x64xf32>
    %124 = tpu.matmul %123, %112, %cst_64 {dimension_numbers = #tpu.dot_dimension_numbers<[1], [0], [0], [1], [0, 0, 1, 1], [], []>} : vector<128x128xbf16>, vector<128x64xbf16>, vector<128x64xf32> -> vector<128x64xf32>
    %125 = tpu.reciprocal %122 {approx = true} : vector<128x1xf32> -> vector<128x1xf32>
    %126 = vector.broadcast %125 : vector<128x1xf32> to vector<128x64xf32>
    %127 = arith.mulf %124, %126 : vector<128x64xf32>
    %128 = arith.truncf %127 : vector<128x64xf32> to vector<128x64xbf16>
    %c0_65 = arith.constant 0 : index
    %c320_66 = arith.constant 320 : index
    %129 = vector.load %arg7[%c0_65, %c320_66] : memref<128x384xbf16, #tpu.memory_space<vmem>>, vector<128x64xbf16>
    tpu.vector_store %arg7[%c0_65, %c320_66], %128 {strides = array<i32>} : memref<128x384xbf16, #tpu.memory_space<vmem>>, vector<128x64xbf16>,
    %c0_67 = arith.constant 0 : index
    %c0_68 = arith.constant 0 : index
    %130 = vector.load %arg7[%c0_67, %c0_68] : memref<128x384xbf16, #tpu.memory_space<vmem>>, vector<128x384xbf16>
    %c0_69 = arith.constant 0 : index
    %c0_70 = arith.constant 0 : index
    %131 = vector.load %arg3[%c0_69, %c0_70] : memref<384x384xbf16, #tpu.memory_space<vmem>>, vector<384x384xbf16>
    %cst_71 = arith.constant dense<0.000000e+00> : vector<128x384xf32>
    %132 = tpu.matmul %130, %131, %cst_71 {dimension_numbers = #tpu.dot_dimension_numbers<[1], [0], [0], [1], [0, 0, 1, 1], [], []>} : vector<128x384xbf16>, vector<384x384xbf16>, vector<128x384xf32> -> vector<128x384xf32>
    %c0_72 = arith.constant 0 : index
    %c0_73 = arith.constant 0 : index
    %133 = vector.load %arg4[%c0_72, %c0_73] : memref<1x384xf32, #tpu.memory_space<vmem>>, vector<1x384xf32>
    %134 = vector.broadcast %133 : vector<1x384xf32> to vector<128x384xf32>
    %135 = arith.addf %132, %134 : vector<128x384xf32>
    %c0_74 = arith.constant 0 : index
    %c0_75 = arith.constant 0 : index
    %c0_76 = arith.constant 0 : index
    %136 = vector.load %arg5[%c0_74, %c0_75, %c0_76] : memref<1x128x384xf32, #tpu.memory_space<vmem>>, vector<1x128x384xf32>
    %137 = vector.shape_cast %136 : vector<1x128x384xf32> to vector<128x384xf32>
    %138 = vector.shape_cast %135 : vector<128x384xf32> to vector<1x128x384xf32>
    tpu.vector_store %arg5[%c0_74, %c0_75, %c0_76], %138 {strides = array<i32>} : memref<1x128x384xf32, #tpu.memory_space<vmem>>, vector<1x128x384xf32>,
    return
  }
  func.func @transform_0(%arg0: i32) -> (i32, i32, i32) {
    %c0_i32 = arith.constant 0 : i32
    %c0_i32_0 = arith.constant 0 : i32
    %c0_i32_1 = arith.constant 0 : i32
    return %arg0, %c0_i32, %c0_i32_0 : i32, i32, i32
  }
  func.func @transform_1(%arg0: i32) -> (i32, i32) {
    %c0_i32 = arith.constant 0 : i32
    %c0_i32_0 = arith.constant 0 : i32
    %c0_i32_1 = arith.constant 0 : i32
    return %c0_i32, %c0_i32_0 : i32, i32
  }
  func.func @transform_2(%arg0: i32) -> (i32, i32) {
    %c0_i32 = arith.constant 0 : i32
    %c0_i32_0 = arith.constant 0 : i32
    %c0_i32_1 = arith.constant 0 : i32
    return %c0_i32, %c0_i32_0 : i32, i32
  }
  func.func @transform_3(%arg0: i32) -> (i32, i32) {
    %c0_i32 = arith.constant 0 : i32
    %c0_i32_0 = arith.constant 0 : i32
    %c0_i32_1 = arith.constant 0 : i32
    return %c0_i32, %c0_i32_0 : i32, i32
  }
  func.func @transform_4(%arg0: i32) -> (i32, i32, i32) {
    %c0_i32 = arith.constant 0 : i32
    %c0_i32_0 = arith.constant 0 : i32
    %c0_i32_1 = arith.constant 0 : i32
    return %arg0, %c0_i32, %c0_i32_0 : i32, i32, i32
  }
}

</mosaic_0001>

<llo_original>
// kernel: tpu_custom_call.1
$region0: #{tpu_custom_call.1}
  #allocation0 [shape = 'u32[]', space=smem, size = 0x4, offset = 0x4, fixed_abs, tag = 'smem constant byte address 0x4 - core index']
  #allocation1 [shape = 'u32[72,128]{1,0:T(1,128)}', space=vmem, size = 0x9000, scoped, tag = 'internal scratch']
  #allocation2 [shape = 'bf16[128,1152]{1,0:T(8,128)(2,1)}', space=vmem, size = 0x48000, scoped, tag = 'scratch operand']
  #allocation3 [shape = 'bf16[128,384]{1,0:T(8,128)(2,1)}', space=vmem, size = 0x18000, scoped, tag = 'scratch operand']
  %s0 = inlined_call_operand.hbm [shape: f32[2,128,384], index: 0, kind: input, shape index: {}]
  %s1 = inlined_call_operand.hbm [shape: bf16[384,1152], index: 1, kind: input, shape index: {}]
  %s2 = inlined_call_operand.hbm [shape: bf16[384,384], index: 2, kind: input, shape index: {}]
  %s3 = inlined_call_operand.hbm [shape: f32[1,384], index: 3, kind: input, shape index: {}]
  %s4 = inlined_call_operand.hbm [shape: f32[2,128,384], index: 4, kind: output, shape index: {}]
  %s5 = sld [smem:[#allocation0]]
  $region65: #{tpu_custom_call.1} parent=0
    _
  %s7 = ssub.s32 1, %s5
  %s8 = scalar_select 0, %s7, %s5
  $region1: #{tpu_custom_call.1} parent=0
    #allocation4 [shape = 'u8[393216]{0}', space=vmem, size = 0x60000, scoped, tag = 'input window, operand 0']
    #allocation5 [shape = 's32[2]{0}', space=sflag, size = 0x8, scoped, tag = 'scoped memory for tpu_custom_call.1']
    #allocation6 [shape = 's32[2]{0}', space=sflag, size = 0x8, scoped, tag = 'scoped memory for tpu_custom_call.1']
    #allocation7 [shape = 'u8[884736]{0}', space=vmem, size = 0xd8000, scoped, tag = 'input window, operand 1, single buffered']
    #allocation8 [shape = 's32[1]{0}', space=sflag, size = 0x4, scoped, tag = 'scoped memory for tpu_custom_call.1']
    #allocation9 [shape = 'u8[294912]{0}', space=vmem, size = 0x48000, scoped, tag = 'input window, operand 2, single buffered']
    #allocation10 [shape = 'u8[1536]{0}', space=vmem, size = 0x800, scoped, tag = 'input window, operand 3, single buffered']
    #allocation11 [shape = 's32[1]{0}', space=sflag, size = 0x4, scoped, tag = 'scoped memory for tpu_custom_call.1']
    #allocation12 [shape = 'u8[393216]{0}', space=vmem, size = 0x60000, scoped, tag = 'output window, operand 0']
    %9 = vsyncpa [#allocation5], 0
    %s10 = scalar_lea.sflag [#allocation5], 1
    %11 = vsyncpa %s10, 0
    %12 = vsyncpa [#allocation8], 0
    %13 = vsyncpa [#allocation11], 0
    %14 = vsyncpa [#allocation6], 0
    %s15 = scalar_lea.sflag [#allocation6], 1
    %16 = vsyncpa %s15, 0
    loop: start=0, step=1, limit=4
    $region2: #{tpu_custom_call.1} parent=1 // loop_pre_header
      _
    $region3: #{tpu_custom_call.1} parent=1 // loop_header
      %s18 = sphi 0, %s22
      %p19 = scmp.ge.s32.totalorder %s18, 4
      %s28 = sphi 0, %s30
      %s31 = sphi 0, %s28
      %s32 = sphi 0, %s31
      %s48 = sphi 0, %s32
      %s52 = sphi 0, %s52
      %s54 = sphi 0, %s52
      %s55 = sphi 0, %s54
      %s69 = sphi 0, %s55
      %s73 = sphi 0, %s73
      %s75 = sphi 0, %s73
      %s76 = sphi 0, %s75
      %s90 = sphi 0, %s76
      %s94 = sphi 0, %s94
      %s96 = sphi 0, %s94
      %s97 = sphi 0, %s96
      %s111 = sphi 0, %s97
      %s117 = sphi 0, %s119
      %s120 = sphi 0, %s117
      %s121 = sphi 0, %s120
      %s137 = sphi 0, %s121
    $region4: #{tpu_custom_call.1} parent=1 // loop_header_branch
      %21 = sbr.rel (%p19) target = $region8
    $region5: #{tpu_custom_call.1} parent=1 // loop_body
      %s23 = ssub.s32 %s18, 1
      %s24 = ssub.s32 %s18, 2
      %s25 = sadd.s32 %s18, 1
      %s26 = ssub.s32 %s18, %s25
      %p27 = scmp.eq.s32.totalorder %s26, 0
      %s29 = sadd.s32 %s28, 1
      %s30 = scalar_select %p27, %s28, %s29
      %p33 = pneg %p27
      %p34 = scmp.eq.s32.totalorder %s18, 1
      %p35 = por %p33, %p34
      %p36 = scmp.ne.s32.totalorder %s28, %s31
      %p37 = scmp.eq.s32.totalorder %s18, 0
      %p38 = por %p36, %p37
      %p39 = scmp.ne.s32.totalorder %s28, %s31
      %p40 = scmp.eq.s32.totalorder %s23, 1
      %p41 = por %p39, %p40
      %p42 = scmp.ne.s32.totalorder %s31, %s32
      %p43 = scmp.eq.s32.totalorder %s23, 0
      %p44 = por %p42, %p43
      %p45 = scmp.ne.s32.totalorder %s31, %s32
      %p46 = scmp.eq.s32.totalorder %s24, 1
      %p47 = por %p45, %p46
      %p49 = scmp.ne.s32.totalorder %s32, %s48
      %p50 = scmp.eq.s32.totalorder %s24, 0
      %p51 = por %p49, %p50
      %s53 = sadd.s32 %s52, 1
      %p56 = scmp.eq.s32.totalorder %s18, 1
      %p57 = scmp.ne.s32.totalorder %s52, %s54
      %p58 = scmp.eq.s32.totalorder %s18, 0
      %p59 = por %p57, %p58
      %p60 = scmp.ne.s32.totalorder %s52, %s54
      %p61 = scmp.eq.s32.totalorder %s23, 1
      %p62 = por %p60, %p61
      %p63 = scmp.ne.s32.totalorder %s54, %s55
      %p64 = scmp.eq.s32.totalorder %s23, 0
      %p65 = por %p63, %p64
      %p66 = scmp.ne.s32.totalorder %s54, %s55
      %p67 = scmp.eq.s32.totalorder %s24, 1
      %p68 = por %p66, %p67
      %p70 = scmp.ne.s32.totalorder %s55, %s69
      %p71 = scmp.eq.s32.totalorder %s24, 0
      %p72 = por %p70, %p71
      %s74 = sadd.s32 %s73, 1
      %p77 = scmp.eq.s32.totalorder %s18, 1
      %p78 = scmp.ne.s32.totalorder %s73, %s75
      %p79 = scmp.eq.s32.totalorder %s18, 0
      %p80 = por %p78, %p79
      %p81 = scmp.ne.s32.totalorder %s73, %s75
      %p82 = scmp.eq.s32.totalorder %s23, 1
      %p83 = por %p81, %p82
      %p84 = scmp.ne.s32.totalorder %s75, %s76
      %p85 = scmp.eq.s32.totalorder %s23, 0
      %p86 = por %p84, %p85
      %p87 = scmp.ne.s32.totalorder %s75, %s76
      %p88 = scmp.eq.s32.totalorder %s24, 1
      %p89 = por %p87, %p88
      %p91 = scmp.ne.s32.totalorder %s76, %s90
      %p92 = scmp.eq.s32.totalorder %s24, 0
      %p93 = por %p91, %p92
      %s95 = sadd.s32 %s94, 1
      %p98 = scmp.eq.s32.totalorder %s18, 1
      %p99 = scmp.ne.s32.totalorder %s94, %s96
      %p100 = scmp.eq.s32.totalorder %s18, 0
      %p101 = por %p99, %p100
      %p102 = scmp.ne.s32.totalorder %s94, %s96
      %p103 = scmp.eq.s32.totalorder %s23, 1
      %p104 = por %p102, %p103
      %p105 = scmp.ne.s32.totalorder %s96, %s97
      %p106 = scmp.eq.s32.totalorder %s23, 0
      %p107 = por %p105, %p106
      %p108 = scmp.ne.s32.totalorder %s96, %s97
      %p109 = scmp.eq.s32.totalorder %s24, 1
      %p110 = por %p108, %p109
      %p112 = scmp.ne.s32.totalorder %s97, %s111
      %p113 = scmp.eq.s32.totalorder %s24, 0
      %p114 = por %p112, %p113
      %s115 = ssub.s32 %s18, %s25
      %p116 = scmp.eq.s32.totalorder %s115, 0
      %s118 = sadd.s32 %s117, 1
      %s119 = scalar_select %p116, %s117, %s118
      %p122 = pneg %p116
      %p123 = scmp.eq.s32.totalorder %s18, 1
      %p124 = por %p122, %p123
      %p125 = scmp.ne.s32.totalorder %s117, %s120
      %p126 = scmp.eq.s32.totalorder %s18, 0
      %p127 = por %p125, %p126
      %p128 = scmp.ne.s32.totalorder %s117, %s120
      %p129 = scmp.eq.s32.totalorder %s23, 1
      %p130 = por %p128, %p129
      %p131 = scmp.ne.s32.totalorder %s120, %s121
      %p132 = scmp.eq.s32.totalorder %s23, 0
      %p133 = por %p131, %p132
      %p134 = scmp.ne.s32.totalorder %s120, %s121
      %p135 = scmp.eq.s32.totalorder %s24, 1
      %p136 = por %p134, %p135
      %p138 = scmp.ne.s32.totalorder %s121, %s137
      %p139 = scmp.eq.s32.totalorder %s24, 0
      %p140 = por %p138, %p139
      %p141 = scmp.le.s32.totalorder 1, %s18
      %p142 = scmp.lt.s32.totalorder %s18, 3
      %p143 = pnand %p141, %p142
      %p144 = pneg %p143
      // Predicated region
      $region9: #{tpu_custom_call.1} parent=5 // pred_check
        _
      $region10: #{tpu_custom_call.1} parent=5 // pred_check_branch
        %146 = sbr.rel (%p143) target = $region12
      $region11: #{tpu_custom_call.1} parent=5 // pred_region
        %s147 = ssub.s32 %s18, 1
        // Predicated region
        $region13: #{tpu_custom_call.1} parent=11 // pred_check
          %p148 = pneg %p65
        $region14: #{tpu_custom_call.1} parent=11 // pred_check_branch
          %150 = sbr.rel (%p148) target = $region16
        $region15: #{tpu_custom_call.1} parent=11 // pred_region
          %152 = vsyncadd [#allocation8], 0
          %s153 = sshll.u32 %s1, 4
          %s154 = int_to_ptr.hbm [resolvable:$true] %s153
          %s155 = sshll.u32 [#allocation7], 4
          %s156 = int_to_ptr.vmem [resolvable:$true] %s155
          %161 = dma.hbm_to_vmem [thread:$0]  %s154, 27648, %s156, [#allocation8], 576, 576, 36
        $region16: #{tpu_custom_call.1} parent=11 // pred_fallthru
          _
        // Predicated region
        $region17: #{tpu_custom_call.1} parent=11 // pred_check
          %p162 = pneg %p86
        $region18: #{tpu_custom_call.1} parent=11 // pred_check_branch
          %164 = sbr.rel (%p162) target = $region20
        $region19: #{tpu_custom_call.1} parent=11 // pred_region
          %166 = vsyncadd [#allocation8], 0
          %s167 = sshll.u32 %s2, 4
          %s168 = int_to_ptr.hbm [resolvable:$true] %s167
          %s169 = sshll.u32 [#allocation9], 4
          %s170 = int_to_ptr.vmem [resolvable:$true] %s169
          %175 = dma.hbm_to_vmem [thread:$0]  %s168, 9216, %s170, [#allocation8], 192, 192, 12
        $region20: #{tpu_custom_call.1} parent=11 // pred_fallthru
          _
        // Predicated region
        $region21: #{tpu_custom_call.1} parent=11 // pred_check
          %p176 = pneg %p107
        $region22: #{tpu_custom_call.1} parent=11 // pred_check_branch
          %178 = sbr.rel (%p176) target = $region24
        $region23: #{tpu_custom_call.1} parent=11 // pred_region
          %180 = vsyncadd [#allocation11], 0
          %s182 = sshll.u32 %s3, 4
          %s183 = int_to_ptr.hbm [resolvable:$true] %s182
          %s184 = sshll.u32 [#allocation10], 4
          %s185 = int_to_ptr.vmem [resolvable:$true] %s184
          %187 = dma.hbm_to_vmem [thread:$0]  %s183, 48, %s185, [#allocation11]
        $region24: #{tpu_custom_call.1} parent=11 // pred_fallthru
          _
      $region12: #{tpu_custom_call.1} parent=5 // pred_fallthru
        _
      %p188 = scmp.lt.s32.totalorder %s18, 2
      // Predicated region
      $region25: #{tpu_custom_call.1} parent=5 // pred_check
        %p189 = pneg %p188
      $region26: #{tpu_custom_call.1} parent=5 // pred_check_branch
        %191 = sbr.rel (%p189) target = $region28
      $region27: #{tpu_custom_call.1} parent=5 // pred_region
        // Predicated region
        $region29: #{tpu_custom_call.1} parent=27 // pred_check
          %p192 = pneg %p38
        $region30: #{tpu_custom_call.1} parent=27 // pred_check_branch
          %194 = sbr.rel (%p192) target = $region32
        $region31: #{tpu_custom_call.1} parent=27 // pred_region
          %s195 = sand.u32 %s28, 1
          %s196 = scalar_lea.sflag [#allocation5], %s195
          %s197 = sand.u32 %s28, 1
          %s198 = smul.addr %s197, 384
          %s199 = scalar_lea.vmem [#allocation4], %s198
          %201 = vsyncadd %s196, 0
          %s202 = smul.addr %s18, 48
          %s203 = smul.addr %s202, 8
          %s204 = scalar_lea.hbm %s0, %s203
          %s205 = sshll.u32 %s204, 4
          %s206 = int_to_ptr.hbm [resolvable:$true] %s205
          %s207 = sshll.u32 %s199, 4
          %s208 = int_to_ptr.vmem [resolvable:$true] %s207
          %213 = dma.hbm_to_vmem [thread:$0]  %s206, 6144, %s208, %s196, 384, 384, 24
        $region32: #{tpu_custom_call.1} parent=27 // pred_fallthru
          _
      $region28: #{tpu_custom_call.1} parent=5 // pred_fallthru
        _
      %p214 = scmp.le.s32.totalorder 1, %s18
      %p215 = scmp.lt.s32.totalorder %s18, 3
      %p216 = pnand %p214, %p215
      %p217 = pneg %p216
      // Predicated region
      $region33: #{tpu_custom_call.1} parent=5 // pred_check
        _
      $region34: #{tpu_custom_call.1} parent=5 // pred_check_branch
        %219 = sbr.rel (%p216) target = $region36
      $region35: #{tpu_custom_call.1} parent=5 // pred_region
        %s220 = ssub.s32 %s18, 1
        %s221 = sand.u32 %s31, 1
        %s222 = scalar_lea.sflag [#allocation5], %s221
        %s223 = sand.u32 %s31, 1
        %s224 = smul.addr %s223, 384
        %s225 = scalar_lea.vmem [#allocation4], %s224
        // Predicated region
        $region37: #{tpu_custom_call.1} parent=35 // pred_check
          %p226 = pneg %p44
        $region38: #{tpu_custom_call.1} parent=35 // pred_check_branch
          %228 = sbr.rel (%p226) target = $region40
        $region39: #{tpu_custom_call.1} parent=35 // pred_region
          %230 = dma.done %s222, 6144
        $region40: #{tpu_custom_call.1} parent=35 // pred_fallthru
          _
        // Predicated region
        $region41: #{tpu_custom_call.1} parent=35 // pred_check
          %p231 = pneg %p65
        $region42: #{tpu_custom_call.1} parent=35 // pred_check_branch
          %233 = sbr.rel (%p231) target = $region44
        $region43: #{tpu_custom_call.1} parent=35 // pred_region
          %235 = dma.done [#allocation8], 27648
        $region44: #{tpu_custom_call.1} parent=35 // pred_fallthru
          _
        // Predicated region
        $region45: #{tpu_custom_call.1} parent=35 // pred_check
          %p236 = pneg %p86
        $region46: #{tpu_custom_call.1} parent=35 // pred_check_branch
          %238 = sbr.rel (%p236) target = $region48
        $region47: #{tpu_custom_call.1} parent=35 // pred_region
          %240 = dma.done [#allocation8], 9216
        $region48: #{tpu_custom_call.1} parent=35 // pred_fallthru
          _
        // Predicated region
        $region49: #{tpu_custom_call.1} parent=35 // pred_check
          %p241 = pneg %p107
        $region50: #{tpu_custom_call.1} parent=35 // pred_check_branch
          %243 = sbr.rel (%p241) target = $region52
        $region51: #{tpu_custom_call.1} parent=35 // pred_region
          %245 = dma.done [#allocation11], 48
        $region52: #{tpu_custom_call.1} parent=35 // pred_fallthru
          _
        %s246 = sand.u32 %s31, 1
        %s247 = scalar_lea.sflag [#allocation5], %s246
        %s248 = sand.u32 %s31, 1
        %s249 = smul.addr %s248, 384
        %s250 = scalar_lea.vmem [#allocation4], %s249
        %p251 = pneg %p44
        %p252 = pneg %p41
        %p253 = pneg %p65
        %p254 = pneg %p62
        %p255 = pneg %p86
        %p256 = pneg %p83
        %p257 = pneg %p107
        %p258 = pneg %p104
        %p259 = pneg %p133
        %p260 = pneg %p130
        %s261 = sand.u32 %s120, 1
        %s262 = scalar_lea.sflag [#allocation6], %s261
        %s263 = sand.u32 %s120, 1
        %s264 = smul.addr %s263, 384
        %s265 = scalar_lea.vmem [#allocation12], %s264
        %v266 = vld [vmem:[%s225] sm:$0xff]
        %v267 = vld [vmem:[%s225 + $0x8] sm:$0xff]
        %v268 = vld [vmem:[%s225 + $0x10] sm:$0xff]
        %v269 = vld [vmem:[%s225 + $0x18] sm:$0xff]
        %v270 = vld [vmem:[%s225 + $0x20] sm:$0xff]
        %v271 = vld [vmem:[%s225 + $0x28] sm:$0xff]
        %v272 = vld [vmem:[%s225 + $0x30] sm:$0xff]
        %v273 = vld [vmem:[%s225 + $0x38] sm:$0xff]
        %v274 = vld [vmem:[%s225 + $0x40] sm:$0xff]
        %v275 = vld [vmem:[%s225 + $0x48] sm:$0xff]
        %v276 = vld [vmem:[%s225 + $0x50] sm:$0xff]
        %v277 = vld [vmem:[%s225 + $0x58] sm:$0xff]
        %v278 = vld [vmem:[%s225 + $0x60] sm:$0xff]
        %v279 = vld [vmem:[%s225 + $0x68] sm:$0xff]
        %v280 = vld [vmem:[%s225 + $0x70] sm:$0xff]
        %v281 = vld [vmem:[%s225 + $0x78] sm:$0xff]
        %v282 = vld [vmem:[%s225 + $0x80] sm:$0xff]
        %v283 = vld [vmem:[%s225 + $0x88] sm:$0xff]
        %v284 = vld [vmem:[%s225 + $0x90] sm:$0xff]
        %v285 = vld [vmem:[%s225 + $0x98] sm:$0xff]
        %v286 = vld [vmem:[%s225 + $0xa0] sm:$0xff]
        %v287 = vld [vmem:[%s225 + $0xa8] sm:$0xff]
        %v288 = vld [vmem:[%s225 + $0xb0] sm:$0xff]
        %v289 = vld [vmem:[%s225 + $0xb8] sm:$0xff]
        %v290 = vld [vmem:[%s225 + $0xc0] sm:$0xff]
        %v291 = vld [vmem:[%s225 + $0xc8] sm:$0xff]
        %v292 = vld [vmem:[%s225 + $0xd0] sm:$0xff]
        %v293 = vld [vmem:[%s225 + $0xd8] sm:$0xff]
        %v294 = vld [vmem:[%s225 + $0xe0] sm:$0xff]
        %v295 = vld [vmem:[%s225 + $0xe8] sm:$0xff]
        %v296 = vld [vmem:[%s225 + $0xf0] sm:$0xff]
        %v297 = vld [vmem:[%s225 + $0xf8] sm:$0xff]
        %v298 = vld [vmem:[%s225 + $0x100] sm:$0xff]
        %v299 = vld [vmem:[%s225 + $0x108] sm:$0xff]
        %v300 = vld [vmem:[%s225 + $0x110] sm:$0xff]
        %v301 = vld [vmem:[%s225 + $0x118] sm:$0xff]
        %v302 = vld [vmem:[%s225 + $0x120] sm:$0xff]
        %v303 = vld [vmem:[%s225 + $0x128] sm:$0xff]
        %v304 = vld [vmem:[%s225 + $0x130] sm:$0xff]
        %v305 = vld [vmem:[%s225 + $0x138] sm:$0xff]
        %v306 = vld [vmem:[%s225 + $0x140] sm:$0xff]
        %v307 = vld [vmem:[%s225 + $0x148] sm:$0xff]
        %v308 = vld [vmem:[%s225 + $0x150] sm:$0xff]
        %v309 = vld [vmem:[%s225 + $0x158] sm:$0xff]
        %v310 = vld [vmem:[%s225 + $0x160] sm:$0xff]
        %v311 = vld [vmem:[%s225 + $0x168] sm:$0xff]
        %v312 = vld [vmem:[%s225 + $0x170] sm:$0xff]
        %v313 = vld [vmem:[%s225 + $0x178] sm:$0xff]
        %v314 = vpack.c.bf16 %v269, %v266
        %v315 = vpack.c.bf16 %v270, %v267
        %v316 = vpack.c.bf16 %v271, %v268
        %v317 = vpack.c.bf16 %v275, %v272
        %v318 = vpack.c.bf16 %v276, %v273
        %v319 = vpack.c.bf16 %v277, %v274
        %v320 = vpack.c.bf16 %v281, %v278
        %v321 = vpack.c.bf16 %v282, %v279
        %v322 = vpack.c.bf16 %v283, %v280
        %v323 = vpack.c.bf16 %v287, %v284
        %v324 = vpack.c.bf16 %v288, %v285
        %v325 = vpack.c.bf16 %v289, %v286
        %v326 = vpack.c.bf16 %v293, %v290
        %v327 = vpack.c.bf16 %v294, %v291
        %v328 = vpack.c.bf16 %v295, %v292
        %v329 = vpack.c.bf16 %v299, %v296
        %v330 = vpack.c.bf16 %v300, %v297
        %v331 = vpack.c.bf16 %v301, %v298
        %v332 = vpack.c.bf16 %v305, %v302
        %v333 = vpack.c.bf16 %v306, %v303
        %v334 = vpack.c.bf16 %v307, %v304
        %v335 = vpack.c.bf16 %v311, %v308
        %v336 = vpack.c.bf16 %v312, %v309
        %v337 = vpack.c.bf16 %v313, %v310
        %v338 = vld [vmem:[#allocation7] sm:$0xff]
        %v339 = vld [vmem:[#allocation7 + $0x8] sm:$0xff]
        %v340 = vld [vmem:[#allocation7 + $0x10] sm:$0xff]
        %v341 = vld [vmem:[#allocation7 + $0x18] sm:$0xff]
        %v342 = vld [vmem:[#allocation7 + $0x20] sm:$0xf]
        %v343 = vld [vmem:[#allocation7 + $0x24] sm:$0xff]
        %v344 = vld [vmem:[#allocation7 + $0x2c] sm:$0xff]
        %v345 = vld [vmem:[#allocation7 + $0x34] sm:$0xff]
        %v346 = vld [vmem:[#allocation7 + $0x3c] sm:$0xff]
        %v347 = vld [vmem:[#allocation7 + $0x44] sm:$0xf]
        %v348 = vld [vmem:[#allocation7 + $0x48] sm:$0xff]
        %v349 = vld [vmem:[#allocation7 + $0x50] sm:$0xff]
        %v350 = vld [vmem:[#allocation7 + $0x58] sm:$0xff]
        %v351 = vld [vmem:[#allocation7 + $0x60] sm:$0xff]
        %v352 = vld [vmem:[#allocation7 + $0x68] sm:$0xf]
        %v353 = vld [vmem:[#allocation7 + $0x6c] sm:$0xff]
        %v354 = vld [vmem:[#allocation7 + $0x74] sm:$0xff]
        %v355 = vld [vmem:[#allocation7 + $0x7c] sm:$0xff]
        %v356 = vld [vmem:[#allocation7 + $0x84] sm:$0xff]
        %v357 = vld [vmem:[#allocation7 + $0x8c] sm:$0xf]
        %v358 = vld [vmem:[#allocation7 + $0x90] sm:$0xff]
        %v359 = vld [vmem:[#allocation7 + $0x98] sm:$0xff]
        %v360 = vld [vmem:[#allocation7 + $0xa0] sm:$0xff]
        %v361 = vld [vmem:[#allocation7 + $0xa8] sm:$0xff]
        %v362 = vld [vmem:[#allocation7 + $0xb0] sm:$0xf]
        %v363 = vld [vmem:[#allocation7 + $0xb4] sm:$0xff]
        %v364 = vld [vmem:[#allocation7 + $0xbc] sm:$0xff]
        %v365 = vld [vmem:[#allocation7 + $0xc4] sm:$0xff]
        %v366 = vld [vmem:[#allocation7 + $0xcc] sm:$0xff]
        %v367 = vld [vmem:[#allocation7 + $0xd4] sm:$0xf]
        %v368 = vld [vmem:[#allocation7 + $0xd8] sm:$0xff]
        %v369 = vld [vmem:[#allocation7 + $0xe0] sm:$0xff]
        %v370 = vld [vmem:[#allocation7 + $0xe8] sm:$0xff]
        %v371 = vld [vmem:[#allocation7 + $0xf0] sm:$0xff]
        %v372 = vld [vmem:[#allocation7 + $0xf8] sm:$0xf]
        %v373 = vld [vmem:[#allocation7 + $0xfc] sm:$0xff]
        %v374 = vld [vmem:[#allocation7 + $0x104] sm:$0xff]
        %v375 = vld [vmem:[#allocation7 + $0x10c] sm:$0xff]
        %v376 = vld [vmem:[#allocation7 + $0x114] sm:$0xff]
        %v377 = vld [vmem:[#allocation7 + $0x11c] sm:$0xf]
        %v378 = vld [vmem:[#allocation7 + $0x120] sm:$0xff]
        %v379 = vld [vmem:[#allocation7 + $0x128] sm:$0xff]
        %v380 = vld [vmem:[#allocation7 + $0x130] sm:$0xff]
        %v381 = vld [vmem:[#allocation7 + $0x138] sm:$0xff]
        %v382 = vld [vmem:[#allocation7 + $0x140] sm:$0xf]
        %v383 = vld [vmem:[#allocation7 + $0x144] sm:$0xff]
        %v384 = vld [vmem:[#allocation7 + $0x14c] sm:$0xff]
        %v385 = vld [vmem:[#allocation7 + $0x154] sm:$0xff]
        %v386 = vld [vmem:[#allocation7 + $0x15c] sm:$0xff]
        %v387 = vld [vmem:[#allocation7 + $0x164] sm:$0xf]
        %v388 = vld [vmem:[#allocation7 + $0x168] sm:$0xff]
        %v389 = vld [vmem:[#allocation7 + $0x170] sm:$0xff]
        %v390 = vld [vmem:[#allocation7 + $0x178] sm:$0xff]
        %v391 = vld [vmem:[#allocation7 + $0x180] sm:$0xff]
        %v392 = vld [vmem:[#allocation7 + $0x188] sm:$0xf]
        %v393 = vld [vmem:[#allocation7 + $0x18c] sm:$0xff]
        %v394 = vld [vmem:[#allocation7 + $0x194] sm:$0xff]
        %v395 = vld [vmem:[#allocation7 + $0x19c] sm:$0xff]
        %v396 = vld [vmem:[#allocation7 + $0x1a4] sm:$0xff]
        %v397 = vld [vmem:[#allocation7 + $0x1ac] sm:$0xf]
        %v398 = vld [vmem:[#allocation7 + $0x1b0] sm:$0xff]
        %v399 = vld [vmem:[#allocation7 + $0x1b8] sm:$0xff]
        %v400 = vld [vmem:[#allocation7 + $0x1c0] sm:$0xff]
        %v401 = vld [vmem:[#allocation7 + $0x1c8] sm:$0xff]
        %v402 = vld [vmem:[#allocation7 + $0x1d0] sm:$0xf]
        %v403 = vld [vmem:[#allocation7 + $0x1d4] sm:$0xff]
        %v404 = vld [vmem:[#allocation7 + $0x1dc] sm:$0xff]
        %v405 = vld [vmem:[#allocation7 + $0x1e4] sm:$0xff]
        %v406 = vld [vmem:[#allocation7 + $0x1ec] sm:$0xff]
        %v407 = vld [vmem:[#allocation7 + $0x1f4] sm:$0xf]
        %v408 = vld [vmem:[#allocation7 + $0x1f8] sm:$0xff]
        %v409 = vld [vmem:[#allocation7 + $0x200] sm:$0xff]
        %v410 = vld [vmem:[#allocation7 + $0x208] sm:$0xff]
        %v411 = vld [vmem:[#allocation7 + $0x210] sm:$0xff]
        %v412 = vld [vmem:[#allocation7 + $0x218] sm:$0xf]
        %v413 = vld [vmem:[#allocation7 + $0x21c] sm:$0xff]
        %v414 = vld [vmem:[#allocation7 + $0x224] sm:$0xff]
        %v415 = vld [vmem:[#allocation7 + $0x22c] sm:$0xff]
        %v416 = vld [vmem:[#allocation7 + $0x234] sm:$0xff]
        %v417 = vld [vmem:[#allocation7 + $0x23c] sm:$0xf]
        %v418 = vld [vmem:[#allocation7 + $0x240] sm:$0xff]
        %v419 = vld [vmem:[#allocation7 + $0x248] sm:$0xff]
        %v420 = vld [vmem:[#allocation7 + $0x250] sm:$0xff]
        %v421 = vld [vmem:[#allocation7 + $0x258] sm:$0xff]
        %v422 = vld [vmem:[#allocation7 + $0x260] sm:$0xf]
        %v423 = vld [vmem:[#allocation7 + $0x264] sm:$0xff]
        %v424 = vld [vmem:[#allocation7 + $0x26c] sm:$0xff]
        %v425 = vld [vmem:[#allocation7 + $0x274] sm:$0xff]
        %v426 = vld [vmem:[#allocation7 + $0x27c] sm:$0xff]
        %v427 = vld [vmem:[#allocation7 + $0x284] sm:$0xf]
        %v428 = vld [vmem:[#allocation7 + $0x288] sm:$0xff]
        %v429 = vld [vmem:[#allocation7 + $0x290] sm:$0xff]
        %v430 = vld [vmem:[#allocation7 + $0x298] sm:$0xff]
        %v431 = vld [vmem:[#allocation7 + $0x2a0] sm:$0xff]
        %v432 = vld [vmem:[#allocation7 + $0x2a8] sm:$0xf]
        %v433 = vld [vmem:[#allocation7 + $0x2ac] sm:$0xff]
        %v434 = vld [vmem:[#allocation7 + $0x2b4] sm:$0xff]
        %v435 = vld [vmem:[#allocation7 + $0x2bc] sm:$0xff]
        %v436 = vld [vmem:[#allocation7 + $0x2c4] sm:$0xff]
        %v437 = vld [vmem:[#allocation7 + $0x2cc] sm:$0xf]
        %v438 = vld [vmem:[#allocation7 + $0x2d0] sm:$0xff]
        %v439 = vld [vmem:[#allocation7 + $0x2d8] sm:$0xff]
        %v440 = vld [vmem:[#allocation7 + $0x2e0] sm:$0xff]
        %v441 = vld [vmem:[#allocation7 + $0x2e8] sm:$0xff]
        %v442 = vld [vmem:[#allocation7 + $0x2f0] sm:$0xf]
        %v443 = vld [vmem:[#allocation7 + $0x2f4] sm:$0xff]
        %v444 = vld [vmem:[#allocation7 + $0x2fc] sm:$0xff]
        %v445 = vld [vmem:[#allocation7 + $0x304] sm:$0xff]
        %v446 = vld [vmem:[#allocation7 + $0x30c] sm:$0xff]
        %v447 = vld [vmem:[#allocation7 + $0x314] sm:$0xf]
        %v448 = vld [vmem:[#allocation7 + $0x318] sm:$0xff]
        %v449 = vld [vmem:[#allocation7 + $0x320] sm:$0xff]
        %v450 = vld [vmem:[#allocation7 + $0x328] sm:$0xff]
        %v451 = vld [vmem:[#allocation7 + $0x330] sm:$0xff]
        %v452 = vld [vmem:[#allocation7 + $0x338] sm:$0xf]
        %v453 = vld [vmem:[#allocation7 + $0x33c] sm:$0xff]
        %v454 = vld [vmem:[#allocation7 + $0x344] sm:$0xff]
        %v455 = vld [vmem:[#allocation7 + $0x34c] sm:$0xff]
        %v456 = vld [vmem:[#allocation7 + $0x354] sm:$0xff]
        %v457 = vld [vmem:[#allocation7 + $0x35c] sm:$0xf]
        %v458 = vld [vmem:[#allocation7 + $0x360] sm:$0xff]
        %v459 = vld [vmem:[#allocation7 + $0x368] sm:$0xff]
        %v460 = vld [vmem:[#allocation7 + $0x370] sm:$0xff]
        %v461 = vld [vmem:[#allocation7 + $0x378] sm:$0xff]
        %v462 = vld [vmem:[#allocation7 + $0x380] sm:$0xf]
        %v463 = vld [vmem:[#allocation7 + $0x384] sm:$0xff]
        %v464 = vld [vmem:[#allocation7 + $0x38c] sm:$0xff]
        %v465 = vld [vmem:[#allocation7 + $0x394] sm:$0xff]
        %v466 = vld [vmem:[#allocation7 + $0x39c] sm:$0xff]
        %v467 = vld [vmem:[#allocation7 + $0x3a4] sm:$0xf]
        %v468 = vld [vmem:[#allocation7 + $0x3a8] sm:$0xff]
        %v469 = vld [vmem:[#allocation7 + $0x3b0] sm:$0xff]
        %v470 = vld [vmem:[#allocation7 + $0x3b8] sm:$0xff]
        %v471 = vld [vmem:[#allocation7 + $0x3c0] sm:$0xff]
        %v472 = vld [vmem:[#allocation7 + $0x3c8] sm:$0xf]
        %v473 = vld [vmem:[#allocation7 + $0x3cc] sm:$0xff]
        %v474 = vld [vmem:[#allocation7 + $0x3d4] sm:$0xff]
        %v475 = vld [vmem:[#allocation7 + $0x3dc] sm:$0xff]
        %v476 = vld [vmem:[#allocation7 + $0x3e4] sm:$0xff]
        %v477 = vld [vmem:[#allocation7 + $0x3ec] sm:$0xf]
        %v478 = vld [vmem:[#allocation7 + $0x3f0] sm:$0xff]
        %v479 = vld [vmem:[#allocation7 + $0x3f8] sm:$0xff]
        %v480 = vld [vmem:[#allocation7 + $0x400] sm:$0xff]
        %v481 = vld [vmem:[#allocation7 + $0x408] sm:$0xff]
        %v482 = vld [vmem:[#allocation7 + $0x410] sm:$0xf]
        %v483 = vld [vmem:[#allocation7 + $0x414] sm:$0xff]
        %v484 = vld [vmem:[#allocation7 + $0x41c] sm:$0xff]
        %v485 = vld [vmem:[#allocation7 + $0x424] sm:$0xff]
        %v486 = vld [vmem:[#allocation7 + $0x42c] sm:$0xff]
        %v487 = vld [vmem:[#allocation7 + $0x434] sm:$0xf]
        %v488 = vld [vmem:[#allocation7 + $0x438] sm:$0xff]
        %v489 = vld [vmem:[#allocation7 + $0x440] sm:$0xff]
        %v490 = vld [vmem:[#allocation7 + $0x448] sm:$0xff]
        %v491 = vld [vmem:[#allocation7 + $0x450] sm:$0xff]
        %v492 = vld [vmem:[#allocation7 + $0x458] sm:$0xf]
        %v493 = vld [vmem:[#allocation7 + $0x45c] sm:$0xff]
        %v494 = vld [vmem:[#allocation7 + $0x464] sm:$0xff]
        %v495 = vld [vmem:[#allocation7 + $0x46c] sm:$0xff]
        %v496 = vld [vmem:[#allocation7 + $0x474] sm:$0xff]
        %v497 = vld [vmem:[#allocation7 + $0x47c] sm:$0xf]
        %v498 = vld [vmem:[#allocation7 + $0x480] sm:$0xff]
        %v499 = vld [vmem:[#allocation7 + $0x488] sm:$0xff]
        %v500 = vld [vmem:[#allocation7 + $0x490] sm:$0xff]
        %v501 = vld [vmem:[#allocation7 + $0x498] sm:$0xff]
        %v502 = vld [vmem:[#allocation7 + $0x4a0] sm:$0xf]
        %v503 = vld [vmem:[#allocation7 + $0x4a4] sm:$0xff]
        %v504 = vld [vmem:[#allocation7 + $0x4ac] sm:$0xff]
        %v505 = vld [vmem:[#allocation7 + $0x4b4] sm:$0xff]
        %v506 = vld [vmem:[#allocation7 + $0x4bc] sm:$0xff]
        %v507 = vld [vmem:[#allocation7 + $0x4c4] sm:$0xf]
        %v508 = vld [vmem:[#allocation7 + $0x4c8] sm:$0xff]
        %v509 = vld [vmem:[#allocation7 + $0x4d0] sm:$0xff]
        %v510 = vld [vmem:[#allocation7 + $0x4d8] sm:$0xff]
        %v511 = vld [vmem:[#allocation7 + $0x4e0] sm:$0xff]
        %v512 = vld [vmem:[#allocation7 + $0x4e8] sm:$0xf]
        %v513 = vld [vmem:[#allocation7 + $0x4ec] sm:$0xff]
        %v514 = vld [vmem:[#allocation7 + $0x4f4] sm:$0xff]
        %v515 = vld [vmem:[#allocation7 + $0x4fc] sm:$0xff]
        %v516 = vld [vmem:[#allocation7 + $0x504] sm:$0xff]
        %v517 = vld [vmem:[#allocation7 + $0x50c] sm:$0xf]
        %v518 = vld [vmem:[#allocation7 + $0x510] sm:$0xff]
        %v519 = vld [vmem:[#allocation7 + $0x518] sm:$0xff]
        %v520 = vld [vmem:[#allocation7 + $0x520] sm:$0xff]
        %v521 = vld [vmem:[#allocation7 + $0x528] sm:$0xff]
        %v522 = vld [vmem:[#allocation7 + $0x530] sm:$0xf]
        %v523 = vld [vmem:[#allocation7 + $0x534] sm:$0xff]
        %v524 = vld [vmem:[#allocation7 + $0x53c] sm:$0xff]
        %v525 = vld [vmem:[#allocation7 + $0x544] sm:$0xff]
        %v526 = vld [vmem:[#allocation7 + $0x54c] sm:$0xff]
        %v527 = vld [vmem:[#allocation7 + $0x554] sm:$0xf]
        %v528 = vld [vmem:[#allocation7 + $0x558] sm:$0xff]
        %v529 = vld [vmem:[#allocation7 + $0x560] sm:$0xff]
        %v530 = vld [vmem:[#allocation7 + $0x568] sm:$0xff]
        %v531 = vld [vmem:[#allocation7 + $0x570] sm:$0xff]
        %v532 = vld [vmem:[#allocation7 + $0x578] sm:$0xf]
        %v533 = vld [vmem:[#allocation7 + $0x57c] sm:$0xff]
        %v534 = vld [vmem:[#allocation7 + $0x584] sm:$0xff]
        %v535 = vld [vmem:[#allocation7 + $0x58c] sm:$0xff]
        %v536 = vld [vmem:[#allocation7 + $0x594] sm:$0xff]
        %v537 = vld [vmem:[#allocation7 + $0x59c] sm:$0xf]
        %v538 = vld [vmem:[#allocation7 + $0x5a0] sm:$0xff]
        %v539 = vld [vmem:[#allocation7 + $0x5a8] sm:$0xff]
        %v540 = vld [vmem:[#allocation7 + $0x5b0] sm:$0xff]
        %v541 = vld [vmem:[#allocation7 + $0x5b8] sm:$0xff]
        %v542 = vld [vmem:[#allocation7 + $0x5c0] sm:$0xf]
        %v543 = vld [vmem:[#allocation7 + $0x5c4] sm:$0xff]
        %v544 = vld [vmem:[#allocation7 + $0x5cc] sm:$0xff]
        %v545 = vld [vmem:[#allocation7 + $0x5d4] sm:$0xff]
        %v546 = vld [vmem:[#allocation7 + $0x5dc] sm:$0xff]
        %v547 = vld [vmem:[#allocation7 + $0x5e4] sm:$0xf]
        %v548 = vld [vmem:[#allocation7 + $0x5e8] sm:$0xff]
        %v549 = vld [vmem:[#allocation7 + $0x5f0] sm:$0xff]
        %v550 = vld [vmem:[#allocation7 + $0x5f8] sm:$0xff]
        %v551 = vld [vmem:[#allocation7 + $0x600] sm:$0xff]
        %v552 = vld [vmem:[#allocation7 + $0x608] sm:$0xf]
        %v553 = vld [vmem:[#allocation7 + $0x60c] sm:$0xff]
        %v554 = vld [vmem:[#allocation7 + $0x614] sm:$0xff]
        %v555 = vld [vmem:[#allocation7 + $0x61c] sm:$0xff]
        %v556 = vld [vmem:[#allocation7 + $0x624] sm:$0xff]
        %v557 = vld [vmem:[#allocation7 + $0x62c] sm:$0xf]
        %v558 = vld [vmem:[#allocation7 + $0x630] sm:$0xff]
        %v559 = vld [vmem:[#allocation7 + $0x638] sm:$0xff]
        %v560 = vld [vmem:[#allocation7 + $0x640] sm:$0xff]
        %v561 = vld [vmem:[#allocation7 + $0x648] sm:$0xff]
        %v562 = vld [vmem:[#allocation7 + $0x650] sm:$0xf]
        %v563 = vld [vmem:[#allocation7 + $0x654] sm:$0xff]
        %v564 = vld [vmem:[#allocation7 + $0x65c] sm:$0xff]
        %v565 = vld [vmem:[#allocation7 + $0x664] sm:$0xff]
        %v566 = vld [vmem:[#allocation7 + $0x66c] sm:$0xff]
        %v567 = vld [vmem:[#allocation7 + $0x674] sm:$0xf]
        %v568 = vld [vmem:[#allocation7 + $0x678] sm:$0xff]
        %v569 = vld [vmem:[#allocation7 + $0x680] sm:$0xff]
        %v570 = vld [vmem:[#allocation7 + $0x688] sm:$0xff]
        %v571 = vld [vmem:[#allocation7 + $0x690] sm:$0xff]
        %v572 = vld [vmem:[#allocation7 + $0x698] sm:$0xf]
        %v573 = vld [vmem:[#allocation7 + $0x69c] sm:$0xff]
        %v574 = vld [vmem:[#allocation7 + $0x6a4] sm:$0xff]
        %v575 = vld [vmem:[#allocation7 + $0x6ac] sm:$0xff]
        %v576 = vld [vmem:[#allocation7 + $0x6b4] sm:$0xff]
        %v577 = vld [vmem:[#allocation7 + $0x6bc] sm:$0xf]
        %v818 = vunpack.c.l.b16 %v338
        %v819 = vunpack.c.h.b16 %v338
        %v820 = vunpack.c.l.b16 %v339
        %v821 = vunpack.c.h.b16 %v339
        %v822 = vunpack.c.l.b16 %v340
        %v823 = vunpack.c.h.b16 %v340
        %v824 = vunpack.c.l.b16 %v341
        %v825 = vunpack.c.h.b16 %v341
        %v826 = vunpack.c.l.b16 %v342
        %v827 = vunpack.c.l.b16 %v343
        %v828 = vunpack.c.h.b16 %v343
        %v829 = vunpack.c.l.b16 %v344
        %v830 = vunpack.c.h.b16 %v344
        %v831 = vunpack.c.l.b16 %v345
        %v832 = vunpack.c.h.b16 %v345
        %v833 = vunpack.c.l.b16 %v346
        %v834 = vunpack.c.h.b16 %v346
        %v835 = vunpack.c.l.b16 %v347
        %v836 = vunpack.c.l.b16 %v348
        %v837 = vunpack.c.h.b16 %v348
        %v838 = vunpack.c.l.b16 %v349
        %v839 = vunpack.c.h.b16 %v349
        %v840 = vunpack.c.l.b16 %v350
        %v841 = vunpack.c.h.b16 %v350
        %v842 = vunpack.c.l.b16 %v351
        %v843 = vunpack.c.h.b16 %v351
        %v844 = vunpack.c.l.b16 %v352
        %v845 = vunpack.c.l.b16 %v353
        %v846 = vunpack.c.h.b16 %v353
        %v847 = vunpack.c.l.b16 %v354
        %v848 = vunpack.c.h.b16 %v354
        %v849 = vunpack.c.l.b16 %v355
        %v850 = vunpack.c.h.b16 %v355
        %v851 = vunpack.c.l.b16 %v356
        %v852 = vunpack.c.h.b16 %v356
        %v853 = vunpack.c.l.b16 %v357
        %v854 = vunpack.c.l.b16 %v358
        %v855 = vunpack.c.h.b16 %v358
        %v856 = vunpack.c.l.b16 %v359
        %v857 = vunpack.c.h.b16 %v359
        %v858 = vunpack.c.l.b16 %v360
        %v859 = vunpack.c.h.b16 %v360
        %v860 = vunpack.c.l.b16 %v361
        %v861 = vunpack.c.h.b16 %v361
        %v862 = vunpack.c.l.b16 %v362
        %v863 = vunpack.c.l.b16 %v363
        %v864 = vunpack.c.h.b16 %v363
        %v865 = vunpack.c.l.b16 %v364
        %v866 = vunpack.c.h.b16 %v364
        %v867 = vunpack.c.l.b16 %v365
        %v868 = vunpack.c.h.b16 %v365
        %v869 = vunpack.c.l.b16 %v366
        %v870 = vunpack.c.h.b16 %v366
        %v871 = vunpack.c.l.b16 %v367
        %v872 = vunpack.c.l.b16 %v368
        %v873 = vunpack.c.h.b16 %v368
        %v874 = vunpack.c.l.b16 %v369
        %v875 = vunpack.c.h.b16 %v369
        %v876 = vunpack.c.l.b16 %v370
        %v877 = vunpack.c.h.b16 %v370
        %v878 = vunpack.c.l.b16 %v371
        %v879 = vunpack.c.h.b16 %v371
        %v880 = vunpack.c.l.b16 %v372
        %v881 = vunpack.c.l.b16 %v373
        %v882 = vunpack.c.h.b16 %v373
        %v883 = vunpack.c.l.b16 %v374
        %v884 = vunpack.c.h.b16 %v374
        %v885 = vunpack.c.l.b16 %v375
        %v886 = vunpack.c.h.b16 %v375
        %v887 = vunpack.c.l.b16 %v376
        %v888 = vunpack.c.h.b16 %v376
        %v889 = vunpack.c.l.b16 %v377
        %v890 = vunpack.c.l.b16 %v378
        %v891 = vunpack.c.h.b16 %v378
        %v892 = vunpack.c.l.b16 %v379
        %v893 = vunpack.c.h.b16 %v379
        %v894 = vunpack.c.l.b16 %v380
        %v895 = vunpack.c.h.b16 %v380
        %v896 = vunpack.c.l.b16 %v381
        %v897 = vunpack.c.h.b16 %v381
        %v898 = vunpack.c.l.b16 %v382
        %v899 = vunpack.c.l.b16 %v383
        %v900 = vunpack.c.h.b16 %v383
        %v901 = vunpack.c.l.b16 %v384
        %v902 = vunpack.c.h.b16 %v384
        %v903 = vunpack.c.l.b16 %v385
        %v904 = vunpack.c.h.b16 %v385
        %v905 = vunpack.c.l.b16 %v386
        %v906 = vunpack.c.h.b16 %v386
        %v907 = vunpack.c.l.b16 %v387
        %v908 = vunpack.c.l.b16 %v388
        %v909 = vunpack.c.h.b16 %v388
        %v910 = vunpack.c.l.b16 %v389
        %v911 = vunpack.c.h.b16 %v389
        %v912 = vunpack.c.l.b16 %v390
        %v913 = vunpack.c.h.b16 %v390
        %v914 = vunpack.c.l.b16 %v391
        %v915 = vunpack.c.h.b16 %v391
        %v916 = vunpack.c.l.b16 %v392
        %v917 = vunpack.c.l.b16 %v393
        %v918 = vunpack.c.h.b16 %v393
        %v919 = vunpack.c.l.b16 %v394
        %v920 = vunpack.c.h.b16 %v394
        %v921 = vunpack.c.l.b16 %v395
        %v922 = vunpack.c.h.b16 %v395
        %v923 = vunpack.c.l.b16 %v396
        %v924 = vunpack.c.h.b16 %v396
        %v925 = vunpack.c.l.b16 %v397
        %v926 = vunpack.c.l.b16 %v398
        %v927 = vunpack.c.h.b16 %v398
        %v928 = vunpack.c.l.b16 %v399
        %v929 = vunpack.c.h.b16 %v399
        %v930 = vunpack.c.l.b16 %v400
        %v931 = vunpack.c.h.b16 %v400
        %v932 = vunpack.c.l.b16 %v401
        %v933 = vunpack.c.h.b16 %v401
        %v934 = vunpack.c.l.b16 %v402
        %v935 = vunpack.c.l.b16 %v403
        %v936 = vunpack.c.h.b16 %v403
        %v937 = vunpack.c.l.b16 %v404
        %v938 = vunpack.c.h.b16 %v404
        %v939 = vunpack.c.l.b16 %v405
        %v940 = vunpack.c.h.b16 %v405
        %v941 = vunpack.c.l.b16 %v406
        %v942 = vunpack.c.h.b16 %v406
        %v943 = vunpack.c.l.b16 %v407
        %v944 = vunpack.c.l.b16 %v408
        %v945 = vunpack.c.h.b16 %v408
        %v946 = vunpack.c.l.b16 %v409
        %v947 = vunpack.c.h.b16 %v409
        %v948 = vunpack.c.l.b16 %v410
        %v949 = vunpack.c.h.b16 %v410
        %v950 = vunpack.c.l.b16 %v411
        %v951 = vunpack.c.h.b16 %v411
        %v952 = vunpack.c.l.b16 %v412
        %v953 = vunpack.c.l.b16 %v413
        %v954 = vunpack.c.h.b16 %v413
        %v955 = vunpack.c.l.b16 %v414
        %v956 = vunpack.c.h.b16 %v414
        %v957 = vunpack.c.l.b16 %v415
        %v958 = vunpack.c.h.b16 %v415
        %v959 = vunpack.c.l.b16 %v416
        %v960 = vunpack.c.h.b16 %v416
        %v961 = vunpack.c.l.b16 %v417
        %v962 = vunpack.c.l.b16 %v418
        %v963 = vunpack.c.h.b16 %v418
        %v964 = vunpack.c.l.b16 %v419
        %v965 = vunpack.c.h.b16 %v419
        %v966 = vunpack.c.l.b16 %v420
        %v967 = vunpack.c.h.b16 %v420
        %v968 = vunpack.c.l.b16 %v421
        %v969 = vunpack.c.h.b16 %v421
        %v970 = vunpack.c.l.b16 %v422
        %v971 = vunpack.c.l.b16 %v423
        %v972 = vunpack.c.h.b16 %v423
        %v973 = vunpack.c.l.b16 %v424
        %v974 = vunpack.c.h.b16 %v424
        %v975 = vunpack.c.l.b16 %v425
        %v976 = vunpack.c.h.b16 %v425
        %v977 = vunpack.c.l.b16 %v426
        %v978 = vunpack.c.h.b16 %v426
        %v979 = vunpack.c.l.b16 %v427
        %v980 = vunpack.c.l.b16 %v428
        %v981 = vunpack.c.h.b16 %v428
        %v982 = vunpack.c.l.b16 %v429
        %v983 = vunpack.c.h.b16 %v429
        %v984 = vunpack.c.l.b16 %v430
        %v985 = vunpack.c.h.b16 %v430
        %v986 = vunpack.c.l.b16 %v431
        %v987 = vunpack.c.h.b16 %v431
        %v988 = vunpack.c.l.b16 %v432
        %v989 = vunpack.c.l.b16 %v433
        %v990 = vunpack.c.h.b16 %v433
        %v991 = vunpack.c.l.b16 %v434
        %v992 = vunpack.c.h.b16 %v434
        %v993 = vunpack.c.l.b16 %v435
        %v994 = vunpack.c.h.b16 %v435
        %v995 = vunpack.c.l.b16 %v436
        %v996 = vunpack.c.h.b16 %v436
        %v997 = vunpack.c.l.b16 %v437
        %v998 = vunpack.c.l.b16 %v438
        %v999 = vunpack.c.h.b16 %v438
        %v1000 = vunpack.c.l.b16 %v439
        %v1001 = vunpack.c.h.b16 %v439
        %v1002 = vunpack.c.l.b16 %v440
        %v1003 = vunpack.c.h.b16 %v440
        %v1004 = vunpack.c.l.b16 %v441
        %v1005 = vunpack.c.h.b16 %v441
        %v1006 = vunpack.c.l.b16 %v442
        %v1007 = vunpack.c.l.b16 %v443
        %v1008 = vunpack.c.h.b16 %v443
        %v1009 = vunpack.c.l.b16 %v444
        %v1010 = vunpack.c.h.b16 %v444
        %v1011 = vunpack.c.l.b16 %v445
        %v1012 = vunpack.c.h.b16 %v445
        %v1013 = vunpack.c.l.b16 %v446
        %v1014 = vunpack.c.h.b16 %v446
        %v1015 = vunpack.c.l.b16 %v447
        %v1016 = vunpack.c.l.b16 %v448
        %v1017 = vunpack.c.h.b16 %v448
        %v1018 = vunpack.c.l.b16 %v449
        %v1019 = vunpack.c.h.b16 %v449
        %v1020 = vunpack.c.l.b16 %v450
        %v1021 = vunpack.c.h.b16 %v450
        %v1022 = vunpack.c.l.b16 %v451
        %v1023 = vunpack.c.h.b16 %v451
        %v1024 = vunpack.c.l.b16 %v452
        %v1025 = vunpack.c.l.b16 %v453
        %v1026 = vunpack.c.h.b16 %v453
        %v1027 = vunpack.c.l.b16 %v454
        %v1028 = vunpack.c.h.b16 %v454
        %v1029 = vunpack.c.l.b16 %v455
        %v1030 = vunpack.c.h.b16 %v455
        %v1031 = vunpack.c.l.b16 %v456
        %v1032 = vunpack.c.h.b16 %v456
        %v1033 = vunpack.c.l.b16 %v457
        %v1034 = vunpack.c.l.b16 %v458
        %v1035 = vunpack.c.h.b16 %v458
        %v1036 = vunpack.c.l.b16 %v459
        %v1037 = vunpack.c.h.b16 %v459
        %v1038 = vunpack.c.l.b16 %v460
        %v1039 = vunpack.c.h.b16 %v460
        %v1040 = vunpack.c.l.b16 %v461
        %v1041 = vunpack.c.h.b16 %v461
        %v1042 = vunpack.c.l.b16 %v462
        %v1043 = vunpack.c.l.b16 %v463
        %v1044 = vunpack.c.h.b16 %v463
        %v1045 = vunpack.c.l.b16 %v464
        %v1046 = vunpack.c.h.b16 %v464
        %v1047 = vunpack.c.l.b16 %v465
        %v1048 = vunpack.c.h.b16 %v465
        %v1049 = vunpack.c.l.b16 %v466
        %v1050 = vunpack.c.h.b16 %v466
        %v1051 = vunpack.c.l.b16 %v467
        %v1052 = vunpack.c.l.b16 %v468
        %v1053 = vunpack.c.h.b16 %v468
        %v1054 = vunpack.c.l.b16 %v469
        %v1055 = vunpack.c.h.b16 %v469
        %v1056 = vunpack.c.l.b16 %v470
        %v1057 = vunpack.c.h.b16 %v470
        %v1058 = vunpack.c.l.b16 %v471
        %v1059 = vunpack.c.h.b16 %v471
        %v1060 = vunpack.c.l.b16 %v472
        %v1061 = vunpack.c.l.b16 %v473
        %v1062 = vunpack.c.h.b16 %v473
        %v1063 = vunpack.c.l.b16 %v474
        %v1064 = vunpack.c.h.b16 %v474
        %v1065 = vunpack.c.l.b16 %v475
        %v1066 = vunpack.c.h.b16 %v475
        %v1067 = vunpack.c.l.b16 %v476
        %v1068 = vunpack.c.h.b16 %v476
        %v1069 = vunpack.c.l.b16 %v477
        %v1070 = vunpack.c.l.b16 %v478
        %v1071 = vunpack.c.h.b16 %v478
        %v1072 = vunpack.c.l.b16 %v479
        %v1073 = vunpack.c.h.b16 %v479
        %v1074 = vunpack.c.l.b16 %v480
        %v1075 = vunpack.c.h.b16 %v480
        %v1076 = vunpack.c.l.b16 %v481
        %v1077 = vunpack.c.h.b16 %v481
        %v1078 = vunpack.c.l.b16 %v482
        %v1079 = vunpack.c.l.b16 %v483
        %v1080 = vunpack.c.h.b16 %v483
        %v1081 = vunpack.c.l.b16 %v484
        %v1082 = vunpack.c.h.b16 %v484
        %v1083 = vunpack.c.l.b16 %v485
        %v1084 = vunpack.c.h.b16 %v485
        %v1085 = vunpack.c.l.b16 %v486
        %v1086 = vunpack.c.h.b16 %v486
        %v1087 = vunpack.c.l.b16 %v487
        %v1088 = vunpack.c.l.b16 %v488
        %v1089 = vunpack.c.h.b16 %v488
        %v1090 = vunpack.c.l.b16 %v489
        %v1091 = vunpack.c.h.b16 %v489
        %v1092 = vunpack.c.l.b16 %v490
        %v1093 = vunpack.c.h.b16 %v490
        %v1094 = vunpack.c.l.b16 %v491
        %v1095 = vunpack.c.h.b16 %v491
        %v1096 = vunpack.c.l.b16 %v492
        %v1097 = vunpack.c.l.b16 %v493
        %v1098 = vunpack.c.h.b16 %v493
        %v1099 = vunpack.c.l.b16 %v494
        %v1100 = vunpack.c.h.b16 %v494
        %v1101 = vunpack.c.l.b16 %v495
        %v1102 = vunpack.c.h.b16 %v495
        %v1103 = vunpack.c.l.b16 %v496
        %v1104 = vunpack.c.h.b16 %v496
        %v1105 = vunpack.c.l.b16 %v497
        %v1106 = vunpack.c.l.b16 %v498
        %v1107 = vunpack.c.h.b16 %v498
        %v1108 = vunpack.c.l.b16 %v499
        %v1109 = vunpack.c.h.b16 %v499
        %v1110 = vunpack.c.l.b16 %v500
        %v1111 = vunpack.c.h.b16 %v500
        %v1112 = vunpack.c.l.b16 %v501
        %v1113 = vunpack.c.h.b16 %v501
        %v1114 = vunpack.c.l.b16 %v502
        %v1115 = vunpack.c.l.b16 %v503
        %v1116 = vunpack.c.h.b16 %v503
        %v1117 = vunpack.c.l.b16 %v504
        %v1118 = vunpack.c.h.b16 %v504
        %v1119 = vunpack.c.l.b16 %v505
        %v1120 = vunpack.c.h.b16 %v505
        %v1121 = vunpack.c.l.b16 %v506
        %v1122 = vunpack.c.h.b16 %v506
        %v1123 = vunpack.c.l.b16 %v507
        %v1124 = vunpack.c.l.b16 %v508
        %v1125 = vunpack.c.h.b16 %v508
        %v1126 = vunpack.c.l.b16 %v509
        %v1127 = vunpack.c.h.b16 %v509
        %v1128 = vunpack.c.l.b16 %v510
        %v1129 = vunpack.c.h.b16 %v510
        %v1130 = vunpack.c.l.b16 %v511
        %v1131 = vunpack.c.h.b16 %v511
        %v1132 = vunpack.c.l.b16 %v512
        %v1133 = vunpack.c.l.b16 %v513
        %v1134 = vunpack.c.h.b16 %v513
        %v1135 = vunpack.c.l.b16 %v514
        %v1136 = vunpack.c.h.b16 %v514
        %v1137 = vunpack.c.l.b16 %v515
        %v1138 = vunpack.c.h.b16 %v515
        %v1139 = vunpack.c.l.b16 %v516
        %v1140 = vunpack.c.h.b16 %v516
        %v1141 = vunpack.c.l.b16 %v517
        %v1142 = vunpack.c.l.b16 %v518
        %v1143 = vunpack.c.h.b16 %v518
        %v1144 = vunpack.c.l.b16 %v519
        %v1145 = vunpack.c.h.b16 %v519
        %v1146 = vunpack.c.l.b16 %v520
        %v1147 = vunpack.c.h.b16 %v520
        %v1148 = vunpack.c.l.b16 %v521
        %v1149 = vunpack.c.h.b16 %v521
        %v1150 = vunpack.c.l.b16 %v522
        %v1151 = vunpack.c.l.b16 %v523
        %v1152 = vunpack.c.h.b16 %v523
        %v1153 = vunpack.c.l.b16 %v524
        %v1154 = vunpack.c.h.b16 %v524
        %v1155 = vunpack.c.l.b16 %v525
        %v1156 = vunpack.c.h.b16 %v525
        %v1157 = vunpack.c.l.b16 %v526
        %v1158 = vunpack.c.h.b16 %v526
        %v1159 = vunpack.c.l.b16 %v527
        %v1160 = vunpack.c.l.b16 %v528
        %v1161 = vunpack.c.h.b16 %v528
        %v1162 = vunpack.c.l.b16 %v529
        %v1163 = vunpack.c.h.b16 %v529
        %v1164 = vunpack.c.l.b16 %v530
        %v1165 = vunpack.c.h.b16 %v530
        %v1166 = vunpack.c.l.b16 %v531
        %v1167 = vunpack.c.h.b16 %v531
        %v1168 = vunpack.c.l.b16 %v532
        %v1169 = vunpack.c.l.b16 %v533
        %v1170 = vunpack.c.h.b16 %v533
        %v1171 = vunpack.c.l.b16 %v534
        %v1172 = vunpack.c.h.b16 %v534
        %v1173 = vunpack.c.l.b16 %v535
        %v1174 = vunpack.c.h.b16 %v535
        %v1175 = vunpack.c.l.b16 %v536
        %v1176 = vunpack.c.h.b16 %v536
        %v1177 = vunpack.c.l.b16 %v537
        %v1178 = vunpack.c.l.b16 %v538
        %v1179 = vunpack.c.h.b16 %v538
        %v1180 = vunpack.c.l.b16 %v539
        %v1181 = vunpack.c.h.b16 %v539
        %v1182 = vunpack.c.l.b16 %v540
        %v1183 = vunpack.c.h.b16 %v540
        %v1184 = vunpack.c.l.b16 %v541
        %v1185 = vunpack.c.h.b16 %v541
        %v1186 = vunpack.c.l.b16 %v542
        %v1187 = vunpack.c.l.b16 %v543
        %v1188 = vunpack.c.h.b16 %v543
        %v1189 = vunpack.c.l.b16 %v544
        %v1190 = vunpack.c.h.b16 %v544
        %v1191 = vunpack.c.l.b16 %v545
        %v1192 = vunpack.c.h.b16 %v545
        %v1193 = vunpack.c.l.b16 %v546
        %v1194 = vunpack.c.h.b16 %v546
        %v1195 = vunpack.c.l.b16 %v547
        %v1196 = vunpack.c.l.b16 %v548
        %v1197 = vunpack.c.h.b16 %v548
        %v1198 = vunpack.c.l.b16 %v549
        %v1199 = vunpack.c.h.b16 %v549
        %v1200 = vunpack.c.l.b16 %v550
        %v1201 = vunpack.c.h.b16 %v550
        %v1202 = vunpack.c.l.b16 %v551
        %v1203 = vunpack.c.h.b16 %v551
        %v1204 = vunpack.c.l.b16 %v552
        %v1205 = vunpack.c.l.b16 %v553
        %v1206 = vunpack.c.h.b16 %v553
        %v1207 = vunpack.c.l.b16 %v554
        %v1208 = vunpack.c.h.b16 %v554
        %v1209 = vunpack.c.l.b16 %v555
        %v1210 = vunpack.c.h.b16 %v555
        %v1211 = vunpack.c.l.b16 %v556
        %v1212 = vunpack.c.h.b16 %v556
        %v1213 = vunpack.c.l.b16 %v557
        %v1214 = vunpack.c.l.b16 %v558
        %v1215 = vunpack.c.h.b16 %v558
        %v1216 = vunpack.c.l.b16 %v559
        %v1217 = vunpack.c.h.b16 %v559
        %v1218 = vunpack.c.l.b16 %v560
        %v1219 = vunpack.c.h.b16 %v560
        %v1220 = vunpack.c.l.b16 %v561
        %v1221 = vunpack.c.h.b16 %v561
        %v1222 = vunpack.c.l.b16 %v562
        %v1223 = vunpack.c.l.b16 %v563
        %v1224 = vunpack.c.h.b16 %v563
        %v1225 = vunpack.c.l.b16 %v564
        %v1226 = vunpack.c.h.b16 %v564
        %v1227 = vunpack.c.l.b16 %v565
        %v1228 = vunpack.c.h.b16 %v565
        %v1229 = vunpack.c.l.b16 %v566
        %v1230 = vunpack.c.h.b16 %v566
        %v1231 = vunpack.c.l.b16 %v567
        %v1232 = vunpack.c.l.b16 %v568
        %v1233 = vunpack.c.h.b16 %v568
        %v1234 = vunpack.c.l.b16 %v569
        %v1235 = vunpack.c.h.b16 %v569
        %v1236 = vunpack.c.l.b16 %v570
        %v1237 = vunpack.c.h.b16 %v570
        %v1238 = vunpack.c.l.b16 %v571
        %v1239 = vunpack.c.h.b16 %v571
        %v1240 = vunpack.c.l.b16 %v572
        %v1241 = vunpack.c.l.b16 %v573
        %v1242 = vunpack.c.h.b16 %v573
        %v1243 = vunpack.c.l.b16 %v574
        %v1244 = vunpack.c.h.b16 %v574
        %v1245 = vunpack.c.l.b16 %v575
        %v1246 = vunpack.c.h.b16 %v575
        %v1247 = vunpack.c.l.b16 %v576
        %v1248 = vunpack.c.h.b16 %v576
        %v1249 = vunpack.c.l.b16 %v577
        %v1250 = vpack.c.b16 %v827, %v818
        %v1251 = vpack.c.b16 %v828, %v819
        %v1252 = vpack.c.b16 %v829, %v820
        %v1253 = vpack.c.b16 %v830, %v821
        %v1254 = vpack.c.b16 %v831, %v822
        %v1255 = vpack.c.b16 %v832, %v823
        %v1256 = vpack.c.b16 %v833, %v824
        %v1257 = vpack.c.b16 %v834, %v825
        %v1258 = vpack.c.b16 %v835, %v826
        %v1259 = vpack.c.b16 %v845, %v836
        %v1260 = vpack.c.b16 %v846, %v837
        %v1261 = vpack.c.b16 %v847, %v838
        %v1262 = vpack.c.b16 %v848, %v839
        %v1263 = vpack.c.b16 %v849, %v840
        %v1264 = vpack.c.b16 %v850, %v841
        %v1265 = vpack.c.b16 %v851, %v842
        %v1266 = vpack.c.b16 %v852, %v843
        %v1267 = vpack.c.b16 %v853, %v844
        %v1268 = vpack.c.b16 %v863, %v854
        %v1269 = vpack.c.b16 %v864, %v855
        %v1270 = vpack.c.b16 %v865, %v856
        %v1271 = vpack.c.b16 %v866, %v857
        %v1272 = vpack.c.b16 %v867, %v858
        %v1273 = vpack.c.b16 %v868, %v859
        %v1274 = vpack.c.b16 %v869, %v860
        %v1275 = vpack.c.b16 %v870, %v861
        %v1276 = vpack.c.b16 %v871, %v862
        %v1277 = vpack.c.b16 %v881, %v872
        %v1278 = vpack.c.b16 %v882, %v873
        %v1279 = vpack.c.b16 %v883, %v874
        %v1280 = vpack.c.b16 %v884, %v875
        %v1281 = vpack.c.b16 %v885, %v876
        %v1282 = vpack.c.b16 %v886, %v877
        %v1283 = vpack.c.b16 %v887, %v878
        %v1284 = vpack.c.b16 %v888, %v879
        %v1285 = vpack.c.b16 %v889, %v880
        %v1286 = vpack.c.b16 %v899, %v890
        %v1287 = vpack.c.b16 %v900, %v891
        %v1288 = vpack.c.b16 %v901, %v892
        %v1289 = vpack.c.b16 %v902, %v893
        %v1290 = vpack.c.b16 %v903, %v894
        %v1291 = vpack.c.b16 %v904, %v895
        %v1292 = vpack.c.b16 %v905, %v896
        %v1293 = vpack.c.b16 %v906, %v897
        %v1294 = vpack.c.b16 %v907, %v898
        %v1295 = vpack.c.b16 %v917, %v908
        %v1296 = vpack.c.b16 %v918, %v909
        %v1297 = vpack.c.b16 %v919, %v910
        %v1298 = vpack.c.b16 %v920, %v911
        %v1299 = vpack.c.b16 %v921, %v912
        %v1300 = vpack.c.b16 %v922, %v913
        %v1301 = vpack.c.b16 %v923, %v914
        %v1302 = vpack.c.b16 %v924, %v915
        %v1303 = vpack.c.b16 %v925, %v916
        %v1304 = vpack.c.b16 %v935, %v926
        %v1305 = vpack.c.b16 %v936, %v927
        %v1306 = vpack.c.b16 %v937, %v928
        %v1307 = vpack.c.b16 %v938, %v929
        %v1308 = vpack.c.b16 %v939, %v930
        %v1309 = vpack.c.b16 %v940, %v931
        %v1310 = vpack.c.b16 %v941, %v932
        %v1311 = vpack.c.b16 %v942, %v933
        %v1312 = vpack.c.b16 %v943, %v934
        %v1313 = vpack.c.b16 %v953, %v944
        %v1314 = vpack.c.b16 %v954, %v945
        %v1315 = vpack.c.b16 %v955, %v946
        %v1316 = vpack.c.b16 %v956, %v947
        %v1317 = vpack.c.b16 %v957, %v948
        %v1318 = vpack.c.b16 %v958, %v949
        %v1319 = vpack.c.b16 %v959, %v950
        %v1320 = vpack.c.b16 %v960, %v951
        %v1321 = vpack.c.b16 %v961, %v952
        %v1322 = vpack.c.b16 %v971, %v962
        %v1323 = vpack.c.b16 %v972, %v963
        %v1324 = vpack.c.b16 %v973, %v964
        %v1325 = vpack.c.b16 %v974, %v965
        %v1326 = vpack.c.b16 %v975, %v966
        %v1327 = vpack.c.b16 %v976, %v967
        %v1328 = vpack.c.b16 %v977, %v968
        %v1329 = vpack.c.b16 %v978, %v969
        %v1330 = vpack.c.b16 %v979, %v970
        %v1331 = vpack.c.b16 %v989, %v980
        %v1332 = vpack.c.b16 %v990, %v981
        %v1333 = vpack.c.b16 %v991, %v982
        %v1334 = vpack.c.b16 %v992, %v983
        %v1335 = vpack.c.b16 %v993, %v984
        %v1336 = vpack.c.b16 %v994, %v985
        %v1337 = vpack.c.b16 %v995, %v986
        %v1338 = vpack.c.b16 %v996, %v987
        %v1339 = vpack.c.b16 %v997, %v988
        %v1340 = vpack.c.b16 %v1007, %v998
        %v1341 = vpack.c.b16 %v1008, %v999
        %v1342 = vpack.c.b16 %v1009, %v1000
        %v1343 = vpack.c.b16 %v1010, %v1001
        %v1344 = vpack.c.b16 %v1011, %v1002
        %v1345 = vpack.c.b16 %v1012, %v1003
        %v1346 = vpack.c.b16 %v1013, %v1004
        %v1347 = vpack.c.b16 %v1014, %v1005
        %v1348 = vpack.c.b16 %v1015, %v1006
        %v1349 = vpack.c.b16 %v1025, %v1016
        %v1350 = vpack.c.b16 %v1026, %v1017
        %v1351 = vpack.c.b16 %v1027, %v1018
        %v1352 = vpack.c.b16 %v1028, %v1019
        %v1353 = vpack.c.b16 %v1029, %v1020
        %v1354 = vpack.c.b16 %v1030, %v1021
        %v1355 = vpack.c.b16 %v1031, %v1022
        %v1356 = vpack.c.b16 %v1032, %v1023
        %v1357 = vpack.c.b16 %v1033, %v1024
        %v1358 = vpack.c.b16 %v1043, %v1034
        %v1359 = vpack.c.b16 %v1044, %v1035
        %v1360 = vpack.c.b16 %v1045, %v1036
        %v1361 = vpack.c.b16 %v1046, %v1037
        %v1362 = vpack.c.b16 %v1047, %v1038
        %v1363 = vpack.c.b16 %v1048, %v1039
        %v1364 = vpack.c.b16 %v1049, %v1040
        %v1365 = vpack.c.b16 %v1050, %v1041
        %v1366 = vpack.c.b16 %v1051, %v1042
        %v1367 = vpack.c.b16 %v1061, %v1052
        %v1368 = vpack.c.b16 %v1062, %v1053
        %v1369 = vpack.c.b16 %v1063, %v1054
        %v1370 = vpack.c.b16 %v1064, %v1055
        %v1371 = vpack.c.b16 %v1065, %v1056
        %v1372 = vpack.c.b16 %v1066, %v1057
        %v1373 = vpack.c.b16 %v1067, %v1058
        %v1374 = vpack.c.b16 %v1068, %v1059
        %v1375 = vpack.c.b16 %v1069, %v1060
        %v1376 = vpack.c.b16 %v1079, %v1070
        %v1377 = vpack.c.b16 %v1080, %v1071
        %v1378 = vpack.c.b16 %v1081, %v1072
        %v1379 = vpack.c.b16 %v1082, %v1073
        %v1380 = vpack.c.b16 %v1083, %v1074
        %v1381 = vpack.c.b16 %v1084, %v1075
        %v1382 = vpack.c.b16 %v1085, %v1076
        %v1383 = vpack.c.b16 %v1086, %v1077
        %v1384 = vpack.c.b16 %v1087, %v1078
        %v1385 = vpack.c.b16 %v1097, %v1088
        %v1386 = vpack.c.b16 %v1098, %v1089
        %v1387 = vpack.c.b16 %v1099, %v1090
        %v1388 = vpack.c.b16 %v1100, %v1091
        %v1389 = vpack.c.b16 %v1101, %v1092
        %v1390 = vpack.c.b16 %v1102, %v1093
        %v1391 = vpack.c.b16 %v1103, %v1094
        %v1392 = vpack.c.b16 %v1104, %v1095
        %v1393 = vpack.c.b16 %v1105, %v1096
        %v1394 = vpack.c.b16 %v1115, %v1106
        %v1395 = vpack.c.b16 %v1116, %v1107
        %v1396 = vpack.c.b16 %v1117, %v1108
        %v1397 = vpack.c.b16 %v1118, %v1109
        %v1398 = vpack.c.b16 %v1119, %v1110
        %v1399 = vpack.c.b16 %v1120, %v1111
        %v1400 = vpack.c.b16 %v1121, %v1112
        %v1401 = vpack.c.b16 %v1122, %v1113
        %v1402 = vpack.c.b16 %v1123, %v1114
        %v1403 = vpack.c.b16 %v1133, %v1124
        %v1404 = vpack.c.b16 %v1134, %v1125
        %v1405 = vpack.c.b16 %v1135, %v1126
        %v1406 = vpack.c.b16 %v1136, %v1127
        %v1407 = vpack.c.b16 %v1137, %v1128
        %v1408 = vpack.c.b16 %v1138, %v1129
        %v1409 = vpack.c.b16 %v1139, %v1130
        %v1410 = vpack.c.b16 %v1140, %v1131
        %v1411 = vpack.c.b16 %v1141, %v1132
        %v1412 = vpack.c.b16 %v1151, %v1142
        %v1413 = vpack.c.b16 %v1152, %v1143
        %v1414 = vpack.c.b16 %v1153, %v1144
        %v1415 = vpack.c.b16 %v1154, %v1145
        %v1416 = vpack.c.b16 %v1155, %v1146
        %v1417 = vpack.c.b16 %v1156, %v1147
        %v1418 = vpack.c.b16 %v1157, %v1148
        %v1419 = vpack.c.b16 %v1158, %v1149
        %v1420 = vpack.c.b16 %v1159, %v1150
        %v1421 = vpack.c.b16 %v1169, %v1160
        %v1422 = vpack.c.b16 %v1170, %v1161
        %v1423 = vpack.c.b16 %v1171, %v1162
        %v1424 = vpack.c.b16 %v1172, %v1163
        %v1425 = vpack.c.b16 %v1173, %v1164
        %v1426 = vpack.c.b16 %v1174, %v1165
        %v1427 = vpack.c.b16 %v1175, %v1166
        %v1428 = vpack.c.b16 %v1176, %v1167
        %v1429 = vpack.c.b16 %v1177, %v1168
        %v1430 = vpack.c.b16 %v1187, %v1178
        %v1431 = vpack.c.b16 %v1188, %v1179
        %v1432 = vpack.c.b16 %v1189, %v1180
        %v1433 = vpack.c.b16 %v1190, %v1181
        %v1434 = vpack.c.b16 %v1191, %v1182
        %v1435 = vpack.c.b16 %v1192, %v1183
        %v1436 = vpack.c.b16 %v1193, %v1184
        %v1437 = vpack.c.b16 %v1194, %v1185
        %v1438 = vpack.c.b16 %v1195, %v1186
        %v1439 = vpack.c.b16 %v1205, %v1196
        %v1440 = vpack.c.b16 %v1206, %v1197
        %v1441 = vpack.c.b16 %v1207, %v1198
        %v1442 = vpack.c.b16 %v1208, %v1199
        %v1443 = vpack.c.b16 %v1209, %v1200
        %v1444 = vpack.c.b16 %v1210, %v1201
        %v1445 = vpack.c.b16 %v1211, %v1202
        %v1446 = vpack.c.b16 %v1212, %v1203
        %v1447 = vpack.c.b16 %v1213, %v1204
        %v1448 = vpack.c.b16 %v1223, %v1214
        %v1449 = vpack.c.b16 %v1224, %v1215
        %v1450 = vpack.c.b16 %v1225, %v1216
        %v1451 = vpack.c.b16 %v1226, %v1217
        %v1452 = vpack.c.b16 %v1227, %v1218
        %v1453 = vpack.c.b16 %v1228, %v1219
        %v1454 = vpack.c.b16 %v1229, %v1220
        %v1455 = vpack.c.b16 %v1230, %v1221
        %v1456 = vpack.c.b16 %v1231, %v1222
        %v1457 = vpack.c.b16 %v1241, %v1232
        %v1458 = vpack.c.b16 %v1242, %v1233
        %v1459 = vpack.c.b16 %v1243, %v1234
        %v1460 = vpack.c.b16 %v1244, %v1235
        %v1461 = vpack.c.b16 %v1245, %v1236
        %v1462 = vpack.c.b16 %v1246, %v1237
        %v1463 = vpack.c.b16 %v1247, %v1238
        %v1464 = vpack.c.b16 %v1248, %v1239
        %v1465 = vpack.c.b16 %v1249, %v1240
        %1682 = vmatpush.bf16.msra.mxu0 %v1313
        %1683 = vmatpush.bf16.msra.mxu0 %v1304
        %1684 = vmatpush.bf16.msra.mxu0 %v1295
        %1685 = vmatpush.bf16.msra.mxu0 %v1286
        %1686 = vmatpush.bf16.msra.mxu0 %v1277
        %1687 = vmatpush.bf16.msra.mxu0 %v1268
        %1688 = vmatpush.bf16.msra.mxu0 %v1259
        %1689 = vmatpush.bf16.msra.mxu0 %v1250
        %1690 = vmatmul.bf16.gmra.mxu0 %v314
        %v1691 = vpop.f32.mrf.mxu0
        %v1692 = vadd.f32 0.0, %v1691
        %v1693 = vpop.f32.mrf.mxu0
        %v1694 = vadd.f32 0.0, %v1693
        %1695 = vmatmul.bf16.gmra.mxu0 %v317
        %v1696 = vpop.f32.mrf.mxu0
        %v1697 = vadd.f32 0.0, %v1696
        %v1698 = vpop.f32.mrf.mxu0
        %v1699 = vadd.f32 0.0, %v1698
        %1700 = vmatmul.bf16.gmra.mxu0 %v320
        %v1701 = vpop.f32.mrf.mxu0
        %v1702 = vadd.f32 0.0, %v1701
        %v1703 = vpop.f32.mrf.mxu0
        %v1704 = vadd.f32 0.0, %v1703
        %1705 = vmatmul.bf16.gmra.mxu0 %v323
        %v1706 = vpop.f32.mrf.mxu0
        %v1707 = vadd.f32 0.0, %v1706
        %v1708 = vpop.f32.mrf.mxu0
        %v1709 = vadd.f32 0.0, %v1708
        %1710 = vmatmul.bf16.gmra.mxu0 %v326
        %v1711 = vpop.f32.mrf.mxu0
        %v1712 = vadd.f32 0.0, %v1711
        %v1713 = vpop.f32.mrf.mxu0
        %v1714 = vadd.f32 0.0, %v1713
        %1715 = vmatmul.bf16.gmra.mxu0 %v329
        %v1716 = vpop.f32.mrf.mxu0
        %v1717 = vadd.f32 0.0, %v1716
        %v1718 = vpop.f32.mrf.mxu0
        %v1719 = vadd.f32 0.0, %v1718
        %1720 = vmatmul.bf16.gmra.mxu0 %v332
        %v1721 = vpop.f32.mrf.mxu0
        %v1722 = vadd.f32 0.0, %v1721
        %v1723 = vpop.f32.mrf.mxu0
        %v1724 = vadd.f32 0.0, %v1723
        %1725 = vmatmul.bf16.gmra.mxu0 %v335
        %v1726 = vpop.f32.mrf.mxu0
        %v1727 = vadd.f32 0.0, %v1726
        %v1728 = vpop.f32.mrf.mxu0
        %v1729 = vadd.f32 0.0, %v1728
        %1730 = vdwg.mxu0
        %1731 = vmatpush.bf16.msra.mxu0 %v1385
        %1732 = vmatpush.bf16.msra.mxu0 %v1376
        %1733 = vmatpush.bf16.msra.mxu0 %v1367
        %1734 = vmatpush.bf16.msra.mxu0 %v1358
        %1735 = vmatpush.bf16.msra.mxu0 %v1349
        %1736 = vmatpush.bf16.msra.mxu0 %v1340
        %1737 = vmatpush.bf16.msra.mxu0 %v1331
        %1738 = vmatpush.bf16.msra.mxu0 %v1322
        %1739 = vmatmul.bf16.gmra.mxu0 %v315
        %v1740 = vpop.f32.mrf.mxu0
        %v1741 = vadd.f32 %v1692, %v1740
        %v1742 = vpop.f32.mrf.mxu0
        %v1743 = vadd.f32 %v1694, %v1742
        %1744 = vmatmul.bf16.gmra.mxu0 %v318
        %v1745 = vpop.f32.mrf.mxu0
        %v1746 = vadd.f32 %v1697, %v1745
        %v1747 = vpop.f32.mrf.mxu0
        %v1748 = vadd.f32 %v1699, %v1747
        %1749 = vmatmul.bf16.gmra.mxu0 %v321
        %v1750 = vpop.f32.mrf.mxu0
        %v1751 = vadd.f32 %v1702, %v1750
        %v1752 = vpop.f32.mrf.mxu0
        %v1753 = vadd.f32 %v1704, %v1752
        %1754 = vmatmul.bf16.gmra.mxu0 %v324
        %v1755 = vpop.f32.mrf.mxu0
        %v1756 = vadd.f32 %v1707, %v1755
        %v1757 = vpop.f32.mrf.mxu0
        %v1758 = vadd.f32 %v1709, %v1757
        %1759 = vmatmul.bf16.gmra.mxu0 %v327
        %v1760 = vpop.f32.mrf.mxu0
        %v1761 = vadd.f32 %v1712, %v1760
        %v1762 = vpop.f32.mrf.mxu0
        %v1763 = vadd.f32 %v1714, %v1762
        %1764 = vmatmul.bf16.gmra.mxu0 %v330
        %v1765 = vpop.f32.mrf.mxu0
        %v1766 = vadd.f32 %v1717, %v1765
        %v1767 = vpop.f32.mrf.mxu0
        %v1768 = vadd.f32 %v1719, %v1767
        %1769 = vmatmul.bf16.gmra.mxu0 %v333
        %v1770 = vpop.f32.mrf.mxu0
        %v1771 = vadd.f32 %v1722, %v1770
        %v1772 = vpop.f32.mrf.mxu0
        %v1773 = vadd.f32 %v1724, %v1772
        %1774 = vmatmul.bf16.gmra.mxu0 %v336
        %v1775 = vpop.f32.mrf.mxu0
        %v1776 = vadd.f32 %v1727, %v1775
        %v1777 = vpop.f32.mrf.mxu0
        %v1778 = vadd.f32 %v1729, %v1777
        %1779 = vdwg.mxu0
        %1780 = vmatpush.bf16.msra.mxu0 %v1457
        %1781 = vmatpush.bf16.msra.mxu0 %v1448
        %1782 = vmatpush.bf16.msra.mxu0 %v1439
        %1783 = vmatpush.bf16.msra.mxu0 %v1430
        %1784 = vmatpush.bf16.msra.mxu0 %v1421
        %1785 = vmatpush.bf16.msra.mxu0 %v1412
        %1786 = vmatpush.bf16.msra.mxu0 %v1403
        %1787 = vmatpush.bf16.msra.mxu0 %v1394
        %1788 = vmatmul.bf16.gmra.mxu0 %v316
        %v1789 = vpop.f32.mrf.mxu0
        %v1790 = vadd.f32 %v1741, %v1789
        %v1791 = vpop.f32.mrf.mxu0
        %v1792 = vadd.f32 %v1743, %v1791
        %1793 = vmatmul.bf16.gmra.mxu0 %v319
        %v1794 = vpop.f32.mrf.mxu0
        %v1795 = vadd.f32 %v1746, %v1794
        %v1796 = vpop.f32.mrf.mxu0
        %v1797 = vadd.f32 %v1748, %v1796
        %1798 = vmatmul.bf16.gmra.mxu0 %v322
        %v1799 = vpop.f32.mrf.mxu0
        %v1800 = vadd.f32 %v1751, %v1799
        %v1801 = vpop.f32.mrf.mxu0
        %v1802 = vadd.f32 %v1753, %v1801
        %1803 = vmatmul.bf16.gmra.mxu0 %v325
        %v1804 = vpop.f32.mrf.mxu0
        %v1805 = vadd.f32 %v1756, %v1804
        %v1806 = vpop.f32.mrf.mxu0
        %v1807 = vadd.f32 %v1758, %v1806
        %1808 = vmatmul.bf16.gmra.mxu0 %v328
        %v1809 = vpop.f32.mrf.mxu0
        %v1810 = vadd.f32 %v1761, %v1809
        %v1811 = vpop.f32.mrf.mxu0
        %v1812 = vadd.f32 %v1763, %v1811
        %1813 = vmatmul.bf16.gmra.mxu0 %v331
        %v1814 = vpop.f32.mrf.mxu0
        %v1815 = vadd.f32 %v1766, %v1814
        %v1816 = vpop.f32.mrf.mxu0
        %v1817 = vadd.f32 %v1768, %v1816
        %1818 = vmatmul.bf16.gmra.mxu0 %v334
        %v1819 = vpop.f32.mrf.mxu0
        %v1820 = vadd.f32 %v1771, %v1819
        %v1821 = vpop.f32.mrf.mxu0
        %v1822 = vadd.f32 %v1773, %v1821
        %1823 = vmatmul.bf16.gmra.mxu0 %v337
        %v1824 = vpop.f32.mrf.mxu0
        %v1825 = vadd.f32 %v1776, %v1824
        %v1826 = vpop.f32.mrf.mxu0
        %v1827 = vadd.f32 %v1778, %v1826
        %1828 = vdwg.mxu0
        %1829 = vmatpush.bf16.msra.mxu0 %v1314
        %1830 = vmatpush.bf16.msra.mxu0 %v1305
        %1831 = vmatpush.bf16.msra.mxu0 %v1296
        %1832 = vmatpush.bf16.msra.mxu0 %v1287
        %1833 = vmatpush.bf16.msra.mxu0 %v1278
        %1834 = vmatpush.bf16.msra.mxu0 %v1269
        %1835 = vmatpush.bf16.msra.mxu0 %v1260
        %1836 = vmatpush.bf16.msra.mxu0 %v1251
        %1837 = vmatmul.bf16.gmra.mxu0 %v314
        %v1838 = vpop.f32.mrf.mxu0
        %v1839 = vadd.f32 0.0, %v1838
        %v1840 = vpop.f32.mrf.mxu0
        %v1841 = vadd.f32 0.0, %v1840
        %1842 = vmatmul.bf16.gmra.mxu0 %v317
        %v1843 = vpop.f32.mrf.mxu0
        %v1844 = vadd.f32 0.0, %v1843
        %v1845 = vpop.f32.mrf.mxu0
        %v1846 = vadd.f32 0.0, %v1845
        %1847 = vmatmul.bf16.gmra.mxu0 %v320
        %v1848 = vpop.f32.mrf.mxu0
        %v1849 = vadd.f32 0.0, %v1848
        %v1850 = vpop.f32.mrf.mxu0
        %v1851 = vadd.f32 0.0, %v1850
        %1852 = vmatmul.bf16.gmra.mxu0 %v323
        %v1853 = vpop.f32.mrf.mxu0
        %v1854 = vadd.f32 0.0, %v1853
        %v1855 = vpop.f32.mrf.mxu0
        %v1856 = vadd.f32 0.0, %v1855
        %1857 = vmatmul.bf16.gmra.mxu0 %v326
        %v1858 = vpop.f32.mrf.mxu0
        %v1859 = vadd.f32 0.0, %v1858
        %v1860 = vpop.f32.mrf.mxu0
        %v1861 = vadd.f32 0.0, %v1860
        %1862 = vmatmul.bf16.gmra.mxu0 %v329
        %v1863 = vpop.f32.mrf.mxu0
        %v1864 = vadd.f32 0.0, %v1863
        %v1865 = vpop.f32.mrf.mxu0
        %v1866 = vadd.f32 0.0, %v1865
        %1867 = vmatmul.bf16.gmra.mxu0 %v332
        %v1868 = vpop.f32.mrf.mxu0
        %v1869 = vadd.f32 0.0, %v1868
        %v1870 = vpop.f32.mrf.mxu0
        %v1871 = vadd.f32 0.0, %v1870
        %1872 = vmatmul.bf16.gmra.mxu0 %v335
        %v1873 = vpop.f32.mrf.mxu0
        %v1874 = vadd.f32 0.0, %v1873
        %v1875 = vpop.f32.mrf.mxu0
        %v1876 = vadd.f32 0.0, %v1875
        %1877 = vdwg.mxu0
        %1878 = vmatpush.bf16.msra.mxu0 %v1386
        %1879 = vmatpush.bf16.msra.mxu0 %v1377
        %1880 = vmatpush.bf16.msra.mxu0 %v1368
        %1881 = vmatpush.bf16.msra.mxu0 %v1359
        %1882 = vmatpush.bf16.msra.mxu0 %v1350
        %1883 = vmatpush.bf16.msra.mxu0 %v1341
        %1884 = vmatpush.bf16.msra.mxu0 %v1332
        %1885 = vmatpush.bf16.msra.mxu0 %v1323
        %1886 = vmatmul.bf16.gmra.mxu0 %v315
        %v1887 = vpop.f32.mrf.mxu0
        %v1888 = vadd.f32 %v1839, %v1887
        %v1889 = vpop.f32.mrf.mxu0
        %v1890 = vadd.f32 %v1841, %v1889
        %1891 = vmatmul.bf16.gmra.mxu0 %v318
        %v1892 = vpop.f32.mrf.mxu0
        %v1893 = vadd.f32 %v1844, %v1892
        %v1894 = vpop.f32.mrf.mxu0
        %v1895 = vadd.f32 %v1846, %v1894
        %1896 = vmatmul.bf16.gmra.mxu0 %v321
        %v1897 = vpop.f32.mrf.mxu0
        %v1898 = vadd.f32 %v1849, %v1897
        %v1899 = vpop.f32.mrf.mxu0
        %v1900 = vadd.f32 %v1851, %v1899
        %1901 = vmatmul.bf16.gmra.mxu0 %v324
        %v1902 = vpop.f32.mrf.mxu0
        %v1903 = vadd.f32 %v1854, %v1902
        %v1904 = vpop.f32.mrf.mxu0
        %v1905 = vadd.f32 %v1856, %v1904
        %1906 = vmatmul.bf16.gmra.mxu0 %v327
        %v1907 = vpop.f32.mrf.mxu0
        %v1908 = vadd.f32 %v1859, %v1907
        %v1909 = vpop.f32.mrf.mxu0
        %v1910 = vadd.f32 %v1861, %v1909
        %1911 = vmatmul.bf16.gmra.mxu0 %v330
        %v1912 = vpop.f32.mrf.mxu0
        %v1913 = vadd.f32 %v1864, %v1912
        %v1914 = vpop.f32.mrf.mxu0
        %v1915 = vadd.f32 %v1866, %v1914
        %1916 = vmatmul.bf16.gmra.mxu0 %v333
        %v1917 = vpop.f32.mrf.mxu0
        %v1918 = vadd.f32 %v1869, %v1917
        %v1919 = vpop.f32.mrf.mxu0
        %v1920 = vadd.f32 %v1871, %v1919
        %1921 = vmatmul.bf16.gmra.mxu0 %v336
        %v1922 = vpop.f32.mrf.mxu0
        %v1923 = vadd.f32 %v1874, %v1922
        %v1924 = vpop.f32.mrf.mxu0
        %v1925 = vadd.f32 %v1876, %v1924
        %1926 = vdwg.mxu0
        %1927 = vmatpush.bf16.msra.mxu0 %v1458
        %1928 = vmatpush.bf16.msra.mxu0 %v1449
        %1929 = vmatpush.bf16.msra.mxu0 %v1440
        %1930 = vmatpush.bf16.msra.mxu0 %v1431
        %1931 = vmatpush.bf16.msra.mxu0 %v1422
        %1932 = vmatpush.bf16.msra.mxu0 %v1413
        %1933 = vmatpush.bf16.msra.mxu0 %v1404
        %1934 = vmatpush.bf16.msra.mxu0 %v1395
        %1935 = vmatmul.bf16.gmra.mxu0 %v316
        %v1936 = vpop.f32.mrf.mxu0
        %v1937 = vadd.f32 %v1888, %v1936
        %v1938 = vpop.f32.mrf.mxu0
        %v1939 = vadd.f32 %v1890, %v1938
        %1940 = vmatmul.bf16.gmra.mxu0 %v319
        %v1941 = vpop.f32.mrf.mxu0
        %v1942 = vadd.f32 %v1893, %v1941
        %v1943 = vpop.f32.mrf.mxu0
        %v1944 = vadd.f32 %v1895, %v1943
        %1945 = vmatmul.bf16.gmra.mxu0 %v322
        %v1946 = vpop.f32.mrf.mxu0
        %v1947 = vadd.f32 %v1898, %v1946
        %v1948 = vpop.f32.mrf.mxu0
        %v1949 = vadd.f32 %v1900, %v1948
        %1950 = vmatmul.bf16.gmra.mxu0 %v325
        %v1951 = vpop.f32.mrf.mxu0
        %v1952 = vadd.f32 %v1903, %v1951
        %v1953 = vpop.f32.mrf.mxu0
        %v1954 = vadd.f32 %v1905, %v1953
        %1955 = vmatmul.bf16.gmra.mxu0 %v328
        %v1956 = vpop.f32.mrf.mxu0
        %v1957 = vadd.f32 %v1908, %v1956
        %v1958 = vpop.f32.mrf.mxu0
        %v1959 = vadd.f32 %v1910, %v1958
        %1960 = vmatmul.bf16.gmra.mxu0 %v331
        %v1961 = vpop.f32.mrf.mxu0
        %v1962 = vadd.f32 %v1913, %v1961
        %v1963 = vpop.f32.mrf.mxu0
        %v1964 = vadd.f32 %v1915, %v1963
        %1965 = vmatmul.bf16.gmra.mxu0 %v334
        %v1966 = vpop.f32.mrf.mxu0
        %v1967 = vadd.f32 %v1918, %v1966
        %v1968 = vpop.f32.mrf.mxu0
        %v1969 = vadd.f32 %v1920, %v1968
        %1970 = vmatmul.bf16.gmra.mxu0 %v337
        %v1971 = vpop.f32.mrf.mxu0
        %v1972 = vadd.f32 %v1923, %v1971
        %v1973 = vpop.f32.mrf.mxu0
        %v1974 = vadd.f32 %v1925, %v1973
        %1975 = vdwg.mxu0
        %1976 = vmatpush.bf16.msra.mxu0 %v1315
        %1977 = vmatpush.bf16.msra.mxu0 %v1306
        %1978 = vmatpush.bf16.msra.mxu0 %v1297
        %1979 = vmatpush.bf16.msra.mxu0 %v1288
        %1980 = vmatpush.bf16.msra.mxu0 %v1279
        %1981 = vmatpush.bf16.msra.mxu0 %v1270
        %1982 = vmatpush.bf16.msra.mxu0 %v1261
        %1983 = vmatpush.bf16.msra.mxu0 %v1252
        %1984 = vmatmul.bf16.gmra.mxu0 %v314
        %v1985 = vpop.f32.mrf.mxu0
        %v1986 = vadd.f32 0.0, %v1985
        %v1987 = vpop.f32.mrf.mxu0
        %v1988 = vadd.f32 0.0, %v1987
        %1989 = vmatmul.bf16.gmra.mxu0 %v317
        %v1990 = vpop.f32.mrf.mxu0
        %v1991 = vadd.f32 0.0, %v1990
        %v1992 = vpop.f32.mrf.mxu0
        %v1993 = vadd.f32 0.0, %v1992
        %1994 = vmatmul.bf16.gmra.mxu0 %v320
        %v1995 = vpop.f32.mrf.mxu0
        %v1996 = vadd.f32 0.0, %v1995
        %v1997 = vpop.f32.mrf.mxu0
        %v1998 = vadd.f32 0.0, %v1997
        %1999 = vmatmul.bf16.gmra.mxu0 %v323
        %v2000 = vpop.f32.mrf.mxu0
        %v2001 = vadd.f32 0.0, %v2000
        %v2002 = vpop.f32.mrf.mxu0
        %v2003 = vadd.f32 0.0, %v2002
        %2004 = vmatmul.bf16.gmra.mxu0 %v326
        %v2005 = vpop.f32.mrf.mxu0
        %v2006 = vadd.f32 0.0, %v2005
        %v2007 = vpop.f32.mrf.mxu0
        %v2008 = vadd.f32 0.0, %v2007
        %2009 = vmatmul.bf16.gmra.mxu0 %v329
        %v2010 = vpop.f32.mrf.mxu0
        %v2011 = vadd.f32 0.0, %v2010
        %v2012 = vpop.f32.mrf.mxu0
        %v2013 = vadd.f32 0.0, %v2012
        %2014 = vmatmul.bf16.gmra.mxu0 %v332
        %v2015 = vpop.f32.mrf.mxu0
        %v2016 = vadd.f32 0.0, %v2015
        %v2017 = vpop.f32.mrf.mxu0
        %v2018 = vadd.f32 0.0, %v2017
        %2019 = vmatmul.bf16.gmra.mxu0 %v335
        %v2020 = vpop.f32.mrf.mxu0
        %v2021 = vadd.f32 0.0, %v2020
        %v2022 = vpop.f32.mrf.mxu0
        %v2023 = vadd.f32 0.0, %v2022
        %2024 = vdwg.mxu0
        %2025 = vmatpush.bf16.msra.mxu0 %v1387
        %2026 = vmatpush.bf16.msra.mxu0 %v1378
        %2027 = vmatpush.bf16.msra.mxu0 %v1369
        %2028 = vmatpush.bf16.msra.mxu0 %v1360
        %2029 = vmatpush.bf16.msra.mxu0 %v1351
        %2030 = vmatpush.bf16.msra.mxu0 %v1342
        %2031 = vmatpush.bf16.msra.mxu0 %v1333
        %2032 = vmatpush.bf16.msra.mxu0 %v1324
        %2033 = vmatmul.bf16.gmra.mxu0 %v315
        %v2034 = vpop.f32.mrf.mxu0
        %v2035 = vadd.f32 %v1986, %v2034
        %v2036 = vpop.f32.mrf.mxu0
        %v2037 = vadd.f32 %v1988, %v2036
        %2038 = vmatmul.bf16.gmra.mxu0 %v318
        %v2039 = vpop.f32.mrf.mxu0
        %v2040 = vadd.f32 %v1991, %v2039
        %v2041 = vpop.f32.mrf.mxu0
        %v2042 = vadd.f32 %v1993, %v2041
        %2043 = vmatmul.bf16.gmra.mxu0 %v321
        %v2044 = vpop.f32.mrf.mxu0
        %v2045 = vadd.f32 %v1996, %v2044
        %v2046 = vpop.f32.mrf.mxu0
        %v2047 = vadd.f32 %v1998, %v2046
        %2048 = vmatmul.bf16.gmra.mxu0 %v324
        %v2049 = vpop.f32.mrf.mxu0
        %v2050 = vadd.f32 %v2001, %v2049
        %v2051 = vpop.f32.mrf.mxu0
        %v2052 = vadd.f32 %v2003, %v2051
        %2053 = vmatmul.bf16.gmra.mxu0 %v327
        %v2054 = vpop.f32.mrf.mxu0
        %v2055 = vadd.f32 %v2006, %v2054
        %v2056 = vpop.f32.mrf.mxu0
        %v2057 = vadd.f32 %v2008, %v2056
        %2058 = vmatmul.bf16.gmra.mxu0 %v330
        %v2059 = vpop.f32.mrf.mxu0
        %v2060 = vadd.f32 %v2011, %v2059
        %v2061 = vpop.f32.mrf.mxu0
        %v2062 = vadd.f32 %v2013, %v2061
        %2063 = vmatmul.bf16.gmra.mxu0 %v333
        %v2064 = vpop.f32.mrf.mxu0
        %v2065 = vadd.f32 %v2016, %v2064
        %v2066 = vpop.f32.mrf.mxu0
        %v2067 = vadd.f32 %v2018, %v2066
        %2068 = vmatmul.bf16.gmra.mxu0 %v336
        %v2069 = vpop.f32.mrf.mxu0
        %v2070 = vadd.f32 %v2021, %v2069
        %v2071 = vpop.f32.mrf.mxu0
        %v2072 = vadd.f32 %v2023, %v2071
        %2073 = vdwg.mxu0
        %2074 = vmatpush.bf16.msra.mxu0 %v1459
        %2075 = vmatpush.bf16.msra.mxu0 %v1450
        %2076 = vmatpush.bf16.msra.mxu0 %v1441
        %2077 = vmatpush.bf16.msra.mxu0 %v1432
        %2078 = vmatpush.bf16.msra.mxu0 %v1423
        %2079 = vmatpush.bf16.msra.mxu0 %v1414
        %2080 = vmatpush.bf16.msra.mxu0 %v1405
        %2081 = vmatpush.bf16.msra.mxu0 %v1396
        %2082 = vmatmul.bf16.gmra.mxu0 %v316
        %v2083 = vpop.f32.mrf.mxu0
        %v2084 = vadd.f32 %v2035, %v2083
        %v2085 = vpop.f32.mrf.mxu0
        %v2086 = vadd.f32 %v2037, %v2085
        %2087 = vmatmul.bf16.gmra.mxu0 %v319
        %v2088 = vpop.f32.mrf.mxu0
        %v2089 = vadd.f32 %v2040, %v2088
        %v2090 = vpop.f32.mrf.mxu0
        %v2091 = vadd.f32 %v2042, %v2090
        %2092 = vmatmul.bf16.gmra.mxu0 %v322
        %v2093 = vpop.f32.mrf.mxu0
        %v2094 = vadd.f32 %v2045, %v2093
        %v2095 = vpop.f32.mrf.mxu0
        %v2096 = vadd.f32 %v2047, %v2095
        %2097 = vmatmul.bf16.gmra.mxu0 %v325
        %v2098 = vpop.f32.mrf.mxu0
        %v2099 = vadd.f32 %v2050, %v2098
        %v2100 = vpop.f32.mrf.mxu0
        %v2101 = vadd.f32 %v2052, %v2100
        %2102 = vmatmul.bf16.gmra.mxu0 %v328
        %v2103 = vpop.f32.mrf.mxu0
        %v2104 = vadd.f32 %v2055, %v2103
        %v2105 = vpop.f32.mrf.mxu0
        %v2106 = vadd.f32 %v2057, %v2105
        %2107 = vmatmul.bf16.gmra.mxu0 %v331
        %v2108 = vpop.f32.mrf.mxu0
        %v2109 = vadd.f32 %v2060, %v2108
        %v2110 = vpop.f32.mrf.mxu0
        %v2111 = vadd.f32 %v2062, %v2110
        %2112 = vmatmul.bf16.gmra.mxu0 %v334
        %v2113 = vpop.f32.mrf.mxu0
        %v2114 = vadd.f32 %v2065, %v2113
        %v2115 = vpop.f32.mrf.mxu0
        %v2116 = vadd.f32 %v2067, %v2115
        %2117 = vmatmul.bf16.gmra.mxu0 %v337
        %v2118 = vpop.f32.mrf.mxu0
        %v2119 = vadd.f32 %v2070, %v2118
        %v2120 = vpop.f32.mrf.mxu0
        %v2121 = vadd.f32 %v2072, %v2120
        %2122 = vdwg.mxu0
        %2123 = vmatpush.bf16.msra.mxu0 %v1316
        %2124 = vmatpush.bf16.msra.mxu0 %v1307
        %2125 = vmatpush.bf16.msra.mxu0 %v1298
        %2126 = vmatpush.bf16.msra.mxu0 %v1289
        %2127 = vmatpush.bf16.msra.mxu0 %v1280
        %2128 = vmatpush.bf16.msra.mxu0 %v1271
        %2129 = vmatpush.bf16.msra.mxu0 %v1262
        %2130 = vmatpush.bf16.msra.mxu0 %v1253
        %2131 = vmatmul.bf16.gmra.mxu0 %v314
        %v2132 = vpop.f32.mrf.mxu0
        %v2133 = vadd.f32 0.0, %v2132
        %v2134 = vpop.f32.mrf.mxu0
        %v2135 = vadd.f32 0.0, %v2134
        %2136 = vmatmul.bf16.gmra.mxu0 %v317
        %v2137 = vpop.f32.mrf.mxu0
        %v2138 = vadd.f32 0.0, %v2137
        %v2139 = vpop.f32.mrf.mxu0
        %v2140 = vadd.f32 0.0, %v2139
        %2141 = vmatmul.bf16.gmra.mxu0 %v320
        %v2142 = vpop.f32.mrf.mxu0
        %v2143 = vadd.f32 0.0, %v2142
        %v2144 = vpop.f32.mrf.mxu0
        %v2145 = vadd.f32 0.0, %v2144
        %2146 = vmatmul.bf16.gmra.mxu0 %v323
        %v2147 = vpop.f32.mrf.mxu0
        %v2148 = vadd.f32 0.0, %v2147
        %v2149 = vpop.f32.mrf.mxu0
        %v2150 = vadd.f32 0.0, %v2149
        %2151 = vmatmul.bf16.gmra.mxu0 %v326
        %v2152 = vpop.f32.mrf.mxu0
        %v2153 = vadd.f32 0.0, %v2152
        %v2154 = vpop.f32.mrf.mxu0
        %v2155 = vadd.f32 0.0, %v2154
        %2156 = vmatmul.bf16.gmra.mxu0 %v329
        %v2157 = vpop.f32.mrf.mxu0
        %v2158 = vadd.f32 0.0, %v2157
        %v2159 = vpop.f32.mrf.mxu0
        %v2160 = vadd.f32 0.0, %v2159
        %2161 = vmatmul.bf16.gmra.mxu0 %v332
        %v2162 = vpop.f32.mrf.mxu0
        %v2163 = vadd.f32 0.0, %v2162
        %v2164 = vpop.f32.mrf.mxu0
        %v2165 = vadd.f32 0.0, %v2164
        %2166 = vmatmul.bf16.gmra.mxu0 %v335
        %v2167 = vpop.f32.mrf.mxu0
        %v2168 = vadd.f32 0.0, %v2167
        %v2169 = vpop.f32.mrf.mxu0
        %v2170 = vadd.f32 0.0, %v2169
        %2171 = vdwg.mxu0
        %2172 = vmatpush.bf16.msra.mxu0 %v1388
        %2173 = vmatpush.bf16.msra.mxu0 %v1379
        %2174 = vmatpush.bf16.msra.mxu0 %v1370
        %2175 = vmatpush.bf16.msra.mxu0 %v1361
        %2176 = vmatpush.bf16.msra.mxu0 %v1352
        %2177 = vmatpush.bf16.msra.mxu0 %v1343
        %2178 = vmatpush.bf16.msra.mxu0 %v1334
        %2179 = vmatpush.bf16.msra.mxu0 %v1325
        %2180 = vmatmul.bf16.gmra.mxu0 %v315
        %v2181 = vpop.f32.mrf.mxu0
        %v2182 = vadd.f32 %v2133, %v2181
        %v2183 = vpop.f32.mrf.mxu0
        %v2184 = vadd.f32 %v2135, %v2183
        %2185 = vmatmul.bf16.gmra.mxu0 %v318
        %v2186 = vpop.f32.mrf.mxu0
        %v2187 = vadd.f32 %v2138, %v2186
        %v2188 = vpop.f32.mrf.mxu0
        %v2189 = vadd.f32 %v2140, %v2188
        %2190 = vmatmul.bf16.gmra.mxu0 %v321
        %v2191 = vpop.f32.mrf.mxu0
        %v2192 = vadd.f32 %v2143, %v2191
        %v2193 = vpop.f32.mrf.mxu0
        %v2194 = vadd.f32 %v2145, %v2193
        %2195 = vmatmul.bf16.gmra.mxu0 %v324
        %v2196 = vpop.f32.mrf.mxu0
        %v2197 = vadd.f32 %v2148, %v2196
        %v2198 = vpop.f32.mrf.mxu0
        %v2199 = vadd.f32 %v2150, %v2198
        %2200 = vmatmul.bf16.gmra.mxu0 %v327
        %v2201 = vpop.f32.mrf.mxu0
        %v2202 = vadd.f32 %v2153, %v2201
        %v2203 = vpop.f32.mrf.mxu0
        %v2204 = vadd.f32 %v2155, %v2203
        %2205 = vmatmul.bf16.gmra.mxu0 %v330
        %v2206 = vpop.f32.mrf.mxu0
        %v2207 = vadd.f32 %v2158, %v2206
        %v2208 = vpop.f32.mrf.mxu0
        %v2209 = vadd.f32 %v2160, %v2208
        %2210 = vmatmul.bf16.gmra.mxu0 %v333
        %v2211 = vpop.f32.mrf.mxu0
        %v2212 = vadd.f32 %v2163, %v2211
        %v2213 = vpop.f32.mrf.mxu0
        %v2214 = vadd.f32 %v2165, %v2213
        %2215 = vmatmul.bf16.gmra.mxu0 %v336
        %v2216 = vpop.f32.mrf.mxu0
        %v2217 = vadd.f32 %v2168, %v2216
        %v2218 = vpop.f32.mrf.mxu0
        %v2219 = vadd.f32 %v2170, %v2218
        %2220 = vdwg.mxu0
        %2221 = vmatpush.bf16.msra.mxu0 %v1460
        %2222 = vmatpush.bf16.msra.mxu0 %v1451
        %2223 = vmatpush.bf16.msra.mxu0 %v1442
        %2224 = vmatpush.bf16.msra.mxu0 %v1433
        %2225 = vmatpush.bf16.msra.mxu0 %v1424
        %2226 = vmatpush.bf16.msra.mxu0 %v1415
        %2227 = vmatpush.bf16.msra.mxu0 %v1406
        %2228 = vmatpush.bf16.msra.mxu0 %v1397
        %2229 = vmatmul.bf16.gmra.mxu0 %v316
        %v2230 = vpop.f32.mrf.mxu0
        %v2231 = vadd.f32 %v2182, %v2230
        %v2232 = vpop.f32.mrf.mxu0
        %v2233 = vadd.f32 %v2184, %v2232
        %2234 = vmatmul.bf16.gmra.mxu0 %v319
        %v2235 = vpop.f32.mrf.mxu0
        %v2236 = vadd.f32 %v2187, %v2235
        %v2237 = vpop.f32.mrf.mxu0
        %v2238 = vadd.f32 %v2189, %v2237
        %2239 = vmatmul.bf16.gmra.mxu0 %v322
        %v2240 = vpop.f32.mrf.mxu0
        %v2241 = vadd.f32 %v2192, %v2240
        %v2242 = vpop.f32.mrf.mxu0
        %v2243 = vadd.f32 %v2194, %v2242
        %2244 = vmatmul.bf16.gmra.mxu0 %v325
        %v2245 = vpop.f32.mrf.mxu0
        %v2246 = vadd.f32 %v2197, %v2245
        %v2247 = vpop.f32.mrf.mxu0
        %v2248 = vadd.f32 %v2199, %v2247
        %2249 = vmatmul.bf16.gmra.mxu0 %v328
        %v2250 = vpop.f32.mrf.mxu0
        %v2251 = vadd.f32 %v2202, %v2250
        %v2252 = vpop.f32.mrf.mxu0
        %v2253 = vadd.f32 %v2204, %v2252
        %2254 = vmatmul.bf16.gmra.mxu0 %v331
        %v2255 = vpop.f32.mrf.mxu0
        %v2256 = vadd.f32 %v2207, %v2255
        %v2257 = vpop.f32.mrf.mxu0
        %v2258 = vadd.f32 %v2209, %v2257
        %2259 = vmatmul.bf16.gmra.mxu0 %v334
        %v2260 = vpop.f32.mrf.mxu0
        %v2261 = vadd.f32 %v2212, %v2260
        %v2262 = vpop.f32.mrf.mxu0
        %v2263 = vadd.f32 %v2214, %v2262
        %2264 = vmatmul.bf16.gmra.mxu0 %v337
        %v2265 = vpop.f32.mrf.mxu0
        %v2266 = vadd.f32 %v2217, %v2265
        %v2267 = vpop.f32.mrf.mxu0
        %v2268 = vadd.f32 %v2219, %v2267
        %2269 = vdwg.mxu0
        %2270 = vmatpush.bf16.msra.mxu0 %v1317
        %2271 = vmatpush.bf16.msra.mxu0 %v1308
        %2272 = vmatpush.bf16.msra.mxu0 %v1299
        %2273 = vmatpush.bf16.msra.mxu0 %v1290
        %2274 = vmatpush.bf16.msra.mxu0 %v1281
        %2275 = vmatpush.bf16.msra.mxu0 %v1272
        %2276 = vmatpush.bf16.msra.mxu0 %v1263
        %2277 = vmatpush.bf16.msra.mxu0 %v1254
        %2278 = vmatmul.bf16.gmra.mxu0 %v314
        %v2279 = vpop.f32.mrf.mxu0
        %v2280 = vadd.f32 0.0, %v2279
        %v2281 = vpop.f32.mrf.mxu0
        %v2282 = vadd.f32 0.0, %v2281
        %2283 = vmatmul.bf16.gmra.mxu0 %v317
        %v2284 = vpop.f32.mrf.mxu0
        %v2285 = vadd.f32 0.0, %v2284
        %v2286 = vpop.f32.mrf.mxu0
        %v2287 = vadd.f32 0.0, %v2286
        %2288 = vmatmul.bf16.gmra.mxu0 %v320
        %v2289 = vpop.f32.mrf.mxu0
        %v2290 = vadd.f32 0.0, %v2289
        %v2291 = vpop.f32.mrf.mxu0
        %v2292 = vadd.f32 0.0, %v2291
        %2293 = vmatmul.bf16.gmra.mxu0 %v323
        %v2294 = vpop.f32.mrf.mxu0
        %v2295 = vadd.f32 0.0, %v2294
        %v2296 = vpop.f32.mrf.mxu0
        %v2297 = vadd.f32 0.0, %v2296
        %2298 = vmatmul.bf16.gmra.mxu0 %v326
        %v2299 = vpop.f32.mrf.mxu0
        %v2300 = vadd.f32 0.0, %v2299
        %v2301 = vpop.f32.mrf.mxu0
        %v2302 = vadd.f32 0.0, %v2301
        %2303 = vmatmul.bf16.gmra.mxu0 %v329
        %v2304 = vpop.f32.mrf.mxu0
        %v2305 = vadd.f32 0.0, %v2304
        %v2306 = vpop.f32.mrf.mxu0
        %v2307 = vadd.f32 0.0, %v2306
        %2308 = vmatmul.bf16.gmra.mxu0 %v332
        %v2309 = vpop.f32.mrf.mxu0
        %v2310 = vadd.f32 0.0, %v2309
        %v2311 = vpop.f32.mrf.mxu0
        %v2312 = vadd.f32 0.0, %v2311
        %2313 = vmatmul.bf16.gmra.mxu0 %v335
        %v2314 = vpop.f32.mrf.mxu0
        %v2315 = vadd.f32 0.0, %v2314
        %v2316 = vpop.f32.mrf.mxu0
        %v2317 = vadd.f32 0.0, %v2316
        %2318 = vdwg.mxu0
        %2319 = vmatpush.bf16.msra.mxu0 %v1389
        %2320 = vmatpush.bf16.msra.mxu0 %v1380
        %2321 = vmatpush.bf16.msra.mxu0 %v1371
        %2322 = vmatpush.bf16.msra.mxu0 %v1362
        %2323 = vmatpush.bf16.msra.mxu0 %v1353
        %2324 = vmatpush.bf16.msra.mxu0 %v1344
        %2325 = vmatpush.bf16.msra.mxu0 %v1335
        %2326 = vmatpush.bf16.msra.mxu0 %v1326
        %2327 = vmatmul.bf16.gmra.mxu0 %v315
        %v2328 = vpop.f32.mrf.mxu0
        %v2329 = vadd.f32 %v2280, %v2328
        %v2330 = vpop.f32.mrf.mxu0
        %v2331 = vadd.f32 %v2282, %v2330
        %2332 = vmatmul.bf16.gmra.mxu0 %v318
        %v2333 = vpop.f32.mrf.mxu0
        %v2334 = vadd.f32 %v2285, %v2333
        %v2335 = vpop.f32.mrf.mxu0
        %v2336 = vadd.f32 %v2287, %v2335
        %2337 = vmatmul.bf16.gmra.mxu0 %v321
        %v2338 = vpop.f32.mrf.mxu0
        %v2339 = vadd.f32 %v2290, %v2338
        %v2340 = vpop.f32.mrf.mxu0
        %v2341 = vadd.f32 %v2292, %v2340
        %2342 = vmatmul.bf16.gmra.mxu0 %v324
        %v2343 = vpop.f32.mrf.mxu0
        %v2344 = vadd.f32 %v2295, %v2343
        %v2345 = vpop.f32.mrf.mxu0
        %v2346 = vadd.f32 %v2297, %v2345
        %2347 = vmatmul.bf16.gmra.mxu0 %v327
        %v2348 = vpop.f32.mrf.mxu0
        %v2349 = vadd.f32 %v2300, %v2348
        %v2350 = vpop.f32.mrf.mxu0
        %v2351 = vadd.f32 %v2302, %v2350
        %2352 = vmatmul.bf16.gmra.mxu0 %v330
        %v2353 = vpop.f32.mrf.mxu0
        %v2354 = vadd.f32 %v2305, %v2353
        %v2355 = vpop.f32.mrf.mxu0
        %v2356 = vadd.f32 %v2307, %v2355
        %2357 = vmatmul.bf16.gmra.mxu0 %v333
        %v2358 = vpop.f32.mrf.mxu0
        %v2359 = vadd.f32 %v2310, %v2358
        %v2360 = vpop.f32.mrf.mxu0
        %v2361 = vadd.f32 %v2312, %v2360
        %2362 = vmatmul.bf16.gmra.mxu0 %v336
        %v2363 = vpop.f32.mrf.mxu0
        %v2364 = vadd.f32 %v2315, %v2363
        %v2365 = vpop.f32.mrf.mxu0
        %v2366 = vadd.f32 %v2317, %v2365
        %2367 = vdwg.mxu0
        %2368 = vmatpush.bf16.msra.mxu0 %v1461
        %2369 = vmatpush.bf16.msra.mxu0 %v1452
        %2370 = vmatpush.bf16.msra.mxu0 %v1443
        %2371 = vmatpush.bf16.msra.mxu0 %v1434
        %2372 = vmatpush.bf16.msra.mxu0 %v1425
        %2373 = vmatpush.bf16.msra.mxu0 %v1416
        %2374 = vmatpush.bf16.msra.mxu0 %v1407
        %2375 = vmatpush.bf16.msra.mxu0 %v1398
        %2376 = vmatmul.bf16.gmra.mxu0 %v316
        %v2377 = vpop.f32.mrf.mxu0
        %v2378 = vadd.f32 %v2329, %v2377
        %v2379 = vpop.f32.mrf.mxu0
        %v2380 = vadd.f32 %v2331, %v2379
        %2381 = vmatmul.bf16.gmra.mxu0 %v319
        %v2382 = vpop.f32.mrf.mxu0
        %v2383 = vadd.f32 %v2334, %v2382
        %v2384 = vpop.f32.mrf.mxu0
        %v2385 = vadd.f32 %v2336, %v2384
        %2386 = vmatmul.bf16.gmra.mxu0 %v322
        %v2387 = vpop.f32.mrf.mxu0
        %v2388 = vadd.f32 %v2339, %v2387
        %v2389 = vpop.f32.mrf.mxu0
        %v2390 = vadd.f32 %v2341, %v2389
        %2391 = vmatmul.bf16.gmra.mxu0 %v325
        %v2392 = vpop.f32.mrf.mxu0
        %v2393 = vadd.f32 %v2344, %v2392
        %v2394 = vpop.f32.mrf.mxu0
        %v2395 = vadd.f32 %v2346, %v2394
        %2396 = vmatmul.bf16.gmra.mxu0 %v328
        %v2397 = vpop.f32.mrf.mxu0
        %v2398 = vadd.f32 %v2349, %v2397
        %v2399 = vpop.f32.mrf.mxu0
        %v2400 = vadd.f32 %v2351, %v2399
        %2401 = vmatmul.bf16.gmra.mxu0 %v331
        %v2402 = vpop.f32.mrf.mxu0
        %v2403 = vadd.f32 %v2354, %v2402
        %v2404 = vpop.f32.mrf.mxu0
        %v2405 = vadd.f32 %v2356, %v2404
        %2406 = vmatmul.bf16.gmra.mxu0 %v334
        %v2407 = vpop.f32.mrf.mxu0
        %v2408 = vadd.f32 %v2359, %v2407
        %v2409 = vpop.f32.mrf.mxu0
        %v2410 = vadd.f32 %v2361, %v2409
        %2411 = vmatmul.bf16.gmra.mxu0 %v337
        %v2412 = vpop.f32.mrf.mxu0
        %v2413 = vadd.f32 %v2364, %v2412
        %v2414 = vpop.f32.mrf.mxu0
        %v2415 = vadd.f32 %v2366, %v2414
        %2416 = vdwg.mxu0
        %2417 = vmatpush.bf16.msra.mxu0 %v1318
        %2418 = vmatpush.bf16.msra.mxu0 %v1309
        %2419 = vmatpush.bf16.msra.mxu0 %v1300
        %2420 = vmatpush.bf16.msra.mxu0 %v1291
        %2421 = vmatpush.bf16.msra.mxu0 %v1282
        %2422 = vmatpush.bf16.msra.mxu0 %v1273
        %2423 = vmatpush.bf16.msra.mxu0 %v1264
        %2424 = vmatpush.bf16.msra.mxu0 %v1255
        %2425 = vmatmul.bf16.gmra.mxu0 %v314
        %v2426 = vpop.f32.mrf.mxu0
        %v2427 = vadd.f32 0.0, %v2426
        %v2428 = vpop.f32.mrf.mxu0
        %v2429 = vadd.f32 0.0, %v2428
        %2430 = vmatmul.bf16.gmra.mxu0 %v317
        %v2431 = vpop.f32.mrf.mxu0
        %v2432 = vadd.f32 0.0, %v2431
        %v2433 = vpop.f32.mrf.mxu0
        %v2434 = vadd.f32 0.0, %v2433
        %2435 = vmatmul.bf16.gmra.mxu0 %v320
        %v2436 = vpop.f32.mrf.mxu0
        %v2437 = vadd.f32 0.0, %v2436
        %v2438 = vpop.f32.mrf.mxu0
        %v2439 = vadd.f32 0.0, %v2438
        %2440 = vmatmul.bf16.gmra.mxu0 %v323
        %v2441 = vpop.f32.mrf.mxu0
        %v2442 = vadd.f32 0.0, %v2441
        %v2443 = vpop.f32.mrf.mxu0
        %v2444 = vadd.f32 0.0, %v2443
        %2445 = vmatmul.bf16.gmra.mxu0 %v326
        %v2446 = vpop.f32.mrf.mxu0
        %v2447 = vadd.f32 0.0, %v2446
        %v2448 = vpop.f32.mrf.mxu0
        %v2449 = vadd.f32 0.0, %v2448
        %2450 = vmatmul.bf16.gmra.mxu0 %v329
        %v2451 = vpop.f32.mrf.mxu0
        %v2452 = vadd.f32 0.0, %v2451
        %v2453 = vpop.f32.mrf.mxu0
        %v2454 = vadd.f32 0.0, %v2453
        %2455 = vmatmul.bf16.gmra.mxu0 %v332
        %v2456 = vpop.f32.mrf.mxu0
        %v2457 = vadd.f32 0.0, %v2456
        %v2458 = vpop.f32.mrf.mxu0
        %v2459 = vadd.f32 0.0, %v2458
        %2460 = vmatmul.bf16.gmra.mxu0 %v335
        %v2461 = vpop.f32.mrf.mxu0
        %v2462 = vadd.f32 0.0, %v2461
        %v2463 = vpop.f32.mrf.mxu0
        %v2464 = vadd.f32 0.0, %v2463
        %2465 = vdwg.mxu0
        %2466 = vmatpush.bf16.msra.mxu0 %v1390
        %2467 = vmatpush.bf16.msra.mxu0 %v1381
        %2468 = vmatpush.bf16.msra.mxu0 %v1372
        %2469 = vmatpush.bf16.msra.mxu0 %v1363
        %2470 = vmatpush.bf16.msra.mxu0 %v1354
        %2471 = vmatpush.bf16.msra.mxu0 %v1345
        %2472 = vmatpush.bf16.msra.mxu0 %v1336
        %2473 = vmatpush.bf16.msra.mxu0 %v1327
        %2474 = vmatmul.bf16.gmra.mxu0 %v315
        %v2475 = vpop.f32.mrf.mxu0
        %v2476 = vadd.f32 %v2427, %v2475
        %v2477 = vpop.f32.mrf.mxu0
        %v2478 = vadd.f32 %v2429, %v2477
        %2479 = vmatmul.bf16.gmra.mxu0 %v318
        %v2480 = vpop.f32.mrf.mxu0
        %v2481 = vadd.f32 %v2432, %v2480
        %v2482 = vpop.f32.mrf.mxu0
        %v2483 = vadd.f32 %v2434, %v2482
        %2484 = vmatmul.bf16.gmra.mxu0 %v321
        %v2485 = vpop.f32.mrf.mxu0
        %v2486 = vadd.f32 %v2437, %v2485
        %v2487 = vpop.f32.mrf.mxu0
        %v2488 = vadd.f32 %v2439, %v2487
        %2489 = vmatmul.bf16.gmra.mxu0 %v324
        %v2490 = vpop.f32.mrf.mxu0
        %v2491 = vadd.f32 %v2442, %v2490
        %v2492 = vpop.f32.mrf.mxu0
        %v2493 = vadd.f32 %v2444, %v2492
        %2494 = vmatmul.bf16.gmra.mxu0 %v327
        %v2495 = vpop.f32.mrf.mxu0
        %v2496 = vadd.f32 %v2447, %v2495
        %v2497 = vpop.f32.mrf.mxu0
        %v2498 = vadd.f32 %v2449, %v2497
        %2499 = vmatmul.bf16.gmra.mxu0 %v330
        %v2500 = vpop.f32.mrf.mxu0
        %v2501 = vadd.f32 %v2452, %v2500
        %v2502 = vpop.f32.mrf.mxu0
        %v2503 = vadd.f32 %v2454, %v2502
        %2504 = vmatmul.bf16.gmra.mxu0 %v333
        %v2505 = vpop.f32.mrf.mxu0
        %v2506 = vadd.f32 %v2457, %v2505
        %v2507 = vpop.f32.mrf.mxu0
        %v2508 = vadd.f32 %v2459, %v2507
        %2509 = vmatmul.bf16.gmra.mxu0 %v336
        %v2510 = vpop.f32.mrf.mxu0
        %v2511 = vadd.f32 %v2462, %v2510
        %v2512 = vpop.f32.mrf.mxu0
        %v2513 = vadd.f32 %v2464, %v2512
        %2514 = vdwg.mxu0
        %2515 = vmatpush.bf16.msra.mxu0 %v1462
        %2516 = vmatpush.bf16.msra.mxu0 %v1453
        %2517 = vmatpush.bf16.msra.mxu0 %v1444
        %2518 = vmatpush.bf16.msra.mxu0 %v1435
        %2519 = vmatpush.bf16.msra.mxu0 %v1426
        %2520 = vmatpush.bf16.msra.mxu0 %v1417
        %2521 = vmatpush.bf16.msra.mxu0 %v1408
        %2522 = vmatpush.bf16.msra.mxu0 %v1399
        %2523 = vmatmul.bf16.gmra.mxu0 %v316
        %v2524 = vpop.f32.mrf.mxu0
        %v2525 = vadd.f32 %v2476, %v2524
        %v2526 = vpop.f32.mrf.mxu0
        %v2527 = vadd.f32 %v2478, %v2526
        %2528 = vmatmul.bf16.gmra.mxu0 %v319
        %v2529 = vpop.f32.mrf.mxu0
        %v2530 = vadd.f32 %v2481, %v2529
        %v2531 = vpop.f32.mrf.mxu0
        %v2532 = vadd.f32 %v2483, %v2531
        %2533 = vmatmul.bf16.gmra.mxu0 %v322
        %v2534 = vpop.f32.mrf.mxu0
        %v2535 = vadd.f32 %v2486, %v2534
        %v2536 = vpop.f32.mrf.mxu0
        %v2537 = vadd.f32 %v2488, %v2536
        %2538 = vmatmul.bf16.gmra.mxu0 %v325
        %v2539 = vpop.f32.mrf.mxu0
        %v2540 = vadd.f32 %v2491, %v2539
        %v2541 = vpop.f32.mrf.mxu0
        %v2542 = vadd.f32 %v2493, %v2541
        %2543 = vmatmul.bf16.gmra.mxu0 %v328
        %v2544 = vpop.f32.mrf.mxu0
        %v2545 = vadd.f32 %v2496, %v2544
        %v2546 = vpop.f32.mrf.mxu0
        %v2547 = vadd.f32 %v2498, %v2546
        %2548 = vmatmul.bf16.gmra.mxu0 %v331
        %v2549 = vpop.f32.mrf.mxu0
        %v2550 = vadd.f32 %v2501, %v2549
        %v2551 = vpop.f32.mrf.mxu0
        %v2552 = vadd.f32 %v2503, %v2551
        %2553 = vmatmul.bf16.gmra.mxu0 %v334
        %v2554 = vpop.f32.mrf.mxu0
        %v2555 = vadd.f32 %v2506, %v2554
        %v2556 = vpop.f32.mrf.mxu0
        %v2557 = vadd.f32 %v2508, %v2556
        %2558 = vmatmul.bf16.gmra.mxu0 %v337
        %v2559 = vpop.f32.mrf.mxu0
        %v2560 = vadd.f32 %v2511, %v2559
        %v2561 = vpop.f32.mrf.mxu0
        %v2562 = vadd.f32 %v2513, %v2561
        %2563 = vdwg.mxu0
        %2564 = vmatpush.bf16.msra.mxu0 %v1319
        %2565 = vmatpush.bf16.msra.mxu0 %v1310
        %2566 = vmatpush.bf16.msra.mxu0 %v1301
        %2567 = vmatpush.bf16.msra.mxu0 %v1292
        %2568 = vmatpush.bf16.msra.mxu0 %v1283
        %2569 = vmatpush.bf16.msra.mxu0 %v1274
        %2570 = vmatpush.bf16.msra.mxu0 %v1265
        %2571 = vmatpush.bf16.msra.mxu0 %v1256
        %2572 = vmatmul.bf16.gmra.mxu0 %v314
        %v2573 = vpop.f32.mrf.mxu0
        %v2574 = vadd.f32 0.0, %v2573
        %v2575 = vpop.f32.mrf.mxu0
        %v2576 = vadd.f32 0.0, %v2575
        %2577 = vmatmul.bf16.gmra.mxu0 %v317
        %v2578 = vpop.f32.mrf.mxu0
        %v2579 = vadd.f32 0.0, %v2578
        %v2580 = vpop.f32.mrf.mxu0
        %v2581 = vadd.f32 0.0, %v2580
        %2582 = vmatmul.bf16.gmra.mxu0 %v320
        %v2583 = vpop.f32.mrf.mxu0
        %v2584 = vadd.f32 0.0, %v2583
        %v2585 = vpop.f32.mrf.mxu0
        %v2586 = vadd.f32 0.0, %v2585
        %2587 = vmatmul.bf16.gmra.mxu0 %v323
        %v2588 = vpop.f32.mrf.mxu0
        %v2589 = vadd.f32 0.0, %v2588
        %v2590 = vpop.f32.mrf.mxu0
        %v2591 = vadd.f32 0.0, %v2590
        %2592 = vmatmul.bf16.gmra.mxu0 %v326
        %v2593 = vpop.f32.mrf.mxu0
        %v2594 = vadd.f32 0.0, %v2593
        %v2595 = vpop.f32.mrf.mxu0
        %v2596 = vadd.f32 0.0, %v2595
        %2597 = vmatmul.bf16.gmra.mxu0 %v329
        %v2598 = vpop.f32.mrf.mxu0
        %v2599 = vadd.f32 0.0, %v2598
        %v2600 = vpop.f32.mrf.mxu0
        %v2601 = vadd.f32 0.0, %v2600
        %2602 = vmatmul.bf16.gmra.mxu0 %v332
        %v2603 = vpop.f32.mrf.mxu0
        %v2604 = vadd.f32 0.0, %v2603
        %v2605 = vpop.f32.mrf.mxu0
        %v2606 = vadd.f32 0.0, %v2605
        %2607 = vmatmul.bf16.gmra.mxu0 %v335
        %v2608 = vpop.f32.mrf.mxu0
        %v2609 = vadd.f32 0.0, %v2608
        %v2610 = vpop.f32.mrf.mxu0
        %v2611 = vadd.f32 0.0, %v2610
        %2612 = vdwg.mxu0
        %2613 = vmatpush.bf16.msra.mxu0 %v1391
        %2614 = vmatpush.bf16.msra.mxu0 %v1382
        %2615 = vmatpush.bf16.msra.mxu0 %v1373
        %2616 = vmatpush.bf16.msra.mxu0 %v1364
        %2617 = vmatpush.bf16.msra.mxu0 %v1355
        %2618 = vmatpush.bf16.msra.mxu0 %v1346
        %2619 = vmatpush.bf16.msra.mxu0 %v1337
        %2620 = vmatpush.bf16.msra.mxu0 %v1328
        %2621 = vmatmul.bf16.gmra.mxu0 %v315
        %v2622 = vpop.f32.mrf.mxu0
        %v2623 = vadd.f32 %v2574, %v2622
        %v2624 = vpop.f32.mrf.mxu0
        %v2625 = vadd.f32 %v2576, %v2624
        %2626 = vmatmul.bf16.gmra.mxu0 %v318
        %v2627 = vpop.f32.mrf.mxu0
        %v2628 = vadd.f32 %v2579, %v2627
        %v2629 = vpop.f32.mrf.mxu0
        %v2630 = vadd.f32 %v2581, %v2629
        %2631 = vmatmul.bf16.gmra.mxu0 %v321
        %v2632 = vpop.f32.mrf.mxu0
        %v2633 = vadd.f32 %v2584, %v2632
        %v2634 = vpop.f32.mrf.mxu0
        %v2635 = vadd.f32 %v2586, %v2634
        %2636 = vmatmul.bf16.gmra.mxu0 %v324
        %v2637 = vpop.f32.mrf.mxu0
        %v2638 = vadd.f32 %v2589, %v2637
        %v2639 = vpop.f32.mrf.mxu0
        %v2640 = vadd.f32 %v2591, %v2639
        %2641 = vmatmul.bf16.gmra.mxu0 %v327
        %v2642 = vpop.f32.mrf.mxu0
        %v2643 = vadd.f32 %v2594, %v2642
        %v2644 = vpop.f32.mrf.mxu0
        %v2645 = vadd.f32 %v2596, %v2644
        %2646 = vmatmul.bf16.gmra.mxu0 %v330
        %v2647 = vpop.f32.mrf.mxu0
        %v2648 = vadd.f32 %v2599, %v2647
        %v2649 = vpop.f32.mrf.mxu0
        %v2650 = vadd.f32 %v2601, %v2649
        %2651 = vmatmul.bf16.gmra.mxu0 %v333
        %v2652 = vpop.f32.mrf.mxu0
        %v2653 = vadd.f32 %v2604, %v2652
        %v2654 = vpop.f32.mrf.mxu0
        %v2655 = vadd.f32 %v2606, %v2654
        %2656 = vmatmul.bf16.gmra.mxu0 %v336
        %v2657 = vpop.f32.mrf.mxu0
        %v2658 = vadd.f32 %v2609, %v2657
        %v2659 = vpop.f32.mrf.mxu0
        %v2660 = vadd.f32 %v2611, %v2659
        %2661 = vdwg.mxu0
        %2662 = vmatpush.bf16.msra.mxu0 %v1463
        %2663 = vmatpush.bf16.msra.mxu0 %v1454
        %2664 = vmatpush.bf16.msra.mxu0 %v1445
        %2665 = vmatpush.bf16.msra.mxu0 %v1436
        %2666 = vmatpush.bf16.msra.mxu0 %v1427
        %2667 = vmatpush.bf16.msra.mxu0 %v1418
        %2668 = vmatpush.bf16.msra.mxu0 %v1409
        %2669 = vmatpush.bf16.msra.mxu0 %v1400
        %2670 = vmatmul.bf16.gmra.mxu0 %v316
        %v2671 = vpop.f32.mrf.mxu0
        %v2672 = vadd.f32 %v2623, %v2671
        %v2673 = vpop.f32.mrf.mxu0
        %v2674 = vadd.f32 %v2625, %v2673
        %2675 = vmatmul.bf16.gmra.mxu0 %v319
        %v2676 = vpop.f32.mrf.mxu0
        %v2677 = vadd.f32 %v2628, %v2676
        %v2678 = vpop.f32.mrf.mxu0
        %v2679 = vadd.f32 %v2630, %v2678
        %2680 = vmatmul.bf16.gmra.mxu0 %v322
        %v2681 = vpop.f32.mrf.mxu0
        %v2682 = vadd.f32 %v2633, %v2681
        %v2683 = vpop.f32.mrf.mxu0
        %v2684 = vadd.f32 %v2635, %v2683
        %2685 = vmatmul.bf16.gmra.mxu0 %v325
        %v2686 = vpop.f32.mrf.mxu0
        %v2687 = vadd.f32 %v2638, %v2686
        %v2688 = vpop.f32.mrf.mxu0
        %v2689 = vadd.f32 %v2640, %v2688
        %2690 = vmatmul.bf16.gmra.mxu0 %v328
        %v2691 = vpop.f32.mrf.mxu0
        %v2692 = vadd.f32 %v2643, %v2691
        %v2693 = vpop.f32.mrf.mxu0
        %v2694 = vadd.f32 %v2645, %v2693
        %2695 = vmatmul.bf16.gmra.mxu0 %v331
        %v2696 = vpop.f32.mrf.mxu0
        %v2697 = vadd.f32 %v2648, %v2696
        %v2698 = vpop.f32.mrf.mxu0
        %v2699 = vadd.f32 %v2650, %v2698
        %2700 = vmatmul.bf16.gmra.mxu0 %v334
        %v2701 = vpop.f32.mrf.mxu0
        %v2702 = vadd.f32 %v2653, %v2701
        %v2703 = vpop.f32.mrf.mxu0
        %v2704 = vadd.f32 %v2655, %v2703
        %2705 = vmatmul.bf16.gmra.mxu0 %v337
        %v2706 = vpop.f32.mrf.mxu0
        %v2707 = vadd.f32 %v2658, %v2706
        %v2708 = vpop.f32.mrf.mxu0
        %v2709 = vadd.f32 %v2660, %v2708
        %2710 = vdwg.mxu0
        %2711 = vmatpush.bf16.msra.mxu0 %v1320
        %2712 = vmatpush.bf16.msra.mxu0 %v1311
        %2713 = vmatpush.bf16.msra.mxu0 %v1302
        %2714 = vmatpush.bf16.msra.mxu0 %v1293
        %2715 = vmatpush.bf16.msra.mxu0 %v1284
        %2716 = vmatpush.bf16.msra.mxu0 %v1275
        %2717 = vmatpush.bf16.msra.mxu0 %v1266
        %2718 = vmatpush.bf16.msra.mxu0 %v1257
        %2719 = vmatmul.bf16.gmra.mxu0 %v314
        %v2720 = vpop.f32.mrf.mxu0
        %v2721 = vadd.f32 0.0, %v2720
        %v2722 = vpop.f32.mrf.mxu0
        %v2723 = vadd.f32 0.0, %v2722
        %2724 = vmatmul.bf16.gmra.mxu0 %v317
        %v2725 = vpop.f32.mrf.mxu0
        %v2726 = vadd.f32 0.0, %v2725
        %v2727 = vpop.f32.mrf.mxu0
        %v2728 = vadd.f32 0.0, %v2727
        %2729 = vmatmul.bf16.gmra.mxu0 %v320
        %v2730 = vpop.f32.mrf.mxu0
        %v2731 = vadd.f32 0.0, %v2730
        %v2732 = vpop.f32.mrf.mxu0
        %v2733 = vadd.f32 0.0, %v2732
        %2734 = vmatmul.bf16.gmra.mxu0 %v323
        %v2735 = vpop.f32.mrf.mxu0
        %v2736 = vadd.f32 0.0, %v2735
        %v2737 = vpop.f32.mrf.mxu0
        %v2738 = vadd.f32 0.0, %v2737
        %2739 = vmatmul.bf16.gmra.mxu0 %v326
        %v2740 = vpop.f32.mrf.mxu0
        %v2741 = vadd.f32 0.0, %v2740
        %v2742 = vpop.f32.mrf.mxu0
        %v2743 = vadd.f32 0.0, %v2742
        %2744 = vmatmul.bf16.gmra.mxu0 %v329
        %v2745 = vpop.f32.mrf.mxu0
        %v2746 = vadd.f32 0.0, %v2745
        %v2747 = vpop.f32.mrf.mxu0
        %v2748 = vadd.f32 0.0, %v2747
        %2749 = vmatmul.bf16.gmra.mxu0 %v332
        %v2750 = vpop.f32.mrf.mxu0
        %v2751 = vadd.f32 0.0, %v2750
        %v2752 = vpop.f32.mrf.mxu0
        %v2753 = vadd.f32 0.0, %v2752
        %2754 = vmatmul.bf16.gmra.mxu0 %v335
        %v2755 = vpop.f32.mrf.mxu0
        %v2756 = vadd.f32 0.0, %v2755
        %v2757 = vpop.f32.mrf.mxu0
        %v2758 = vadd.f32 0.0, %v2757
        %2759 = vdwg.mxu0
        %2760 = vmatpush.bf16.msra.mxu0 %v1392
        %2761 = vmatpush.bf16.msra.mxu0 %v1383
        %2762 = vmatpush.bf16.msra.mxu0 %v1374
        %2763 = vmatpush.bf16.msra.mxu0 %v1365
        %2764 = vmatpush.bf16.msra.mxu0 %v1356
        %2765 = vmatpush.bf16.msra.mxu0 %v1347
        %2766 = vmatpush.bf16.msra.mxu0 %v1338
        %2767 = vmatpush.bf16.msra.mxu0 %v1329
        %2768 = vmatmul.bf16.gmra.mxu0 %v315
        %v2769 = vpop.f32.mrf.mxu0
        %v2770 = vadd.f32 %v2721, %v2769
        %v2771 = vpop.f32.mrf.mxu0
        %v2772 = vadd.f32 %v2723, %v2771
        %2773 = vmatmul.bf16.gmra.mxu0 %v318
        %v2774 = vpop.f32.mrf.mxu0
        %v2775 = vadd.f32 %v2726, %v2774
        %v2776 = vpop.f32.mrf.mxu0
        %v2777 = vadd.f32 %v2728, %v2776
        %2778 = vmatmul.bf16.gmra.mxu0 %v321
        %v2779 = vpop.f32.mrf.mxu0
        %v2780 = vadd.f32 %v2731, %v2779
        %v2781 = vpop.f32.mrf.mxu0
        %v2782 = vadd.f32 %v2733, %v2781
        %2783 = vmatmul.bf16.gmra.mxu0 %v324
        %v2784 = vpop.f32.mrf.mxu0
        %v2785 = vadd.f32 %v2736, %v2784
        %v2786 = vpop.f32.mrf.mxu0
        %v2787 = vadd.f32 %v2738, %v2786
        %2788 = vmatmul.bf16.gmra.mxu0 %v327
        %v2789 = vpop.f32.mrf.mxu0
        %v2790 = vadd.f32 %v2741, %v2789
        %v2791 = vpop.f32.mrf.mxu0
        %v2792 = vadd.f32 %v2743, %v2791
        %2793 = vmatmul.bf16.gmra.mxu0 %v330
        %v2794 = vpop.f32.mrf.mxu0
        %v2795 = vadd.f32 %v2746, %v2794
        %v2796 = vpop.f32.mrf.mxu0
        %v2797 = vadd.f32 %v2748, %v2796
        %2798 = vmatmul.bf16.gmra.mxu0 %v333
        %v2799 = vpop.f32.mrf.mxu0
        %v2800 = vadd.f32 %v2751, %v2799
        %v2801 = vpop.f32.mrf.mxu0
        %v2802 = vadd.f32 %v2753, %v2801
        %2803 = vmatmul.bf16.gmra.mxu0 %v336
        %v2804 = vpop.f32.mrf.mxu0
        %v2805 = vadd.f32 %v2756, %v2804
        %v2806 = vpop.f32.mrf.mxu0
        %v2807 = vadd.f32 %v2758, %v2806
        %2808 = vdwg.mxu0
        %2809 = vmatpush.bf16.msra.mxu0 %v1464
        %2810 = vmatpush.bf16.msra.mxu0 %v1455
        %2811 = vmatpush.bf16.msra.mxu0 %v1446
        %2812 = vmatpush.bf16.msra.mxu0 %v1437
        %2813 = vmatpush.bf16.msra.mxu0 %v1428
        %2814 = vmatpush.bf16.msra.mxu0 %v1419
        %2815 = vmatpush.bf16.msra.mxu0 %v1410
        %2816 = vmatpush.bf16.msra.mxu0 %v1401
        %2817 = vmatmul.bf16.gmra.mxu0 %v316
        %v2818 = vpop.f32.mrf.mxu0
        %v2819 = vadd.f32 %v2770, %v2818
        %v2820 = vpop.f32.mrf.mxu0
        %v2821 = vadd.f32 %v2772, %v2820
        %2822 = vmatmul.bf16.gmra.mxu0 %v319
        %v2823 = vpop.f32.mrf.mxu0
        %v2824 = vadd.f32 %v2775, %v2823
        %v2825 = vpop.f32.mrf.mxu0
        %v2826 = vadd.f32 %v2777, %v2825
        %2827 = vmatmul.bf16.gmra.mxu0 %v322
        %v2828 = vpop.f32.mrf.mxu0
        %v2829 = vadd.f32 %v2780, %v2828
        %v2830 = vpop.f32.mrf.mxu0
        %v2831 = vadd.f32 %v2782, %v2830
        %2832 = vmatmul.bf16.gmra.mxu0 %v325
        %v2833 = vpop.f32.mrf.mxu0
        %v2834 = vadd.f32 %v2785, %v2833
        %v2835 = vpop.f32.mrf.mxu0
        %v2836 = vadd.f32 %v2787, %v2835
        %2837 = vmatmul.bf16.gmra.mxu0 %v328
        %v2838 = vpop.f32.mrf.mxu0
        %v2839 = vadd.f32 %v2790, %v2838
        %v2840 = vpop.f32.mrf.mxu0
        %v2841 = vadd.f32 %v2792, %v2840
        %2842 = vmatmul.bf16.gmra.mxu0 %v331
        %v2843 = vpop.f32.mrf.mxu0
        %v2844 = vadd.f32 %v2795, %v2843
        %v2845 = vpop.f32.mrf.mxu0
        %v2846 = vadd.f32 %v2797, %v2845
        %2847 = vmatmul.bf16.gmra.mxu0 %v334
        %v2848 = vpop.f32.mrf.mxu0
        %v2849 = vadd.f32 %v2800, %v2848
        %v2850 = vpop.f32.mrf.mxu0
        %v2851 = vadd.f32 %v2802, %v2850
        %2852 = vmatmul.bf16.gmra.mxu0 %v337
        %v2853 = vpop.f32.mrf.mxu0
        %v2854 = vadd.f32 %v2805, %v2853
        %v2855 = vpop.f32.mrf.mxu0
        %v2856 = vadd.f32 %v2807, %v2855
        %2857 = vdwg.mxu0
        %2858 = vmatpush.bf16.msra.mxu0 %v1321
        %2859 = vmatpush.bf16.msra.mxu0 %v1312
        %2860 = vmatpush.bf16.msra.mxu0 %v1303
        %2861 = vmatpush.bf16.msra.mxu0 %v1294
        %2862 = vmatpush.bf16.msra.mxu0 %v1285
        %2863 = vmatpush.bf16.msra.mxu0 %v1276
        %2864 = vmatpush.bf16.msra.mxu0 %v1267
        %2865 = vmatpush.bf16.msra.mxu0 %v1258
        %2866 = vmatmul.bf16.gmra.mxu0 %v314
        %v2867 = vpop.f32.mrf.mxu0
        %v2868 = vadd.f32 0.0, %v2867
        %v2869 = vpop.f32.mrf.mxu0
        %v2870 = vadd.f32 0.0, %v2869
        %2871 = vmatmul.bf16.gmra.mxu0 %v317
        %v2872 = vpop.f32.mrf.mxu0
        %v2873 = vadd.f32 0.0, %v2872
        %v2874 = vpop.f32.mrf.mxu0
        %v2875 = vadd.f32 0.0, %v2874
        %2876 = vmatmul.bf16.gmra.mxu0 %v320
        %v2877 = vpop.f32.mrf.mxu0
        %v2878 = vadd.f32 0.0, %v2877
        %v2879 = vpop.f32.mrf.mxu0
        %v2880 = vadd.f32 0.0, %v2879
        %2881 = vmatmul.bf16.gmra.mxu0 %v323
        %v2882 = vpop.f32.mrf.mxu0
        %v2883 = vadd.f32 0.0, %v2882
        %v2884 = vpop.f32.mrf.mxu0
        %v2885 = vadd.f32 0.0, %v2884
        %2886 = vmatmul.bf16.gmra.mxu0 %v326
        %v2887 = vpop.f32.mrf.mxu0
        %v2888 = vadd.f32 0.0, %v2887
        %v2889 = vpop.f32.mrf.mxu0
        %v2890 = vadd.f32 0.0, %v2889
        %2891 = vmatmul.bf16.gmra.mxu0 %v329
        %v2892 = vpop.f32.mrf.mxu0
        %v2893 = vadd.f32 0.0, %v2892
        %v2894 = vpop.f32.mrf.mxu0
        %v2895 = vadd.f32 0.0, %v2894
        %2896 = vmatmul.bf16.gmra.mxu0 %v332
        %v2897 = vpop.f32.mrf.mxu0
        %v2898 = vadd.f32 0.0, %v2897
        %v2899 = vpop.f32.mrf.mxu0
        %v2900 = vadd.f32 0.0, %v2899
        %2901 = vmatmul.bf16.gmra.mxu0 %v335
        %v2902 = vpop.f32.mrf.mxu0
        %v2903 = vadd.f32 0.0, %v2902
        %v2904 = vpop.f32.mrf.mxu0
        %v2905 = vadd.f32 0.0, %v2904
        %2906 = vdwg.mxu0
        %2907 = vmatpush.bf16.msra.mxu0 %v1393
        %2908 = vmatpush.bf16.msra.mxu0 %v1384
        %2909 = vmatpush.bf16.msra.mxu0 %v1375
        %2910 = vmatpush.bf16.msra.mxu0 %v1366
        %2911 = vmatpush.bf16.msra.mxu0 %v1357
        %2912 = vmatpush.bf16.msra.mxu0 %v1348
        %2913 = vmatpush.bf16.msra.mxu0 %v1339
        %2914 = vmatpush.bf16.msra.mxu0 %v1330
        %2915 = vmatmul.bf16.gmra.mxu0 %v315
        %v2916 = vpop.f32.mrf.mxu0
        %v2917 = vadd.f32 %v2868, %v2916
        %v2918 = vpop.f32.mrf.mxu0
        %v2919 = vadd.f32 %v2870, %v2918
        %2920 = vmatmul.bf16.gmra.mxu0 %v318
        %v2921 = vpop.f32.mrf.mxu0
        %v2922 = vadd.f32 %v2873, %v2921
        %v2923 = vpop.f32.mrf.mxu0
        %v2924 = vadd.f32 %v2875, %v2923
        %2925 = vmatmul.bf16.gmra.mxu0 %v321
        %v2926 = vpop.f32.mrf.mxu0
        %v2927 = vadd.f32 %v2878, %v2926
        %v2928 = vpop.f32.mrf.mxu0
        %v2929 = vadd.f32 %v2880, %v2928
        %2930 = vmatmul.bf16.gmra.mxu0 %v324
        %v2931 = vpop.f32.mrf.mxu0
        %v2932 = vadd.f32 %v2883, %v2931
        %v2933 = vpop.f32.mrf.mxu0
        %v2934 = vadd.f32 %v2885, %v2933
        %2935 = vmatmul.bf16.gmra.mxu0 %v327
        %v2936 = vpop.f32.mrf.mxu0
        %v2937 = vadd.f32 %v2888, %v2936
        %v2938 = vpop.f32.mrf.mxu0
        %v2939 = vadd.f32 %v2890, %v2938
        %2940 = vmatmul.bf16.gmra.mxu0 %v330
        %v2941 = vpop.f32.mrf.mxu0
        %v2942 = vadd.f32 %v2893, %v2941
        %v2943 = vpop.f32.mrf.mxu0
        %v2944 = vadd.f32 %v2895, %v2943
        %2945 = vmatmul.bf16.gmra.mxu0 %v333
        %v2946 = vpop.f32.mrf.mxu0
        %v2947 = vadd.f32 %v2898, %v2946
        %v2948 = vpop.f32.mrf.mxu0
        %v2949 = vadd.f32 %v2900, %v2948
        %2950 = vmatmul.bf16.gmra.mxu0 %v336
        %v2951 = vpop.f32.mrf.mxu0
        %v2952 = vadd.f32 %v2903, %v2951
        %v2953 = vpop.f32.mrf.mxu0
        %v2954 = vadd.f32 %v2905, %v2953
        %2955 = vdwg.mxu0
        %2956 = vmatpush.bf16.msra.mxu0 %v1465
        %2957 = vmatpush.bf16.msra.mxu0 %v1456
        %2958 = vmatpush.bf16.msra.mxu0 %v1447
        %2959 = vmatpush.bf16.msra.mxu0 %v1438
        %2960 = vmatpush.bf16.msra.mxu0 %v1429
        %2961 = vmatpush.bf16.msra.mxu0 %v1420
        %2962 = vmatpush.bf16.msra.mxu0 %v1411
        %2963 = vmatpush.bf16.msra.mxu0 %v1402
        %2964 = vmatmul.bf16.gmra.mxu0 %v316
        %v2965 = vpop.f32.mrf.mxu0
        %v2966 = vadd.f32 %v2917, %v2965
        %v2967 = vpop.f32.mrf.mxu0
        %v2968 = vadd.f32 %v2919, %v2967
        %2969 = vmatmul.bf16.gmra.mxu0 %v319
        %v2970 = vpop.f32.mrf.mxu0
        %v2971 = vadd.f32 %v2922, %v2970
        %v2972 = vpop.f32.mrf.mxu0
        %v2973 = vadd.f32 %v2924, %v2972
        %2974 = vmatmul.bf16.gmra.mxu0 %v322
        %v2975 = vpop.f32.mrf.mxu0
        %v2976 = vadd.f32 %v2927, %v2975
        %v2977 = vpop.f32.mrf.mxu0
        %v2978 = vadd.f32 %v2929, %v2977
        %2979 = vmatmul.bf16.gmra.mxu0 %v325
        %v2980 = vpop.f32.mrf.mxu0
        %v2981 = vadd.f32 %v2932, %v2980
        %v2982 = vpop.f32.mrf.mxu0
        %v2983 = vadd.f32 %v2934, %v2982
        %2984 = vmatmul.bf16.gmra.mxu0 %v328
        %v2985 = vpop.f32.mrf.mxu0
        %v2986 = vadd.f32 %v2937, %v2985
        %v2987 = vpop.f32.mrf.mxu0
        %v2988 = vadd.f32 %v2939, %v2987
        %2989 = vmatmul.bf16.gmra.mxu0 %v331
        %v2990 = vpop.f32.mrf.mxu0
        %v2991 = vadd.f32 %v2942, %v2990
        %v2992 = vpop.f32.mrf.mxu0
        %v2993 = vadd.f32 %v2944, %v2992
        %2994 = vmatmul.bf16.gmra.mxu0 %v334
        %v2995 = vpop.f32.mrf.mxu0
        %v2996 = vadd.f32 %v2947, %v2995
        %v2997 = vpop.f32.mrf.mxu0
        %v2998 = vadd.f32 %v2949, %v2997
        %2999 = vmatmul.bf16.gmra.mxu0 %v337
        %v3000 = vpop.f32.mrf.mxu0
        %v3001 = vadd.f32 %v2952, %v3000
        %v3002 = vpop.f32.mrf.mxu0
        %v3003 = vadd.f32 %v2954, %v3002
        %3004 = vdwg.mxu0
        %v3005 = vpack.c.bf16 %v1937, %v1790
        %v3006 = vpack.c.bf16 %v2231, %v2084
        %v3007 = vpack.c.bf16 %v2525, %v2378
        %v3008 = vpack.c.bf16 %v2819, %v2672
        %v3009 = vpack.c.bf16 %v2966, %v2966
        %v3010 = vpack.c.bf16 %v1939, %v1792
        %v3011 = vpack.c.bf16 %v2233, %v2086
        %v3012 = vpack.c.bf16 %v2527, %v2380
        %v3013 = vpack.c.bf16 %v2821, %v2674
        %v3014 = vpack.c.bf16 %v2968, %v2968
        %v3015 = vpack.c.bf16 %v1942, %v1795
        %v3016 = vpack.c.bf16 %v2236, %v2089
        %v3017 = vpack.c.bf16 %v2530, %v2383
        %v3018 = vpack.c.bf16 %v2824, %v2677
        %v3019 = vpack.c.bf16 %v2971, %v2971
        %v3020 = vpack.c.bf16 %v1944, %v1797
        %v3021 = vpack.c.bf16 %v2238, %v2091
        %v3022 = vpack.c.bf16 %v2532, %v2385
        %v3023 = vpack.c.bf16 %v2826, %v2679
        %v3024 = vpack.c.bf16 %v2973, %v2973
        %v3025 = vpack.c.bf16 %v1947, %v1800
        %v3026 = vpack.c.bf16 %v2241, %v2094
        %v3027 = vpack.c.bf16 %v2535, %v2388
        %v3028 = vpack.c.bf16 %v2829, %v2682
        %v3029 = vpack.c.bf16 %v2976, %v2976
        %v3030 = vpack.c.bf16 %v1949, %v1802
        %v3031 = vpack.c.bf16 %v2243, %v2096
        %v3032 = vpack.c.bf16 %v2537, %v2390
        %v3033 = vpack.c.bf16 %v2831, %v2684
        %v3034 = vpack.c.bf16 %v2978, %v2978
        %v3035 = vpack.c.bf16 %v1952, %v1805
        %v3036 = vpack.c.bf16 %v2246, %v2099
        %v3037 = vpack.c.bf16 %v2540, %v2393
        %v3038 = vpack.c.bf16 %v2834, %v2687
        %v3039 = vpack.c.bf16 %v2981, %v2981
        %v3040 = vpack.c.bf16 %v1954, %v1807
        %v3041 = vpack.c.bf16 %v2248, %v2101
        %v3042 = vpack.c.bf16 %v2542, %v2395
        %v3043 = vpack.c.bf16 %v2836, %v2689
        %v3044 = vpack.c.bf16 %v2983, %v2983
        %v3045 = vpack.c.bf16 %v1957, %v1810
        %v3046 = vpack.c.bf16 %v2251, %v2104
        %v3047 = vpack.c.bf16 %v2545, %v2398
        %v3048 = vpack.c.bf16 %v2839, %v2692
        %v3049 = vpack.c.bf16 %v2986, %v2986
        %v3050 = vpack.c.bf16 %v1959, %v1812
        %v3051 = vpack.c.bf16 %v2253, %v2106
        %v3052 = vpack.c.bf16 %v2547, %v2400
        %v3053 = vpack.c.bf16 %v2841, %v2694
        %v3054 = vpack.c.bf16 %v2988, %v2988
        %v3055 = vpack.c.bf16 %v1962, %v1815
        %v3056 = vpack.c.bf16 %v2256, %v2109
        %v3057 = vpack.c.bf16 %v2550, %v2403
        %v3058 = vpack.c.bf16 %v2844, %v2697
        %v3059 = vpack.c.bf16 %v2991, %v2991
        %v3060 = vpack.c.bf16 %v1964, %v1817
        %v3061 = vpack.c.bf16 %v2258, %v2111
        %v3062 = vpack.c.bf16 %v2552, %v2405
        %v3063 = vpack.c.bf16 %v2846, %v2699
        %v3064 = vpack.c.bf16 %v2993, %v2993
        %v3065 = vpack.c.bf16 %v1967, %v1820
        %v3066 = vpack.c.bf16 %v2261, %v2114
        %v3067 = vpack.c.bf16 %v2555, %v2408
        %v3068 = vpack.c.bf16 %v2849, %v2702
        %v3069 = vpack.c.bf16 %v2996, %v2996
        %v3070 = vpack.c.bf16 %v1969, %v1822
        %v3071 = vpack.c.bf16 %v2263, %v2116
        %v3072 = vpack.c.bf16 %v2557, %v2410
        %v3073 = vpack.c.bf16 %v2851, %v2704
        %v3074 = vpack.c.bf16 %v2998, %v2998
        %v3075 = vpack.c.bf16 %v1972, %v1825
        %v3076 = vpack.c.bf16 %v2266, %v2119
        %v3077 = vpack.c.bf16 %v2560, %v2413
        %v3078 = vpack.c.bf16 %v2854, %v2707
        %v3079 = vpack.c.bf16 %v3001, %v3001
        %v3080 = vpack.c.bf16 %v1974, %v1827
        %v3081 = vpack.c.bf16 %v2268, %v2121
        %v3082 = vpack.c.bf16 %v2562, %v2415
        %v3083 = vpack.c.bf16 %v2856, %v2709
        %v3084 = vpack.c.bf16 %v3003, %v3003
        %3085 = vst [vmem:[#allocation2] sm:$0xff] %v3005
        %3086 = vst [vmem:[#allocation2 + $0x8] sm:$0xff] %v3006
        %3087 = vst [vmem:[#allocation2 + $0x10] sm:$0xff] %v3007
        %3088 = vst [vmem:[#allocation2 + $0x18] sm:$0xff] %v3008
        %3089 = vst [vmem:[#allocation2 + $0x20] sm:$0xf] %v3009
        %3090 = vst [vmem:[#allocation2 + $0x24] sm:$0xff] %v3010
        %3091 = vst [vmem:[#allocation2 + $0x2c] sm:$0xff] %v3011
        %3092 = vst [vmem:[#allocation2 + $0x34] sm:$0xff] %v3012
        %3093 = vst [vmem:[#allocation2 + $0x3c] sm:$0xff] %v3013
        %3094 = vst [vmem:[#allocation2 + $0x44] sm:$0xf] %v3014
        %3095 = vst [vmem:[#allocation2 + $0x48] sm:$0xff] %v3015
        %3096 = vst [vmem:[#allocation2 + $0x50] sm:$0xff] %v3016
        %3097 = vst [vmem:[#allocation2 + $0x58] sm:$0xff] %v3017
        %3098 = vst [vmem:[#allocation2 + $0x60] sm:$0xff] %v3018
        %3099 = vst [vmem:[#allocation2 + $0x68] sm:$0xf] %v3019
        %3100 = vst [vmem:[#allocation2 + $0x6c] sm:$0xff] %v3020
        %3101 = vst [vmem:[#allocation2 + $0x74] sm:$0xff] %v3021
        %3102 = vst [vmem:[#allocation2 + $0x7c] sm:$0xff] %v3022
        %3103 = vst [vmem:[#allocation2 + $0x84] sm:$0xff] %v3023
        %3104 = vst [vmem:[#allocation2 + $0x8c] sm:$0xf] %v3024
        %3105 = vst [vmem:[#allocation2 + $0x90] sm:$0xff] %v3025
        %3106 = vst [vmem:[#allocation2 + $0x98] sm:$0xff] %v3026
        %3107 = vst [vmem:[#allocation2 + $0xa0] sm:$0xff] %v3027
        %3108 = vst [vmem:[#allocation2 + $0xa8] sm:$0xff] %v3028
        %3109 = vst [vmem:[#allocation2 + $0xb0] sm:$0xf] %v3029
        %3110 = vst [vmem:[#allocation2 + $0xb4] sm:$0xff] %v3030
        %3111 = vst [vmem:[#allocation2 + $0xbc] sm:$0xff] %v3031
        %3112 = vst [vmem:[#allocation2 + $0xc4] sm:$0xff] %v3032
        %3113 = vst [vmem:[#allocation2 + $0xcc] sm:$0xff] %v3033
        %3114 = vst [vmem:[#allocation2 + $0xd4] sm:$0xf] %v3034
        %3115 = vst [vmem:[#allocation2 + $0xd8] sm:$0xff] %v3035
        %3116 = vst [vmem:[#allocation2 + $0xe0] sm:$0xff] %v3036
        %3117 = vst [vmem:[#allocation2 + $0xe8] sm:$0xff] %v3037
        %3118 = vst [vmem:[#allocation2 + $0xf0] sm:$0xff] %v3038
        %3119 = vst [vmem:[#allocation2 + $0xf8] sm:$0xf] %v3039
        %3120 = vst [vmem:[#allocation2 + $0xfc] sm:$0xff] %v3040
        %3121 = vst [vmem:[#allocation2 + $0x104] sm:$0xff] %v3041
        %3122 = vst [vmem:[#allocation2 + $0x10c] sm:$0xff] %v3042
        %3123 = vst [vmem:[#allocation2 + $0x114] sm:$0xff] %v3043
        %3124 = vst [vmem:[#allocation2 + $0x11c] sm:$0xf] %v3044
        %3125 = vst [vmem:[#allocation2 + $0x120] sm:$0xff] %v3045
        %3126 = vst [vmem:[#allocation2 + $0x128] sm:$0xff] %v3046
        %3127 = vst [vmem:[#allocation2 + $0x130] sm:$0xff] %v3047
        %3128 = vst [vmem:[#allocation2 + $0x138] sm:$0xff] %v3048
        %3129 = vst [vmem:[#allocation2 + $0x140] sm:$0xf] %v3049
        %3130 = vst [vmem:[#allocation2 + $0x144] sm:$0xff] %v3050
        %3131 = vst [vmem:[#allocation2 + $0x14c] sm:$0xff] %v3051
        %3132 = vst [vmem:[#allocation2 + $0x154] sm:$0xff] %v3052
        %3133 = vst [vmem:[#allocation2 + $0x15c] sm:$0xff] %v3053
        %3134 = vst [vmem:[#allocation2 + $0x164] sm:$0xf] %v3054
        %3135 = vst [vmem:[#allocation2 + $0x168] sm:$0xff] %v3055
        %3136 = vst [vmem:[#allocation2 + $0x170] sm:$0xff] %v3056
        %3137 = vst [vmem:[#allocation2 + $0x178] sm:$0xff] %v3057
        %3138 = vst [vmem:[#allocation2 + $0x180] sm:$0xff] %v3058
        %3139 = vst [vmem:[#allocation2 + $0x188] sm:$0xf] %v3059
        %3140 = vst [vmem:[#allocation2 + $0x18c] sm:$0xff] %v3060
        %3141 = vst [vmem:[#allocation2 + $0x194] sm:$0xff] %v3061
        %3142 = vst [vmem:[#allocation2 + $0x19c] sm:$0xff] %v3062
        %3143 = vst [vmem:[#allocation2 + $0x1a4] sm:$0xff] %v3063
        %3144 = vst [vmem:[#allocation2 + $0x1ac] sm:$0xf] %v3064
        %3145 = vst [vmem:[#allocation2 + $0x1b0] sm:$0xff] %v3065
        %3146 = vst [vmem:[#allocation2 + $0x1b8] sm:$0xff] %v3066
        %3147 = vst [vmem:[#allocation2 + $0x1c0] sm:$0xff] %v3067
        %3148 = vst [vmem:[#allocation2 + $0x1c8] sm:$0xff] %v3068
        %3149 = vst [vmem:[#allocation2 + $0x1d0] sm:$0xf] %v3069
        %3150 = vst [vmem:[#allocation2 + $0x1d4] sm:$0xff] %v3070
        %3151 = vst [vmem:[#allocation2 + $0x1dc] sm:$0xff] %v3071
        %3152 = vst [vmem:[#allocation2 + $0x1e4] sm:$0xff] %v3072
        %3153 = vst [vmem:[#allocation2 + $0x1ec] sm:$0xff] %v3073
        %3154 = vst [vmem:[#allocation2 + $0x1f4] sm:$0xf] %v3074
        %3155 = vst [vmem:[#allocation2 + $0x1f8] sm:$0xff] %v3075
        %3156 = vst [vmem:[#allocation2 + $0x200] sm:$0xff] %v3076
        %3157 = vst [vmem:[#allocation2 + $0x208] sm:$0xff] %v3077
        %3158 = vst [vmem:[#allocation2 + $0x210] sm:$0xff] %v3078
        %3159 = vst [vmem:[#allocation2 + $0x218] sm:$0xf] %v3079
        %3160 = vst [vmem:[#allocation2 + $0x21c] sm:$0xff] %v3080
        %3161 = vst [vmem:[#allocation2 + $0x224] sm:$0xff] %v3081
        %3162 = vst [vmem:[#allocation2 + $0x22c] sm:$0xff] %v3082
        %3163 = vst [vmem:[#allocation2 + $0x234] sm:$0xff] %v3083
        %3164 = vst [vmem:[#allocation2 + $0x23c] sm:$0xf] %v3084
        %v3165 = vlaneseq
        %v3166 = vshrl.u32 %v3165, 7
        %v3167 = vadd.s32 %v3166, 8
        %v3168 = vadd.s32 %v3166, 16
        %v3169 = vadd.s32 %v3166, 24
        %v3170 = vadd.s32 %v3166, 32
        %v3171 = vadd.s32 %v3166, 40
        %v3172 = vadd.s32 %v3166, 48
        %v3173 = vadd.s32 %v3166, 56
        %v3174 = vadd.s32 %v3166, 64
        %v3175 = vadd.s32 %v3166, 72
        %v3176 = vadd.s32 %v3166, 80
        %v3177 = vadd.s32 %v3166, 88
        %v3178 = vadd.s32 %v3166, 96
        %v3179 = vadd.s32 %v3166, 104
        %v3180 = vadd.s32 %v3166, 112
        %v3181 = vadd.s32 %v3166, 120
        %v3182 = vlaneseq
        %v3183 = vand.u32 %v3182, 127
        %vm3184 = vcmp.le.s32.totalorder %v3183, %v3166
        %vm3185 = vcmp.le.s32.totalorder %v3183, %v3167
        %vm3186 = vcmp.le.s32.totalorder %v3183, %v3168
        %vm3187 = vcmp.le.s32.totalorder %v3183, %v3169
        %vm3188 = vcmp.le.s32.totalorder %v3183, %v3170
        %vm3189 = vcmp.le.s32.totalorder %v3183, %v3171
        %vm3190 = vcmp.le.s32.totalorder %v3183, %v3172
        %vm3191 = vcmp.le.s32.totalorder %v3183, %v3173
        %vm3192 = vcmp.le.s32.totalorder %v3183, %v3174
        %vm3193 = vcmp.le.s32.totalorder %v3183, %v3175
        %vm3194 = vcmp.le.s32.totalorder %v3183, %v3176
        %vm3195 = vcmp.le.s32.totalorder %v3183, %v3177
        %vm3196 = vcmp.le.s32.totalorder %v3183, %v3178
        %vm3197 = vcmp.le.s32.totalorder %v3183, %v3179
        %vm3198 = vcmp.le.s32.totalorder %v3183, %v3180
        %vm3199 = vcmp.le.s32.totalorder %v3183, %v3181
        %v3200 = vld [vmem:[#allocation2] sm:$0xf]
        %v3201 = vld [vmem:[#allocation2 + $0x24] sm:$0xf]
        %v3202 = vld [vmem:[#allocation2 + $0x48] sm:$0xf]
        %v3203 = vld [vmem:[#allocation2 + $0x6c] sm:$0xf]
        %v3204 = vld [vmem:[#allocation2 + $0x90] sm:$0xf]
        %v3205 = vld [vmem:[#allocation2 + $0xb4] sm:$0xf]
        %v3206 = vld [vmem:[#allocation2 + $0xd8] sm:$0xf]
        %v3207 = vld [vmem:[#allocation2 + $0xfc] sm:$0xf]
        %v3208 = vld [vmem:[#allocation2 + $0x120] sm:$0xf]
        %v3209 = vld [vmem:[#allocation2 + $0x144] sm:$0xf]
        %v3210 = vld [vmem:[#allocation2 + $0x168] sm:$0xf]
        %v3211 = vld [vmem:[#allocation2 + $0x18c] sm:$0xf]
        %v3212 = vld [vmem:[#allocation2 + $0x1b0] sm:$0xf]
        %v3213 = vld [vmem:[#allocation2 + $0x1d4] sm:$0xf]
        %v3214 = vld [vmem:[#allocation2 + $0x1f8] sm:$0xf]
        %v3215 = vld [vmem:[#allocation2 + $0x21c] sm:$0xf]
        %v3216 = vld [vmem:[#allocation2 + $0xc] sm:$0xf]
        %v3217 = vld [vmem:[#allocation2 + $0x30] sm:$0xf]
        %v3218 = vld [vmem:[#allocation2 + $0x54] sm:$0xf]
        %v3219 = vld [vmem:[#allocation2 + $0x78] sm:$0xf]
        %v3220 = vld [vmem:[#allocation2 + $0x9c] sm:$0xf]
        %v3221 = vld [vmem:[#allocation2 + $0xc0] sm:$0xf]
        %v3222 = vld [vmem:[#allocation2 + $0xe4] sm:$0xf]
        %v3223 = vld [vmem:[#allocation2 + $0x108] sm:$0xf]
        %v3224 = vld [vmem:[#allocation2 + $0x12c] sm:$0xf]
        %v3225 = vld [vmem:[#allocation2 + $0x150] sm:$0xf]
        %v3226 = vld [vmem:[#allocation2 + $0x174] sm:$0xf]
        %v3227 = vld [vmem:[#allocation2 + $0x198] sm:$0xf]
        %v3228 = vld [vmem:[#allocation2 + $0x1bc] sm:$0xf]
        %v3229 = vld [vmem:[#allocation2 + $0x1e0] sm:$0xf]
        %v3230 = vld [vmem:[#allocation2 + $0x204] sm:$0xf]
        %v3231 = vld [vmem:[#allocation2 + $0x228] sm:$0xf]
        %v3232 = vld [vmem:[#allocation2 + $0x18] sm:$0xf]
        %v3233 = vld [vmem:[#allocation2 + $0x3c] sm:$0xf]
        %v3234 = vld [vmem:[#allocation2 + $0x60] sm:$0xf]
        %v3235 = vld [vmem:[#allocation2 + $0x84] sm:$0xf]
        %v3236 = vld [vmem:[#allocation2 + $0xa8] sm:$0xf]
        %v3237 = vld [vmem:[#allocation2 + $0xcc] sm:$0xf]
        %v3238 = vld [vmem:[#allocation2 + $0xf0] sm:$0xf]
        %v3239 = vld [vmem:[#allocation2 + $0x114] sm:$0xf]
        %v3240 = vld [vmem:[#allocation2 + $0x138] sm:$0xf]
        %v3241 = vld [vmem:[#allocation2 + $0x15c] sm:$0xf]
        %v3242 = vld [vmem:[#allocation2 + $0x180] sm:$0xf]
        %v3243 = vld [vmem:[#allocation2 + $0x1a4] sm:$0xf]
        %v3244 = vld [vmem:[#allocation2 + $0x1c8] sm:$0xf]
        %v3245 = vld [vmem:[#allocation2 + $0x1ec] sm:$0xf]
        %v3246 = vld [vmem:[#allocation2 + $0x210] sm:$0xf]
        %v3247 = vld [vmem:[#allocation2 + $0x234] sm:$0xf]
        %v3264 = vunpack.c.l.b16 %v3200
        %v3265 = vunpack.c.l.b16 %v3201
        %v3266 = vunpack.c.l.b16 %v3202
        %v3267 = vunpack.c.l.b16 %v3203
        %v3268 = vunpack.c.l.b16 %v3204
        %v3269 = vunpack.c.l.b16 %v3205
        %v3270 = vunpack.c.l.b16 %v3206
        %v3271 = vunpack.c.l.b16 %v3207
        %v3272 = vunpack.c.l.b16 %v3208
        %v3273 = vunpack.c.l.b16 %v3209
        %v3274 = vunpack.c.l.b16 %v3210
        %v3275 = vunpack.c.l.b16 %v3211
        %v3276 = vunpack.c.l.b16 %v3212
        %v3277 = vunpack.c.l.b16 %v3213
        %v3278 = vunpack.c.l.b16 %v3214
        %v3279 = vunpack.c.l.b16 %v3215
        %v3280 = vpack.c.b16 %v3265, %v3264
        %v3281 = vpack.c.b16 %v3267, %v3266
        %v3282 = vpack.c.b16 %v3269, %v3268
        %v3283 = vpack.c.b16 %v3271, %v3270
        %v3284 = vpack.c.b16 %v3273, %v3272
        %v3285 = vpack.c.b16 %v3275, %v3274
        %v3286 = vpack.c.b16 %v3277, %v3276
        %v3287 = vpack.c.b16 %v3279, %v3278
        %v3304 = vunpack.c.l.b16 %v3216
        %v3305 = vunpack.c.l.b16 %v3217
        %v3306 = vunpack.c.l.b16 %v3218
        %v3307 = vunpack.c.l.b16 %v3219
        %v3308 = vunpack.c.l.b16 %v3220
        %v3309 = vunpack.c.l.b16 %v3221
        %v3310 = vunpack.c.l.b16 %v3222
        %v3311 = vunpack.c.l.b16 %v3223
        %v3312 = vunpack.c.l.b16 %v3224
        %v3313 = vunpack.c.l.b16 %v3225
        %v3314 = vunpack.c.l.b16 %v3226
        %v3315 = vunpack.c.l.b16 %v3227
        %v3316 = vunpack.c.l.b16 %v3228
        %v3317 = vunpack.c.l.b16 %v3229
        %v3318 = vunpack.c.l.b16 %v3230
        %v3319 = vunpack.c.l.b16 %v3231
        %v3320 = vpack.c.b16 %v3305, %v3304
        %v3321 = vpack.c.b16 %v3307, %v3306
        %v3322 = vpack.c.b16 %v3309, %v3308
        %v3323 = vpack.c.b16 %v3311, %v3310
        %v3324 = vpack.c.b16 %v3313, %v3312
        %v3325 = vpack.c.b16 %v3315, %v3314
        %v3326 = vpack.c.b16 %v3317, %v3316
        %v3327 = vpack.c.b16 %v3319, %v3318
        %vm3328 = vcmask 523264
        %v3330 = vsel %vm3328, %v3280, 0
        %v3333 = vsel %vm3328, %v3281, 0
        %v3336 = vsel %vm3328, %v3282, 0
        %v3339 = vsel %vm3328, %v3283, 0
        %v3342 = vsel %vm3328, %v3284, 0
        %v3345 = vsel %vm3328, %v3285, 0
        %v3348 = vsel %vm3328, %v3286, 0
        %v3351 = vsel %vm3328, %v3287, 0
        %v3354 = vsel %vm3328, %v3320, 0
        %v3357 = vsel %vm3328, %v3321, 0
        %v3360 = vsel %vm3328, %v3322, 0
        %v3363 = vsel %vm3328, %v3323, 0
        %v3366 = vsel %vm3328, %v3324, 0
        %v3369 = vsel %vm3328, %v3325, 0
        %v3372 = vsel %vm3328, %v3326, 0
        %v3375 = vsel %vm3328, %v3327, 0
        %3377 = vmatpush.bf16.xpose.msra.mxu0 %v3375
        %3378 = vmatpush.bf16.xpose.msra.mxu0 %v3372
        %3379 = vmatpush.bf16.xpose.msra.mxu0 %v3369
        %3380 = vmatpush.bf16.xpose.msra.mxu0 %v3366
        %3381 = vmatpush.bf16.xpose.msra.mxu0 %v3363
        %3382 = vmatpush.bf16.xpose.msra.mxu0 %v3360
        %3383 = vmatpush.bf16.xpose.msra.mxu0 %v3357
        %3384 = vmatpush.bf16.xpose.msra.mxu0 %v3354
        %3385 = vmatmul.bf16.gmra.mxu0 %v3330
        %v3386 = vpop.f32.mrf.mxu0
        %v3387 = vadd.f32 0.0, %v3386
        %v3388 = vpop.f32.mrf.mxu0
        %v3389 = vadd.f32 0.0, %v3388
        %3390 = vmatmul.bf16.gmra.mxu0 %v3333
        %v3391 = vpop.f32.mrf.mxu0
        %v3392 = vadd.f32 0.0, %v3391
        %v3393 = vpop.f32.mrf.mxu0
        %v3394 = vadd.f32 0.0, %v3393
        %3395 = vmatmul.bf16.gmra.mxu0 %v3336
        %v3396 = vpop.f32.mrf.mxu0
        %v3397 = vadd.f32 0.0, %v3396
        %v3398 = vpop.f32.mrf.mxu0
        %v3399 = vadd.f32 0.0, %v3398
        %3400 = vmatmul.bf16.gmra.mxu0 %v3339
        %v3401 = vpop.f32.mrf.mxu0
        %v3402 = vadd.f32 0.0, %v3401
        %v3403 = vpop.f32.mrf.mxu0
        %v3404 = vadd.f32 0.0, %v3403
        %3405 = vmatmul.bf16.gmra.mxu0 %v3342
        %v3406 = vpop.f32.mrf.mxu0
        %v3407 = vadd.f32 0.0, %v3406
        %v3408 = vpop.f32.mrf.mxu0
        %v3409 = vadd.f32 0.0, %v3408
        %3410 = vmatmul.bf16.gmra.mxu0 %v3345
        %v3411 = vpop.f32.mrf.mxu0
        %v3412 = vadd.f32 0.0, %v3411
        %v3413 = vpop.f32.mrf.mxu0
        %v3414 = vadd.f32 0.0, %v3413
        %3415 = vmatmul.bf16.gmra.mxu0 %v3348
        %v3416 = vpop.f32.mrf.mxu0
        %v3417 = vadd.f32 0.0, %v3416
        %v3418 = vpop.f32.mrf.mxu0
        %v3419 = vadd.f32 0.0, %v3418
        %3420 = vmatmul.bf16.gmra.mxu0 %v3351
        %v3421 = vpop.f32.mrf.mxu0
        %v3422 = vadd.f32 0.0, %v3421
        %v3423 = vpop.f32.mrf.mxu0
        %v3424 = vadd.f32 0.0, %v3423
        %3425 = vdwg.mxu0
        %v3426 = vsel %vm3184, %v3387, -1e+30
        %v3427 = vsel %vm3185, %v3389, -1e+30
        %v3428 = vsel %vm3186, %v3392, -1e+30
        %v3429 = vsel %vm3187, %v3394, -1e+30
        %v3430 = vsel %vm3188, %v3397, -1e+30
        %v3431 = vsel %vm3189, %v3399, -1e+30
        %v3432 = vsel %vm3190, %v3402, -1e+30
        %v3433 = vsel %vm3191, %v3404, -1e+30
        %v3434 = vsel %vm3192, %v3407, -1e+30
        %v3435 = vsel %vm3193, %v3409, -1e+30
        %v3436 = vsel %vm3194, %v3412, -1e+30
        %v3437 = vsel %vm3195, %v3414, -1e+30
        %v3438 = vsel %vm3196, %v3417, -1e+30
        %v3439 = vsel %vm3197, %v3419, -1e+30
        %v3440 = vsel %vm3198, %v3422, -1e+30
        %v3441 = vsel %vm3199, %v3424, -1e+30
        %3442 = vmax.xlane.f32.xlu0 %v3426
        %v3443 = vpop.xlane.xlu0 %3442
        %3444 = vmax.xlane.f32.xlu0 %v3427
        %v3445 = vpop.xlane.xlu0 %3444
        %3446 = vmax.xlane.f32.xlu0 %v3428
        %v3447 = vpop.xlane.xlu0 %3446
        %3448 = vmax.xlane.f32.xlu0 %v3429
        %v3449 = vpop.xlane.xlu0 %3448
        %3450 = vmax.xlane.f32.xlu0 %v3430
        %v3451 = vpop.xlane.xlu0 %3450
        %3452 = vmax.xlane.f32.xlu0 %v3431
        %v3453 = vpop.xlane.xlu0 %3452
        %3454 = vmax.xlane.f32.xlu0 %v3432
        %v3455 = vpop.xlane.xlu0 %3454
        %3456 = vmax.xlane.f32.xlu0 %v3433
        %v3457 = vpop.xlane.xlu0 %3456
        %3458 = vmax.xlane.f32.xlu0 %v3434
        %v3459 = vpop.xlane.xlu0 %3458
        %3460 = vmax.xlane.f32.xlu0 %v3435
        %v3461 = vpop.xlane.xlu0 %3460
        %3462 = vmax.xlane.f32.xlu0 %v3436
        %v3463 = vpop.xlane.xlu0 %3462
        %3464 = vmax.xlane.f32.xlu0 %v3437
        %v3465 = vpop.xlane.xlu0 %3464
        %3466 = vmax.xlane.f32.xlu0 %v3438
        %v3467 = vpop.xlane.xlu0 %3466
        %3468 = vmax.xlane.f32.xlu0 %v3439
        %v3469 = vpop.xlane.xlu0 %3468
        %3470 = vmax.xlane.f32.xlu0 %v3440
        %v3471 = vpop.xlane.xlu0 %3470
        %3472 = vmax.xlane.f32.xlu0 %v3441
        %v3473 = vpop.xlane.xlu0 %3472
        %v3474 = vsub.f32 %v3426, %v3443
        %v3475 = vsub.f32 %v3427, %v3445
        %v3476 = vsub.f32 %v3428, %v3447
        %v3477 = vsub.f32 %v3429, %v3449
        %v3478 = vsub.f32 %v3430, %v3451
        %v3479 = vsub.f32 %v3431, %v3453
        %v3480 = vsub.f32 %v3432, %v3455
        %v3481 = vsub.f32 %v3433, %v3457
        %v3482 = vsub.f32 %v3434, %v3459
        %v3483 = vsub.f32 %v3435, %v3461
        %v3484 = vsub.f32 %v3436, %v3463
        %v3485 = vsub.f32 %v3437, %v3465
        %v3486 = vsub.f32 %v3438, %v3467
        %v3487 = vsub.f32 %v3439, %v3469
        %v3488 = vsub.f32 %v3440, %v3471
        %v3489 = vsub.f32 %v3441, %v3473
        %v3490 = vmul.f32 %v3474, 1.442695
        %v3491 = vpow.pop %v3490
        %v3492 = vmul.f32 %v3475, 1.442695
        %v3493 = vpow.pop %v3492
        %v3494 = vmul.f32 %v3476, 1.442695
        %v3495 = vpow.pop %v3494
        %v3496 = vmul.f32 %v3477, 1.442695
        %v3497 = vpow.pop %v3496
        %v3498 = vmul.f32 %v3478, 1.442695
        %v3499 = vpow.pop %v3498
        %v3500 = vmul.f32 %v3479, 1.442695
        %v3501 = vpow.pop %v3500
        %v3502 = vmul.f32 %v3480, 1.442695
        %v3503 = vpow.pop %v3502
        %v3504 = vmul.f32 %v3481, 1.442695
        %v3505 = vpow.pop %v3504
        %v3506 = vmul.f32 %v3482, 1.442695
        %v3507 = vpow.pop %v3506
        %v3508 = vmul.f32 %v3483, 1.442695
        %v3509 = vpow.pop %v3508
        %v3510 = vmul.f32 %v3484, 1.442695
        %v3511 = vpow.pop %v3510
        %v3512 = vmul.f32 %v3485, 1.442695
        %v3513 = vpow.pop %v3512
        %v3514 = vmul.f32 %v3486, 1.442695
        %v3515 = vpow.pop %v3514
        %v3516 = vmul.f32 %v3487, 1.442695
        %v3517 = vpow.pop %v3516
        %v3518 = vmul.f32 %v3488, 1.442695
        %v3519 = vpow.pop %v3518
        %v3520 = vmul.f32 %v3489, 1.442695
        %v3521 = vpow.pop %v3520
        %3522 = vadd.xlane.f32.xlu0 %v3491
        %v3523 = vpop.xlane.xlu0 %3522
        %3524 = vadd.xlane.f32.xlu0 %v3493
        %v3525 = vpop.xlane.xlu0 %3524
        %3526 = vadd.xlane.f32.xlu0 %v3495
        %v3527 = vpop.xlane.xlu0 %3526
        %3528 = vadd.xlane.f32.xlu0 %v3497
        %v3529 = vpop.xlane.xlu0 %3528
        %3530 = vadd.xlane.f32.xlu0 %v3499
        %v3531 = vpop.xlane.xlu0 %3530
        %3532 = vadd.xlane.f32.xlu0 %v3501
        %v3533 = vpop.xlane.xlu0 %3532
        %3534 = vadd.xlane.f32.xlu0 %v3503
        %v3535 = vpop.xlane.xlu0 %3534
        %3536 = vadd.xlane.f32.xlu0 %v3505
        %v3537 = vpop.xlane.xlu0 %3536
        %3538 = vadd.xlane.f32.xlu0 %v3507
        %v3539 = vpop.xlane.xlu0 %3538
        %3540 = vadd.xlane.f32.xlu0 %v3509
        %v3541 = vpop.xlane.xlu0 %3540
        %3542 = vadd.xlane.f32.xlu0 %v3511
        %v3543 = vpop.xlane.xlu0 %3542
        %3544 = vadd.xlane.f32.xlu0 %v3513
        %v3545 = vpop.xlane.xlu0 %3544
        %3546 = vadd.xlane.f32.xlu0 %v3515
        %v3547 = vpop.xlane.xlu0 %3546
        %3548 = vadd.xlane.f32.xlu0 %v3517
        %v3549 = vpop.xlane.xlu0 %3548
        %3550 = vadd.xlane.f32.xlu0 %v3519
        %v3551 = vpop.xlane.xlu0 %3550
        %3552 = vadd.xlane.f32.xlu0 %v3521
        %v3553 = vpop.xlane.xlu0 %3552
        %v3554 = vpack.c.bf16 %v3493, %v3491
        %v3555 = vpack.c.bf16 %v3497, %v3495
        %v3556 = vpack.c.bf16 %v3501, %v3499
        %v3557 = vpack.c.bf16 %v3505, %v3503
        %v3558 = vpack.c.bf16 %v3509, %v3507
        %v3559 = vpack.c.bf16 %v3513, %v3511
        %v3560 = vpack.c.bf16 %v3517, %v3515
        %v3561 = vpack.c.bf16 %v3521, %v3519
        %v3578 = vunpack.c.l.b16 %v3232
        %v3579 = vunpack.c.l.b16 %v3233
        %v3580 = vunpack.c.l.b16 %v3234
        %v3581 = vunpack.c.l.b16 %v3235
        %v3582 = vunpack.c.l.b16 %v3236
        %v3583 = vunpack.c.l.b16 %v3237
        %v3584 = vunpack.c.l.b16 %v3238
        %v3585 = vunpack.c.l.b16 %v3239
        %v3586 = vunpack.c.l.b16 %v3240
        %v3587 = vunpack.c.l.b16 %v3241
        %v3588 = vunpack.c.l.b16 %v3242
        %v3589 = vunpack.c.l.b16 %v3243
        %v3590 = vunpack.c.l.b16 %v3244
        %v3591 = vunpack.c.l.b16 %v3245
        %v3592 = vunpack.c.l.b16 %v3246
        %v3593 = vunpack.c.l.b16 %v3247
        %v3594 = vpack.c.b16 %v3579, %v3578
        %v3595 = vpack.c.b16 %v3581, %v3580
        %v3596 = vpack.c.b16 %v3583, %v3582
        %v3597 = vpack.c.b16 %v3585, %v3584
        %v3598 = vpack.c.b16 %v3587, %v3586
        %v3599 = vpack.c.b16 %v3589, %v3588
        %v3600 = vpack.c.b16 %v3591, %v3590
        %v3601 = vpack.c.b16 %v3593, %v3592
        %3610 = vmatpush.bf16.msra.mxu0 %v3601
        %3611 = vmatpush.bf16.msra.mxu0 %v3600
        %3612 = vmatpush.bf16.msra.mxu0 %v3599
        %3613 = vmatpush.bf16.msra.mxu0 %v3598
        %3614 = vmatpush.bf16.msra.mxu0 %v3597
        %3615 = vmatpush.bf16.msra.mxu0 %v3596
        %3616 = vmatpush.bf16.msra.mxu0 %v3595
        %3617 = vmatpush.bf16.msra.mxu0 %v3594
        %3618 = vmatmul.bf16.gmra.mxu0 %v3554
        %v3619 = vpop.f32.mrf.mxu0
        %v3620 = vadd.f32 0.0, %v3619
        %v3621 = vpop.f32.mrf.mxu0
        %v3622 = vadd.f32 0.0, %v3621
        %3623 = vmatmul.bf16.gmra.mxu0 %v3555
        %v3624 = vpop.f32.mrf.mxu0
        %v3625 = vadd.f32 0.0, %v3624
        %v3626 = vpop.f32.mrf.mxu0
        %v3627 = vadd.f32 0.0, %v3626
        %3628 = vmatmul.bf16.gmra.mxu0 %v3556
        %v3629 = vpop.f32.mrf.mxu0
        %v3630 = vadd.f32 0.0, %v3629
        %v3631 = vpop.f32.mrf.mxu0
        %v3632 = vadd.f32 0.0, %v3631
        %3633 = vmatmul.bf16.gmra.mxu0 %v3557
        %v3634 = vpop.f32.mrf.mxu0
        %v3635 = vadd.f32 0.0, %v3634
        %v3636 = vpop.f32.mrf.mxu0
        %v3637 = vadd.f32 0.0, %v3636
        %3638 = vmatmul.bf16.gmra.mxu0 %v3558
        %v3639 = vpop.f32.mrf.mxu0
        %v3640 = vadd.f32 0.0, %v3639
        %v3641 = vpop.f32.mrf.mxu0
        %v3642 = vadd.f32 0.0, %v3641
        %3643 = vmatmul.bf16.gmra.mxu0 %v3559
        %v3644 = vpop.f32.mrf.mxu0
        %v3645 = vadd.f32 0.0, %v3644
        %v3646 = vpop.f32.mrf.mxu0
        %v3647 = vadd.f32 0.0, %v3646
        %3648 = vmatmul.bf16.gmra.mxu0 %v3560
        %v3649 = vpop.f32.mrf.mxu0
        %v3650 = vadd.f32 0.0, %v3649
        %v3651 = vpop.f32.mrf.mxu0
        %v3652 = vadd.f32 0.0, %v3651
        %3653 = vmatmul.bf16.gmra.mxu0 %v3561
        %v3654 = vpop.f32.mrf.mxu0
        %v3655 = vadd.f32 0.0, %v3654
        %v3656 = vpop.f32.mrf.mxu0
        %v3657 = vadd.f32 0.0, %v3656
        %3658 = vdwg.mxu0
        %v3659 = vrcp.pop %v3523
        %v3660 = vrcp.pop %v3525
        %v3661 = vrcp.pop %v3527
        %v3662 = vrcp.pop %v3529
        %v3663 = vrcp.pop %v3531
        %v3664 = vrcp.pop %v3533
        %v3665 = vrcp.pop %v3535
        %v3666 = vrcp.pop %v3537
        %v3667 = vrcp.pop %v3539
        %v3668 = vrcp.pop %v3541
        %v3669 = vrcp.pop %v3543
        %v3670 = vrcp.pop %v3545
        %v3671 = vrcp.pop %v3547
        %v3672 = vrcp.pop %v3549
        %v3673 = vrcp.pop %v3551
        %v3674 = vrcp.pop %v3553
        %v3675 = vmul.f32 %v3620, %v3659
        %v3676 = vmul.f32 %v3622, %v3660
        %v3677 = vmul.f32 %v3625, %v3661
        %v3678 = vmul.f32 %v3627, %v3662
        %v3679 = vmul.f32 %v3630, %v3663
        %v3680 = vmul.f32 %v3632, %v3664
        %v3681 = vmul.f32 %v3635, %v3665
        %v3682 = vmul.f32 %v3637, %v3666
        %v3683 = vmul.f32 %v3640, %v3667
        %v3684 = vmul.f32 %v3642, %v3668
        %v3685 = vmul.f32 %v3645, %v3669
        %v3686 = vmul.f32 %v3647, %v3670
        %v3687 = vmul.f32 %v3650, %v3671
        %v3688 = vmul.f32 %v3652, %v3672
        %v3689 = vmul.f32 %v3655, %v3673
        %v3690 = vmul.f32 %v3657, %v3674
        %v3691 = vpack.c.bf16 %v3675, %v3675
        %v3692 = vpack.c.bf16 %v3676, %v3676
        %v3693 = vpack.c.bf16 %v3677, %v3677
        %v3694 = vpack.c.bf16 %v3678, %v3678
        %v3695 = vpack.c.bf16 %v3679, %v3679
        %v3696 = vpack.c.bf16 %v3680, %v3680
        %v3697 = vpack.c.bf16 %v3681, %v3681
        %v3698 = vpack.c.bf16 %v3682, %v3682
        %v3699 = vpack.c.bf16 %v3683, %v3683
        %v3700 = vpack.c.bf16 %v3684, %v3684
        %v3701 = vpack.c.bf16 %v3685, %v3685
        %v3702 = vpack.c.bf16 %v3686, %v3686
        %v3703 = vpack.c.bf16 %v3687, %v3687
        %v3704 = vpack.c.bf16 %v3688, %v3688
        %v3705 = vpack.c.bf16 %v3689, %v3689
        %v3706 = vpack.c.bf16 %v3690, %v3690
        %vm3707 = vcmask 519168
        %3708 = vst.msk [vmem:[#allocation3] sm:$0xf] %vm3707, %v3691
        %3709 = vst.msk [vmem:[#allocation3 + $0xc] sm:$0xf] %vm3707, %v3692
        %3710 = vst.msk [vmem:[#allocation3 + $0x18] sm:$0xf] %vm3707, %v3693
        %3711 = vst.msk [vmem:[#allocation3 + $0x24] sm:$0xf] %vm3707, %v3694
        %3712 = vst.msk [vmem:[#allocation3 + $0x30] sm:$0xf] %vm3707, %v3695
        %3713 = vst.msk [vmem:[#allocation3 + $0x3c] sm:$0xf] %vm3707, %v3696
        %3714 = vst.msk [vmem:[#allocation3 + $0x48] sm:$0xf] %vm3707, %v3697
        %3715 = vst.msk [vmem:[#allocation3 + $0x54] sm:$0xf] %vm3707, %v3698
        %3716 = vst.msk [vmem:[#allocation3 + $0x60] sm:$0xf] %vm3707, %v3699
        %3717 = vst.msk [vmem:[#allocation3 + $0x6c] sm:$0xf] %vm3707, %v3700
        %3718 = vst.msk [vmem:[#allocation3 + $0x78] sm:$0xf] %vm3707, %v3701
        %3719 = vst.msk [vmem:[#allocation3 + $0x84] sm:$0xf] %vm3707, %v3702
        %3720 = vst.msk [vmem:[#allocation3 + $0x90] sm:$0xf] %vm3707, %v3703
        %3721 = vst.msk [vmem:[#allocation3 + $0x9c] sm:$0xf] %vm3707, %v3704
        %3722 = vst.msk [vmem:[#allocation3 + $0xa8] sm:$0xf] %vm3707, %v3705
        %3723 = vst.msk [vmem:[#allocation3 + $0xb4] sm:$0xf] %vm3707, %v3706
        %v3724 = vld [vmem:[#allocation2] sm:$0xf]
        %v3725 = vld [vmem:[#allocation2 + $0x24] sm:$0xf]
        %v3726 = vld [vmem:[#allocation2 + $0x48] sm:$0xf]
        %v3727 = vld [vmem:[#allocation2 + $0x6c] sm:$0xf]
        %v3728 = vld [vmem:[#allocation2 + $0x90] sm:$0xf]
        %v3729 = vld [vmem:[#allocation2 + $0xb4] sm:$0xf]
        %v3730 = vld [vmem:[#allocation2 + $0xd8] sm:$0xf]
        %v3731 = vld [vmem:[#allocation2 + $0xfc] sm:$0xf]
        %v3732 = vld [vmem:[#allocation2 + $0x120] sm:$0xf]
        %v3733 = vld [vmem:[#allocation2 + $0x144] sm:$0xf]
        %v3734 = vld [vmem:[#allocation2 + $0x168] sm:$0xf]
        %v3735 = vld [vmem:[#allocation2 + $0x18c] sm:$0xf]
        %v3736 = vld [vmem:[#allocation2 + $0x1b0] sm:$0xf]
        %v3737 = vld [vmem:[#allocation2 + $0x1d4] sm:$0xf]
        %v3738 = vld [vmem:[#allocation2 + $0x1f8] sm:$0xf]
        %v3739 = vld [vmem:[#allocation2 + $0x21c] sm:$0xf]
        %v3740 = vld [vmem:[#allocation2 + $0xc] sm:$0xf]
        %v3741 = vld [vmem:[#allocation2 + $0x30] sm:$0xf]
        %v3742 = vld [vmem:[#allocation2 + $0x54] sm:$0xf]
        %v3743 = vld [vmem:[#allocation2 + $0x78] sm:$0xf]
        %v3744 = vld [vmem:[#allocation2 + $0x9c] sm:$0xf]
        %v3745 = vld [vmem:[#allocation2 + $0xc0] sm:$0xf]
        %v3746 = vld [vmem:[#allocation2 + $0xe4] sm:$0xf]
        %v3747 = vld [vmem:[#allocation2 + $0x108] sm:$0xf]
        %v3748 = vld [vmem:[#allocation2 + $0x12c] sm:$0xf]
        %v3749 = vld [vmem:[#allocation2 + $0x150] sm:$0xf]
        %v3750 = vld [vmem:[#allocation2 + $0x174] sm:$0xf]
        %v3751 = vld [vmem:[#allocation2 + $0x198] sm:$0xf]
        %v3752 = vld [vmem:[#allocation2 + $0x1bc] sm:$0xf]
        %v3753 = vld [vmem:[#allocation2 + $0x1e0] sm:$0xf]
        %v3754 = vld [vmem:[#allocation2 + $0x204] sm:$0xf]
        %v3755 = vld [vmem:[#allocation2 + $0x228] sm:$0xf]
        %v3756 = vld [vmem:[#allocation2 + $0x18] sm:$0xf]
        %v3757 = vld [vmem:[#allocation2 + $0x3c] sm:$0xf]
        %v3758 = vld [vmem:[#allocation2 + $0x60] sm:$0xf]
        %v3759 = vld [vmem:[#allocation2 + $0x84] sm:$0xf]
        %v3760 = vld [vmem:[#allocation2 + $0xa8] sm:$0xf]
        %v3761 = vld [vmem:[#allocation2 + $0xcc] sm:$0xf]
        %v3762 = vld [vmem:[#allocation2 + $0xf0] sm:$0xf]
        %v3763 = vld [vmem:[#allocation2 + $0x114] sm:$0xf]
        %v3764 = vld [vmem:[#allocation2 + $0x138] sm:$0xf]
        %v3765 = vld [vmem:[#allocation2 + $0x15c] sm:$0xf]
        %v3766 = vld [vmem:[#allocation2 + $0x180] sm:$0xf]
        %v3767 = vld [vmem:[#allocation2 + $0x1a4] sm:$0xf]
        %v3768 = vld [vmem:[#allocation2 + $0x1c8] sm:$0xf]
        %v3769 = vld [vmem:[#allocation2 + $0x1ec] sm:$0xf]
        %v3770 = vld [vmem:[#allocation2 + $0x210] sm:$0xf]
        %v3771 = vld [vmem:[#allocation2 + $0x234] sm:$0xf]
        %v3788 = vunpack.c.l.b16 %v3724
        %v3789 = vunpack.c.l.b16 %v3725
        %v3790 = vunpack.c.l.b16 %v3726
        %v3791 = vunpack.c.l.b16 %v3727
        %v3792 = vunpack.c.l.b16 %v3728
        %v3793 = vunpack.c.l.b16 %v3729
        %v3794 = vunpack.c.l.b16 %v3730
        %v3795 = vunpack.c.l.b16 %v3731
        %v3796 = vunpack.c.l.b16 %v3732
        %v3797 = vunpack.c.l.b16 %v3733
        %v3798 = vunpack.c.l.b16 %v3734
        %v3799 = vunpack.c.l.b16 %v3735
        %v3800 = vunpack.c.l.b16 %v3736
        %v3801 = vunpack.c.l.b16 %v3737
        %v3802 = vunpack.c.l.b16 %v3738
        %v3803 = vunpack.c.l.b16 %v3739
        %v3804 = vpack.c.b16 %v3789, %v3788
        %v3805 = vpack.c.b16 %v3791, %v3790
        %v3806 = vpack.c.b16 %v3793, %v3792
        %v3807 = vpack.c.b16 %v3795, %v3794
        %v3808 = vpack.c.b16 %v3797, %v3796
        %v3809 = vpack.c.b16 %v3799, %v3798
        %v3810 = vpack.c.b16 %v3801, %v3800
        %v3811 = vpack.c.b16 %v3803, %v3802
        %3812 = vrot.lane.b32.xlu0 %v3804, 64
        %v3813 = vpop.permute.xlu0 %3812
        %3814 = vrot.lane.b32.xlu0 %v3805, 64
        %v3815 = vpop.permute.xlu0 %3814
        %3816 = vrot.lane.b32.xlu0 %v3806, 64
        %v3817 = vpop.permute.xlu0 %3816
        %3818 = vrot.lane.b32.xlu0 %v3807, 64
        %v3819 = vpop.permute.xlu0 %3818
        %3820 = vrot.lane.b32.xlu0 %v3808, 64
        %v3821 = vpop.permute.xlu0 %3820
        %3822 = vrot.lane.b32.xlu0 %v3809, 64
        %v3823 = vpop.permute.xlu0 %3822
        %3824 = vrot.lane.b32.xlu0 %v3810, 64
        %v3825 = vpop.permute.xlu0 %3824
        %3826 = vrot.lane.b32.xlu0 %v3811, 64
        %v3827 = vpop.permute.xlu0 %3826
        %v3844 = vunpack.c.l.b16 %v3740
        %v3845 = vunpack.c.l.b16 %v3741
        %v3846 = vunpack.c.l.b16 %v3742
        %v3847 = vunpack.c.l.b16 %v3743
        %v3848 = vunpack.c.l.b16 %v3744
        %v3849 = vunpack.c.l.b16 %v3745
        %v3850 = vunpack.c.l.b16 %v3746
        %v3851 = vunpack.c.l.b16 %v3747
        %v3852 = vunpack.c.l.b16 %v3748
        %v3853 = vunpack.c.l.b16 %v3749
        %v3854 = vunpack.c.l.b16 %v3750
        %v3855 = vunpack.c.l.b16 %v3751
        %v3856 = vunpack.c.l.b16 %v3752
        %v3857 = vunpack.c.l.b16 %v3753
        %v3858 = vunpack.c.l.b16 %v3754
        %v3859 = vunpack.c.l.b16 %v3755
        %v3860 = vpack.c.b16 %v3845, %v3844
        %v3861 = vpack.c.b16 %v3847, %v3846
        %v3862 = vpack.c.b16 %v3849, %v3848
        %v3863 = vpack.c.b16 %v3851, %v3850
        %v3864 = vpack.c.b16 %v3853, %v3852
        %v3865 = vpack.c.b16 %v3855, %v3854
        %v3866 = vpack.c.b16 %v3857, %v3856
        %v3867 = vpack.c.b16 %v3859, %v3858
        %3868 = vrot.lane.b32.xlu0 %v3860, 64
        %v3869 = vpop.permute.xlu0 %3868
        %3870 = vrot.lane.b32.xlu0 %v3861, 64
        %v3871 = vpop.permute.xlu0 %3870
        %3872 = vrot.lane.b32.xlu0 %v3862, 64
        %v3873 = vpop.permute.xlu0 %3872
        %3874 = vrot.lane.b32.xlu0 %v3863, 64
        %v3875 = vpop.permute.xlu0 %3874
        %3876 = vrot.lane.b32.xlu0 %v3864, 64
        %v3877 = vpop.permute.xlu0 %3876
        %3878 = vrot.lane.b32.xlu0 %v3865, 64
        %v3879 = vpop.permute.xlu0 %3878
        %3880 = vrot.lane.b32.xlu0 %v3866, 64
        %v3881 = vpop.permute.xlu0 %3880
        %3882 = vrot.lane.b32.xlu0 %v3867, 64
        %v3883 = vpop.permute.xlu0 %3882
        %v3885 = vsel %vm3328, %v3813, 0
        %v3888 = vsel %vm3328, %v3815, 0
        %v3891 = vsel %vm3328, %v3817, 0
        %v3894 = vsel %vm3328, %v3819, 0
        %v3897 = vsel %vm3328, %v3821, 0
        %v3900 = vsel %vm3328, %v3823, 0
        %v3903 = vsel %vm3328, %v3825, 0
        %v3906 = vsel %vm3328, %v3827, 0
        %v3909 = vsel %vm3328, %v3869, 0
        %v3912 = vsel %vm3328, %v3871, 0
        %v3915 = vsel %vm3328, %v3873, 0
        %v3918 = vsel %vm3328, %v3875, 0
        %v3921 = vsel %vm3328, %v3877, 0
        %v3924 = vsel %vm3328, %v3879, 0
        %v3927 = vsel %vm3328, %v3881, 0
        %v3930 = vsel %vm3328, %v3883, 0
        %3932 = vmatpush.bf16.xpose.msra.mxu0 %v3930
        %3933 = vmatpush.bf16.xpose.msra.mxu0 %v3927
        %3934 = vmatpush.bf16.xpose.msra.mxu0 %v3924
        %3935 = vmatpush.bf16.xpose.msra.mxu0 %v3921
        %3936 = vmatpush.bf16.xpose.msra.mxu0 %v3918
        %3937 = vmatpush.bf16.xpose.msra.mxu0 %v3915
        %3938 = vmatpush.bf16.xpose.msra.mxu0 %v3912
        %3939 = vmatpush.bf16.xpose.msra.mxu0 %v3909
        %3940 = vmatmul.bf16.gmra.mxu0 %v3885
        %v3941 = vpop.f32.mrf.mxu0
        %v3942 = vadd.f32 0.0, %v3941
        %v3943 = vpop.f32.mrf.mxu0
        %v3944 = vadd.f32 0.0, %v3943
        %3945 = vmatmul.bf16.gmra.mxu0 %v3888
        %v3946 = vpop.f32.mrf.mxu0
        %v3947 = vadd.f32 0.0, %v3946
        %v3948 = vpop.f32.mrf.mxu0
        %v3949 = vadd.f32 0.0, %v3948
        %3950 = vmatmul.bf16.gmra.mxu0 %v3891
        %v3951 = vpop.f32.mrf.mxu0
        %v3952 = vadd.f32 0.0, %v3951
        %v3953 = vpop.f32.mrf.mxu0
        %v3954 = vadd.f32 0.0, %v3953
        %3955 = vmatmul.bf16.gmra.mxu0 %v3894
        %v3956 = vpop.f32.mrf.mxu0
        %v3957 = vadd.f32 0.0, %v3956
        %v3958 = vpop.f32.mrf.mxu0
        %v3959 = vadd.f32 0.0, %v3958
        %3960 = vmatmul.bf16.gmra.mxu0 %v3897
        %v3961 = vpop.f32.mrf.mxu0
        %v3962 = vadd.f32 0.0, %v3961
        %v3963 = vpop.f32.mrf.mxu0
        %v3964 = vadd.f32 0.0, %v3963
        %3965 = vmatmul.bf16.gmra.mxu0 %v3900
        %v3966 = vpop.f32.mrf.mxu0
        %v3967 = vadd.f32 0.0, %v3966
        %v3968 = vpop.f32.mrf.mxu0
        %v3969 = vadd.f32 0.0, %v3968
        %3970 = vmatmul.bf16.gmra.mxu0 %v3903
        %v3971 = vpop.f32.mrf.mxu0
        %v3972 = vadd.f32 0.0, %v3971
        %v3973 = vpop.f32.mrf.mxu0
        %v3974 = vadd.f32 0.0, %v3973
        %3975 = vmatmul.bf16.gmra.mxu0 %v3906
        %v3976 = vpop.f32.mrf.mxu0
        %v3977 = vadd.f32 0.0, %v3976
        %v3978 = vpop.f32.mrf.mxu0
        %v3979 = vadd.f32 0.0, %v3978
        %3980 = vdwg.mxu0
        %v3981 = vsel %vm3184, %v3942, -1e+30
        %v3982 = vsel %vm3185, %v3944, -1e+30
        %v3983 = vsel %vm3186, %v3947, -1e+30
        %v3984 = vsel %vm3187, %v3949, -1e+30
        %v3985 = vsel %vm3188, %v3952, -1e+30
        %v3986 = vsel %vm3189, %v3954, -1e+30
        %v3987 = vsel %vm3190, %v3957, -1e+30
        %v3988 = vsel %vm3191, %v3959, -1e+30
        %v3989 = vsel %vm3192, %v3962, -1e+30
        %v3990 = vsel %vm3193, %v3964, -1e+30
        %v3991 = vsel %vm3194, %v3967, -1e+30
        %v3992 = vsel %vm3195, %v3969, -1e+30
        %v3993 = vsel %vm3196, %v3972, -1e+30
        %v3994 = vsel %vm3197, %v3974, -1e+30
        %v3995 = vsel %vm3198, %v3977, -1e+30
        %v3996 = vsel %vm3199, %v3979, -1e+30
        %3997 = vmax.xlane.f32.xlu0 %v3981
        %v3998 = vpop.xlane.xlu0 %3997
        %3999 = vmax.xlane.f32.xlu0 %v3982
        %v4000 = vpop.xlane.xlu0 %3999
        %4001 = vmax.xlane.f32.xlu0 %v3983
        %v4002 = vpop.xlane.xlu0 %4001
        %4003 = vmax.xlane.f32.xlu0 %v3984
        %v4004 = vpop.xlane.xlu0 %4003
        %4005 = vmax.xlane.f32.xlu0 %v3985
        %v4006 = vpop.xlane.xlu0 %4005
        %4007 = vmax.xlane.f32.xlu0 %v3986
        %v4008 = vpop.xlane.xlu0 %4007
        %4009 = vmax.xlane.f32.xlu0 %v3987
        %v4010 = vpop.xlane.xlu0 %4009
        %4011 = vmax.xlane.f32.xlu0 %v3988
        %v4012 = vpop.xlane.xlu0 %4011
        %4013 = vmax.xlane.f32.xlu0 %v3989
        %v4014 = vpop.xlane.xlu0 %4013
        %4015 = vmax.xlane.f32.xlu0 %v3990
        %v4016 = vpop.xlane.xlu0 %4015
        %4017 = vmax.xlane.f32.xlu0 %v3991
        %v4018 = vpop.xlane.xlu0 %4017
        %4019 = vmax.xlane.f32.xlu0 %v3992
        %v4020 = vpop.xlane.xlu0 %4019
        %4021 = vmax.xlane.f32.xlu0 %v3993
        %v4022 = vpop.xlane.xlu0 %4021
        %4023 = vmax.xlane.f32.xlu0 %v3994
        %v4024 = vpop.xlane.xlu0 %4023
        %4025 = vmax.xlane.f32.xlu0 %v3995
        %v4026 = vpop.xlane.xlu0 %4025
        %4027 = vmax.xlane.f32.xlu0 %v3996
        %v4028 = vpop.xlane.xlu0 %4027
        %v4029 = vsub.f32 %v3981, %v3998
        %v4030 = vsub.f32 %v3982, %v4000
        %v4031 = vsub.f32 %v3983, %v4002
        %v4032 = vsub.f32 %v3984, %v4004
        %v4033 = vsub.f32 %v3985, %v4006
        %v4034 = vsub.f32 %v3986, %v4008
        %v4035 = vsub.f32 %v3987, %v4010
        %v4036 = vsub.f32 %v3988, %v4012
        %v4037 = vsub.f32 %v3989, %v4014
        %v4038 = vsub.f32 %v3990, %v4016
        %v4039 = vsub.f32 %v3991, %v4018
        %v4040 = vsub.f32 %v3992, %v4020
        %v4041 = vsub.f32 %v3993, %v4022
        %v4042 = vsub.f32 %v3994, %v4024
        %v4043 = vsub.f32 %v3995, %v4026
        %v4044 = vsub.f32 %v3996, %v4028
        %v4045 = vmul.f32 %v4029, 1.442695
        %v4046 = vpow.pop %v4045
        %v4047 = vmul.f32 %v4030, 1.442695
        %v4048 = vpow.pop %v4047
        %v4049 = vmul.f32 %v4031, 1.442695
        %v4050 = vpow.pop %v4049
        %v4051 = vmul.f32 %v4032, 1.442695
        %v4052 = vpow.pop %v4051
        %v4053 = vmul.f32 %v4033, 1.442695
        %v4054 = vpow.pop %v4053
        %v4055 = vmul.f32 %v4034, 1.442695
        %v4056 = vpow.pop %v4055
        %v4057 = vmul.f32 %v4035, 1.442695
        %v4058 = vpow.pop %v4057
        %v4059 = vmul.f32 %v4036, 1.442695
        %v4060 = vpow.pop %v4059
        %v4061 = vmul.f32 %v4037, 1.442695
        %v4062 = vpow.pop %v4061
        %v4063 = vmul.f32 %v4038, 1.442695
        %v4064 = vpow.pop %v4063
        %v4065 = vmul.f32 %v4039, 1.442695
        %v4066 = vpow.pop %v4065
        %v4067 = vmul.f32 %v4040, 1.442695
        %v4068 = vpow.pop %v4067
        %v4069 = vmul.f32 %v4041, 1.442695
        %v4070 = vpow.pop %v4069
        %v4071 = vmul.f32 %v4042, 1.442695
        %v4072 = vpow.pop %v4071
        %v4073 = vmul.f32 %v4043, 1.442695
        %v4074 = vpow.pop %v4073
        %v4075 = vmul.f32 %v4044, 1.442695
        %v4076 = vpow.pop %v4075
        %4077 = vadd.xlane.f32.xlu0 %v4046
        %v4078 = vpop.xlane.xlu0 %4077
        %4079 = vadd.xlane.f32.xlu0 %v4048
        %v4080 = vpop.xlane.xlu0 %4079
        %4081 = vadd.xlane.f32.xlu0 %v4050
        %v4082 = vpop.xlane.xlu0 %4081
        %4083 = vadd.xlane.f32.xlu0 %v4052
        %v4084 = vpop.xlane.xlu0 %4083
        %4085 = vadd.xlane.f32.xlu0 %v4054
        %v4086 = vpop.xlane.xlu0 %4085
        %4087 = vadd.xlane.f32.xlu0 %v4056
        %v4088 = vpop.xlane.xlu0 %4087
        %4089 = vadd.xlane.f32.xlu0 %v4058
        %v4090 = vpop.xlane.xlu0 %4089
        %4091 = vadd.xlane.f32.xlu0 %v4060
        %v4092 = vpop.xlane.xlu0 %4091
        %4093 = vadd.xlane.f32.xlu0 %v4062
        %v4094 = vpop.xlane.xlu0 %4093
        %4095 = vadd.xlane.f32.xlu0 %v4064
        %v4096 = vpop.xlane.xlu0 %4095
        %4097 = vadd.xlane.f32.xlu0 %v4066
        %v4098 = vpop.xlane.xlu0 %4097
        %4099 = vadd.xlane.f32.xlu0 %v4068
        %v4100 = vpop.xlane.xlu0 %4099
        %4101 = vadd.xlane.f32.xlu0 %v4070
        %v4102 = vpop.xlane.xlu0 %4101
        %4103 = vadd.xlane.f32.xlu0 %v4072
        %v4104 = vpop.xlane.xlu0 %4103
        %4105 = vadd.xlane.f32.xlu0 %v4074
        %v4106 = vpop.xlane.xlu0 %4105
        %4107 = vadd.xlane.f32.xlu0 %v4076
        %v4108 = vpop.xlane.xlu0 %4107
        %v4109 = vpack.c.bf16 %v4048, %v4046
        %v4110 = vpack.c.bf16 %v4052, %v4050
        %v4111 = vpack.c.bf16 %v4056, %v4054
        %v4112 = vpack.c.bf16 %v4060, %v4058
        %v4113 = vpack.c.bf16 %v4064, %v4062
        %v4114 = vpack.c.bf16 %v4068, %v4066
        %v4115 = vpack.c.bf16 %v4072, %v4070
        %v4116 = vpack.c.bf16 %v4076, %v4074
        %v4133 = vunpack.c.l.b16 %v3756
        %v4134 = vunpack.c.l.b16 %v3757
        %v4135 = vunpack.c.l.b16 %v3758
        %v4136 = vunpack.c.l.b16 %v3759
        %v4137 = vunpack.c.l.b16 %v3760
        %v4138 = vunpack.c.l.b16 %v3761
        %v4139 = vunpack.c.l.b16 %v3762
        %v4140 = vunpack.c.l.b16 %v3763
        %v4141 = vunpack.c.l.b16 %v3764
        %v4142 = vunpack.c.l.b16 %v3765
        %v4143 = vunpack.c.l.b16 %v3766
        %v4144 = vunpack.c.l.b16 %v3767
        %v4145 = vunpack.c.l.b16 %v3768
        %v4146 = vunpack.c.l.b16 %v3769
        %v4147 = vunpack.c.l.b16 %v3770
        %v4148 = vunpack.c.l.b16 %v3771
        %v4149 = vpack.c.b16 %v4134, %v4133
        %v4150 = vpack.c.b16 %v4136, %v4135
        %v4151 = vpack.c.b16 %v4138, %v4137
        %v4152 = vpack.c.b16 %v4140, %v4139
        %v4153 = vpack.c.b16 %v4142, %v4141
        %v4154 = vpack.c.b16 %v4144, %v4143
        %v4155 = vpack.c.b16 %v4146, %v4145
        %v4156 = vpack.c.b16 %v4148, %v4147
        %4157 = vrot.lane.b32.xlu0 %v4149, 64
        %v4158 = vpop.permute.xlu0 %4157
        %4159 = vrot.lane.b32.xlu0 %v4150, 64
        %v4160 = vpop.permute.xlu0 %4159
        %4161 = vrot.lane.b32.xlu0 %v4151, 64
        %v4162 = vpop.permute.xlu0 %4161
        %4163 = vrot.lane.b32.xlu0 %v4152, 64
        %v4164 = vpop.permute.xlu0 %4163
        %4165 = vrot.lane.b32.xlu0 %v4153, 64
        %v4166 = vpop.permute.xlu0 %4165
        %4167 = vrot.lane.b32.xlu0 %v4154, 64
        %v4168 = vpop.permute.xlu0 %4167
        %4169 = vrot.lane.b32.xlu0 %v4155, 64
        %v4170 = vpop.permute.xlu0 %4169
        %4171 = vrot.lane.b32.xlu0 %v4156, 64
        %v4172 = vpop.permute.xlu0 %4171
        %4181 = vmatpush.bf16.msra.mxu0 %v4172
        %4182 = vmatpush.bf16.msra.mxu0 %v4170
        %4183 = vmatpush.bf16.msra.mxu0 %v4168
        %4184 = vmatpush.bf16.msra.mxu0 %v4166
        %4185 = vmatpush.bf16.msra.mxu0 %v4164
        %4186 = vmatpush.bf16.msra.mxu0 %v4162
        %4187 = vmatpush.bf16.msra.mxu0 %v4160
        %4188 = vmatpush.bf16.msra.mxu0 %v4158
        %4189 = vmatmul.bf16.gmra.mxu0 %v4109
        %v4190 = vpop.f32.mrf.mxu0
        %v4191 = vadd.f32 0.0, %v4190
        %v4192 = vpop.f32.mrf.mxu0
        %v4193 = vadd.f32 0.0, %v4192
        %4194 = vmatmul.bf16.gmra.mxu0 %v4110
        %v4195 = vpop.f32.mrf.mxu0
        %v4196 = vadd.f32 0.0, %v4195
        %v4197 = vpop.f32.mrf.mxu0
        %v4198 = vadd.f32 0.0, %v4197
        %4199 = vmatmul.bf16.gmra.mxu0 %v4111
        %v4200 = vpop.f32.mrf.mxu0
        %v4201 = vadd.f32 0.0, %v4200
        %v4202 = vpop.f32.mrf.mxu0
        %v4203 = vadd.f32 0.0, %v4202
        %4204 = vmatmul.bf16.gmra.mxu0 %v4112
        %v4205 = vpop.f32.mrf.mxu0
        %v4206 = vadd.f32 0.0, %v4205
        %v4207 = vpop.f32.mrf.mxu0
        %v4208 = vadd.f32 0.0, %v4207
        %4209 = vmatmul.bf16.gmra.mxu0 %v4113
        %v4210 = vpop.f32.mrf.mxu0
        %v4211 = vadd.f32 0.0, %v4210
        %v4212 = vpop.f32.mrf.mxu0
        %v4213 = vadd.f32 0.0, %v4212
        %4214 = vmatmul.bf16.gmra.mxu0 %v4114
        %v4215 = vpop.f32.mrf.mxu0
        %v4216 = vadd.f32 0.0, %v4215
        %v4217 = vpop.f32.mrf.mxu0
        %v4218 = vadd.f32 0.0, %v4217
        %4219 = vmatmul.bf16.gmra.mxu0 %v4115
        %v4220 = vpop.f32.mrf.mxu0
        %v4221 = vadd.f32 0.0, %v4220
        %v4222 = vpop.f32.mrf.mxu0
        %v4223 = vadd.f32 0.0, %v4222
        %4224 = vmatmul.bf16.gmra.mxu0 %v4116
        %v4225 = vpop.f32.mrf.mxu0
        %v4226 = vadd.f32 0.0, %v4225
        %v4227 = vpop.f32.mrf.mxu0
        %v4228 = vadd.f32 0.0, %v4227
        %4229 = vdwg.mxu0
        %v4230 = vrcp.pop %v4078
        %v4231 = vrcp.pop %v4080
        %v4232 = vrcp.pop %v4082
        %v4233 = vrcp.pop %v4084
        %v4234 = vrcp.pop %v4086
        %v4235 = vrcp.pop %v4088
        %v4236 = vrcp.pop %v4090
        %v4237 = vrcp.pop %v4092
        %v4238 = vrcp.pop %v4094
        %v4239 = vrcp.pop %v4096
        %v4240 = vrcp.pop %v4098
        %v4241 = vrcp.pop %v4100
        %v4242 = vrcp.pop %v4102
        %v4243 = vrcp.pop %v4104
        %v4244 = vrcp.pop %v4106
        %v4245 = vrcp.pop %v4108
        %v4246 = vmul.f32 %v4191, %v4230
        %v4247 = vmul.f32 %v4193, %v4231
        %v4248 = vmul.f32 %v4196, %v4232
        %v4249 = vmul.f32 %v4198, %v4233
        %v4250 = vmul.f32 %v4201, %v4234
        %v4251 = vmul.f32 %v4203, %v4235
        %v4252 = vmul.f32 %v4206, %v4236
        %v4253 = vmul.f32 %v4208, %v4237
        %v4254 = vmul.f32 %v4211, %v4238
        %v4255 = vmul.f32 %v4213, %v4239
        %v4256 = vmul.f32 %v4216, %v4240
        %v4257 = vmul.f32 %v4218, %v4241
        %v4258 = vmul.f32 %v4221, %v4242
        %v4259 = vmul.f32 %v4223, %v4243
        %v4260 = vmul.f32 %v4226, %v4244
        %v4261 = vmul.f32 %v4228, %v4245
        %v4262 = vpack.c.bf16 %v4246, %v4246
        %v4263 = vpack.c.bf16 %v4247, %v4247
        %v4264 = vpack.c.bf16 %v4248, %v4248
        %v4265 = vpack.c.bf16 %v4249, %v4249
        %v4266 = vpack.c.bf16 %v4250, %v4250
        %v4267 = vpack.c.bf16 %v4251, %v4251
        %v4268 = vpack.c.bf16 %v4252, %v4252
        %v4269 = vpack.c.bf16 %v4253, %v4253
        %v4270 = vpack.c.bf16 %v4254, %v4254
        %v4271 = vpack.c.bf16 %v4255, %v4255
        %v4272 = vpack.c.bf16 %v4256, %v4256
        %v4273 = vpack.c.bf16 %v4257, %v4257
        %v4274 = vpack.c.bf16 %v4258, %v4258
        %v4275 = vpack.c.bf16 %v4259, %v4259
        %v4276 = vpack.c.bf16 %v4260, %v4260
        %v4277 = vpack.c.bf16 %v4261, %v4261
        %4294 = vrot.lane.b32.xlu0 %v4262, 64
        %v4295 = vpop.permute.xlu0 %4294
        %4296 = vrot.lane.b32.xlu0 %v4263, 64
        %v4297 = vpop.permute.xlu0 %4296
        %4298 = vrot.lane.b32.xlu0 %v4264, 64
        %v4299 = vpop.permute.xlu0 %4298
        %4300 = vrot.lane.b32.xlu0 %v4265, 64
        %v4301 = vpop.permute.xlu0 %4300
        %4302 = vrot.lane.b32.xlu0 %v4266, 64
        %v4303 = vpop.permute.xlu0 %4302
        %4304 = vrot.lane.b32.xlu0 %v4267, 64
        %v4305 = vpop.permute.xlu0 %4304
        %4306 = vrot.lane.b32.xlu0 %v4268, 64
        %v4307 = vpop.permute.xlu0 %4306
        %4308 = vrot.lane.b32.xlu0 %v4269, 64
        %v4309 = vpop.permute.xlu0 %4308
        %4310 = vrot.lane.b32.xlu0 %v4270, 64
        %v4311 = vpop.permute.xlu0 %4310
        %4312 = vrot.lane.b32.xlu0 %v4271, 64
        %v4313 = vpop.permute.xlu0 %4312
        %4314 = vrot.lane.b32.xlu0 %v4272, 64
        %v4315 = vpop.permute.xlu0 %4314
        %4316 = vrot.lane.b32.xlu0 %v4273, 64
        %v4317 = vpop.permute.xlu0 %4316
        %4318 = vrot.lane.b32.xlu0 %v4274, 64
        %v4319 = vpop.permute.xlu0 %4318
        %4320 = vrot.lane.b32.xlu0 %v4275, 64
        %v4321 = vpop.permute.xlu0 %4320
        %4322 = vrot.lane.b32.xlu0 %v4276, 64
        %v4323 = vpop.permute.xlu0 %4322
        %4324 = vrot.lane.b32.xlu0 %v4277, 64
        %v4325 = vpop.permute.xlu0 %4324
        %vm4342 = vcmask 1043968
        %4343 = vst.msk [vmem:[#allocation3] sm:$0xf] %vm4342, %v4295
        %4344 = vst.msk [vmem:[#allocation3 + $0xc] sm:$0xf] %vm4342, %v4297
        %4345 = vst.msk [vmem:[#allocation3 + $0x18] sm:$0xf] %vm4342, %v4299
        %4346 = vst.msk [vmem:[#allocation3 + $0x24] sm:$0xf] %vm4342, %v4301
        %4347 = vst.msk [vmem:[#allocation3 + $0x30] sm:$0xf] %vm4342, %v4303
        %4348 = vst.msk [vmem:[#allocation3 + $0x3c] sm:$0xf] %vm4342, %v4305
        %4349 = vst.msk [vmem:[#allocation3 + $0x48] sm:$0xf] %vm4342, %v4307
        %4350 = vst.msk [vmem:[#allocation3 + $0x54] sm:$0xf] %vm4342, %v4309
        %4351 = vst.msk [vmem:[#allocation3 + $0x60] sm:$0xf] %vm4342, %v4311
        %4352 = vst.msk [vmem:[#allocation3 + $0x6c] sm:$0xf] %vm4342, %v4313
        %4353 = vst.msk [vmem:[#allocation3 + $0x78] sm:$0xf] %vm4342, %v4315
        %4354 = vst.msk [vmem:[#allocation3 + $0x84] sm:$0xf] %vm4342, %v4317
        %4355 = vst.msk [vmem:[#allocation3 + $0x90] sm:$0xf] %vm4342, %v4319
        %4356 = vst.msk [vmem:[#allocation3 + $0x9c] sm:$0xf] %vm4342, %v4321
        %4357 = vst.msk [vmem:[#allocation3 + $0xa8] sm:$0xf] %vm4342, %v4323
        %4358 = vst.msk [vmem:[#allocation3 + $0xb4] sm:$0xf] %vm4342, %v4325
        %v4359 = vld [vmem:[#allocation2 + $0x4] sm:$0xf]
        %v4360 = vld [vmem:[#allocation2 + $0x28] sm:$0xf]
        %v4361 = vld [vmem:[#allocation2 + $0x4c] sm:$0xf]
        %v4362 = vld [vmem:[#allocation2 + $0x70] sm:$0xf]
        %v4363 = vld [vmem:[#allocation2 + $0x94] sm:$0xf]
        %v4364 = vld [vmem:[#allocation2 + $0xb8] sm:$0xf]
        %v4365 = vld [vmem:[#allocation2 + $0xdc] sm:$0xf]
        %v4366 = vld [vmem:[#allocation2 + $0x100] sm:$0xf]
        %v4367 = vld [vmem:[#allocation2 + $0x124] sm:$0xf]
        %v4368 = vld [vmem:[#allocation2 + $0x148] sm:$0xf]
        %v4369 = vld [vmem:[#allocation2 + $0x16c] sm:$0xf]
        %v4370 = vld [vmem:[#allocation2 + $0x190] sm:$0xf]
        %v4371 = vld [vmem:[#allocation2 + $0x1b4] sm:$0xf]
        %v4372 = vld [vmem:[#allocation2 + $0x1d8] sm:$0xf]
        %v4373 = vld [vmem:[#allocation2 + $0x1fc] sm:$0xf]
        %v4374 = vld [vmem:[#allocation2 + $0x220] sm:$0xf]
        %v4375 = vld [vmem:[#allocation2 + $0x10] sm:$0xf]
        %v4376 = vld [vmem:[#allocation2 + $0x34] sm:$0xf]
        %v4377 = vld [vmem:[#allocation2 + $0x58] sm:$0xf]
        %v4378 = vld [vmem:[#allocation2 + $0x7c] sm:$0xf]
        %v4379 = vld [vmem:[#allocation2 + $0xa0] sm:$0xf]
        %v4380 = vld [vmem:[#allocation2 + $0xc4] sm:$0xf]
        %v4381 = vld [vmem:[#allocation2 + $0xe8] sm:$0xf]
        %v4382 = vld [vmem:[#allocation2 + $0x10c] sm:$0xf]
        %v4383 = vld [vmem:[#allocation2 + $0x130] sm:$0xf]
        %v4384 = vld [vmem:[#allocation2 + $0x154] sm:$0xf]
        %v4385 = vld [vmem:[#allocation2 + $0x178] sm:$0xf]
        %v4386 = vld [vmem:[#allocation2 + $0x19c] sm:$0xf]
        %v4387 = vld [vmem:[#allocation2 + $0x1c0] sm:$0xf]
        %v4388 = vld [vmem:[#allocation2 + $0x1e4] sm:$0xf]
        %v4389 = vld [vmem:[#allocation2 + $0x208] sm:$0xf]
        %v4390 = vld [vmem:[#allocation2 + $0x22c] sm:$0xf]
        %v4391 = vld [vmem:[#allocation2 + $0x1c] sm:$0xf]
        %v4392 = vld [vmem:[#allocation2 + $0x40] sm:$0xf]
        %v4393 = vld [vmem:[#allocation2 + $0x64] sm:$0xf]
        %v4394 = vld [vmem:[#allocation2 + $0x88] sm:$0xf]
        %v4395 = vld [vmem:[#allocation2 + $0xac] sm:$0xf]
        %v4396 = vld [vmem:[#allocation2 + $0xd0] sm:$0xf]
        %v4397 = vld [vmem:[#allocation2 + $0xf4] sm:$0xf]
        %v4398 = vld [vmem:[#allocation2 + $0x118] sm:$0xf]
        %v4399 = vld [vmem:[#allocation2 + $0x13c] sm:$0xf]
        %v4400 = vld [vmem:[#allocation2 + $0x160] sm:$0xf]
        %v4401 = vld [vmem:[#allocation2 + $0x184] sm:$0xf]
        %v4402 = vld [vmem:[#allocation2 + $0x1a8] sm:$0xf]
        %v4403 = vld [vmem:[#allocation2 + $0x1cc] sm:$0xf]
        %v4404 = vld [vmem:[#allocation2 + $0x1f0] sm:$0xf]
        %v4405 = vld [vmem:[#allocation2 + $0x214] sm:$0xf]
        %v4406 = vld [vmem:[#allocation2 + $0x238] sm:$0xf]
        %v4423 = vunpack.c.l.b16 %v4359
        %v4424 = vunpack.c.l.b16 %v4360
        %v4425 = vunpack.c.l.b16 %v4361
        %v4426 = vunpack.c.l.b16 %v4362
        %v4427 = vunpack.c.l.b16 %v4363
        %v4428 = vunpack.c.l.b16 %v4364
        %v4429 = vunpack.c.l.b16 %v4365
        %v4430 = vunpack.c.l.b16 %v4366
        %v4431 = vunpack.c.l.b16 %v4367
        %v4432 = vunpack.c.l.b16 %v4368
        %v4433 = vunpack.c.l.b16 %v4369
        %v4434 = vunpack.c.l.b16 %v4370
        %v4435 = vunpack.c.l.b16 %v4371
        %v4436 = vunpack.c.l.b16 %v4372
        %v4437 = vunpack.c.l.b16 %v4373
        %v4438 = vunpack.c.l.b16 %v4374
        %v4439 = vpack.c.b16 %v4424, %v4423
        %v4440 = vpack.c.b16 %v4426, %v4425
        %v4441 = vpack.c.b16 %v4428, %v4427
        %v4442 = vpack.c.b16 %v4430, %v4429
        %v4443 = vpack.c.b16 %v4432, %v4431
        %v4444 = vpack.c.b16 %v4434, %v4433
        %v4445 = vpack.c.b16 %v4436, %v4435
        %v4446 = vpack.c.b16 %v4438, %v4437
        %v4463 = vunpack.c.l.b16 %v4375
        %v4464 = vunpack.c.l.b16 %v4376
        %v4465 = vunpack.c.l.b16 %v4377
        %v4466 = vunpack.c.l.b16 %v4378
        %v4467 = vunpack.c.l.b16 %v4379
        %v4468 = vunpack.c.l.b16 %v4380
        %v4469 = vunpack.c.l.b16 %v4381
        %v4470 = vunpack.c.l.b16 %v4382
        %v4471 = vunpack.c.l.b16 %v4383
        %v4472 = vunpack.c.l.b16 %v4384
        %v4473 = vunpack.c.l.b16 %v4385
        %v4474 = vunpack.c.l.b16 %v4386
        %v4475 = vunpack.c.l.b16 %v4387
        %v4476 = vunpack.c.l.b16 %v4388
        %v4477 = vunpack.c.l.b16 %v4389
        %v4478 = vunpack.c.l.b16 %v4390
        %v4479 = vpack.c.b16 %v4464, %v4463
        %v4480 = vpack.c.b16 %v4466, %v4465
        %v4481 = vpack.c.b16 %v4468, %v4467
        %v4482 = vpack.c.b16 %v4470, %v4469
        %v4483 = vpack.c.b16 %v4472, %v4471
        %v4484 = vpack.c.b16 %v4474, %v4473
        %v4485 = vpack.c.b16 %v4476, %v4475
        %v4486 = vpack.c.b16 %v4478, %v4477
        %v4488 = vsel %vm3328, %v4439, 0
        %v4491 = vsel %vm3328, %v4440, 0
        %v4494 = vsel %vm3328, %v4441, 0
        %v4497 = vsel %vm3328, %v4442, 0
        %v4500 = vsel %vm3328, %v4443, 0
        %v4503 = vsel %vm3328, %v4444, 0
        %v4506 = vsel %vm3328, %v4445, 0
        %v4509 = vsel %vm3328, %v4446, 0
        %v4512 = vsel %vm3328, %v4479, 0
        %v4515 = vsel %vm3328, %v4480, 0
        %v4518 = vsel %vm3328, %v4481, 0
        %v4521 = vsel %vm3328, %v4482, 0
        %v4524 = vsel %vm3328, %v4483, 0
        %v4527 = vsel %vm3328, %v4484, 0
        %v4530 = vsel %vm3328, %v4485, 0
        %v4533 = vsel %vm3328, %v4486, 0
        %4535 = vmatpush.bf16.xpose.msra.mxu0 %v4533
        %4536 = vmatpush.bf16.xpose.msra.mxu0 %v4530
        %4537 = vmatpush.bf16.xpose.msra.mxu0 %v4527
        %4538 = vmatpush.bf16.xpose.msra.mxu0 %v4524
        %4539 = vmatpush.bf16.xpose.msra.mxu0 %v4521
        %4540 = vmatpush.bf16.xpose.msra.mxu0 %v4518
        %4541 = vmatpush.bf16.xpose.msra.mxu0 %v4515
        %4542 = vmatpush.bf16.xpose.msra.mxu0 %v4512
        %4543 = vmatmul.bf16.gmra.mxu0 %v4488
        %v4544 = vpop.f32.mrf.mxu0
        %v4545 = vadd.f32 0.0, %v4544
        %v4546 = vpop.f32.mrf.mxu0
        %v4547 = vadd.f32 0.0, %v4546
        %4548 = vmatmul.bf16.gmra.mxu0 %v4491
        %v4549 = vpop.f32.mrf.mxu0
        %v4550 = vadd.f32 0.0, %v4549
        %v4551 = vpop.f32.mrf.mxu0
        %v4552 = vadd.f32 0.0, %v4551
        %4553 = vmatmul.bf16.gmra.mxu0 %v4494
        %v4554 = vpop.f32.mrf.mxu0
        %v4555 = vadd.f32 0.0, %v4554
        %v4556 = vpop.f32.mrf.mxu0
        %v4557 = vadd.f32 0.0, %v4556
        %4558 = vmatmul.bf16.gmra.mxu0 %v4497
        %v4559 = vpop.f32.mrf.mxu0
        %v4560 = vadd.f32 0.0, %v4559
        %v4561 = vpop.f32.mrf.mxu0
        %v4562 = vadd.f32 0.0, %v4561
        %4563 = vmatmul.bf16.gmra.mxu0 %v4500
        %v4564 = vpop.f32.mrf.mxu0
        %v4565 = vadd.f32 0.0, %v4564
        %v4566 = vpop.f32.mrf.mxu0
        %v4567 = vadd.f32 0.0, %v4566
        %4568 = vmatmul.bf16.gmra.mxu0 %v4503
        %v4569 = vpop.f32.mrf.mxu0
        %v4570 = vadd.f32 0.0, %v4569
        %v4571 = vpop.f32.mrf.mxu0
        %v4572 = vadd.f32 0.0, %v4571
        %4573 = vmatmul.bf16.gmra.mxu0 %v4506
        %v4574 = vpop.f32.mrf.mxu0
        %v4575 = vadd.f32 0.0, %v4574
        %v4576 = vpop.f32.mrf.mxu0
        %v4577 = vadd.f32 0.0, %v4576
        %4578 = vmatmul.bf16.gmra.mxu0 %v4509
        %v4579 = vpop.f32.mrf.mxu0
        %v4580 = vadd.f32 0.0, %v4579
        %v4581 = vpop.f32.mrf.mxu0
        %v4582 = vadd.f32 0.0, %v4581
        %4583 = vdwg.mxu0
        %v4584 = vsel %vm3184, %v4545, -1e+30
        %v4585 = vsel %vm3185, %v4547, -1e+30
        %v4586 = vsel %vm3186, %v4550, -1e+30
        %v4587 = vsel %vm3187, %v4552, -1e+30
        %v4588 = vsel %vm3188, %v4555, -1e+30
        %v4589 = vsel %vm3189, %v4557, -1e+30
        %v4590 = vsel %vm3190, %v4560, -1e+30
        %v4591 = vsel %vm3191, %v4562, -1e+30
        %v4592 = vsel %vm3192, %v4565, -1e+30
        %v4593 = vsel %vm3193, %v4567, -1e+30
        %v4594 = vsel %vm3194, %v4570, -1e+30
        %v4595 = vsel %vm3195, %v4572, -1e+30
        %v4596 = vsel %vm3196, %v4575, -1e+30
        %v4597 = vsel %vm3197, %v4577, -1e+30
        %v4598 = vsel %vm3198, %v4580, -1e+30
        %v4599 = vsel %vm3199, %v4582, -1e+30
        %4600 = vmax.xlane.f32.xlu0 %v4584
        %v4601 = vpop.xlane.xlu0 %4600
        %4602 = vmax.xlane.f32.xlu0 %v4585
        %v4603 = vpop.xlane.xlu0 %4602
        %4604 = vmax.xlane.f32.xlu0 %v4586
        %v4605 = vpop.xlane.xlu0 %4604
        %4606 = vmax.xlane.f32.xlu0 %v4587
        %v4607 = vpop.xlane.xlu0 %4606
        %4608 = vmax.xlane.f32.xlu0 %v4588
        %v4609 = vpop.xlane.xlu0 %4608
        %4610 = vmax.xlane.f32.xlu0 %v4589
        %v4611 = vpop.xlane.xlu0 %4610
        %4612 = vmax.xlane.f32.xlu0 %v4590
        %v4613 = vpop.xlane.xlu0 %4612
        %4614 = vmax.xlane.f32.xlu0 %v4591
        %v4615 = vpop.xlane.xlu0 %4614
        %4616 = vmax.xlane.f32.xlu0 %v4592
        %v4617 = vpop.xlane.xlu0 %4616
        %4618 = vmax.xlane.f32.xlu0 %v4593
        %v4619 = vpop.xlane.xlu0 %4618
        %4620 = vmax.xlane.f32.xlu0 %v4594
        %v4621 = vpop.xlane.xlu0 %4620
        %4622 = vmax.xlane.f32.xlu0 %v4595
        %v4623 = vpop.xlane.xlu0 %4622
        %4624 = vmax.xlane.f32.xlu0 %v4596
        %v4625 = vpop.xlane.xlu0 %4624
        %4626 = vmax.xlane.f32.xlu0 %v4597
        %v4627 = vpop.xlane.xlu0 %4626
        %4628 = vmax.xlane.f32.xlu0 %v4598
        %v4629 = vpop.xlane.xlu0 %4628
        %4630 = vmax.xlane.f32.xlu0 %v4599
        %v4631 = vpop.xlane.xlu0 %4630
        %v4632 = vsub.f32 %v4584, %v4601
        %v4633 = vsub.f32 %v4585, %v4603
        %v4634 = vsub.f32 %v4586, %v4605
        %v4635 = vsub.f32 %v4587, %v4607
        %v4636 = vsub.f32 %v4588, %v4609
        %v4637 = vsub.f32 %v4589, %v4611
        %v4638 = vsub.f32 %v4590, %v4613
        %v4639 = vsub.f32 %v4591, %v4615
        %v4640 = vsub.f32 %v4592, %v4617
        %v4641 = vsub.f32 %v4593, %v4619
        %v4642 = vsub.f32 %v4594, %v4621
        %v4643 = vsub.f32 %v4595, %v4623
        %v4644 = vsub.f32 %v4596, %v4625
        %v4645 = vsub.f32 %v4597, %v4627
        %v4646 = vsub.f32 %v4598, %v4629
        %v4647 = vsub.f32 %v4599, %v4631
        %v4648 = vmul.f32 %v4632, 1.442695
        %v4649 = vpow.pop %v4648
        %v4650 = vmul.f32 %v4633, 1.442695
        %v4651 = vpow.pop %v4650
        %v4652 = vmul.f32 %v4634, 1.442695
        %v4653 = vpow.pop %v4652
        %v4654 = vmul.f32 %v4635, 1.442695
        %v4655 = vpow.pop %v4654
        %v4656 = vmul.f32 %v4636, 1.442695
        %v4657 = vpow.pop %v4656
        %v4658 = vmul.f32 %v4637, 1.442695
        %v4659 = vpow.pop %v4658
        %v4660 = vmul.f32 %v4638, 1.442695
        %v4661 = vpow.pop %v4660
        %v4662 = vmul.f32 %v4639, 1.442695
        %v4663 = vpow.pop %v4662
        %v4664 = vmul.f32 %v4640, 1.442695
        %v4665 = vpow.pop %v4664
        %v4666 = vmul.f32 %v4641, 1.442695
        %v4667 = vpow.pop %v4666
        %v4668 = vmul.f32 %v4642, 1.442695
        %v4669 = vpow.pop %v4668
        %v4670 = vmul.f32 %v4643, 1.442695
        %v4671 = vpow.pop %v4670
        %v4672 = vmul.f32 %v4644, 1.442695
        %v4673 = vpow.pop %v4672
        %v4674 = vmul.f32 %v4645, 1.442695
        %v4675 = vpow.pop %v4674
        %v4676 = vmul.f32 %v4646, 1.442695
        %v4677 = vpow.pop %v4676
        %v4678 = vmul.f32 %v4647, 1.442695
        %v4679 = vpow.pop %v4678
        %4680 = vadd.xlane.f32.xlu0 %v4649
        %v4681 = vpop.xlane.xlu0 %4680
        %4682 = vadd.xlane.f32.xlu0 %v4651
        %v4683 = vpop.xlane.xlu0 %4682
        %4684 = vadd.xlane.f32.xlu0 %v4653
        %v4685 = vpop.xlane.xlu0 %4684
        %4686 = vadd.xlane.f32.xlu0 %v4655
        %v4687 = vpop.xlane.xlu0 %4686
        %4688 = vadd.xlane.f32.xlu0 %v4657
        %v4689 = vpop.xlane.xlu0 %4688
        %4690 = vadd.xlane.f32.xlu0 %v4659
        %v4691 = vpop.xlane.xlu0 %4690
        %4692 = vadd.xlane.f32.xlu0 %v4661
        %v4693 = vpop.xlane.xlu0 %4692
        %4694 = vadd.xlane.f32.xlu0 %v4663
        %v4695 = vpop.xlane.xlu0 %4694
        %4696 = vadd.xlane.f32.xlu0 %v4665
        %v4697 = vpop.xlane.xlu0 %4696
        %4698 = vadd.xlane.f32.xlu0 %v4667
        %v4699 = vpop.xlane.xlu0 %4698
        %4700 = vadd.xlane.f32.xlu0 %v4669
        %v4701 = vpop.xlane.xlu0 %4700
        %4702 = vadd.xlane.f32.xlu0 %v4671
        %v4703 = vpop.xlane.xlu0 %4702
        %4704 = vadd.xlane.f32.xlu0 %v4673
        %v4705 = vpop.xlane.xlu0 %4704
        %4706 = vadd.xlane.f32.xlu0 %v4675
        %v4707 = vpop.xlane.xlu0 %4706
        %4708 = vadd.xlane.f32.xlu0 %v4677
        %v4709 = vpop.xlane.xlu0 %4708
        %4710 = vadd.xlane.f32.xlu0 %v4679
        %v4711 = vpop.xlane.xlu0 %4710
        %v4712 = vpack.c.bf16 %v4651, %v4649
        %v4713 = vpack.c.bf16 %v4655, %v4653
        %v4714 = vpack.c.bf16 %v4659, %v4657
        %v4715 = vpack.c.bf16 %v4663, %v4661
        %v4716 = vpack.c.bf16 %v4667, %v4665
        %v4717 = vpack.c.bf16 %v4671, %v4669
        %v4718 = vpack.c.bf16 %v4675, %v4673
        %v4719 = vpack.c.bf16 %v4679, %v4677
        %v4736 = vunpack.c.l.b16 %v4391
        %v4737 = vunpack.c.l.b16 %v4392
        %v4738 = vunpack.c.l.b16 %v4393
        %v4739 = vunpack.c.l.b16 %v4394
        %v4740 = vunpack.c.l.b16 %v4395
        %v4741 = vunpack.c.l.b16 %v4396
        %v4742 = vunpack.c.l.b16 %v4397
        %v4743 = vunpack.c.l.b16 %v4398
        %v4744 = vunpack.c.l.b16 %v4399
        %v4745 = vunpack.c.l.b16 %v4400
        %v4746 = vunpack.c.l.b16 %v4401
        %v4747 = vunpack.c.l.b16 %v4402
        %v4748 = vunpack.c.l.b16 %v4403
        %v4749 = vunpack.c.l.b16 %v4404
        %v4750 = vunpack.c.l.b16 %v4405
        %v4751 = vunpack.c.l.b16 %v4406
        %v4752 = vpack.c.b16 %v4737, %v4736
        %v4753 = vpack.c.b16 %v4739, %v4738
        %v4754 = vpack.c.b16 %v4741, %v4740
        %v4755 = vpack.c.b16 %v4743, %v4742
        %v4756 = vpack.c.b16 %v4745, %v4744
        %v4757 = vpack.c.b16 %v4747, %v4746
        %v4758 = vpack.c.b16 %v4749, %v4748
        %v4759 = vpack.c.b16 %v4751, %v4750
        %4768 = vmatpush.bf16.msra.mxu0 %v4759
        %4769 = vmatpush.bf16.msra.mxu0 %v4758
        %4770 = vmatpush.bf16.msra.mxu0 %v4757
        %4771 = vmatpush.bf16.msra.mxu0 %v4756
        %4772 = vmatpush.bf16.msra.mxu0 %v4755
        %4773 = vmatpush.bf16.msra.mxu0 %v4754
        %4774 = vmatpush.bf16.msra.mxu0 %v4753
        %4775 = vmatpush.bf16.msra.mxu0 %v4752
        %4776 = vmatmul.bf16.gmra.mxu0 %v4712
        %v4777 = vpop.f32.mrf.mxu0
        %v4778 = vadd.f32 0.0, %v4777
        %v4779 = vpop.f32.mrf.mxu0
        %v4780 = vadd.f32 0.0, %v4779
        %4781 = vmatmul.bf16.gmra.mxu0 %v4713
        %v4782 = vpop.f32.mrf.mxu0
        %v4783 = vadd.f32 0.0, %v4782
        %v4784 = vpop.f32.mrf.mxu0
        %v4785 = vadd.f32 0.0, %v4784
        %4786 = vmatmul.bf16.gmra.mxu0 %v4714
        %v4787 = vpop.f32.mrf.mxu0
        %v4788 = vadd.f32 0.0, %v4787
        %v4789 = vpop.f32.mrf.mxu0
        %v4790 = vadd.f32 0.0, %v4789
        %4791 = vmatmul.bf16.gmra.mxu0 %v4715
        %v4792 = vpop.f32.mrf.mxu0
        %v4793 = vadd.f32 0.0, %v4792
        %v4794 = vpop.f32.mrf.mxu0
        %v4795 = vadd.f32 0.0, %v4794
        %4796 = vmatmul.bf16.gmra.mxu0 %v4716
        %v4797 = vpop.f32.mrf.mxu0
        %v4798 = vadd.f32 0.0, %v4797
        %v4799 = vpop.f32.mrf.mxu0
        %v4800 = vadd.f32 0.0, %v4799
        %4801 = vmatmul.bf16.gmra.mxu0 %v4717
        %v4802 = vpop.f32.mrf.mxu0
        %v4803 = vadd.f32 0.0, %v4802
        %v4804 = vpop.f32.mrf.mxu0
        %v4805 = vadd.f32 0.0, %v4804
        %4806 = vmatmul.bf16.gmra.mxu0 %v4718
        %v4807 = vpop.f32.mrf.mxu0
        %v4808 = vadd.f32 0.0, %v4807
        %v4809 = vpop.f32.mrf.mxu0
        %v4810 = vadd.f32 0.0, %v4809
        %4811 = vmatmul.bf16.gmra.mxu0 %v4719
        %v4812 = vpop.f32.mrf.mxu0
        %v4813 = vadd.f32 0.0, %v4812
        %v4814 = vpop.f32.mrf.mxu0
        %v4815 = vadd.f32 0.0, %v4814
        %4816 = vdwg.mxu0
        %v4817 = vrcp.pop %v4681
        %v4818 = vrcp.pop %v4683
        %v4819 = vrcp.pop %v4685
        %v4820 = vrcp.pop %v4687
        %v4821 = vrcp.pop %v4689
        %v4822 = vrcp.pop %v4691
        %v4823 = vrcp.pop %v4693
        %v4824 = vrcp.pop %v4695
        %v4825 = vrcp.pop %v4697
        %v4826 = vrcp.pop %v4699
        %v4827 = vrcp.pop %v4701
        %v4828 = vrcp.pop %v4703
        %v4829 = vrcp.pop %v4705
        %v4830 = vrcp.pop %v4707
        %v4831 = vrcp.pop %v4709
        %v4832 = vrcp.pop %v4711
        %v4833 = vmul.f32 %v4778, %v4817
        %v4834 = vmul.f32 %v4780, %v4818
        %v4835 = vmul.f32 %v4783, %v4819
        %v4836 = vmul.f32 %v4785, %v4820
        %v4837 = vmul.f32 %v4788, %v4821
        %v4838 = vmul.f32 %v4790, %v4822
        %v4839 = vmul.f32 %v4793, %v4823
        %v4840 = vmul.f32 %v4795, %v4824
        %v4841 = vmul.f32 %v4798, %v4825
        %v4842 = vmul.f32 %v4800, %v4826
        %v4843 = vmul.f32 %v4803, %v4827
        %v4844 = vmul.f32 %v4805, %v4828
        %v4845 = vmul.f32 %v4808, %v4829
        %v4846 = vmul.f32 %v4810, %v4830
        %v4847 = vmul.f32 %v4813, %v4831
        %v4848 = vmul.f32 %v4815, %v4832
        %v4849 = vpack.c.bf16 %v4833, %v4833
        %v4850 = vpack.c.bf16 %v4834, %v4834
        %v4851 = vpack.c.bf16 %v4835, %v4835
        %v4852 = vpack.c.bf16 %v4836, %v4836
        %v4853 = vpack.c.bf16 %v4837, %v4837
        %v4854 = vpack.c.bf16 %v4838, %v4838
        %v4855 = vpack.c.bf16 %v4839, %v4839
        %v4856 = vpack.c.bf16 %v4840, %v4840
        %v4857 = vpack.c.bf16 %v4841, %v4841
        %v4858 = vpack.c.bf16 %v4842, %v4842
        %v4859 = vpack.c.bf16 %v4843, %v4843
        %v4860 = vpack.c.bf16 %v4844, %v4844
        %v4861 = vpack.c.bf16 %v4845, %v4845
        %v4862 = vpack.c.bf16 %v4846, %v4846
        %v4863 = vpack.c.bf16 %v4847, %v4847
        %v4864 = vpack.c.bf16 %v4848, %v4848
        %4865 = vst.msk [vmem:[#allocation3 + $0x4] sm:$0xf] %vm3707, %v4849
        %4866 = vst.msk [vmem:[#allocation3 + $0x10] sm:$0xf] %vm3707, %v4850
        %4867 = vst.msk [vmem:[#allocation3 + $0x1c] sm:$0xf] %vm3707, %v4851
        %4868 = vst.msk [vmem:[#allocation3 + $0x28] sm:$0xf] %vm3707, %v4852
        %4869 = vst.msk [vmem:[#allocation3 + $0x34] sm:$0xf] %vm3707, %v4853
        %4870 = vst.msk [vmem:[#allocation3 + $0x40] sm:$0xf] %vm3707, %v4854
        %4871 = vst.msk [vmem:[#allocation3 + $0x4c] sm:$0xf] %vm3707, %v4855
        %4872 = vst.msk [vmem:[#allocation3 + $0x58] sm:$0xf] %vm3707, %v4856
        %4873 = vst.msk [vmem:[#allocation3 + $0x64] sm:$0xf] %vm3707, %v4857
        %4874 = vst.msk [vmem:[#allocation3 + $0x70] sm:$0xf] %vm3707, %v4858
        %4875 = vst.msk [vmem:[#allocation3 + $0x7c] sm:$0xf] %vm3707, %v4859
        %4876 = vst.msk [vmem:[#allocation3 + $0x88] sm:$0xf] %vm3707, %v4860
        %4877 = vst.msk [vmem:[#allocation3 + $0x94] sm:$0xf] %vm3707, %v4861
        %4878 = vst.msk [vmem:[#allocation3 + $0xa0] sm:$0xf] %vm3707, %v4862
        %4879 = vst.msk [vmem:[#allocation3 + $0xac] sm:$0xf] %vm3707, %v4863
        %4880 = vst.msk [vmem:[#allocation3 + $0xb8] sm:$0xf] %vm3707, %v4864
        %v4881 = vld [vmem:[#allocation2 + $0x4] sm:$0xf]
        %v4882 = vld [vmem:[#allocation2 + $0x28] sm:$0xf]
        %v4883 = vld [vmem:[#allocation2 + $0x4c] sm:$0xf]
        %v4884 = vld [vmem:[#allocation2 + $0x70] sm:$0xf]
        %v4885 = vld [vmem:[#allocation2 + $0x94] sm:$0xf]
        %v4886 = vld [vmem:[#allocation2 + $0xb8] sm:$0xf]
        %v4887 = vld [vmem:[#allocation2 + $0xdc] sm:$0xf]
        %v4888 = vld [vmem:[#allocation2 + $0x100] sm:$0xf]
        %v4889 = vld [vmem:[#allocation2 + $0x124] sm:$0xf]
        %v4890 = vld [vmem:[#allocation2 + $0x148] sm:$0xf]
        %v4891 = vld [vmem:[#allocation2 + $0x16c] sm:$0xf]
        %v4892 = vld [vmem:[#allocation2 + $0x190] sm:$0xf]
        %v4893 = vld [vmem:[#allocation2 + $0x1b4] sm:$0xf]
        %v4894 = vld [vmem:[#allocation2 + $0x1d8] sm:$0xf]
        %v4895 = vld [vmem:[#allocation2 + $0x1fc] sm:$0xf]
        %v4896 = vld [vmem:[#allocation2 + $0x220] sm:$0xf]
        %v4897 = vld [vmem:[#allocation2 + $0x10] sm:$0xf]
        %v4898 = vld [vmem:[#allocation2 + $0x34] sm:$0xf]
        %v4899 = vld [vmem:[#allocation2 + $0x58] sm:$0xf]
        %v4900 = vld [vmem:[#allocation2 + $0x7c] sm:$0xf]
        %v4901 = vld [vmem:[#allocation2 + $0xa0] sm:$0xf]
        %v4902 = vld [vmem:[#allocation2 + $0xc4] sm:$0xf]
        %v4903 = vld [vmem:[#allocation2 + $0xe8] sm:$0xf]
        %v4904 = vld [vmem:[#allocation2 + $0x10c] sm:$0xf]
        %v4905 = vld [vmem:[#allocation2 + $0x130] sm:$0xf]
        %v4906 = vld [vmem:[#allocation2 + $0x154] sm:$0xf]
        %v4907 = vld [vmem:[#allocation2 + $0x178] sm:$0xf]
        %v4908 = vld [vmem:[#allocation2 + $0x19c] sm:$0xf]
        %v4909 = vld [vmem:[#allocation2 + $0x1c0] sm:$0xf]
        %v4910 = vld [vmem:[#allocation2 + $0x1e4] sm:$0xf]
        %v4911 = vld [vmem:[#allocation2 + $0x208] sm:$0xf]
        %v4912 = vld [vmem:[#allocation2 + $0x22c] sm:$0xf]
        %v4913 = vld [vmem:[#allocation2 + $0x1c] sm:$0xf]
        %v4914 = vld [vmem:[#allocation2 + $0x40] sm:$0xf]
        %v4915 = vld [vmem:[#allocation2 + $0x64] sm:$0xf]
        %v4916 = vld [vmem:[#allocation2 + $0x88] sm:$0xf]
        %v4917 = vld [vmem:[#allocation2 + $0xac] sm:$0xf]
        %v4918 = vld [vmem:[#allocation2 + $0xd0] sm:$0xf]
        %v4919 = vld [vmem:[#allocation2 + $0xf4] sm:$0xf]
        %v4920 = vld [vmem:[#allocation2 + $0x118] sm:$0xf]
        %v4921 = vld [vmem:[#allocation2 + $0x13c] sm:$0xf]
        %v4922 = vld [vmem:[#allocation2 + $0x160] sm:$0xf]
        %v4923 = vld [vmem:[#allocation2 + $0x184] sm:$0xf]
        %v4924 = vld [vmem:[#allocation2 + $0x1a8] sm:$0xf]
        %v4925 = vld [vmem:[#allocation2 + $0x1cc] sm:$0xf]
        %v4926 = vld [vmem:[#allocation2 + $0x1f0] sm:$0xf]
        %v4927 = vld [vmem:[#allocation2 + $0x214] sm:$0xf]
        %v4928 = vld [vmem:[#allocation2 + $0x238] sm:$0xf]
        %v4945 = vunpack.c.l.b16 %v4881
        %v4946 = vunpack.c.l.b16 %v4882
        %v4947 = vunpack.c.l.b16 %v4883
        %v4948 = vunpack.c.l.b16 %v4884
        %v4949 = vunpack.c.l.b16 %v4885
        %v4950 = vunpack.c.l.b16 %v4886
        %v4951 = vunpack.c.l.b16 %v4887
        %v4952 = vunpack.c.l.b16 %v4888
        %v4953 = vunpack.c.l.b16 %v4889
        %v4954 = vunpack.c.l.b16 %v4890
        %v4955 = vunpack.c.l.b16 %v4891
        %v4956 = vunpack.c.l.b16 %v4892
        %v4957 = vunpack.c.l.b16 %v4893
        %v4958 = vunpack.c.l.b16 %v4894
        %v4959 = vunpack.c.l.b16 %v4895
        %v4960 = vunpack.c.l.b16 %v4896
        %v4961 = vpack.c.b16 %v4946, %v4945
        %v4962 = vpack.c.b16 %v4948, %v4947
        %v4963 = vpack.c.b16 %v4950, %v4949
        %v4964 = vpack.c.b16 %v4952, %v4951
        %v4965 = vpack.c.b16 %v4954, %v4953
        %v4966 = vpack.c.b16 %v4956, %v4955
        %v4967 = vpack.c.b16 %v4958, %v4957
        %v4968 = vpack.c.b16 %v4960, %v4959
        %4969 = vrot.lane.b32.xlu0 %v4961, 64
        %v4970 = vpop.permute.xlu0 %4969
        %4971 = vrot.lane.b32.xlu0 %v4962, 64
        %v4972 = vpop.permute.xlu0 %4971
        %4973 = vrot.lane.b32.xlu0 %v4963, 64
        %v4974 = vpop.permute.xlu0 %4973
        %4975 = vrot.lane.b32.xlu0 %v4964, 64
        %v4976 = vpop.permute.xlu0 %4975
        %4977 = vrot.lane.b32.xlu0 %v4965, 64
        %v4978 = vpop.permute.xlu0 %4977
        %4979 = vrot.lane.b32.xlu0 %v4966, 64
        %v4980 = vpop.permute.xlu0 %4979
        %4981 = vrot.lane.b32.xlu0 %v4967, 64
        %v4982 = vpop.permute.xlu0 %4981
        %4983 = vrot.lane.b32.xlu0 %v4968, 64
        %v4984 = vpop.permute.xlu0 %4983
        %v5001 = vunpack.c.l.b16 %v4897
        %v5002 = vunpack.c.l.b16 %v4898
        %v5003 = vunpack.c.l.b16 %v4899
        %v5004 = vunpack.c.l.b16 %v4900
        %v5005 = vunpack.c.l.b16 %v4901
        %v5006 = vunpack.c.l.b16 %v4902
        %v5007 = vunpack.c.l.b16 %v4903
        %v5008 = vunpack.c.l.b16 %v4904
        %v5009 = vunpack.c.l.b16 %v4905
        %v5010 = vunpack.c.l.b16 %v4906
        %v5011 = vunpack.c.l.b16 %v4907
        %v5012 = vunpack.c.l.b16 %v4908
        %v5013 = vunpack.c.l.b16 %v4909
        %v5014 = vunpack.c.l.b16 %v4910
        %v5015 = vunpack.c.l.b16 %v4911
        %v5016 = vunpack.c.l.b16 %v4912
        %v5017 = vpack.c.b16 %v5002, %v5001
        %v5018 = vpack.c.b16 %v5004, %v5003
        %v5019 = vpack.c.b16 %v5006, %v5005
        %v5020 = vpack.c.b16 %v5008, %v5007
        %v5021 = vpack.c.b16 %v5010, %v5009
        %v5022 = vpack.c.b16 %v5012, %v5011
        %v5023 = vpack.c.b16 %v5014, %v5013
        %v5024 = vpack.c.b16 %v5016, %v5015
        %5025 = vrot.lane.b32.xlu0 %v5017, 64
        %v5026 = vpop.permute.xlu0 %5025
        %5027 = vrot.lane.b32.xlu0 %v5018, 64
        %v5028 = vpop.permute.xlu0 %5027
        %5029 = vrot.lane.b32.xlu0 %v5019, 64
        %v5030 = vpop.permute.xlu0 %5029
        %5031 = vrot.lane.b32.xlu0 %v5020, 64
        %v5032 = vpop.permute.xlu0 %5031
        %5033 = vrot.lane.b32.xlu0 %v5021, 64
        %v5034 = vpop.permute.xlu0 %5033
        %5035 = vrot.lane.b32.xlu0 %v5022, 64
        %v5036 = vpop.permute.xlu0 %5035
        %5037 = vrot.lane.b32.xlu0 %v5023, 64
        %v5038 = vpop.permute.xlu0 %5037
        %5039 = vrot.lane.b32.xlu0 %v5024, 64
        %v5040 = vpop.permute.xlu0 %5039
        %v5042 = vsel %vm3328, %v4970, 0
        %v5045 = vsel %vm3328, %v4972, 0
        %v5048 = vsel %vm3328, %v4974, 0
        %v5051 = vsel %vm3328, %v4976, 0
        %v5054 = vsel %vm3328, %v4978, 0
        %v5057 = vsel %vm3328, %v4980, 0
        %v5060 = vsel %vm3328, %v4982, 0
        %v5063 = vsel %vm3328, %v4984, 0
        %v5066 = vsel %vm3328, %v5026, 0
        %v5069 = vsel %vm3328, %v5028, 0
        %v5072 = vsel %vm3328, %v5030, 0
        %v5075 = vsel %vm3328, %v5032, 0
        %v5078 = vsel %vm3328, %v5034, 0
        %v5081 = vsel %vm3328, %v5036, 0
        %v5084 = vsel %vm3328, %v5038, 0
        %v5087 = vsel %vm3328, %v5040, 0
        %5089 = vmatpush.bf16.xpose.msra.mxu0 %v5087
        %5090 = vmatpush.bf16.xpose.msra.mxu0 %v5084
        %5091 = vmatpush.bf16.xpose.msra.mxu0 %v5081
        %5092 = vmatpush.bf16.xpose.msra.mxu0 %v5078
        %5093 = vmatpush.bf16.xpose.msra.mxu0 %v5075
        %5094 = vmatpush.bf16.xpose.msra.mxu0 %v5072
        %5095 = vmatpush.bf16.xpose.msra.mxu0 %v5069
        %5096 = vmatpush.bf16.xpose.msra.mxu0 %v5066
        %5097 = vmatmul.bf16.gmra.mxu0 %v5042
        %v5098 = vpop.f32.mrf.mxu0
        %v5099 = vadd.f32 0.0, %v5098
        %v5100 = vpop.f32.mrf.mxu0
        %v5101 = vadd.f32 0.0, %v5100
        %5102 = vmatmul.bf16.gmra.mxu0 %v5045
        %v5103 = vpop.f32.mrf.mxu0
        %v5104 = vadd.f32 0.0, %v5103
        %v5105 = vpop.f32.mrf.mxu0
        %v5106 = vadd.f32 0.0, %v5105
        %5107 = vmatmul.bf16.gmra.mxu0 %v5048
        %v5108 = vpop.f32.mrf.mxu0
        %v5109 = vadd.f32 0.0, %v5108
        %v5110 = vpop.f32.mrf.mxu0
        %v5111 = vadd.f32 0.0, %v5110
        %5112 = vmatmul.bf16.gmra.mxu0 %v5051
        %v5113 = vpop.f32.mrf.mxu0
        %v5114 = vadd.f32 0.0, %v5113
        %v5115 = vpop.f32.mrf.mxu0
        %v5116 = vadd.f32 0.0, %v5115
        %5117 = vmatmul.bf16.gmra.mxu0 %v5054
        %v5118 = vpop.f32.mrf.mxu0
        %v5119 = vadd.f32 0.0, %v5118
        %v5120 = vpop.f32.mrf.mxu0
        %v5121 = vadd.f32 0.0, %v5120
        %5122 = vmatmul.bf16.gmra.mxu0 %v5057
        %v5123 = vpop.f32.mrf.mxu0
        %v5124 = vadd.f32 0.0, %v5123
        %v5125 = vpop.f32.mrf.mxu0
        %v5126 = vadd.f32 0.0, %v5125
        %5127 = vmatmul.bf16.gmra.mxu0 %v5060
        %v5128 = vpop.f32.mrf.mxu0
        %v5129 = vadd.f32 0.0, %v5128
        %v5130 = vpop.f32.mrf.mxu0
        %v5131 = vadd.f32 0.0, %v5130
        %5132 = vmatmul.bf16.gmra.mxu0 %v5063
        %v5133 = vpop.f32.mrf.mxu0
        %v5134 = vadd.f32 0.0, %v5133
        %v5135 = vpop.f32.mrf.mxu0
        %v5136 = vadd.f32 0.0, %v5135
        %5137 = vdwg.mxu0
        %v5138 = vsel %vm3184, %v5099, -1e+30
        %v5139 = vsel %vm3185, %v5101, -1e+30
        %v5140 = vsel %vm3186, %v5104, -1e+30
        %v5141 = vsel %vm3187, %v5106, -1e+30
        %v5142 = vsel %vm3188, %v5109, -1e+30
        %v5143 = vsel %vm3189, %v5111, -1e+30
        %v5144 = vsel %vm3190, %v5114, -1e+30
        %v5145 = vsel %vm3191, %v5116, -1e+30
        %v5146 = vsel %vm3192, %v5119, -1e+30
        %v5147 = vsel %vm3193, %v5121, -1e+30
        %v5148 = vsel %vm3194, %v5124, -1e+30
        %v5149 = vsel %vm3195, %v5126, -1e+30
        %v5150 = vsel %vm3196, %v5129, -1e+30
        %v5151 = vsel %vm3197, %v5131, -1e+30
        %v5152 = vsel %vm3198, %v5134, -1e+30
        %v5153 = vsel %vm3199, %v5136, -1e+30
        %5154 = vmax.xlane.f32.xlu0 %v5138
        %v5155 = vpop.xlane.xlu0 %5154
        %5156 = vmax.xlane.f32.xlu0 %v5139
        %v5157 = vpop.xlane.xlu0 %5156
        %5158 = vmax.xlane.f32.xlu0 %v5140
        %v5159 = vpop.xlane.xlu0 %5158
        %5160 = vmax.xlane.f32.xlu0 %v5141
        %v5161 = vpop.xlane.xlu0 %5160
        %5162 = vmax.xlane.f32.xlu0 %v5142
        %v5163 = vpop.xlane.xlu0 %5162
        %5164 = vmax.xlane.f32.xlu0 %v5143
        %v5165 = vpop.xlane.xlu0 %5164
        %5166 = vmax.xlane.f32.xlu0 %v5144
        %v5167 = vpop.xlane.xlu0 %5166
        %5168 = vmax.xlane.f32.xlu0 %v5145
        %v5169 = vpop.xlane.xlu0 %5168
        %5170 = vmax.xlane.f32.xlu0 %v5146
        %v5171 = vpop.xlane.xlu0 %5170
        %5172 = vmax.xlane.f32.xlu0 %v5147
        %v5173 = vpop.xlane.xlu0 %5172
        %5174 = vmax.xlane.f32.xlu0 %v5148
        %v5175 = vpop.xlane.xlu0 %5174
        %5176 = vmax.xlane.f32.xlu0 %v5149
        %v5177 = vpop.xlane.xlu0 %5176
        %5178 = vmax.xlane.f32.xlu0 %v5150
        %v5179 = vpop.xlane.xlu0 %5178
        %5180 = vmax.xlane.f32.xlu0 %v5151
        %v5181 = vpop.xlane.xlu0 %5180
        %5182 = vmax.xlane.f32.xlu0 %v5152
        %v5183 = vpop.xlane.xlu0 %5182
        %5184 = vmax.xlane.f32.xlu0 %v5153
        %v5185 = vpop.xlane.xlu0 %5184
        %v5186 = vsub.f32 %v5138, %v5155
        %v5187 = vsub.f32 %v5139, %v5157
        %v5188 = vsub.f32 %v5140, %v5159
        %v5189 = vsub.f32 %v5141, %v5161
        %v5190 = vsub.f32 %v5142, %v5163
        %v5191 = vsub.f32 %v5143, %v5165
        %v5192 = vsub.f32 %v5144, %v5167
        %v5193 = vsub.f32 %v5145, %v5169
        %v5194 = vsub.f32 %v5146, %v5171
        %v5195 = vsub.f32 %v5147, %v5173
        %v5196 = vsub.f32 %v5148, %v5175
        %v5197 = vsub.f32 %v5149, %v5177
        %v5198 = vsub.f32 %v5150, %v5179
        %v5199 = vsub.f32 %v5151, %v5181
        %v5200 = vsub.f32 %v5152, %v5183
        %v5201 = vsub.f32 %v5153, %v5185
        %v5202 = vmul.f32 %v5186, 1.442695
        %v5203 = vpow.pop %v5202
        %v5204 = vmul.f32 %v5187, 1.442695
        %v5205 = vpow.pop %v5204
        %v5206 = vmul.f32 %v5188, 1.442695
        %v5207 = vpow.pop %v5206
        %v5208 = vmul.f32 %v5189, 1.442695
        %v5209 = vpow.pop %v5208
        %v5210 = vmul.f32 %v5190, 1.442695
        %v5211 = vpow.pop %v5210
        %v5212 = vmul.f32 %v5191, 1.442695
        %v5213 = vpow.pop %v5212
        %v5214 = vmul.f32 %v5192, 1.442695
        %v5215 = vpow.pop %v5214
        %v5216 = vmul.f32 %v5193, 1.442695
        %v5217 = vpow.pop %v5216
        %v5218 = vmul.f32 %v5194, 1.442695
        %v5219 = vpow.pop %v5218
        %v5220 = vmul.f32 %v5195, 1.442695
        %v5221 = vpow.pop %v5220
        %v5222 = vmul.f32 %v5196, 1.442695
        %v5223 = vpow.pop %v5222
        %v5224 = vmul.f32 %v5197, 1.442695
        %v5225 = vpow.pop %v5224
        %v5226 = vmul.f32 %v5198, 1.442695
        %v5227 = vpow.pop %v5226
        %v5228 = vmul.f32 %v5199, 1.442695
        %v5229 = vpow.pop %v5228
        %v5230 = vmul.f32 %v5200, 1.442695
        %v5231 = vpow.pop %v5230
        %v5232 = vmul.f32 %v5201, 1.442695
        %v5233 = vpow.pop %v5232
        %5234 = vadd.xlane.f32.xlu0 %v5203
        %v5235 = vpop.xlane.xlu0 %5234
        %5236 = vadd.xlane.f32.xlu0 %v5205
        %v5237 = vpop.xlane.xlu0 %5236
        %5238 = vadd.xlane.f32.xlu0 %v5207
        %v5239 = vpop.xlane.xlu0 %5238
        %5240 = vadd.xlane.f32.xlu0 %v5209
        %v5241 = vpop.xlane.xlu0 %5240
        %5242 = vadd.xlane.f32.xlu0 %v5211
        %v5243 = vpop.xlane.xlu0 %5242
        %5244 = vadd.xlane.f32.xlu0 %v5213
        %v5245 = vpop.xlane.xlu0 %5244
        %5246 = vadd.xlane.f32.xlu0 %v5215
        %v5247 = vpop.xlane.xlu0 %5246
        %5248 = vadd.xlane.f32.xlu0 %v5217
        %v5249 = vpop.xlane.xlu0 %5248
        %5250 = vadd.xlane.f32.xlu0 %v5219
        %v5251 = vpop.xlane.xlu0 %5250
        %5252 = vadd.xlane.f32.xlu0 %v5221
        %v5253 = vpop.xlane.xlu0 %5252
        %5254 = vadd.xlane.f32.xlu0 %v5223
        %v5255 = vpop.xlane.xlu0 %5254
        %5256 = vadd.xlane.f32.xlu0 %v5225
        %v5257 = vpop.xlane.xlu0 %5256
        %5258 = vadd.xlane.f32.xlu0 %v5227
        %v5259 = vpop.xlane.xlu0 %5258
        %5260 = vadd.xlane.f32.xlu0 %v5229
        %v5261 = vpop.xlane.xlu0 %5260
        %5262 = vadd.xlane.f32.xlu0 %v5231
        %v5263 = vpop.xlane.xlu0 %5262
        %5264 = vadd.xlane.f32.xlu0 %v5233
        %v5265 = vpop.xlane.xlu0 %5264
        %v5266 = vpack.c.bf16 %v5205, %v5203
        %v5267 = vpack.c.bf16 %v5209, %v5207
        %v5268 = vpack.c.bf16 %v5213, %v5211
        %v5269 = vpack.c.bf16 %v5217, %v5215
        %v5270 = vpack.c.bf16 %v5221, %v5219
        %v5271 = vpack.c.bf16 %v5225, %v5223
        %v5272 = vpack.c.bf16 %v5229, %v5227
        %v5273 = vpack.c.bf16 %v5233, %v5231
        %v5290 = vunpack.c.l.b16 %v4913
        %v5291 = vunpack.c.l.b16 %v4914
        %v5292 = vunpack.c.l.b16 %v4915
        %v5293 = vunpack.c.l.b16 %v4916
        %v5294 = vunpack.c.l.b16 %v4917
        %v5295 = vunpack.c.l.b16 %v4918
        %v5296 = vunpack.c.l.b16 %v4919
        %v5297 = vunpack.c.l.b16 %v4920
        %v5298 = vunpack.c.l.b16 %v4921
        %v5299 = vunpack.c.l.b16 %v4922
        %v5300 = vunpack.c.l.b16 %v4923
        %v5301 = vunpack.c.l.b16 %v4924
        %v5302 = vunpack.c.l.b16 %v4925
        %v5303 = vunpack.c.l.b16 %v4926
        %v5304 = vunpack.c.l.b16 %v4927
        %v5305 = vunpack.c.l.b16 %v4928
        %v5306 = vpack.c.b16 %v5291, %v5290
        %v5307 = vpack.c.b16 %v5293, %v5292
        %v5308 = vpack.c.b16 %v5295, %v5294
        %v5309 = vpack.c.b16 %v5297, %v5296
        %v5310 = vpack.c.b16 %v5299, %v5298
        %v5311 = vpack.c.b16 %v5301, %v5300
        %v5312 = vpack.c.b16 %v5303, %v5302
        %v5313 = vpack.c.b16 %v5305, %v5304
        %5314 = vrot.lane.b32.xlu0 %v5306, 64
        %v5315 = vpop.permute.xlu0 %5314
        %5316 = vrot.lane.b32.xlu0 %v5307, 64
        %v5317 = vpop.permute.xlu0 %5316
        %5318 = vrot.lane.b32.xlu0 %v5308, 64
        %v5319 = vpop.permute.xlu0 %5318
        %5320 = vrot.lane.b32.xlu0 %v5309, 64
        %v5321 = vpop.permute.xlu0 %5320
        %5322 = vrot.lane.b32.xlu0 %v5310, 64
        %v5323 = vpop.permute.xlu0 %5322
        %5324 = vrot.lane.b32.xlu0 %v5311, 64
        %v5325 = vpop.permute.xlu0 %5324
        %5326 = vrot.lane.b32.xlu0 %v5312, 64
        %v5327 = vpop.permute.xlu0 %5326
        %5328 = vrot.lane.b32.xlu0 %v5313, 64
        %v5329 = vpop.permute.xlu0 %5328
        %5338 = vmatpush.bf16.msra.mxu0 %v5329
        %5339 = vmatpush.bf16.msra.mxu0 %v5327
        %5340 = vmatpush.bf16.msra.mxu0 %v5325
        %5341 = vmatpush.bf16.msra.mxu0 %v5323
        %5342 = vmatpush.bf16.msra.mxu0 %v5321
        %5343 = vmatpush.bf16.msra.mxu0 %v5319
        %5344 = vmatpush.bf16.msra.mxu0 %v5317
        %5345 = vmatpush.bf16.msra.mxu0 %v5315
        %5346 = vmatmul.bf16.gmra.mxu0 %v5266
        %v5347 = vpop.f32.mrf.mxu0
        %v5348 = vadd.f32 0.0, %v5347
        %v5349 = vpop.f32.mrf.mxu0
        %v5350 = vadd.f32 0.0, %v5349
        %5351 = vmatmul.bf16.gmra.mxu0 %v5267
        %v5352 = vpop.f32.mrf.mxu0
        %v5353 = vadd.f32 0.0, %v5352
        %v5354 = vpop.f32.mrf.mxu0
        %v5355 = vadd.f32 0.0, %v5354
        %5356 = vmatmul.bf16.gmra.mxu0 %v5268
        %v5357 = vpop.f32.mrf.mxu0
        %v5358 = vadd.f32 0.0, %v5357
        %v5359 = vpop.f32.mrf.mxu0
        %v5360 = vadd.f32 0.0, %v5359
        %5361 = vmatmul.bf16.gmra.mxu0 %v5269
        %v5362 = vpop.f32.mrf.mxu0
        %v5363 = vadd.f32 0.0, %v5362
        %v5364 = vpop.f32.mrf.mxu0
        %v5365 = vadd.f32 0.0, %v5364
        %5366 = vmatmul.bf16.gmra.mxu0 %v5270
        %v5367 = vpop.f32.mrf.mxu0
        %v5368 = vadd.f32 0.0, %v5367
        %v5369 = vpop.f32.mrf.mxu0
        %v5370 = vadd.f32 0.0, %v5369
        %5371 = vmatmul.bf16.gmra.mxu0 %v5271
        %v5372 = vpop.f32.mrf.mxu0
        %v5373 = vadd.f32 0.0, %v5372
        %v5374 = vpop.f32.mrf.mxu0
        %v5375 = vadd.f32 0.0, %v5374
        %5376 = vmatmul.bf16.gmra.mxu0 %v5272
        %v5377 = vpop.f32.mrf.mxu0
        %v5378 = vadd.f32 0.0, %v5377
        %v5379 = vpop.f32.mrf.mxu0
        %v5380 = vadd.f32 0.0, %v5379
        %5381 = vmatmul.bf16.gmra.mxu0 %v5273
        %v5382 = vpop.f32.mrf.mxu0
        %v5383 = vadd.f32 0.0, %v5382
        %v5384 = vpop.f32.mrf.mxu0
        %v5385 = vadd.f32 0.0, %v5384
        %5386 = vdwg.mxu0
        %v5387 = vrcp.pop %v5235
        %v5388 = vrcp.pop %v5237
        %v5389 = vrcp.pop %v5239
        %v5390 = vrcp.pop %v5241
        %v5391 = vrcp.pop %v5243
        %v5392 = vrcp.pop %v5245
        %v5393 = vrcp.pop %v5247
        %v5394 = vrcp.pop %v5249
        %v5395 = vrcp.pop %v5251
        %v5396 = vrcp.pop %v5253
        %v5397 = vrcp.pop %v5255
        %v5398 = vrcp.pop %v5257
        %v5399 = vrcp.pop %v5259
        %v5400 = vrcp.pop %v5261
        %v5401 = vrcp.pop %v5263
        %v5402 = vrcp.pop %v5265
        %v5403 = vmul.f32 %v5348, %v5387
        %v5404 = vmul.f32 %v5350, %v5388
        %v5405 = vmul.f32 %v5353, %v5389
        %v5406 = vmul.f32 %v5355, %v5390
        %v5407 = vmul.f32 %v5358, %v5391
        %v5408 = vmul.f32 %v5360, %v5392
        %v5409 = vmul.f32 %v5363, %v5393
        %v5410 = vmul.f32 %v5365, %v5394
        %v5411 = vmul.f32 %v5368, %v5395
        %v5412 = vmul.f32 %v5370, %v5396
        %v5413 = vmul.f32 %v5373, %v5397
        %v5414 = vmul.f32 %v5375, %v5398
        %v5415 = vmul.f32 %v5378, %v5399
        %v5416 = vmul.f32 %v5380, %v5400
        %v5417 = vmul.f32 %v5383, %v5401
        %v5418 = vmul.f32 %v5385, %v5402
        %v5419 = vpack.c.bf16 %v5403, %v5403
        %v5420 = vpack.c.bf16 %v5404, %v5404
        %v5421 = vpack.c.bf16 %v5405, %v5405
        %v5422 = vpack.c.bf16 %v5406, %v5406
        %v5423 = vpack.c.bf16 %v5407, %v5407
        %v5424 = vpack.c.bf16 %v5408, %v5408
        %v5425 = vpack.c.bf16 %v5409, %v5409
        %v5426 = vpack.c.bf16 %v5410, %v5410
        %v5427 = vpack.c.bf16 %v5411, %v5411
        %v5428 = vpack.c.bf16 %v5412, %v5412
        %v5429 = vpack.c.bf16 %v5413, %v5413
        %v5430 = vpack.c.bf16 %v5414, %v5414
        %v5431 = vpack.c.bf16 %v5415, %v5415
        %v5432 = vpack.c.bf16 %v5416, %v5416
        %v5433 = vpack.c.bf16 %v5417, %v5417
        %v5434 = vpack.c.bf16 %v5418, %v5418
        %5451 = vrot.lane.b32.xlu0 %v5419, 64
        %v5452 = vpop.permute.xlu0 %5451
        %5453 = vrot.lane.b32.xlu0 %v5420, 64
        %v5454 = vpop.permute.xlu0 %5453
        %5455 = vrot.lane.b32.xlu0 %v5421, 64
        %v5456 = vpop.permute.xlu0 %5455
        %5457 = vrot.lane.b32.xlu0 %v5422, 64
        %v5458 = vpop.permute.xlu0 %5457
        %5459 = vrot.lane.b32.xlu0 %v5423, 64
        %v5460 = vpop.permute.xlu0 %5459
        %5461 = vrot.lane.b32.xlu0 %v5424, 64
        %v5462 = vpop.permute.xlu0 %5461
        %5463 = vrot.lane.b32.xlu0 %v5425, 64
        %v5464 = vpop.permute.xlu0 %5463
        %5465 = vrot.lane.b32.xlu0 %v5426, 64
        %v5466 = vpop.permute.xlu0 %5465
        %5467 = vrot.lane.b32.xlu0 %v5427, 64
        %v5468 = vpop.permute.xlu0 %5467
        %5469 = vrot.lane.b32.xlu0 %v5428, 64
        %v5470 = vpop.permute.xlu0 %5469
        %5471 = vrot.lane.b32.xlu0 %v5429, 64
        %v5472 = vpop.permute.xlu0 %5471
        %5473 = vrot.lane.b32.xlu0 %v5430, 64
        %v5474 = vpop.permute.xlu0 %5473
        %5475 = vrot.lane.b32.xlu0 %v5431, 64
        %v5476 = vpop.permute.xlu0 %5475
        %5477 = vrot.lane.b32.xlu0 %v5432, 64
        %v5478 = vpop.permute.xlu0 %5477
        %5479 = vrot.lane.b32.xlu0 %v5433, 64
        %v5480 = vpop.permute.xlu0 %5479
        %5481 = vrot.lane.b32.xlu0 %v5434, 64
        %v5482 = vpop.permute.xlu0 %5481
        %5499 = vst.msk [vmem:[#allocation3 + $0x4] sm:$0xf] %vm4342, %v5452
        %5500 = vst.msk [vmem:[#allocation3 + $0x10] sm:$0xf] %vm4342, %v5454
        %5501 = vst.msk [vmem:[#allocation3 + $0x1c] sm:$0xf] %vm4342, %v5456
        %5502 = vst.msk [vmem:[#allocation3 + $0x28] sm:$0xf] %vm4342, %v5458
        %5503 = vst.msk [vmem:[#allocation3 + $0x34] sm:$0xf] %vm4342, %v5460
        %5504 = vst.msk [vmem:[#allocation3 + $0x40] sm:$0xf] %vm4342, %v5462
        %5505 = vst.msk [vmem:[#allocation3 + $0x4c] sm:$0xf] %vm4342, %v5464
        %5506 = vst.msk [vmem:[#allocation3 + $0x58] sm:$0xf] %vm4342, %v5466
        %5507 = vst.msk [vmem:[#allocation3 + $0x64] sm:$0xf] %vm4342, %v5468
        %5508 = vst.msk [vmem:[#allocation3 + $0x70] sm:$0xf] %vm4342, %v5470
        %5509 = vst.msk [vmem:[#allocation3 + $0x7c] sm:$0xf] %vm4342, %v5472
        %5510 = vst.msk [vmem:[#allocation3 + $0x88] sm:$0xf] %vm4342, %v5474
        %5511 = vst.msk [vmem:[#allocation3 + $0x94] sm:$0xf] %vm4342, %v5476
        %5512 = vst.msk [vmem:[#allocation3 + $0xa0] sm:$0xf] %vm4342, %v5478
        %5513 = vst.msk [vmem:[#allocation3 + $0xac] sm:$0xf] %vm4342, %v5480
        %5514 = vst.msk [vmem:[#allocation3 + $0xb8] sm:$0xf] %vm4342, %v5482
        %v5515 = vld [vmem:[#allocation2 + $0x8] sm:$0xf]
        %v5516 = vld [vmem:[#allocation2 + $0x2c] sm:$0xf]
        %v5517 = vld [vmem:[#allocation2 + $0x50] sm:$0xf]
        %v5518 = vld [vmem:[#allocation2 + $0x74] sm:$0xf]
        %v5519 = vld [vmem:[#allocation2 + $0x98] sm:$0xf]
        %v5520 = vld [vmem:[#allocation2 + $0xbc] sm:$0xf]
        %v5521 = vld [vmem:[#allocation2 + $0xe0] sm:$0xf]
        %v5522 = vld [vmem:[#allocation2 + $0x104] sm:$0xf]
        %v5523 = vld [vmem:[#allocation2 + $0x128] sm:$0xf]
        %v5524 = vld [vmem:[#allocation2 + $0x14c] sm:$0xf]
        %v5525 = vld [vmem:[#allocation2 + $0x170] sm:$0xf]
        %v5526 = vld [vmem:[#allocation2 + $0x194] sm:$0xf]
        %v5527 = vld [vmem:[#allocation2 + $0x1b8] sm:$0xf]
        %v5528 = vld [vmem:[#allocation2 + $0x1dc] sm:$0xf]
        %v5529 = vld [vmem:[#allocation2 + $0x200] sm:$0xf]
        %v5530 = vld [vmem:[#allocation2 + $0x224] sm:$0xf]
        %v5531 = vld [vmem:[#allocation2 + $0x14] sm:$0xf]
        %v5532 = vld [vmem:[#allocation2 + $0x38] sm:$0xf]
        %v5533 = vld [vmem:[#allocation2 + $0x5c] sm:$0xf]
        %v5534 = vld [vmem:[#allocation2 + $0x80] sm:$0xf]
        %v5535 = vld [vmem:[#allocation2 + $0xa4] sm:$0xf]
        %v5536 = vld [vmem:[#allocation2 + $0xc8] sm:$0xf]
        %v5537 = vld [vmem:[#allocation2 + $0xec] sm:$0xf]
        %v5538 = vld [vmem:[#allocation2 + $0x110] sm:$0xf]
        %v5539 = vld [vmem:[#allocation2 + $0x134] sm:$0xf]
        %v5540 = vld [vmem:[#allocation2 + $0x158] sm:$0xf]
        %v5541 = vld [vmem:[#allocation2 + $0x17c] sm:$0xf]
        %v5542 = vld [vmem:[#allocation2 + $0x1a0] sm:$0xf]
        %v5543 = vld [vmem:[#allocation2 + $0x1c4] sm:$0xf]
        %v5544 = vld [vmem:[#allocation2 + $0x1e8] sm:$0xf]
        %v5545 = vld [vmem:[#allocation2 + $0x20c] sm:$0xf]
        %v5546 = vld [vmem:[#allocation2 + $0x230] sm:$0xf]
        %v5547 = vld [vmem:[#allocation2 + $0x20] sm:$0xf]
        %v5548 = vld [vmem:[#allocation2 + $0x44] sm:$0xf]
        %v5549 = vld [vmem:[#allocation2 + $0x68] sm:$0xf]
        %v5550 = vld [vmem:[#allocation2 + $0x8c] sm:$0xf]
        %v5551 = vld [vmem:[#allocation2 + $0xb0] sm:$0xf]
        %v5552 = vld [vmem:[#allocation2 + $0xd4] sm:$0xf]
        %v5553 = vld [vmem:[#allocation2 + $0xf8] sm:$0xf]
        %v5554 = vld [vmem:[#allocation2 + $0x11c] sm:$0xf]
        %v5555 = vld [vmem:[#allocation2 + $0x140] sm:$0xf]
        %v5556 = vld [vmem:[#allocation2 + $0x164] sm:$0xf]
        %v5557 = vld [vmem:[#allocation2 + $0x188] sm:$0xf]
        %v5558 = vld [vmem:[#allocation2 + $0x1ac] sm:$0xf]
        %v5559 = vld [vmem:[#allocation2 + $0x1d0] sm:$0xf]
        %v5560 = vld [vmem:[#allocation2 + $0x1f4] sm:$0xf]
        %v5561 = vld [vmem:[#allocation2 + $0x218] sm:$0xf]
        %v5562 = vld [vmem:[#allocation2 + $0x23c] sm:$0xf]
        %v5579 = vunpack.c.l.b16 %v5515
        %v5580 = vunpack.c.l.b16 %v5516
        %v5581 = vunpack.c.l.b16 %v5517
        %v5582 = vunpack.c.l.b16 %v5518
        %v5583 = vunpack.c.l.b16 %v5519
        %v5584 = vunpack.c.l.b16 %v5520
        %v5585 = vunpack.c.l.b16 %v5521
        %v5586 = vunpack.c.l.b16 %v5522
        %v5587 = vunpack.c.l.b16 %v5523
        %v5588 = vunpack.c.l.b16 %v5524
        %v5589 = vunpack.c.l.b16 %v5525
        %v5590 = vunpack.c.l.b16 %v5526
        %v5591 = vunpack.c.l.b16 %v5527
        %v5592 = vunpack.c.l.b16 %v5528
        %v5593 = vunpack.c.l.b16 %v5529
        %v5594 = vunpack.c.l.b16 %v5530
        %v5595 = vpack.c.b16 %v5580, %v5579
        %v5596 = vpack.c.b16 %v5582, %v5581
        %v5597 = vpack.c.b16 %v5584, %v5583
        %v5598 = vpack.c.b16 %v5586, %v5585
        %v5599 = vpack.c.b16 %v5588, %v5587
        %v5600 = vpack.c.b16 %v5590, %v5589
        %v5601 = vpack.c.b16 %v5592, %v5591
        %v5602 = vpack.c.b16 %v5594, %v5593
        %v5619 = vunpack.c.l.b16 %v5531
        %v5620 = vunpack.c.l.b16 %v5532
        %v5621 = vunpack.c.l.b16 %v5533
        %v5622 = vunpack.c.l.b16 %v5534
        %v5623 = vunpack.c.l.b16 %v5535
        %v5624 = vunpack.c.l.b16 %v5536
        %v5625 = vunpack.c.l.b16 %v5537
        %v5626 = vunpack.c.l.b16 %v5538
        %v5627 = vunpack.c.l.b16 %v5539
        %v5628 = vunpack.c.l.b16 %v5540
        %v5629 = vunpack.c.l.b16 %v5541
        %v5630 = vunpack.c.l.b16 %v5542
        %v5631 = vunpack.c.l.b16 %v5543
        %v5632 = vunpack.c.l.b16 %v5544
        %v5633 = vunpack.c.l.b16 %v5545
        %v5634 = vunpack.c.l.b16 %v5546
        %v5635 = vpack.c.b16 %v5620, %v5619
        %v5636 = vpack.c.b16 %v5622, %v5621
        %v5637 = vpack.c.b16 %v5624, %v5623
        %v5638 = vpack.c.b16 %v5626, %v5625
        %v5639 = vpack.c.b16 %v5628, %v5627
        %v5640 = vpack.c.b16 %v5630, %v5629
        %v5641 = vpack.c.b16 %v5632, %v5631
        %v5642 = vpack.c.b16 %v5634, %v5633
        %v5644 = vsel %vm3328, %v5595, 0
        %v5647 = vsel %vm3328, %v5596, 0
        %v5650 = vsel %vm3328, %v5597, 0
        %v5653 = vsel %vm3328, %v5598, 0
        %v5656 = vsel %vm3328, %v5599, 0
        %v5659 = vsel %vm3328, %v5600, 0
        %v5662 = vsel %vm3328, %v5601, 0
        %v5665 = vsel %vm3328, %v5602, 0
        %v5668 = vsel %vm3328, %v5635, 0
        %v5671 = vsel %vm3328, %v5636, 0
        %v5674 = vsel %vm3328, %v5637, 0
        %v5677 = vsel %vm3328, %v5638, 0
        %v5680 = vsel %vm3328, %v5639, 0
        %v5683 = vsel %vm3328, %v5640, 0
        %v5686 = vsel %vm3328, %v5641, 0
        %v5689 = vsel %vm3328, %v5642, 0
        %5691 = vmatpush.bf16.xpose.msra.mxu0 %v5689
        %5692 = vmatpush.bf16.xpose.msra.mxu0 %v5686
        %5693 = vmatpush.bf16.xpose.msra.mxu0 %v5683
        %5694 = vmatpush.bf16.xpose.msra.mxu0 %v5680
        %5695 = vmatpush.bf16.xpose.msra.mxu0 %v5677
        %5696 = vmatpush.bf16.xpose.msra.mxu0 %v5674
        %5697 = vmatpush.bf16.xpose.msra.mxu0 %v5671
        %5698 = vmatpush.bf16.xpose.msra.mxu0 %v5668
        %5699 = vmatmul.bf16.gmra.mxu0 %v5644
        %v5700 = vpop.f32.mrf.mxu0
        %v5701 = vadd.f32 0.0, %v5700
        %v5702 = vpop.f32.mrf.mxu0
        %v5703 = vadd.f32 0.0, %v5702
        %5704 = vmatmul.bf16.gmra.mxu0 %v5647
        %v5705 = vpop.f32.mrf.mxu0
        %v5706 = vadd.f32 0.0, %v5705
        %v5707 = vpop.f32.mrf.mxu0
        %v5708 = vadd.f32 0.0, %v5707
        %5709 = vmatmul.bf16.gmra.mxu0 %v5650
        %v5710 = vpop.f32.mrf.mxu0
        %v5711 = vadd.f32 0.0, %v5710
        %v5712 = vpop.f32.mrf.mxu0
        %v5713 = vadd.f32 0.0, %v5712
        %5714 = vmatmul.bf16.gmra.mxu0 %v5653
        %v5715 = vpop.f32.mrf.mxu0
        %v5716 = vadd.f32 0.0, %v5715
        %v5717 = vpop.f32.mrf.mxu0
        %v5718 = vadd.f32 0.0, %v5717
        %5719 = vmatmul.bf16.gmra.mxu0 %v5656
        %v5720 = vpop.f32.mrf.mxu0
        %v5721 = vadd.f32 0.0, %v5720
        %v5722 = vpop.f32.mrf.mxu0
        %v5723 = vadd.f32 0.0, %v5722
        %5724 = vmatmul.bf16.gmra.mxu0 %v5659
        %v5725 = vpop.f32.mrf.mxu0
        %v5726 = vadd.f32 0.0, %v5725
        %v5727 = vpop.f32.mrf.mxu0
        %v5728 = vadd.f32 0.0, %v5727
        %5729 = vmatmul.bf16.gmra.mxu0 %v5662
        %v5730 = vpop.f32.mrf.mxu0
        %v5731 = vadd.f32 0.0, %v5730
        %v5732 = vpop.f32.mrf.mxu0
        %v5733 = vadd.f32 0.0, %v5732
        %5734 = vmatmul.bf16.gmra.mxu0 %v5665
        %v5735 = vpop.f32.mrf.mxu0
        %v5736 = vadd.f32 0.0, %v5735
        %v5737 = vpop.f32.mrf.mxu0
        %v5738 = vadd.f32 0.0, %v5737
        %5739 = vdwg.mxu0
        %v5740 = vsel %vm3184, %v5701, -1e+30
        %v5741 = vsel %vm3185, %v5703, -1e+30
        %v5742 = vsel %vm3186, %v5706, -1e+30
        %v5743 = vsel %vm3187, %v5708, -1e+30
        %v5744 = vsel %vm3188, %v5711, -1e+30
        %v5745 = vsel %vm3189, %v5713, -1e+30
        %v5746 = vsel %vm3190, %v5716, -1e+30
        %v5747 = vsel %vm3191, %v5718, -1e+30
        %v5748 = vsel %vm3192, %v5721, -1e+30
        %v5749 = vsel %vm3193, %v5723, -1e+30
        %v5750 = vsel %vm3194, %v5726, -1e+30
        %v5751 = vsel %vm3195, %v5728, -1e+30
        %v5752 = vsel %vm3196, %v5731, -1e+30
        %v5753 = vsel %vm3197, %v5733, -1e+30
        %v5754 = vsel %vm3198, %v5736, -1e+30
        %v5755 = vsel %vm3199, %v5738, -1e+30
        %5756 = vmax.xlane.f32.xlu0 %v5740
        %v5757 = vpop.xlane.xlu0 %5756
        %5758 = vmax.xlane.f32.xlu0 %v5741
        %v5759 = vpop.xlane.xlu0 %5758
        %5760 = vmax.xlane.f32.xlu0 %v5742
        %v5761 = vpop.xlane.xlu0 %5760
        %5762 = vmax.xlane.f32.xlu0 %v5743
        %v5763 = vpop.xlane.xlu0 %5762
        %5764 = vmax.xlane.f32.xlu0 %v5744
        %v5765 = vpop.xlane.xlu0 %5764
        %5766 = vmax.xlane.f32.xlu0 %v5745
        %v5767 = vpop.xlane.xlu0 %5766
        %5768 = vmax.xlane.f32.xlu0 %v5746
        %v5769 = vpop.xlane.xlu0 %5768
        %5770 = vmax.xlane.f32.xlu0 %v5747
        %v5771 = vpop.xlane.xlu0 %5770
        %5772 = vmax.xlane.f32.xlu0 %v5748
        %v5773 = vpop.xlane.xlu0 %5772
        %5774 = vmax.xlane.f32.xlu0 %v5749
        %v5775 = vpop.xlane.xlu0 %5774
        %5776 = vmax.xlane.f32.xlu0 %v5750
        %v5777 = vpop.xlane.xlu0 %5776
        %5778 = vmax.xlane.f32.xlu0 %v5751
        %v5779 = vpop.xlane.xlu0 %5778
        %5780 = vmax.xlane.f32.xlu0 %v5752
        %v5781 = vpop.xlane.xlu0 %5780
        %5782 = vmax.xlane.f32.xlu0 %v5753
        %v5783 = vpop.xlane.xlu0 %5782
        %5784 = vmax.xlane.f32.xlu0 %v5754
        %v5785 = vpop.xlane.xlu0 %5784
        %5786 = vmax.xlane.f32.xlu0 %v5755
        %v5787 = vpop.xlane.xlu0 %5786
        %v5788 = vsub.f32 %v5740, %v5757
        %v5789 = vsub.f32 %v5741, %v5759
        %v5790 = vsub.f32 %v5742, %v5761
        %v5791 = vsub.f32 %v5743, %v5763
        %v5792 = vsub.f32 %v5744, %v5765
        %v5793 = vsub.f32 %v5745, %v5767
        %v5794 = vsub.f32 %v5746, %v5769
        %v5795 = vsub.f32 %v5747, %v5771
        %v5796 = vsub.f32 %v5748, %v5773
        %v5797 = vsub.f32 %v5749, %v5775
        %v5798 = vsub.f32 %v5750, %v5777
        %v5799 = vsub.f32 %v5751, %v5779
        %v5800 = vsub.f32 %v5752, %v5781
        %v5801 = vsub.f32 %v5753, %v5783
        %v5802 = vsub.f32 %v5754, %v5785
        %v5803 = vsub.f32 %v5755, %v5787
        %v5804 = vmul.f32 %v5788, 1.442695
        %v5805 = vpow.pop %v5804
        %v5806 = vmul.f32 %v5789, 1.442695
        %v5807 = vpow.pop %v5806
        %v5808 = vmul.f32 %v5790, 1.442695
        %v5809 = vpow.pop %v5808
        %v5810 = vmul.f32 %v5791, 1.442695
        %v5811 = vpow.pop %v5810
        %v5812 = vmul.f32 %v5792, 1.442695
        %v5813 = vpow.pop %v5812
        %v5814 = vmul.f32 %v5793, 1.442695
        %v5815 = vpow.pop %v5814
        %v5816 = vmul.f32 %v5794, 1.442695
        %v5817 = vpow.pop %v5816
        %v5818 = vmul.f32 %v5795, 1.442695
        %v5819 = vpow.pop %v5818
        %v5820 = vmul.f32 %v5796, 1.442695
        %v5821 = vpow.pop %v5820
        %v5822 = vmul.f32 %v5797, 1.442695
        %v5823 = vpow.pop %v5822
        %v5824 = vmul.f32 %v5798, 1.442695
        %v5825 = vpow.pop %v5824
        %v5826 = vmul.f32 %v5799, 1.442695
        %v5827 = vpow.pop %v5826
        %v5828 = vmul.f32 %v5800, 1.442695
        %v5829 = vpow.pop %v5828
        %v5830 = vmul.f32 %v5801, 1.442695
        %v5831 = vpow.pop %v5830
        %v5832 = vmul.f32 %v5802, 1.442695
        %v5833 = vpow.pop %v5832
        %v5834 = vmul.f32 %v5803, 1.442695
        %v5835 = vpow.pop %v5834
        %5836 = vadd.xlane.f32.xlu0 %v5805
        %v5837 = vpop.xlane.xlu0 %5836
        %5838 = vadd.xlane.f32.xlu0 %v5807
        %v5839 = vpop.xlane.xlu0 %5838
        %5840 = vadd.xlane.f32.xlu0 %v5809
        %v5841 = vpop.xlane.xlu0 %5840
        %5842 = vadd.xlane.f32.xlu0 %v5811
        %v5843 = vpop.xlane.xlu0 %5842
        %5844 = vadd.xlane.f32.xlu0 %v5813
        %v5845 = vpop.xlane.xlu0 %5844
        %5846 = vadd.xlane.f32.xlu0 %v5815
        %v5847 = vpop.xlane.xlu0 %5846
        %5848 = vadd.xlane.f32.xlu0 %v5817
        %v5849 = vpop.xlane.xlu0 %5848
        %5850 = vadd.xlane.f32.xlu0 %v5819
        %v5851 = vpop.xlane.xlu0 %5850
        %5852 = vadd.xlane.f32.xlu0 %v5821
        %v5853 = vpop.xlane.xlu0 %5852
        %5854 = vadd.xlane.f32.xlu0 %v5823
        %v5855 = vpop.xlane.xlu0 %5854
        %5856 = vadd.xlane.f32.xlu0 %v5825
        %v5857 = vpop.xlane.xlu0 %5856
        %5858 = vadd.xlane.f32.xlu0 %v5827
        %v5859 = vpop.xlane.xlu0 %5858
        %5860 = vadd.xlane.f32.xlu0 %v5829
        %v5861 = vpop.xlane.xlu0 %5860
        %5862 = vadd.xlane.f32.xlu0 %v5831
        %v5863 = vpop.xlane.xlu0 %5862
        %5864 = vadd.xlane.f32.xlu0 %v5833
        %v5865 = vpop.xlane.xlu0 %5864
        %5866 = vadd.xlane.f32.xlu0 %v5835
        %v5867 = vpop.xlane.xlu0 %5866
        %v5868 = vpack.c.bf16 %v5807, %v5805
        %v5869 = vpack.c.bf16 %v5811, %v5809
        %v5870 = vpack.c.bf16 %v5815, %v5813
        %v5871 = vpack.c.bf16 %v5819, %v5817
        %v5872 = vpack.c.bf16 %v5823, %v5821
        %v5873 = vpack.c.bf16 %v5827, %v5825
        %v5874 = vpack.c.bf16 %v5831, %v5829
        %v5875 = vpack.c.bf16 %v5835, %v5833
        %v5892 = vunpack.c.l.b16 %v5547
        %v5893 = vunpack.c.l.b16 %v5548
        %v5894 = vunpack.c.l.b16 %v5549
        %v5895 = vunpack.c.l.b16 %v5550
        %v5896 = vunpack.c.l.b16 %v5551
        %v5897 = vunpack.c.l.b16 %v5552
        %v5898 = vunpack.c.l.b16 %v5553
        %v5899 = vunpack.c.l.b16 %v5554
        %v5900 = vunpack.c.l.b16 %v5555
        %v5901 = vunpack.c.l.b16 %v5556
        %v5902 = vunpack.c.l.b16 %v5557
        %v5903 = vunpack.c.l.b16 %v5558
        %v5904 = vunpack.c.l.b16 %v5559
        %v5905 = vunpack.c.l.b16 %v5560
        %v5906 = vunpack.c.l.b16 %v5561
        %v5907 = vunpack.c.l.b16 %v5562
        %v5908 = vpack.c.b16 %v5893, %v5892
        %v5909 = vpack.c.b16 %v5895, %v5894
        %v5910 = vpack.c.b16 %v5897, %v5896
        %v5911 = vpack.c.b16 %v5899, %v5898
        %v5912 = vpack.c.b16 %v5901, %v5900
        %v5913 = vpack.c.b16 %v5903, %v5902
        %v5914 = vpack.c.b16 %v5905, %v5904
        %v5915 = vpack.c.b16 %v5907, %v5906
        %5924 = vmatpush.bf16.msra.mxu0 %v5915
        %5925 = vmatpush.bf16.msra.mxu0 %v5914
        %5926 = vmatpush.bf16.msra.mxu0 %v5913
        %5927 = vmatpush.bf16.msra.mxu0 %v5912
        %5928 = vmatpush.bf16.msra.mxu0 %v5911
        %5929 = vmatpush.bf16.msra.mxu0 %v5910
        %5930 = vmatpush.bf16.msra.mxu0 %v5909
        %5931 = vmatpush.bf16.msra.mxu0 %v5908
        %5932 = vmatmul.bf16.gmra.mxu0 %v5868
        %v5933 = vpop.f32.mrf.mxu0
        %v5934 = vadd.f32 0.0, %v5933
        %v5935 = vpop.f32.mrf.mxu0
        %v5936 = vadd.f32 0.0, %v5935
        %5937 = vmatmul.bf16.gmra.mxu0 %v5869
        %v5938 = vpop.f32.mrf.mxu0
        %v5939 = vadd.f32 0.0, %v5938
        %v5940 = vpop.f32.mrf.mxu0
        %v5941 = vadd.f32 0.0, %v5940
        %5942 = vmatmul.bf16.gmra.mxu0 %v5870
        %v5943 = vpop.f32.mrf.mxu0
        %v5944 = vadd.f32 0.0, %v5943
        %v5945 = vpop.f32.mrf.mxu0
        %v5946 = vadd.f32 0.0, %v5945
        %5947 = vmatmul.bf16.gmra.mxu0 %v5871
        %v5948 = vpop.f32.mrf.mxu0
        %v5949 = vadd.f32 0.0, %v5948
        %v5950 = vpop.f32.mrf.mxu0
        %v5951 = vadd.f32 0.0, %v5950
        %5952 = vmatmul.bf16.gmra.mxu0 %v5872
        %v5953 = vpop.f32.mrf.mxu0
        %v5954 = vadd.f32 0.0, %v5953
        %v5955 = vpop.f32.mrf.mxu0
        %v5956 = vadd.f32 0.0, %v5955
        %5957 = vmatmul.bf16.gmra.mxu0 %v5873
        %v5958 = vpop.f32.mrf.mxu0
        %v5959 = vadd.f32 0.0, %v5958
        %v5960 = vpop.f32.mrf.mxu0
        %v5961 = vadd.f32 0.0, %v5960
        %5962 = vmatmul.bf16.gmra.mxu0 %v5874
        %v5963 = vpop.f32.mrf.mxu0
        %v5964 = vadd.f32 0.0, %v5963
        %v5965 = vpop.f32.mrf.mxu0
        %v5966 = vadd.f32 0.0, %v5965
        %5967 = vmatmul.bf16.gmra.mxu0 %v5875
        %v5968 = vpop.f32.mrf.mxu0
        %v5969 = vadd.f32 0.0, %v5968
        %v5970 = vpop.f32.mrf.mxu0
        %v5971 = vadd.f32 0.0, %v5970
        %5972 = vdwg.mxu0
        %v5973 = vrcp.pop %v5837
        %v5974 = vrcp.pop %v5839
        %v5975 = vrcp.pop %v5841
        %v5976 = vrcp.pop %v5843
        %v5977 = vrcp.pop %v5845
        %v5978 = vrcp.pop %v5847
        %v5979 = vrcp.pop %v5849
        %v5980 = vrcp.pop %v5851
        %v5981 = vrcp.pop %v5853
        %v5982 = vrcp.pop %v5855
        %v5983 = vrcp.pop %v5857
        %v5984 = vrcp.pop %v5859
        %v5985 = vrcp.pop %v5861
        %v5986 = vrcp.pop %v5863
        %v5987 = vrcp.pop %v5865
        %v5988 = vrcp.pop %v5867
        %v5989 = vmul.f32 %v5934, %v5973
        %v5990 = vmul.f32 %v5936, %v5974
        %v5991 = vmul.f32 %v5939, %v5975
        %v5992 = vmul.f32 %v5941, %v5976
        %v5993 = vmul.f32 %v5944, %v5977
        %v5994 = vmul.f32 %v5946, %v5978
        %v5995 = vmul.f32 %v5949, %v5979
        %v5996 = vmul.f32 %v5951, %v5980
        %v5997 = vmul.f32 %v5954, %v5981
        %v5998 = vmul.f32 %v5956, %v5982
        %v5999 = vmul.f32 %v5959, %v5983
        %v6000 = vmul.f32 %v5961, %v5984
        %v6001 = vmul.f32 %v5964, %v5985
        %v6002 = vmul.f32 %v5966, %v5986
        %v6003 = vmul.f32 %v5969, %v5987
        %v6004 = vmul.f32 %v5971, %v5988
        %v6005 = vpack.c.bf16 %v5989, %v5989
        %v6006 = vpack.c.bf16 %v5990, %v5990
        %v6007 = vpack.c.bf16 %v5991, %v5991
        %v6008 = vpack.c.bf16 %v5992, %v5992
        %v6009 = vpack.c.bf16 %v5993, %v5993
        %v6010 = vpack.c.bf16 %v5994, %v5994
        %v6011 = vpack.c.bf16 %v5995, %v5995
        %v6012 = vpack.c.bf16 %v5996, %v5996
        %v6013 = vpack.c.bf16 %v5997, %v5997
        %v6014 = vpack.c.bf16 %v5998, %v5998
        %v6015 = vpack.c.bf16 %v5999, %v5999
        %v6016 = vpack.c.bf16 %v6000, %v6000
        %v6017 = vpack.c.bf16 %v6001, %v6001
        %v6018 = vpack.c.bf16 %v6002, %v6002
        %v6019 = vpack.c.bf16 %v6003, %v6003
        %v6020 = vpack.c.bf16 %v6004, %v6004
        %6021 = vst.msk [vmem:[#allocation3 + $0x8] sm:$0xf] %vm3707, %v6005
        %6022 = vst.msk [vmem:[#allocation3 + $0x14] sm:$0xf] %vm3707, %v6006
        %6023 = vst.msk [vmem:[#allocation3 + $0x20] sm:$0xf] %vm3707, %v6007
        %6024 = vst.msk [vmem:[#allocation3 + $0x2c] sm:$0xf] %vm3707, %v6008
        %6025 = vst.msk [vmem:[#allocation3 + $0x38] sm:$0xf] %vm3707, %v6009
        %6026 = vst.msk [vmem:[#allocation3 + $0x44] sm:$0xf] %vm3707, %v6010
        %6027 = vst.msk [vmem:[#allocation3 + $0x50] sm:$0xf] %vm3707, %v6011
        %6028 = vst.msk [vmem:[#allocation3 + $0x5c] sm:$0xf] %vm3707, %v6012
        %6029 = vst.msk [vmem:[#allocation3 + $0x68] sm:$0xf] %vm3707, %v6013
        %6030 = vst.msk [vmem:[#allocation3 + $0x74] sm:$0xf] %vm3707, %v6014
        %6031 = vst.msk [vmem:[#allocation3 + $0x80] sm:$0xf] %vm3707, %v6015
        %6032 = vst.msk [vmem:[#allocation3 + $0x8c] sm:$0xf] %vm3707, %v6016
        %6033 = vst.msk [vmem:[#allocation3 + $0x98] sm:$0xf] %vm3707, %v6017
        %6034 = vst.msk [vmem:[#allocation3 + $0xa4] sm:$0xf] %vm3707, %v6018
        %6035 = vst.msk [vmem:[#allocation3 + $0xb0] sm:$0xf] %vm3707, %v6019
        %6036 = vst.msk [vmem:[#allocation3 + $0xbc] sm:$0xf] %vm3707, %v6020
        %v6037 = vld [vmem:[#allocation2 + $0x8] sm:$0xf]
        %v6038 = vld [vmem:[#allocation2 + $0x2c] sm:$0xf]
        %v6039 = vld [vmem:[#allocation2 + $0x50] sm:$0xf]
        %v6040 = vld [vmem:[#allocation2 + $0x74] sm:$0xf]
        %v6041 = vld [vmem:[#allocation2 + $0x98] sm:$0xf]
        %v6042 = vld [vmem:[#allocation2 + $0xbc] sm:$0xf]
        %v6043 = vld [vmem:[#allocation2 + $0xe0] sm:$0xf]
        %v6044 = vld [vmem:[#allocation2 + $0x104] sm:$0xf]
        %v6045 = vld [vmem:[#allocation2 + $0x128] sm:$0xf]
        %v6046 = vld [vmem:[#allocation2 + $0x14c] sm:$0xf]
        %v6047 = vld [vmem:[#allocation2 + $0x170] sm:$0xf]
        %v6048 = vld [vmem:[#allocation2 + $0x194] sm:$0xf]
        %v6049 = vld [vmem:[#allocation2 + $0x1b8] sm:$0xf]
        %v6050 = vld [vmem:[#allocation2 + $0x1dc] sm:$0xf]
        %v6051 = vld [vmem:[#allocation2 + $0x200] sm:$0xf]
        %v6052 = vld [vmem:[#allocation2 + $0x224] sm:$0xf]
        %v6053 = vld [vmem:[#allocation2 + $0x14] sm:$0xf]
        %v6054 = vld [vmem:[#allocation2 + $0x38] sm:$0xf]
        %v6055 = vld [vmem:[#allocation2 + $0x5c] sm:$0xf]
        %v6056 = vld [vmem:[#allocation2 + $0x80] sm:$0xf]
        %v6057 = vld [vmem:[#allocation2 + $0xa4] sm:$0xf]
        %v6058 = vld [vmem:[#allocation2 + $0xc8] sm:$0xf]
        %v6059 = vld [vmem:[#allocation2 + $0xec] sm:$0xf]
        %v6060 = vld [vmem:[#allocation2 + $0x110] sm:$0xf]
        %v6061 = vld [vmem:[#allocation2 + $0x134] sm:$0xf]
        %v6062 = vld [vmem:[#allocation2 + $0x158] sm:$0xf]
        %v6063 = vld [vmem:[#allocation2 + $0x17c] sm:$0xf]
        %v6064 = vld [vmem:[#allocation2 + $0x1a0] sm:$0xf]
        %v6065 = vld [vmem:[#allocation2 + $0x1c4] sm:$0xf]
        %v6066 = vld [vmem:[#allocation2 + $0x1e8] sm:$0xf]
        %v6067 = vld [vmem:[#allocation2 + $0x20c] sm:$0xf]
        %v6068 = vld [vmem:[#allocation2 + $0x230] sm:$0xf]
        %v6069 = vld [vmem:[#allocation2 + $0x20] sm:$0xf]
        %v6070 = vld [vmem:[#allocation2 + $0x44] sm:$0xf]
        %v6071 = vld [vmem:[#allocation2 + $0x68] sm:$0xf]
        %v6072 = vld [vmem:[#allocation2 + $0x8c] sm:$0xf]
        %v6073 = vld [vmem:[#allocation2 + $0xb0] sm:$0xf]
        %v6074 = vld [vmem:[#allocation2 + $0xd4] sm:$0xf]
        %v6075 = vld [vmem:[#allocation2 + $0xf8] sm:$0xf]
        %v6076 = vld [vmem:[#allocation2 + $0x11c] sm:$0xf]
        %v6077 = vld [vmem:[#allocation2 + $0x140] sm:$0xf]
        %v6078 = vld [vmem:[#allocation2 + $0x164] sm:$0xf]
        %v6079 = vld [vmem:[#allocation2 + $0x188] sm:$0xf]
        %v6080 = vld [vmem:[#allocation2 + $0x1ac] sm:$0xf]
        %v6081 = vld [vmem:[#allocation2 + $0x1d0] sm:$0xf]
        %v6082 = vld [vmem:[#allocation2 + $0x1f4] sm:$0xf]
        %v6083 = vld [vmem:[#allocation2 + $0x218] sm:$0xf]
        %v6084 = vld [vmem:[#allocation2 + $0x23c] sm:$0xf]
        %v6101 = vunpack.c.l.b16 %v6037
        %v6102 = vunpack.c.l.b16 %v6038
        %v6103 = vunpack.c.l.b16 %v6039
        %v6104 = vunpack.c.l.b16 %v6040
        %v6105 = vunpack.c.l.b16 %v6041
        %v6106 = vunpack.c.l.b16 %v6042
        %v6107 = vunpack.c.l.b16 %v6043
        %v6108 = vunpack.c.l.b16 %v6044
        %v6109 = vunpack.c.l.b16 %v6045
        %v6110 = vunpack.c.l.b16 %v6046
        %v6111 = vunpack.c.l.b16 %v6047
        %v6112 = vunpack.c.l.b16 %v6048
        %v6113 = vunpack.c.l.b16 %v6049
        %v6114 = vunpack.c.l.b16 %v6050
        %v6115 = vunpack.c.l.b16 %v6051
        %v6116 = vunpack.c.l.b16 %v6052
        %v6117 = vpack.c.b16 %v6102, %v6101
        %v6118 = vpack.c.b16 %v6104, %v6103
        %v6119 = vpack.c.b16 %v6106, %v6105
        %v6120 = vpack.c.b16 %v6108, %v6107
        %v6121 = vpack.c.b16 %v6110, %v6109
        %v6122 = vpack.c.b16 %v6112, %v6111
        %v6123 = vpack.c.b16 %v6114, %v6113
        %v6124 = vpack.c.b16 %v6116, %v6115
        %6125 = vrot.lane.b32.xlu0 %v6117, 64
        %v6126 = vpop.permute.xlu0 %6125
        %6127 = vrot.lane.b32.xlu0 %v6118, 64
        %v6128 = vpop.permute.xlu0 %6127
        %6129 = vrot.lane.b32.xlu0 %v6119, 64
        %v6130 = vpop.permute.xlu0 %6129
        %6131 = vrot.lane.b32.xlu0 %v6120, 64
        %v6132 = vpop.permute.xlu0 %6131
        %6133 = vrot.lane.b32.xlu0 %v6121, 64
        %v6134 = vpop.permute.xlu0 %6133
        %6135 = vrot.lane.b32.xlu0 %v6122, 64
        %v6136 = vpop.permute.xlu0 %6135
        %6137 = vrot.lane.b32.xlu0 %v6123, 64
        %v6138 = vpop.permute.xlu0 %6137
        %6139 = vrot.lane.b32.xlu0 %v6124, 64
        %v6140 = vpop.permute.xlu0 %6139
        %v6157 = vunpack.c.l.b16 %v6053
        %v6158 = vunpack.c.l.b16 %v6054
        %v6159 = vunpack.c.l.b16 %v6055
        %v6160 = vunpack.c.l.b16 %v6056
        %v6161 = vunpack.c.l.b16 %v6057
        %v6162 = vunpack.c.l.b16 %v6058
        %v6163 = vunpack.c.l.b16 %v6059
        %v6164 = vunpack.c.l.b16 %v6060
        %v6165 = vunpack.c.l.b16 %v6061
        %v6166 = vunpack.c.l.b16 %v6062
        %v6167 = vunpack.c.l.b16 %v6063
        %v6168 = vunpack.c.l.b16 %v6064
        %v6169 = vunpack.c.l.b16 %v6065
        %v6170 = vunpack.c.l.b16 %v6066
        %v6171 = vunpack.c.l.b16 %v6067
        %v6172 = vunpack.c.l.b16 %v6068
        %v6173 = vpack.c.b16 %v6158, %v6157
        %v6174 = vpack.c.b16 %v6160, %v6159
        %v6175 = vpack.c.b16 %v6162, %v6161
        %v6176 = vpack.c.b16 %v6164, %v6163
        %v6177 = vpack.c.b16 %v6166, %v6165
        %v6178 = vpack.c.b16 %v6168, %v6167
        %v6179 = vpack.c.b16 %v6170, %v6169
        %v6180 = vpack.c.b16 %v6172, %v6171
        %6181 = vrot.lane.b32.xlu0 %v6173, 64
        %v6182 = vpop.permute.xlu0 %6181
        %6183 = vrot.lane.b32.xlu0 %v6174, 64
        %v6184 = vpop.permute.xlu0 %6183
        %6185 = vrot.lane.b32.xlu0 %v6175, 64
        %v6186 = vpop.permute.xlu0 %6185
        %6187 = vrot.lane.b32.xlu0 %v6176, 64
        %v6188 = vpop.permute.xlu0 %6187
        %6189 = vrot.lane.b32.xlu0 %v6177, 64
        %v6190 = vpop.permute.xlu0 %6189
        %6191 = vrot.lane.b32.xlu0 %v6178, 64
        %v6192 = vpop.permute.xlu0 %6191
        %6193 = vrot.lane.b32.xlu0 %v6179, 64
        %v6194 = vpop.permute.xlu0 %6193
        %6195 = vrot.lane.b32.xlu0 %v6180, 64
        %v6196 = vpop.permute.xlu0 %6195
        %v6198 = vsel %vm3328, %v6126, 0
        %v6201 = vsel %vm3328, %v6128, 0
        %v6204 = vsel %vm3328, %v6130, 0
        %v6207 = vsel %vm3328, %v6132, 0
        %v6210 = vsel %vm3328, %v6134, 0
        %v6213 = vsel %vm3328, %v6136, 0
        %v6216 = vsel %vm3328, %v6138, 0
        %v6219 = vsel %vm3328, %v6140, 0
        %v6222 = vsel %vm3328, %v6182, 0
        %v6225 = vsel %vm3328, %v6184, 0
        %v6228 = vsel %vm3328, %v6186, 0
        %v6231 = vsel %vm3328, %v6188, 0
        %v6234 = vsel %vm3328, %v6190, 0
        %v6237 = vsel %vm3328, %v6192, 0
        %v6240 = vsel %vm3328, %v6194, 0
        %v6243 = vsel %vm3328, %v6196, 0
        %6245 = vmatpush.bf16.xpose.msra.mxu0 %v6243
        %6246 = vmatpush.bf16.xpose.msra.mxu0 %v6240
        %6247 = vmatpush.bf16.xpose.msra.mxu0 %v6237
        %6248 = vmatpush.bf16.xpose.msra.mxu0 %v6234
        %6249 = vmatpush.bf16.xpose.msra.mxu0 %v6231
        %6250 = vmatpush.bf16.xpose.msra.mxu0 %v6228
        %6251 = vmatpush.bf16.xpose.msra.mxu0 %v6225
        %6252 = vmatpush.bf16.xpose.msra.mxu0 %v6222
        %6253 = vmatmul.bf16.gmra.mxu0 %v6198
        %v6254 = vpop.f32.mrf.mxu0
        %v6255 = vadd.f32 0.0, %v6254
        %v6256 = vpop.f32.mrf.mxu0
        %v6257 = vadd.f32 0.0, %v6256
        %6258 = vmatmul.bf16.gmra.mxu0 %v6201
        %v6259 = vpop.f32.mrf.mxu0
        %v6260 = vadd.f32 0.0, %v6259
        %v6261 = vpop.f32.mrf.mxu0
        %v6262 = vadd.f32 0.0, %v6261
        %6263 = vmatmul.bf16.gmra.mxu0 %v6204
        %v6264 = vpop.f32.mrf.mxu0
        %v6265 = vadd.f32 0.0, %v6264
        %v6266 = vpop.f32.mrf.mxu0
        %v6267 = vadd.f32 0.0, %v6266
        %6268 = vmatmul.bf16.gmra.mxu0 %v6207
        %v6269 = vpop.f32.mrf.mxu0
        %v6270 = vadd.f32 0.0, %v6269
        %v6271 = vpop.f32.mrf.mxu0
        %v6272 = vadd.f32 0.0, %v6271
        %6273 = vmatmul.bf16.gmra.mxu0 %v6210
        %v6274 = vpop.f32.mrf.mxu0
        %v6275 = vadd.f32 0.0, %v6274
        %v6276 = vpop.f32.mrf.mxu0
        %v6277 = vadd.f32 0.0, %v6276
        %6278 = vmatmul.bf16.gmra.mxu0 %v6213
        %v6279 = vpop.f32.mrf.mxu0
        %v6280 = vadd.f32 0.0, %v6279
        %v6281 = vpop.f32.mrf.mxu0
        %v6282 = vadd.f32 0.0, %v6281
        %6283 = vmatmul.bf16.gmra.mxu0 %v6216
        %v6284 = vpop.f32.mrf.mxu0
        %v6285 = vadd.f32 0.0, %v6284
        %v6286 = vpop.f32.mrf.mxu0
        %v6287 = vadd.f32 0.0, %v6286
        %6288 = vmatmul.bf16.gmra.mxu0 %v6219
        %v6289 = vpop.f32.mrf.mxu0
        %v6290 = vadd.f32 0.0, %v6289
        %v6291 = vpop.f32.mrf.mxu0
        %v6292 = vadd.f32 0.0, %v6291
        %6293 = vdwg.mxu0
        %v6294 = vsel %vm3184, %v6255, -1e+30
        %v6295 = vsel %vm3185, %v6257, -1e+30
        %v6296 = vsel %vm3186, %v6260, -1e+30
        %v6297 = vsel %vm3187, %v6262, -1e+30
        %v6298 = vsel %vm3188, %v6265, -1e+30
        %v6299 = vsel %vm3189, %v6267, -1e+30
        %v6300 = vsel %vm3190, %v6270, -1e+30
        %v6301 = vsel %vm3191, %v6272, -1e+30
        %v6302 = vsel %vm3192, %v6275, -1e+30
        %v6303 = vsel %vm3193, %v6277, -1e+30
        %v6304 = vsel %vm3194, %v6280, -1e+30
        %v6305 = vsel %vm3195, %v6282, -1e+30
        %v6306 = vsel %vm3196, %v6285, -1e+30
        %v6307 = vsel %vm3197, %v6287, -1e+30
        %v6308 = vsel %vm3198, %v6290, -1e+30
        %v6309 = vsel %vm3199, %v6292, -1e+30
        %6310 = vmax.xlane.f32.xlu0 %v6294
        %v6311 = vpop.xlane.xlu0 %6310
        %6312 = vmax.xlane.f32.xlu0 %v6295
        %v6313 = vpop.xlane.xlu0 %6312
        %6314 = vmax.xlane.f32.xlu0 %v6296
        %v6315 = vpop.xlane.xlu0 %6314
        %6316 = vmax.xlane.f32.xlu0 %v6297
        %v6317 = vpop.xlane.xlu0 %6316
        %6318 = vmax.xlane.f32.xlu0 %v6298
        %v6319 = vpop.xlane.xlu0 %6318
        %6320 = vmax.xlane.f32.xlu0 %v6299
        %v6321 = vpop.xlane.xlu0 %6320
        %6322 = vmax.xlane.f32.xlu0 %v6300
        %v6323 = vpop.xlane.xlu0 %6322
        %6324 = vmax.xlane.f32.xlu0 %v6301
        %v6325 = vpop.xlane.xlu0 %6324
        %6326 = vmax.xlane.f32.xlu0 %v6302
        %v6327 = vpop.xlane.xlu0 %6326
        %6328 = vmax.xlane.f32.xlu0 %v6303
        %v6329 = vpop.xlane.xlu0 %6328
        %6330 = vmax.xlane.f32.xlu0 %v6304
        %v6331 = vpop.xlane.xlu0 %6330
        %6332 = vmax.xlane.f32.xlu0 %v6305
        %v6333 = vpop.xlane.xlu0 %6332
        %6334 = vmax.xlane.f32.xlu0 %v6306
        %v6335 = vpop.xlane.xlu0 %6334
        %6336 = vmax.xlane.f32.xlu0 %v6307
        %v6337 = vpop.xlane.xlu0 %6336
        %6338 = vmax.xlane.f32.xlu0 %v6308
        %v6339 = vpop.xlane.xlu0 %6338
        %6340 = vmax.xlane.f32.xlu0 %v6309
        %v6341 = vpop.xlane.xlu0 %6340
        %v6342 = vsub.f32 %v6294, %v6311
        %v6343 = vsub.f32 %v6295, %v6313
        %v6344 = vsub.f32 %v6296, %v6315
        %v6345 = vsub.f32 %v6297, %v6317
        %v6346 = vsub.f32 %v6298, %v6319
        %v6347 = vsub.f32 %v6299, %v6321
        %v6348 = vsub.f32 %v6300, %v6323
        %v6349 = vsub.f32 %v6301, %v6325
        %v6350 = vsub.f32 %v6302, %v6327
        %v6351 = vsub.f32 %v6303, %v6329
        %v6352 = vsub.f32 %v6304, %v6331
        %v6353 = vsub.f32 %v6305, %v6333
        %v6354 = vsub.f32 %v6306, %v6335
        %v6355 = vsub.f32 %v6307, %v6337
        %v6356 = vsub.f32 %v6308, %v6339
        %v6357 = vsub.f32 %v6309, %v6341
        %v6358 = vmul.f32 %v6342, 1.442695
        %v6359 = vpow.pop %v6358
        %v6360 = vmul.f32 %v6343, 1.442695
        %v6361 = vpow.pop %v6360
        %v6362 = vmul.f32 %v6344, 1.442695
        %v6363 = vpow.pop %v6362
        %v6364 = vmul.f32 %v6345, 1.442695
        %v6365 = vpow.pop %v6364
        %v6366 = vmul.f32 %v6346, 1.442695
        %v6367 = vpow.pop %v6366
        %v6368 = vmul.f32 %v6347, 1.442695
        %v6369 = vpow.pop %v6368
        %v6370 = vmul.f32 %v6348, 1.442695
        %v6371 = vpow.pop %v6370
        %v6372 = vmul.f32 %v6349, 1.442695
        %v6373 = vpow.pop %v6372
        %v6374 = vmul.f32 %v6350, 1.442695
        %v6375 = vpow.pop %v6374
        %v6376 = vmul.f32 %v6351, 1.442695
        %v6377 = vpow.pop %v6376
        %v6378 = vmul.f32 %v6352, 1.442695
        %v6379 = vpow.pop %v6378
        %v6380 = vmul.f32 %v6353, 1.442695
        %v6381 = vpow.pop %v6380
        %v6382 = vmul.f32 %v6354, 1.442695
        %v6383 = vpow.pop %v6382
        %v6384 = vmul.f32 %v6355, 1.442695
        %v6385 = vpow.pop %v6384
        %v6386 = vmul.f32 %v6356, 1.442695
        %v6387 = vpow.pop %v6386
        %v6388 = vmul.f32 %v6357, 1.442695
        %v6389 = vpow.pop %v6388
        %6390 = vadd.xlane.f32.xlu0 %v6359
        %v6391 = vpop.xlane.xlu0 %6390
        %6392 = vadd.xlane.f32.xlu0 %v6361
        %v6393 = vpop.xlane.xlu0 %6392
        %6394 = vadd.xlane.f32.xlu0 %v6363
        %v6395 = vpop.xlane.xlu0 %6394
        %6396 = vadd.xlane.f32.xlu0 %v6365
        %v6397 = vpop.xlane.xlu0 %6396
        %6398 = vadd.xlane.f32.xlu0 %v6367
        %v6399 = vpop.xlane.xlu0 %6398
        %6400 = vadd.xlane.f32.xlu0 %v6369
        %v6401 = vpop.xlane.xlu0 %6400
        %6402 = vadd.xlane.f32.xlu0 %v6371
        %v6403 = vpop.xlane.xlu0 %6402
        %6404 = vadd.xlane.f32.xlu0 %v6373
        %v6405 = vpop.xlane.xlu0 %6404
        %6406 = vadd.xlane.f32.xlu0 %v6375
        %v6407 = vpop.xlane.xlu0 %6406
        %6408 = vadd.xlane.f32.xlu0 %v6377
        %v6409 = vpop.xlane.xlu0 %6408
        %6410 = vadd.xlane.f32.xlu0 %v6379
        %v6411 = vpop.xlane.xlu0 %6410
        %6412 = vadd.xlane.f32.xlu0 %v6381
        %v6413 = vpop.xlane.xlu0 %6412
        %6414 = vadd.xlane.f32.xlu0 %v6383
        %v6415 = vpop.xlane.xlu0 %6414
        %6416 = vadd.xlane.f32.xlu0 %v6385
        %v6417 = vpop.xlane.xlu0 %6416
        %6418 = vadd.xlane.f32.xlu0 %v6387
        %v6419 = vpop.xlane.xlu0 %6418
        %6420 = vadd.xlane.f32.xlu0 %v6389
        %v6421 = vpop.xlane.xlu0 %6420
        %v6422 = vpack.c.bf16 %v6361, %v6359
        %v6423 = vpack.c.bf16 %v6365, %v6363
        %v6424 = vpack.c.bf16 %v6369, %v6367
        %v6425 = vpack.c.bf16 %v6373, %v6371
        %v6426 = vpack.c.bf16 %v6377, %v6375
        %v6427 = vpack.c.bf16 %v6381, %v6379
        %v6428 = vpack.c.bf16 %v6385, %v6383
        %v6429 = vpack.c.bf16 %v6389, %v6387
        %v6446 = vunpack.c.l.b16 %v6069
        %v6447 = vunpack.c.l.b16 %v6070
        %v6448 = vunpack.c.l.b16 %v6071
        %v6449 = vunpack.c.l.b16 %v6072
        %v6450 = vunpack.c.l.b16 %v6073
        %v6451 = vunpack.c.l.b16 %v6074
        %v6452 = vunpack.c.l.b16 %v6075
        %v6453 = vunpack.c.l.b16 %v6076
        %v6454 = vunpack.c.l.b16 %v6077
        %v6455 = vunpack.c.l.b16 %v6078
        %v6456 = vunpack.c.l.b16 %v6079
        %v6457 = vunpack.c.l.b16 %v6080
        %v6458 = vunpack.c.l.b16 %v6081
        %v6459 = vunpack.c.l.b16 %v6082
        %v6460 = vunpack.c.l.b16 %v6083
        %v6461 = vunpack.c.l.b16 %v6084
        %v6462 = vpack.c.b16 %v6447, %v6446
        %v6463 = vpack.c.b16 %v6449, %v6448
        %v6464 = vpack.c.b16 %v6451, %v6450
        %v6465 = vpack.c.b16 %v6453, %v6452
        %v6466 = vpack.c.b16 %v6455, %v6454
        %v6467 = vpack.c.b16 %v6457, %v6456
        %v6468 = vpack.c.b16 %v6459, %v6458
        %v6469 = vpack.c.b16 %v6461, %v6460
        %6470 = vrot.lane.b32.xlu0 %v6462, 64
        %v6471 = vpop.permute.xlu0 %6470
        %6472 = vrot.lane.b32.xlu0 %v6463, 64
        %v6473 = vpop.permute.xlu0 %6472
        %6474 = vrot.lane.b32.xlu0 %v6464, 64
        %v6475 = vpop.permute.xlu0 %6474
        %6476 = vrot.lane.b32.xlu0 %v6465, 64
        %v6477 = vpop.permute.xlu0 %6476
        %6478 = vrot.lane.b32.xlu0 %v6466, 64
        %v6479 = vpop.permute.xlu0 %6478
        %6480 = vrot.lane.b32.xlu0 %v6467, 64
        %v6481 = vpop.permute.xlu0 %6480
        %6482 = vrot.lane.b32.xlu0 %v6468, 64
        %v6483 = vpop.permute.xlu0 %6482
        %6484 = vrot.lane.b32.xlu0 %v6469, 64
        %v6485 = vpop.permute.xlu0 %6484
        %6494 = vmatpush.bf16.msra.mxu0 %v6485
        %6495 = vmatpush.bf16.msra.mxu0 %v6483
        %6496 = vmatpush.bf16.msra.mxu0 %v6481
        %6497 = vmatpush.bf16.msra.mxu0 %v6479
        %6498 = vmatpush.bf16.msra.mxu0 %v6477
        %6499 = vmatpush.bf16.msra.mxu0 %v6475
        %6500 = vmatpush.bf16.msra.mxu0 %v6473
        %6501 = vmatpush.bf16.msra.mxu0 %v6471
        %6502 = vmatmul.bf16.gmra.mxu0 %v6422
        %v6503 = vpop.f32.mrf.mxu0
        %v6504 = vadd.f32 0.0, %v6503
        %v6505 = vpop.f32.mrf.mxu0
        %v6506 = vadd.f32 0.0, %v6505
        %6507 = vmatmul.bf16.gmra.mxu0 %v6423
        %v6508 = vpop.f32.mrf.mxu0
        %v6509 = vadd.f32 0.0, %v6508
        %v6510 = vpop.f32.mrf.mxu0
        %v6511 = vadd.f32 0.0, %v6510
        %6512 = vmatmul.bf16.gmra.mxu0 %v6424
        %v6513 = vpop.f32.mrf.mxu0
        %v6514 = vadd.f32 0.0, %v6513
        %v6515 = vpop.f32.mrf.mxu0
        %v6516 = vadd.f32 0.0, %v6515
        %6517 = vmatmul.bf16.gmra.mxu0 %v6425
        %v6518 = vpop.f32.mrf.mxu0
        %v6519 = vadd.f32 0.0, %v6518
        %v6520 = vpop.f32.mrf.mxu0
        %v6521 = vadd.f32 0.0, %v6520
        %6522 = vmatmul.bf16.gmra.mxu0 %v6426
        %v6523 = vpop.f32.mrf.mxu0
        %v6524 = vadd.f32 0.0, %v6523
        %v6525 = vpop.f32.mrf.mxu0
        %v6526 = vadd.f32 0.0, %v6525
        %6527 = vmatmul.bf16.gmra.mxu0 %v6427
        %v6528 = vpop.f32.mrf.mxu0
        %v6529 = vadd.f32 0.0, %v6528
        %v6530 = vpop.f32.mrf.mxu0
        %v6531 = vadd.f32 0.0, %v6530
        %6532 = vmatmul.bf16.gmra.mxu0 %v6428
        %v6533 = vpop.f32.mrf.mxu0
        %v6534 = vadd.f32 0.0, %v6533
        %v6535 = vpop.f32.mrf.mxu0
        %v6536 = vadd.f32 0.0, %v6535
        %6537 = vmatmul.bf16.gmra.mxu0 %v6429
        %v6538 = vpop.f32.mrf.mxu0
        %v6539 = vadd.f32 0.0, %v6538
        %v6540 = vpop.f32.mrf.mxu0
        %v6541 = vadd.f32 0.0, %v6540
        %6542 = vdwg.mxu0
        %v6543 = vrcp.pop %v6391
        %v6544 = vrcp.pop %v6393
        %v6545 = vrcp.pop %v6395
        %v6546 = vrcp.pop %v6397
        %v6547 = vrcp.pop %v6399
        %v6548 = vrcp.pop %v6401
        %v6549 = vrcp.pop %v6403
        %v6550 = vrcp.pop %v6405
        %v6551 = vrcp.pop %v6407
        %v6552 = vrcp.pop %v6409
        %v6553 = vrcp.pop %v6411
        %v6554 = vrcp.pop %v6413
        %v6555 = vrcp.pop %v6415
        %v6556 = vrcp.pop %v6417
        %v6557 = vrcp.pop %v6419
        %v6558 = vrcp.pop %v6421
        %v6559 = vmul.f32 %v6504, %v6543
        %v6560 = vmul.f32 %v6506, %v6544
        %v6561 = vmul.f32 %v6509, %v6545
        %v6562 = vmul.f32 %v6511, %v6546
        %v6563 = vmul.f32 %v6514, %v6547
        %v6564 = vmul.f32 %v6516, %v6548
        %v6565 = vmul.f32 %v6519, %v6549
        %v6566 = vmul.f32 %v6521, %v6550
        %v6567 = vmul.f32 %v6524, %v6551
        %v6568 = vmul.f32 %v6526, %v6552
        %v6569 = vmul.f32 %v6529, %v6553
        %v6570 = vmul.f32 %v6531, %v6554
        %v6571 = vmul.f32 %v6534, %v6555
        %v6572 = vmul.f32 %v6536, %v6556
        %v6573 = vmul.f32 %v6539, %v6557
        %v6574 = vmul.f32 %v6541, %v6558
        %v6575 = vpack.c.bf16 %v6559, %v6559
        %v6576 = vpack.c.bf16 %v6560, %v6560
        %v6577 = vpack.c.bf16 %v6561, %v6561
        %v6578 = vpack.c.bf16 %v6562, %v6562
        %v6579 = vpack.c.bf16 %v6563, %v6563
        %v6580 = vpack.c.bf16 %v6564, %v6564
        %v6581 = vpack.c.bf16 %v6565, %v6565
        %v6582 = vpack.c.bf16 %v6566, %v6566
        %v6583 = vpack.c.bf16 %v6567, %v6567
        %v6584 = vpack.c.bf16 %v6568, %v6568
        %v6585 = vpack.c.bf16 %v6569, %v6569
        %v6586 = vpack.c.bf16 %v6570, %v6570
        %v6587 = vpack.c.bf16 %v6571, %v6571
        %v6588 = vpack.c.bf16 %v6572, %v6572
        %v6589 = vpack.c.bf16 %v6573, %v6573
        %v6590 = vpack.c.bf16 %v6574, %v6574
        %6607 = vrot.lane.b32.xlu0 %v6575, 64
        %v6608 = vpop.permute.xlu0 %6607
        %6609 = vrot.lane.b32.xlu0 %v6576, 64
        %v6610 = vpop.permute.xlu0 %6609
        %6611 = vrot.lane.b32.xlu0 %v6577, 64
        %v6612 = vpop.permute.xlu0 %6611
        %6613 = vrot.lane.b32.xlu0 %v6578, 64
        %v6614 = vpop.permute.xlu0 %6613
        %6615 = vrot.lane.b32.xlu0 %v6579, 64
        %v6616 = vpop.permute.xlu0 %6615
        %6617 = vrot.lane.b32.xlu0 %v6580, 64
        %v6618 = vpop.permute.xlu0 %6617
        %6619 = vrot.lane.b32.xlu0 %v6581, 64
        %v6620 = vpop.permute.xlu0 %6619
        %6621 = vrot.lane.b32.xlu0 %v6582, 64
        %v6622 = vpop.permute.xlu0 %6621
        %6623 = vrot.lane.b32.xlu0 %v6583, 64
        %v6624 = vpop.permute.xlu0 %6623
        %6625 = vrot.lane.b32.xlu0 %v6584, 64
        %v6626 = vpop.permute.xlu0 %6625
        %6627 = vrot.lane.b32.xlu0 %v6585, 64
        %v6628 = vpop.permute.xlu0 %6627
        %6629 = vrot.lane.b32.xlu0 %v6586, 64
        %v6630 = vpop.permute.xlu0 %6629
        %6631 = vrot.lane.b32.xlu0 %v6587, 64
        %v6632 = vpop.permute.xlu0 %6631
        %6633 = vrot.lane.b32.xlu0 %v6588, 64
        %v6634 = vpop.permute.xlu0 %6633
        %6635 = vrot.lane.b32.xlu0 %v6589, 64
        %v6636 = vpop.permute.xlu0 %6635
        %6637 = vrot.lane.b32.xlu0 %v6590, 64
        %v6638 = vpop.permute.xlu0 %6637
        %6655 = vst.msk [vmem:[#allocation3 + $0x8] sm:$0xf] %vm4342, %v6608
        %6656 = vst.msk [vmem:[#allocation3 + $0x14] sm:$0xf] %vm4342, %v6610
        %6657 = vst.msk [vmem:[#allocation3 + $0x20] sm:$0xf] %vm4342, %v6612
        %6658 = vst.msk [vmem:[#allocation3 + $0x2c] sm:$0xf] %vm4342, %v6614
        %6659 = vst.msk [vmem:[#allocation3 + $0x38] sm:$0xf] %vm4342, %v6616
        %6660 = vst.msk [vmem:[#allocation3 + $0x44] sm:$0xf] %vm4342, %v6618
        %6661 = vst.msk [vmem:[#allocation3 + $0x50] sm:$0xf] %vm4342, %v6620
        %6662 = vst.msk [vmem:[#allocation3 + $0x5c] sm:$0xf] %vm4342, %v6622
        %6663 = vst.msk [vmem:[#allocation3 + $0x68] sm:$0xf] %vm4342, %v6624
        %6664 = vst.msk [vmem:[#allocation3 + $0x74] sm:$0xf] %vm4342, %v6626
        %6665 = vst.msk [vmem:[#allocation3 + $0x80] sm:$0xf] %vm4342, %v6628
        %6666 = vst.msk [vmem:[#allocation3 + $0x8c] sm:$0xf] %vm4342, %v6630
        %6667 = vst.msk [vmem:[#allocation3 + $0x98] sm:$0xf] %vm4342, %v6632
        %6668 = vst.msk [vmem:[#allocation3 + $0xa4] sm:$0xf] %vm4342, %v6634
        %6669 = vst.msk [vmem:[#allocation3 + $0xb0] sm:$0xf] %vm4342, %v6636
        %6670 = vst.msk [vmem:[#allocation3 + $0xbc] sm:$0xf] %vm4342, %v6638
        %v6671 = vld [vmem:[#allocation3] sm:$0xff]
        %v6672 = vld [vmem:[#allocation3 + $0x8] sm:$0xf]
        %v6673 = vld [vmem:[#allocation3 + $0xc] sm:$0xff]
        %v6674 = vld [vmem:[#allocation3 + $0x14] sm:$0xf]
        %v6675 = vld [vmem:[#allocation3 + $0x18] sm:$0xff]
        %v6676 = vld [vmem:[#allocation3 + $0x20] sm:$0xf]
        %v6677 = vld [vmem:[#allocation3 + $0x24] sm:$0xff]
        %v6678 = vld [vmem:[#allocation3 + $0x2c] sm:$0xf]
        %v6679 = vld [vmem:[#allocation3 + $0x30] sm:$0xff]
        %v6680 = vld [vmem:[#allocation3 + $0x38] sm:$0xf]
        %v6681 = vld [vmem:[#allocation3 + $0x3c] sm:$0xff]
        %v6682 = vld [vmem:[#allocation3 + $0x44] sm:$0xf]
        %v6683 = vld [vmem:[#allocation3 + $0x48] sm:$0xff]
        %v6684 = vld [vmem:[#allocation3 + $0x50] sm:$0xf]
        %v6685 = vld [vmem:[#allocation3 + $0x54] sm:$0xff]
        %v6686 = vld [vmem:[#allocation3 + $0x5c] sm:$0xf]
        %v6687 = vld [vmem:[#allocation3 + $0x60] sm:$0xff]
        %v6688 = vld [vmem:[#allocation3 + $0x68] sm:$0xf]
        %v6689 = vld [vmem:[#allocation3 + $0x6c] sm:$0xff]
        %v6690 = vld [vmem:[#allocation3 + $0x74] sm:$0xf]
        %v6691 = vld [vmem:[#allocation3 + $0x78] sm:$0xff]
        %v6692 = vld [vmem:[#allocation3 + $0x80] sm:$0xf]
        %v6693 = vld [vmem:[#allocation3 + $0x84] sm:$0xff]
        %v6694 = vld [vmem:[#allocation3 + $0x8c] sm:$0xf]
        %v6695 = vld [vmem:[#allocation3 + $0x90] sm:$0xff]
        %v6696 = vld [vmem:[#allocation3 + $0x98] sm:$0xf]
        %v6697 = vld [vmem:[#allocation3 + $0x9c] sm:$0xff]
        %v6698 = vld [vmem:[#allocation3 + $0xa4] sm:$0xf]
        %v6699 = vld [vmem:[#allocation3 + $0xa8] sm:$0xff]
        %v6700 = vld [vmem:[#allocation3 + $0xb0] sm:$0xf]
        %v6701 = vld [vmem:[#allocation3 + $0xb4] sm:$0xff]
        %v6702 = vld [vmem:[#allocation3 + $0xbc] sm:$0xf]
        %v6703 = vld [vmem:[#allocation9] sm:$0xff]
        %v6704 = vld [vmem:[#allocation9 + $0x8] sm:$0xf]
        %v6705 = vld [vmem:[#allocation9 + $0xc] sm:$0xff]
        %v6706 = vld [vmem:[#allocation9 + $0x14] sm:$0xf]
        %v6707 = vld [vmem:[#allocation9 + $0x18] sm:$0xff]
        %v6708 = vld [vmem:[#allocation9 + $0x20] sm:$0xf]
        %v6709 = vld [vmem:[#allocation9 + $0x24] sm:$0xff]
        %v6710 = vld [vmem:[#allocation9 + $0x2c] sm:$0xf]
        %v6711 = vld [vmem:[#allocation9 + $0x30] sm:$0xff]
        %v6712 = vld [vmem:[#allocation9 + $0x38] sm:$0xf]
        %v6713 = vld [vmem:[#allocation9 + $0x3c] sm:$0xff]
        %v6714 = vld [vmem:[#allocation9 + $0x44] sm:$0xf]
        %v6715 = vld [vmem:[#allocation9 + $0x48] sm:$0xff]
        %v6716 = vld [vmem:[#allocation9 + $0x50] sm:$0xf]
        %v6717 = vld [vmem:[#allocation9 + $0x54] sm:$0xff]
        %v6718 = vld [vmem:[#allocation9 + $0x5c] sm:$0xf]
        %v6719 = vld [vmem:[#allocation9 + $0x60] sm:$0xff]
        %v6720 = vld [vmem:[#allocation9 + $0x68] sm:$0xf]
        %v6721 = vld [vmem:[#allocation9 + $0x6c] sm:$0xff]
        %v6722 = vld [vmem:[#allocation9 + $0x74] sm:$0xf]
        %v6723 = vld [vmem:[#allocation9 + $0x78] sm:$0xff]
        %v6724 = vld [vmem:[#allocation9 + $0x80] sm:$0xf]
        %v6725 = vld [vmem:[#allocation9 + $0x84] sm:$0xff]
        %v6726 = vld [vmem:[#allocation9 + $0x8c] sm:$0xf]
        %v6727 = vld [vmem:[#allocation9 + $0x90] sm:$0xff]
        %v6728 = vld [vmem:[#allocation9 + $0x98] sm:$0xf]
        %v6729 = vld [vmem:[#allocation9 + $0x9c] sm:$0xff]
        %v6730 = vld [vmem:[#allocation9 + $0xa4] sm:$0xf]
        %v6731 = vld [vmem:[#allocation9 + $0xa8] sm:$0xff]
        %v6732 = vld [vmem:[#allocation9 + $0xb0] sm:$0xf]
        %v6733 = vld [vmem:[#allocation9 + $0xb4] sm:$0xff]
        %v6734 = vld [vmem:[#allocation9 + $0xbc] sm:$0xf]
        %v6735 = vld [vmem:[#allocation9 + $0xc0] sm:$0xff]
        %v6736 = vld [vmem:[#allocation9 + $0xc8] sm:$0xf]
        %v6737 = vld [vmem:[#allocation9 + $0xcc] sm:$0xff]
        %v6738 = vld [vmem:[#allocation9 + $0xd4] sm:$0xf]
        %v6739 = vld [vmem:[#allocation9 + $0xd8] sm:$0xff]
        %v6740 = vld [vmem:[#allocation9 + $0xe0] sm:$0xf]
        %v6741 = vld [vmem:[#allocation9 + $0xe4] sm:$0xff]
        %v6742 = vld [vmem:[#allocation9 + $0xec] sm:$0xf]
        %v6743 = vld [vmem:[#allocation9 + $0xf0] sm:$0xff]
        %v6744 = vld [vmem:[#allocation9 + $0xf8] sm:$0xf]
        %v6745 = vld [vmem:[#allocation9 + $0xfc] sm:$0xff]
        %v6746 = vld [vmem:[#allocation9 + $0x104] sm:$0xf]
        %v6747 = vld [vmem:[#allocation9 + $0x108] sm:$0xff]
        %v6748 = vld [vmem:[#allocation9 + $0x110] sm:$0xf]
        %v6749 = vld [vmem:[#allocation9 + $0x114] sm:$0xff]
        %v6750 = vld [vmem:[#allocation9 + $0x11c] sm:$0xf]
        %v6751 = vld [vmem:[#allocation9 + $0x120] sm:$0xff]
        %v6752 = vld [vmem:[#allocation9 + $0x128] sm:$0xf]
        %v6753 = vld [vmem:[#allocation9 + $0x12c] sm:$0xff]
        %v6754 = vld [vmem:[#allocation9 + $0x134] sm:$0xf]
        %v6755 = vld [vmem:[#allocation9 + $0x138] sm:$0xff]
        %v6756 = vld [vmem:[#allocation9 + $0x140] sm:$0xf]
        %v6757 = vld [vmem:[#allocation9 + $0x144] sm:$0xff]
        %v6758 = vld [vmem:[#allocation9 + $0x14c] sm:$0xf]
        %v6759 = vld [vmem:[#allocation9 + $0x150] sm:$0xff]
        %v6760 = vld [vmem:[#allocation9 + $0x158] sm:$0xf]
        %v6761 = vld [vmem:[#allocation9 + $0x15c] sm:$0xff]
        %v6762 = vld [vmem:[#allocation9 + $0x164] sm:$0xf]
        %v6763 = vld [vmem:[#allocation9 + $0x168] sm:$0xff]
        %v6764 = vld [vmem:[#allocation9 + $0x170] sm:$0xf]
        %v6765 = vld [vmem:[#allocation9 + $0x174] sm:$0xff]
        %v6766 = vld [vmem:[#allocation9 + $0x17c] sm:$0xf]
        %v6767 = vld [vmem:[#allocation9 + $0x180] sm:$0xff]
        %v6768 = vld [vmem:[#allocation9 + $0x188] sm:$0xf]
        %v6769 = vld [vmem:[#allocation9 + $0x18c] sm:$0xff]
        %v6770 = vld [vmem:[#allocation9 + $0x194] sm:$0xf]
        %v6771 = vld [vmem:[#allocation9 + $0x198] sm:$0xff]
        %v6772 = vld [vmem:[#allocation9 + $0x1a0] sm:$0xf]
        %v6773 = vld [vmem:[#allocation9 + $0x1a4] sm:$0xff]
        %v6774 = vld [vmem:[#allocation9 + $0x1ac] sm:$0xf]
        %v6775 = vld [vmem:[#allocation9 + $0x1b0] sm:$0xff]
        %v6776 = vld [vmem:[#allocation9 + $0x1b8] sm:$0xf]
        %v6777 = vld [vmem:[#allocation9 + $0x1bc] sm:$0xff]
        %v6778 = vld [vmem:[#allocation9 + $0x1c4] sm:$0xf]
        %v6779 = vld [vmem:[#allocation9 + $0x1c8] sm:$0xff]
        %v6780 = vld [vmem:[#allocation9 + $0x1d0] sm:$0xf]
        %v6781 = vld [vmem:[#allocation9 + $0x1d4] sm:$0xff]
        %v6782 = vld [vmem:[#allocation9 + $0x1dc] sm:$0xf]
        %v6783 = vld [vmem:[#allocation9 + $0x1e0] sm:$0xff]
        %v6784 = vld [vmem:[#allocation9 + $0x1e8] sm:$0xf]
        %v6785 = vld [vmem:[#allocation9 + $0x1ec] sm:$0xff]
        %v6786 = vld [vmem:[#allocation9 + $0x1f4] sm:$0xf]
        %v6787 = vld [vmem:[#allocation9 + $0x1f8] sm:$0xff]
        %v6788 = vld [vmem:[#allocation9 + $0x200] sm:$0xf]
        %v6789 = vld [vmem:[#allocation9 + $0x204] sm:$0xff]
        %v6790 = vld [vmem:[#allocation9 + $0x20c] sm:$0xf]
        %v6791 = vld [vmem:[#allocation9 + $0x210] sm:$0xff]
        %v6792 = vld [vmem:[#allocation9 + $0x218] sm:$0xf]
        %v6793 = vld [vmem:[#allocation9 + $0x21c] sm:$0xff]
        %v6794 = vld [vmem:[#allocation9 + $0x224] sm:$0xf]
        %v6795 = vld [vmem:[#allocation9 + $0x228] sm:$0xff]
        %v6796 = vld [vmem:[#allocation9 + $0x230] sm:$0xf]
        %v6797 = vld [vmem:[#allocation9 + $0x234] sm:$0xff]
        %v6798 = vld [vmem:[#allocation9 + $0x23c] sm:$0xf]
        %v6799 = vld [vmem:[#allocation10] sm:$0x7]
        %v6801 = vperm.slane %v6799, 0
        %v6802 = vperm.slane %v6799, 1
        %v6803 = vperm.slane %v6799, 2
        %v6839 = vunpack.c.l.b16 %v6671
        %v6840 = vunpack.c.h.b16 %v6671
        %v6841 = vunpack.c.l.b16 %v6672
        %v6842 = vunpack.c.l.b16 %v6673
        %v6843 = vunpack.c.h.b16 %v6673
        %v6844 = vunpack.c.l.b16 %v6674
        %v6845 = vunpack.c.l.b16 %v6675
        %v6846 = vunpack.c.h.b16 %v6675
        %v6847 = vunpack.c.l.b16 %v6676
        %v6848 = vunpack.c.l.b16 %v6677
        %v6849 = vunpack.c.h.b16 %v6677
        %v6850 = vunpack.c.l.b16 %v6678
        %v6851 = vunpack.c.l.b16 %v6679
        %v6852 = vunpack.c.h.b16 %v6679
        %v6853 = vunpack.c.l.b16 %v6680
        %v6854 = vunpack.c.l.b16 %v6681
        %v6855 = vunpack.c.h.b16 %v6681
        %v6856 = vunpack.c.l.b16 %v6682
        %v6857 = vunpack.c.l.b16 %v6683
        %v6858 = vunpack.c.h.b16 %v6683
        %v6859 = vunpack.c.l.b16 %v6684
        %v6860 = vunpack.c.l.b16 %v6685
        %v6861 = vunpack.c.h.b16 %v6685
        %v6862 = vunpack.c.l.b16 %v6686
        %v6863 = vunpack.c.l.b16 %v6687
        %v6864 = vunpack.c.h.b16 %v6687
        %v6865 = vunpack.c.l.b16 %v6688
        %v6866 = vunpack.c.l.b16 %v6689
        %v6867 = vunpack.c.h.b16 %v6689
        %v6868 = vunpack.c.l.b16 %v6690
        %v6869 = vunpack.c.l.b16 %v6691
        %v6870 = vunpack.c.h.b16 %v6691
        %v6871 = vunpack.c.l.b16 %v6692
        %v6872 = vunpack.c.l.b16 %v6693
        %v6873 = vunpack.c.h.b16 %v6693
        %v6874 = vunpack.c.l.b16 %v6694
        %v6875 = vunpack.c.l.b16 %v6695
        %v6876 = vunpack.c.h.b16 %v6695
        %v6877 = vunpack.c.l.b16 %v6696
        %v6878 = vunpack.c.l.b16 %v6697
        %v6879 = vunpack.c.h.b16 %v6697
        %v6880 = vunpack.c.l.b16 %v6698
        %v6881 = vunpack.c.l.b16 %v6699
        %v6882 = vunpack.c.h.b16 %v6699
        %v6883 = vunpack.c.l.b16 %v6700
        %v6884 = vunpack.c.l.b16 %v6701
        %v6885 = vunpack.c.h.b16 %v6701
        %v6886 = vunpack.c.l.b16 %v6702
        %v6887 = vpack.c.b16 %v6842, %v6839
        %v6888 = vpack.c.b16 %v6843, %v6840
        %v6889 = vpack.c.b16 %v6844, %v6841
        %v6890 = vpack.c.b16 %v6848, %v6845
        %v6891 = vpack.c.b16 %v6849, %v6846
        %v6892 = vpack.c.b16 %v6850, %v6847
        %v6893 = vpack.c.b16 %v6854, %v6851
        %v6894 = vpack.c.b16 %v6855, %v6852
        %v6895 = vpack.c.b16 %v6856, %v6853
        %v6896 = vpack.c.b16 %v6860, %v6857
        %v6897 = vpack.c.b16 %v6861, %v6858
        %v6898 = vpack.c.b16 %v6862, %v6859
        %v6899 = vpack.c.b16 %v6866, %v6863
        %v6900 = vpack.c.b16 %v6867, %v6864
        %v6901 = vpack.c.b16 %v6868, %v6865
        %v6902 = vpack.c.b16 %v6872, %v6869
        %v6903 = vpack.c.b16 %v6873, %v6870
        %v6904 = vpack.c.b16 %v6874, %v6871
        %v6905 = vpack.c.b16 %v6878, %v6875
        %v6906 = vpack.c.b16 %v6879, %v6876
        %v6907 = vpack.c.b16 %v6880, %v6877
        %v6908 = vpack.c.b16 %v6884, %v6881
        %v6909 = vpack.c.b16 %v6885, %v6882
        %v6910 = vpack.c.b16 %v6886, %v6883
        %v7031 = vunpack.c.l.b16 %v6703
        %v7032 = vunpack.c.h.b16 %v6703
        %v7033 = vunpack.c.l.b16 %v6704
        %v7034 = vunpack.c.l.b16 %v6705
        %v7035 = vunpack.c.h.b16 %v6705
        %v7036 = vunpack.c.l.b16 %v6706
        %v7037 = vunpack.c.l.b16 %v6707
        %v7038 = vunpack.c.h.b16 %v6707
        %v7039 = vunpack.c.l.b16 %v6708
        %v7040 = vunpack.c.l.b16 %v6709
        %v7041 = vunpack.c.h.b16 %v6709
        %v7042 = vunpack.c.l.b16 %v6710
        %v7043 = vunpack.c.l.b16 %v6711
        %v7044 = vunpack.c.h.b16 %v6711
        %v7045 = vunpack.c.l.b16 %v6712
        %v7046 = vunpack.c.l.b16 %v6713
        %v7047 = vunpack.c.h.b16 %v6713
        %v7048 = vunpack.c.l.b16 %v6714
        %v7049 = vunpack.c.l.b16 %v6715
        %v7050 = vunpack.c.h.b16 %v6715
        %v7051 = vunpack.c.l.b16 %v6716
        %v7052 = vunpack.c.l.b16 %v6717
        %v7053 = vunpack.c.h.b16 %v6717
        %v7054 = vunpack.c.l.b16 %v6718
        %v7055 = vunpack.c.l.b16 %v6719
        %v7056 = vunpack.c.h.b16 %v6719
        %v7057 = vunpack.c.l.b16 %v6720
        %v7058 = vunpack.c.l.b16 %v6721
        %v7059 = vunpack.c.h.b16 %v6721
        %v7060 = vunpack.c.l.b16 %v6722
        %v7061 = vunpack.c.l.b16 %v6723
        %v7062 = vunpack.c.h.b16 %v6723
        %v7063 = vunpack.c.l.b16 %v6724
        %v7064 = vunpack.c.l.b16 %v6725
        %v7065 = vunpack.c.h.b16 %v6725
        %v7066 = vunpack.c.l.b16 %v6726
        %v7067 = vunpack.c.l.b16 %v6727
        %v7068 = vunpack.c.h.b16 %v6727
        %v7069 = vunpack.c.l.b16 %v6728
        %v7070 = vunpack.c.l.b16 %v6729
        %v7071 = vunpack.c.h.b16 %v6729
        %v7072 = vunpack.c.l.b16 %v6730
        %v7073 = vunpack.c.l.b16 %v6731
        %v7074 = vunpack.c.h.b16 %v6731
        %v7075 = vunpack.c.l.b16 %v6732
        %v7076 = vunpack.c.l.b16 %v6733
        %v7077 = vunpack.c.h.b16 %v6733
        %v7078 = vunpack.c.l.b16 %v6734
        %v7079 = vunpack.c.l.b16 %v6735
        %v7080 = vunpack.c.h.b16 %v6735
        %v7081 = vunpack.c.l.b16 %v6736
        %v7082 = vunpack.c.l.b16 %v6737
        %v7083 = vunpack.c.h.b16 %v6737
        %v7084 = vunpack.c.l.b16 %v6738
        %v7085 = vunpack.c.l.b16 %v6739
        %v7086 = vunpack.c.h.b16 %v6739
        %v7087 = vunpack.c.l.b16 %v6740
        %v7088 = vunpack.c.l.b16 %v6741
        %v7089 = vunpack.c.h.b16 %v6741
        %v7090 = vunpack.c.l.b16 %v6742
        %v7091 = vunpack.c.l.b16 %v6743
        %v7092 = vunpack.c.h.b16 %v6743
        %v7093 = vunpack.c.l.b16 %v6744
        %v7094 = vunpack.c.l.b16 %v6745
        %v7095 = vunpack.c.h.b16 %v6745
        %v7096 = vunpack.c.l.b16 %v6746
        %v7097 = vunpack.c.l.b16 %v6747
        %v7098 = vunpack.c.h.b16 %v6747
        %v7099 = vunpack.c.l.b16 %v6748
        %v7100 = vunpack.c.l.b16 %v6749
        %v7101 = vunpack.c.h.b16 %v6749
        %v7102 = vunpack.c.l.b16 %v6750
        %v7103 = vunpack.c.l.b16 %v6751
        %v7104 = vunpack.c.h.b16 %v6751
        %v7105 = vunpack.c.l.b16 %v6752
        %v7106 = vunpack.c.l.b16 %v6753
        %v7107 = vunpack.c.h.b16 %v6753
        %v7108 = vunpack.c.l.b16 %v6754
        %v7109 = vunpack.c.l.b16 %v6755
        %v7110 = vunpack.c.h.b16 %v6755
        %v7111 = vunpack.c.l.b16 %v6756
        %v7112 = vunpack.c.l.b16 %v6757
        %v7113 = vunpack.c.h.b16 %v6757
        %v7114 = vunpack.c.l.b16 %v6758
        %v7115 = vunpack.c.l.b16 %v6759
        %v7116 = vunpack.c.h.b16 %v6759
        %v7117 = vunpack.c.l.b16 %v6760
        %v7118 = vunpack.c.l.b16 %v6761
        %v7119 = vunpack.c.h.b16 %v6761
        %v7120 = vunpack.c.l.b16 %v6762
        %v7121 = vunpack.c.l.b16 %v6763
        %v7122 = vunpack.c.h.b16 %v6763
        %v7123 = vunpack.c.l.b16 %v6764
        %v7124 = vunpack.c.l.b16 %v6765
        %v7125 = vunpack.c.h.b16 %v6765
        %v7126 = vunpack.c.l.b16 %v6766
        %v7127 = vunpack.c.l.b16 %v6767
        %v7128 = vunpack.c.h.b16 %v6767
        %v7129 = vunpack.c.l.b16 %v6768
        %v7130 = vunpack.c.l.b16 %v6769
        %v7131 = vunpack.c.h.b16 %v6769
        %v7132 = vunpack.c.l.b16 %v6770
        %v7133 = vunpack.c.l.b16 %v6771
        %v7134 = vunpack.c.h.b16 %v6771
        %v7135 = vunpack.c.l.b16 %v6772
        %v7136 = vunpack.c.l.b16 %v6773
        %v7137 = vunpack.c.h.b16 %v6773
        %v7138 = vunpack.c.l.b16 %v6774
        %v7139 = vunpack.c.l.b16 %v6775
        %v7140 = vunpack.c.h.b16 %v6775
        %v7141 = vunpack.c.l.b16 %v6776
        %v7142 = vunpack.c.l.b16 %v6777
        %v7143 = vunpack.c.h.b16 %v6777
        %v7144 = vunpack.c.l.b16 %v6778
        %v7145 = vunpack.c.l.b16 %v6779
        %v7146 = vunpack.c.h.b16 %v6779
        %v7147 = vunpack.c.l.b16 %v6780
        %v7148 = vunpack.c.l.b16 %v6781
        %v7149 = vunpack.c.h.b16 %v6781
        %v7150 = vunpack.c.l.b16 %v6782
        %v7151 = vunpack.c.l.b16 %v6783
        %v7152 = vunpack.c.h.b16 %v6783
        %v7153 = vunpack.c.l.b16 %v6784
        %v7154 = vunpack.c.l.b16 %v6785
        %v7155 = vunpack.c.h.b16 %v6785
        %v7156 = vunpack.c.l.b16 %v6786
        %v7157 = vunpack.c.l.b16 %v6787
        %v7158 = vunpack.c.h.b16 %v6787
        %v7159 = vunpack.c.l.b16 %v6788
        %v7160 = vunpack.c.l.b16 %v6789
        %v7161 = vunpack.c.h.b16 %v6789
        %v7162 = vunpack.c.l.b16 %v6790
        %v7163 = vunpack.c.l.b16 %v6791
        %v7164 = vunpack.c.h.b16 %v6791
        %v7165 = vunpack.c.l.b16 %v6792
        %v7166 = vunpack.c.l.b16 %v6793
        %v7167 = vunpack.c.h.b16 %v6793
        %v7168 = vunpack.c.l.b16 %v6794
        %v7169 = vunpack.c.l.b16 %v6795
        %v7170 = vunpack.c.h.b16 %v6795
        %v7171 = vunpack.c.l.b16 %v6796
        %v7172 = vunpack.c.l.b16 %v6797
        %v7173 = vunpack.c.h.b16 %v6797
        %v7174 = vunpack.c.l.b16 %v6798
        %v7175 = vpack.c.b16 %v7034, %v7031
        %v7176 = vpack.c.b16 %v7035, %v7032
        %v7177 = vpack.c.b16 %v7036, %v7033
        %v7178 = vpack.c.b16 %v7040, %v7037
        %v7179 = vpack.c.b16 %v7041, %v7038
        %v7180 = vpack.c.b16 %v7042, %v7039
        %v7181 = vpack.c.b16 %v7046, %v7043
        %v7182 = vpack.c.b16 %v7047, %v7044
        %v7183 = vpack.c.b16 %v7048, %v7045
        %v7184 = vpack.c.b16 %v7052, %v7049
        %v7185 = vpack.c.b16 %v7053, %v7050
        %v7186 = vpack.c.b16 %v7054, %v7051
        %v7187 = vpack.c.b16 %v7058, %v7055
        %v7188 = vpack.c.b16 %v7059, %v7056
        %v7189 = vpack.c.b16 %v7060, %v7057
        %v7190 = vpack.c.b16 %v7064, %v7061
        %v7191 = vpack.c.b16 %v7065, %v7062
        %v7192 = vpack.c.b16 %v7066, %v7063
        %v7193 = vpack.c.b16 %v7070, %v7067
        %v7194 = vpack.c.b16 %v7071, %v7068
        %v7195 = vpack.c.b16 %v7072, %v7069
        %v7196 = vpack.c.b16 %v7076, %v7073
        %v7197 = vpack.c.b16 %v7077, %v7074
        %v7198 = vpack.c.b16 %v7078, %v7075
        %v7199 = vpack.c.b16 %v7082, %v7079
        %v7200 = vpack.c.b16 %v7083, %v7080
        %v7201 = vpack.c.b16 %v7084, %v7081
        %v7202 = vpack.c.b16 %v7088, %v7085
        %v7203 = vpack.c.b16 %v7089, %v7086
        %v7204 = vpack.c.b16 %v7090, %v7087
        %v7205 = vpack.c.b16 %v7094, %v7091
        %v7206 = vpack.c.b16 %v7095, %v7092
        %v7207 = vpack.c.b16 %v7096, %v7093
        %v7208 = vpack.c.b16 %v7100, %v7097
        %v7209 = vpack.c.b16 %v7101, %v7098
        %v7210 = vpack.c.b16 %v7102, %v7099
        %v7211 = vpack.c.b16 %v7106, %v7103
        %v7212 = vpack.c.b16 %v7107, %v7104
        %v7213 = vpack.c.b16 %v7108, %v7105
        %v7214 = vpack.c.b16 %v7112, %v7109
        %v7215 = vpack.c.b16 %v7113, %v7110
        %v7216 = vpack.c.b16 %v7114, %v7111
        %v7217 = vpack.c.b16 %v7118, %v7115
        %v7218 = vpack.c.b16 %v7119, %v7116
        %v7219 = vpack.c.b16 %v7120, %v7117
        %v7220 = vpack.c.b16 %v7124, %v7121
        %v7221 = vpack.c.b16 %v7125, %v7122
        %v7222 = vpack.c.b16 %v7126, %v7123
        %v7223 = vpack.c.b16 %v7130, %v7127
        %v7224 = vpack.c.b16 %v7131, %v7128
        %v7225 = vpack.c.b16 %v7132, %v7129
        %v7226 = vpack.c.b16 %v7136, %v7133
        %v7227 = vpack.c.b16 %v7137, %v7134
        %v7228 = vpack.c.b16 %v7138, %v7135
        %v7229 = vpack.c.b16 %v7142, %v7139
        %v7230 = vpack.c.b16 %v7143, %v7140
        %v7231 = vpack.c.b16 %v7144, %v7141
        %v7232 = vpack.c.b16 %v7148, %v7145
        %v7233 = vpack.c.b16 %v7149, %v7146
        %v7234 = vpack.c.b16 %v7150, %v7147
        %v7235 = vpack.c.b16 %v7154, %v7151
        %v7236 = vpack.c.b16 %v7155, %v7152
        %v7237 = vpack.c.b16 %v7156, %v7153
        %v7238 = vpack.c.b16 %v7160, %v7157
        %v7239 = vpack.c.b16 %v7161, %v7158
        %v7240 = vpack.c.b16 %v7162, %v7159
        %v7241 = vpack.c.b16 %v7166, %v7163
        %v7242 = vpack.c.b16 %v7167, %v7164
        %v7243 = vpack.c.b16 %v7168, %v7165
        %v7244 = vpack.c.b16 %v7172, %v7169
        %v7245 = vpack.c.b16 %v7173, %v7170
        %v7246 = vpack.c.b16 %v7174, %v7171
        %7319 = vmatpush.bf16.msra.mxu0 %v7196
        %7320 = vmatpush.bf16.msra.mxu0 %v7193
        %7321 = vmatpush.bf16.msra.mxu0 %v7190
        %7322 = vmatpush.bf16.msra.mxu0 %v7187
        %7323 = vmatpush.bf16.msra.mxu0 %v7184
        %7324 = vmatpush.bf16.msra.mxu0 %v7181
        %7325 = vmatpush.bf16.msra.mxu0 %v7178
        %7326 = vmatpush.bf16.msra.mxu0 %v7175
        %7327 = vmatmul.bf16.gmra.mxu0 %v6887
        %v7328 = vpop.f32.mrf.mxu0
        %v7329 = vadd.f32 %v6801, %v7328
        %v7330 = vpop.f32.mrf.mxu0
        %v7331 = vadd.f32 %v6801, %v7330
        %7332 = vmatmul.bf16.gmra.mxu0 %v6890
        %v7333 = vpop.f32.mrf.mxu0
        %v7334 = vadd.f32 %v6801, %v7333
        %v7335 = vpop.f32.mrf.mxu0
        %v7336 = vadd.f32 %v6801, %v7335
        %7337 = vmatmul.bf16.gmra.mxu0 %v6893
        %v7338 = vpop.f32.mrf.mxu0
        %v7339 = vadd.f32 %v6801, %v7338
        %v7340 = vpop.f32.mrf.mxu0
        %v7341 = vadd.f32 %v6801, %v7340
        %7342 = vmatmul.bf16.gmra.mxu0 %v6896
        %v7343 = vpop.f32.mrf.mxu0
        %v7344 = vadd.f32 %v6801, %v7343
        %v7345 = vpop.f32.mrf.mxu0
        %v7346 = vadd.f32 %v6801, %v7345
        %7347 = vmatmul.bf16.gmra.mxu0 %v6899
        %v7348 = vpop.f32.mrf.mxu0
        %v7349 = vadd.f32 %v6801, %v7348
        %v7350 = vpop.f32.mrf.mxu0
        %v7351 = vadd.f32 %v6801, %v7350
        %7352 = vmatmul.bf16.gmra.mxu0 %v6902
        %v7353 = vpop.f32.mrf.mxu0
        %v7354 = vadd.f32 %v6801, %v7353
        %v7355 = vpop.f32.mrf.mxu0
        %v7356 = vadd.f32 %v6801, %v7355
        %7357 = vmatmul.bf16.gmra.mxu0 %v6905
        %v7358 = vpop.f32.mrf.mxu0
        %v7359 = vadd.f32 %v6801, %v7358
        %v7360 = vpop.f32.mrf.mxu0
        %v7361 = vadd.f32 %v6801, %v7360
        %7362 = vmatmul.bf16.gmra.mxu0 %v6908
        %v7363 = vpop.f32.mrf.mxu0
        %v7364 = vadd.f32 %v6801, %v7363
        %v7365 = vpop.f32.mrf.mxu0
        %v7366 = vadd.f32 %v6801, %v7365
        %7367 = vdwg.mxu0
        %7368 = vmatpush.bf16.msra.mxu0 %v7220
        %7369 = vmatpush.bf16.msra.mxu0 %v7217
        %7370 = vmatpush.bf16.msra.mxu0 %v7214
        %7371 = vmatpush.bf16.msra.mxu0 %v7211
        %7372 = vmatpush.bf16.msra.mxu0 %v7208
        %7373 = vmatpush.bf16.msra.mxu0 %v7205
        %7374 = vmatpush.bf16.msra.mxu0 %v7202
        %7375 = vmatpush.bf16.msra.mxu0 %v7199
        %7376 = vmatmul.bf16.gmra.mxu0 %v6888
        %v7377 = vpop.f32.mrf.mxu0
        %v7378 = vadd.f32 %v7329, %v7377
        %v7379 = vpop.f32.mrf.mxu0
        %v7380 = vadd.f32 %v7331, %v7379
        %7381 = vmatmul.bf16.gmra.mxu0 %v6891
        %v7382 = vpop.f32.mrf.mxu0
        %v7383 = vadd.f32 %v7334, %v7382
        %v7384 = vpop.f32.mrf.mxu0
        %v7385 = vadd.f32 %v7336, %v7384
        %7386 = vmatmul.bf16.gmra.mxu0 %v6894
        %v7387 = vpop.f32.mrf.mxu0
        %v7388 = vadd.f32 %v7339, %v7387
        %v7389 = vpop.f32.mrf.mxu0
        %v7390 = vadd.f32 %v7341, %v7389
        %7391 = vmatmul.bf16.gmra.mxu0 %v6897
        %v7392 = vpop.f32.mrf.mxu0
        %v7393 = vadd.f32 %v7344, %v7392
        %v7394 = vpop.f32.mrf.mxu0
        %v7395 = vadd.f32 %v7346, %v7394
        %7396 = vmatmul.bf16.gmra.mxu0 %v6900
        %v7397 = vpop.f32.mrf.mxu0
        %v7398 = vadd.f32 %v7349, %v7397
        %v7399 = vpop.f32.mrf.mxu0
        %v7400 = vadd.f32 %v7351, %v7399
        %7401 = vmatmul.bf16.gmra.mxu0 %v6903
        %v7402 = vpop.f32.mrf.mxu0
        %v7403 = vadd.f32 %v7354, %v7402
        %v7404 = vpop.f32.mrf.mxu0
        %v7405 = vadd.f32 %v7356, %v7404
        %7406 = vmatmul.bf16.gmra.mxu0 %v6906
        %v7407 = vpop.f32.mrf.mxu0
        %v7408 = vadd.f32 %v7359, %v7407
        %v7409 = vpop.f32.mrf.mxu0
        %v7410 = vadd.f32 %v7361, %v7409
        %7411 = vmatmul.bf16.gmra.mxu0 %v6909
        %v7412 = vpop.f32.mrf.mxu0
        %v7413 = vadd.f32 %v7364, %v7412
        %v7414 = vpop.f32.mrf.mxu0
        %v7415 = vadd.f32 %v7366, %v7414
        %7416 = vdwg.mxu0
        %7417 = vmatpush.bf16.msra.mxu0 %v7244
        %7418 = vmatpush.bf16.msra.mxu0 %v7241
        %7419 = vmatpush.bf16.msra.mxu0 %v7238
        %7420 = vmatpush.bf16.msra.mxu0 %v7235
        %7421 = vmatpush.bf16.msra.mxu0 %v7232
        %7422 = vmatpush.bf16.msra.mxu0 %v7229
        %7423 = vmatpush.bf16.msra.mxu0 %v7226
        %7424 = vmatpush.bf16.msra.mxu0 %v7223
        %7425 = vmatmul.bf16.gmra.mxu0 %v6889
        %v7426 = vpop.f32.mrf.mxu0
        %v7427 = vadd.f32 %v7378, %v7426
        %v7428 = vpop.f32.mrf.mxu0
        %v7429 = vadd.f32 %v7380, %v7428
        %7430 = vmatmul.bf16.gmra.mxu0 %v6892
        %v7431 = vpop.f32.mrf.mxu0
        %v7432 = vadd.f32 %v7383, %v7431
        %v7433 = vpop.f32.mrf.mxu0
        %v7434 = vadd.f32 %v7385, %v7433
        %7435 = vmatmul.bf16.gmra.mxu0 %v6895
        %v7436 = vpop.f32.mrf.mxu0
        %v7437 = vadd.f32 %v7388, %v7436
        %v7438 = vpop.f32.mrf.mxu0
        %v7439 = vadd.f32 %v7390, %v7438
        %7440 = vmatmul.bf16.gmra.mxu0 %v6898
        %v7441 = vpop.f32.mrf.mxu0
        %v7442 = vadd.f32 %v7393, %v7441
        %v7443 = vpop.f32.mrf.mxu0
        %v7444 = vadd.f32 %v7395, %v7443
        %7445 = vmatmul.bf16.gmra.mxu0 %v6901
        %v7446 = vpop.f32.mrf.mxu0
        %v7447 = vadd.f32 %v7398, %v7446
        %v7448 = vpop.f32.mrf.mxu0
        %v7449 = vadd.f32 %v7400, %v7448
        %7450 = vmatmul.bf16.gmra.mxu0 %v6904
        %v7451 = vpop.f32.mrf.mxu0
        %v7452 = vadd.f32 %v7403, %v7451
        %v7453 = vpop.f32.mrf.mxu0
        %v7454 = vadd.f32 %v7405, %v7453
        %7455 = vmatmul.bf16.gmra.mxu0 %v6907
        %v7456 = vpop.f32.mrf.mxu0
        %v7457 = vadd.f32 %v7408, %v7456
        %v7458 = vpop.f32.mrf.mxu0
        %v7459 = vadd.f32 %v7410, %v7458
        %7460 = vmatmul.bf16.gmra.mxu0 %v6910
        %v7461 = vpop.f32.mrf.mxu0
        %v7462 = vadd.f32 %v7413, %v7461
        %v7463 = vpop.f32.mrf.mxu0
        %v7464 = vadd.f32 %v7415, %v7463
        %7465 = vdwg.mxu0
        %7466 = vmatpush.bf16.msra.mxu0 %v7197
        %7467 = vmatpush.bf16.msra.mxu0 %v7194
        %7468 = vmatpush.bf16.msra.mxu0 %v7191
        %7469 = vmatpush.bf16.msra.mxu0 %v7188
        %7470 = vmatpush.bf16.msra.mxu0 %v7185
        %7471 = vmatpush.bf16.msra.mxu0 %v7182
        %7472 = vmatpush.bf16.msra.mxu0 %v7179
        %7473 = vmatpush.bf16.msra.mxu0 %v7176
        %7474 = vmatmul.bf16.gmra.mxu0 %v6887
        %v7475 = vpop.f32.mrf.mxu0
        %v7476 = vadd.f32 %v6802, %v7475
        %v7477 = vpop.f32.mrf.mxu0
        %v7478 = vadd.f32 %v6802, %v7477
        %7479 = vmatmul.bf16.gmra.mxu0 %v6890
        %v7480 = vpop.f32.mrf.mxu0
        %v7481 = vadd.f32 %v6802, %v7480
        %v7482 = vpop.f32.mrf.mxu0
        %v7483 = vadd.f32 %v6802, %v7482
        %7484 = vmatmul.bf16.gmra.mxu0 %v6893
        %v7485 = vpop.f32.mrf.mxu0
        %v7486 = vadd.f32 %v6802, %v7485
        %v7487 = vpop.f32.mrf.mxu0
        %v7488 = vadd.f32 %v6802, %v7487
        %7489 = vmatmul.bf16.gmra.mxu0 %v6896
        %v7490 = vpop.f32.mrf.mxu0
        %v7491 = vadd.f32 %v6802, %v7490
        %v7492 = vpop.f32.mrf.mxu0
        %v7493 = vadd.f32 %v6802, %v7492
        %7494 = vmatmul.bf16.gmra.mxu0 %v6899
        %v7495 = vpop.f32.mrf.mxu0
        %v7496 = vadd.f32 %v6802, %v7495
        %v7497 = vpop.f32.mrf.mxu0
        %v7498 = vadd.f32 %v6802, %v7497
        %7499 = vmatmul.bf16.gmra.mxu0 %v6902
        %v7500 = vpop.f32.mrf.mxu0
        %v7501 = vadd.f32 %v6802, %v7500
        %v7502 = vpop.f32.mrf.mxu0
        %v7503 = vadd.f32 %v6802, %v7502
        %7504 = vmatmul.bf16.gmra.mxu0 %v6905
        %v7505 = vpop.f32.mrf.mxu0
        %v7506 = vadd.f32 %v6802, %v7505
        %v7507 = vpop.f32.mrf.mxu0
        %v7508 = vadd.f32 %v6802, %v7507
        %7509 = vmatmul.bf16.gmra.mxu0 %v6908
        %v7510 = vpop.f32.mrf.mxu0
        %v7511 = vadd.f32 %v6802, %v7510
        %v7512 = vpop.f32.mrf.mxu0
        %v7513 = vadd.f32 %v6802, %v7512
        %7514 = vdwg.mxu0
        %7515 = vmatpush.bf16.msra.mxu0 %v7221
        %7516 = vmatpush.bf16.msra.mxu0 %v7218
        %7517 = vmatpush.bf16.msra.mxu0 %v7215
        %7518 = vmatpush.bf16.msra.mxu0 %v7212
        %7519 = vmatpush.bf16.msra.mxu0 %v7209
        %7520 = vmatpush.bf16.msra.mxu0 %v7206
        %7521 = vmatpush.bf16.msra.mxu0 %v7203
        %7522 = vmatpush.bf16.msra.mxu0 %v7200
        %7523 = vmatmul.bf16.gmra.mxu0 %v6888
        %v7524 = vpop.f32.mrf.mxu0
        %v7525 = vadd.f32 %v7476, %v7524
        %v7526 = vpop.f32.mrf.mxu0
        %v7527 = vadd.f32 %v7478, %v7526
        %7528 = vmatmul.bf16.gmra.mxu0 %v6891
        %v7529 = vpop.f32.mrf.mxu0
        %v7530 = vadd.f32 %v7481, %v7529
        %v7531 = vpop.f32.mrf.mxu0
        %v7532 = vadd.f32 %v7483, %v7531
        %7533 = vmatmul.bf16.gmra.mxu0 %v6894
        %v7534 = vpop.f32.mrf.mxu0
        %v7535 = vadd.f32 %v7486, %v7534
        %v7536 = vpop.f32.mrf.mxu0
        %v7537 = vadd.f32 %v7488, %v7536
        %7538 = vmatmul.bf16.gmra.mxu0 %v6897
        %v7539 = vpop.f32.mrf.mxu0
        %v7540 = vadd.f32 %v7491, %v7539
        %v7541 = vpop.f32.mrf.mxu0
        %v7542 = vadd.f32 %v7493, %v7541
        %7543 = vmatmul.bf16.gmra.mxu0 %v6900
        %v7544 = vpop.f32.mrf.mxu0
        %v7545 = vadd.f32 %v7496, %v7544
        %v7546 = vpop.f32.mrf.mxu0
        %v7547 = vadd.f32 %v7498, %v7546
        %7548 = vmatmul.bf16.gmra.mxu0 %v6903
        %v7549 = vpop.f32.mrf.mxu0
        %v7550 = vadd.f32 %v7501, %v7549
        %v7551 = vpop.f32.mrf.mxu0
        %v7552 = vadd.f32 %v7503, %v7551
        %7553 = vmatmul.bf16.gmra.mxu0 %v6906
        %v7554 = vpop.f32.mrf.mxu0
        %v7555 = vadd.f32 %v7506, %v7554
        %v7556 = vpop.f32.mrf.mxu0
        %v7557 = vadd.f32 %v7508, %v7556
        %7558 = vmatmul.bf16.gmra.mxu0 %v6909
        %v7559 = vpop.f32.mrf.mxu0
        %v7560 = vadd.f32 %v7511, %v7559
        %v7561 = vpop.f32.mrf.mxu0
        %v7562 = vadd.f32 %v7513, %v7561
        %7563 = vdwg.mxu0
        %7564 = vmatpush.bf16.msra.mxu0 %v7245
        %7565 = vmatpush.bf16.msra.mxu0 %v7242
        %7566 = vmatpush.bf16.msra.mxu0 %v7239
        %7567 = vmatpush.bf16.msra.mxu0 %v7236
        %7568 = vmatpush.bf16.msra.mxu0 %v7233
        %7569 = vmatpush.bf16.msra.mxu0 %v7230
        %7570 = vmatpush.bf16.msra.mxu0 %v7227
        %7571 = vmatpush.bf16.msra.mxu0 %v7224
        %7572 = vmatmul.bf16.gmra.mxu0 %v6889
        %v7573 = vpop.f32.mrf.mxu0
        %v7574 = vadd.f32 %v7525, %v7573
        %v7575 = vpop.f32.mrf.mxu0
        %v7576 = vadd.f32 %v7527, %v7575
        %7577 = vmatmul.bf16.gmra.mxu0 %v6892
        %v7578 = vpop.f32.mrf.mxu0
        %v7579 = vadd.f32 %v7530, %v7578
        %v7580 = vpop.f32.mrf.mxu0
        %v7581 = vadd.f32 %v7532, %v7580
        %7582 = vmatmul.bf16.gmra.mxu0 %v6895
        %v7583 = vpop.f32.mrf.mxu0
        %v7584 = vadd.f32 %v7535, %v7583
        %v7585 = vpop.f32.mrf.mxu0
        %v7586 = vadd.f32 %v7537, %v7585
        %7587 = vmatmul.bf16.gmra.mxu0 %v6898
        %v7588 = vpop.f32.mrf.mxu0
        %v7589 = vadd.f32 %v7540, %v7588
        %v7590 = vpop.f32.mrf.mxu0
        %v7591 = vadd.f32 %v7542, %v7590
        %7592 = vmatmul.bf16.gmra.mxu0 %v6901
        %v7593 = vpop.f32.mrf.mxu0
        %v7594 = vadd.f32 %v7545, %v7593
        %v7595 = vpop.f32.mrf.mxu0
        %v7596 = vadd.f32 %v7547, %v7595
        %7597 = vmatmul.bf16.gmra.mxu0 %v6904
        %v7598 = vpop.f32.mrf.mxu0
        %v7599 = vadd.f32 %v7550, %v7598
        %v7600 = vpop.f32.mrf.mxu0
        %v7601 = vadd.f32 %v7552, %v7600
        %7602 = vmatmul.bf16.gmra.mxu0 %v6907
        %v7603 = vpop.f32.mrf.mxu0
        %v7604 = vadd.f32 %v7555, %v7603
        %v7605 = vpop.f32.mrf.mxu0
        %v7606 = vadd.f32 %v7557, %v7605
        %7607 = vmatmul.bf16.gmra.mxu0 %v6910
        %v7608 = vpop.f32.mrf.mxu0
        %v7609 = vadd.f32 %v7560, %v7608
        %v7610 = vpop.f32.mrf.mxu0
        %v7611 = vadd.f32 %v7562, %v7610
        %7612 = vdwg.mxu0
        %7613 = vmatpush.bf16.msra.mxu0 %v7198
        %7614 = vmatpush.bf16.msra.mxu0 %v7195
        %7615 = vmatpush.bf16.msra.mxu0 %v7192
        %7616 = vmatpush.bf16.msra.mxu0 %v7189
        %7617 = vmatpush.bf16.msra.mxu0 %v7186
        %7618 = vmatpush.bf16.msra.mxu0 %v7183
        %7619 = vmatpush.bf16.msra.mxu0 %v7180
        %7620 = vmatpush.bf16.msra.mxu0 %v7177
        %7621 = vmatmul.bf16.gmra.mxu0 %v6887
        %v7622 = vpop.f32.mrf.mxu0
        %v7623 = vadd.f32 %v6803, %v7622
        %v7624 = vpop.f32.mrf.mxu0
        %v7625 = vadd.f32 %v6803, %v7624
        %7626 = vmatmul.bf16.gmra.mxu0 %v6890
        %v7627 = vpop.f32.mrf.mxu0
        %v7628 = vadd.f32 %v6803, %v7627
        %v7629 = vpop.f32.mrf.mxu0
        %v7630 = vadd.f32 %v6803, %v7629
        %7631 = vmatmul.bf16.gmra.mxu0 %v6893
        %v7632 = vpop.f32.mrf.mxu0
        %v7633 = vadd.f32 %v6803, %v7632
        %v7634 = vpop.f32.mrf.mxu0
        %v7635 = vadd.f32 %v6803, %v7634
        %7636 = vmatmul.bf16.gmra.mxu0 %v6896
        %v7637 = vpop.f32.mrf.mxu0
        %v7638 = vadd.f32 %v6803, %v7637
        %v7639 = vpop.f32.mrf.mxu0
        %v7640 = vadd.f32 %v6803, %v7639
        %7641 = vmatmul.bf16.gmra.mxu0 %v6899
        %v7642 = vpop.f32.mrf.mxu0
        %v7643 = vadd.f32 %v6803, %v7642
        %v7644 = vpop.f32.mrf.mxu0
        %v7645 = vadd.f32 %v6803, %v7644
        %7646 = vmatmul.bf16.gmra.mxu0 %v6902
        %v7647 = vpop.f32.mrf.mxu0
        %v7648 = vadd.f32 %v6803, %v7647
        %v7649 = vpop.f32.mrf.mxu0
        %v7650 = vadd.f32 %v6803, %v7649
        %7651 = vmatmul.bf16.gmra.mxu0 %v6905
        %v7652 = vpop.f32.mrf.mxu0
        %v7653 = vadd.f32 %v6803, %v7652
        %v7654 = vpop.f32.mrf.mxu0
        %v7655 = vadd.f32 %v6803, %v7654
        %7656 = vmatmul.bf16.gmra.mxu0 %v6908
        %v7657 = vpop.f32.mrf.mxu0
        %v7658 = vadd.f32 %v6803, %v7657
        %v7659 = vpop.f32.mrf.mxu0
        %v7660 = vadd.f32 %v6803, %v7659
        %7661 = vdwg.mxu0
        %7662 = vmatpush.bf16.msra.mxu0 %v7222
        %7663 = vmatpush.bf16.msra.mxu0 %v7219
        %7664 = vmatpush.bf16.msra.mxu0 %v7216
        %7665 = vmatpush.bf16.msra.mxu0 %v7213
        %7666 = vmatpush.bf16.msra.mxu0 %v7210
        %7667 = vmatpush.bf16.msra.mxu0 %v7207
        %7668 = vmatpush.bf16.msra.mxu0 %v7204
        %7669 = vmatpush.bf16.msra.mxu0 %v7201
        %7670 = vmatmul.bf16.gmra.mxu0 %v6888
        %v7671 = vpop.f32.mrf.mxu0
        %v7672 = vadd.f32 %v7623, %v7671
        %v7673 = vpop.f32.mrf.mxu0
        %v7674 = vadd.f32 %v7625, %v7673
        %7675 = vmatmul.bf16.gmra.mxu0 %v6891
        %v7676 = vpop.f32.mrf.mxu0
        %v7677 = vadd.f32 %v7628, %v7676
        %v7678 = vpop.f32.mrf.mxu0
        %v7679 = vadd.f32 %v7630, %v7678
        %7680 = vmatmul.bf16.gmra.mxu0 %v6894
        %v7681 = vpop.f32.mrf.mxu0
        %v7682 = vadd.f32 %v7633, %v7681
        %v7683 = vpop.f32.mrf.mxu0
        %v7684 = vadd.f32 %v7635, %v7683
        %7685 = vmatmul.bf16.gmra.mxu0 %v6897
        %v7686 = vpop.f32.mrf.mxu0
        %v7687 = vadd.f32 %v7638, %v7686
        %v7688 = vpop.f32.mrf.mxu0
        %v7689 = vadd.f32 %v7640, %v7688
        %7690 = vmatmul.bf16.gmra.mxu0 %v6900
        %v7691 = vpop.f32.mrf.mxu0
        %v7692 = vadd.f32 %v7643, %v7691
        %v7693 = vpop.f32.mrf.mxu0
        %v7694 = vadd.f32 %v7645, %v7693
        %7695 = vmatmul.bf16.gmra.mxu0 %v6903
        %v7696 = vpop.f32.mrf.mxu0
        %v7697 = vadd.f32 %v7648, %v7696
        %v7698 = vpop.f32.mrf.mxu0
        %v7699 = vadd.f32 %v7650, %v7698
        %7700 = vmatmul.bf16.gmra.mxu0 %v6906
        %v7701 = vpop.f32.mrf.mxu0
        %v7702 = vadd.f32 %v7653, %v7701
        %v7703 = vpop.f32.mrf.mxu0
        %v7704 = vadd.f32 %v7655, %v7703
        %7705 = vmatmul.bf16.gmra.mxu0 %v6909
        %v7706 = vpop.f32.mrf.mxu0
        %v7707 = vadd.f32 %v7658, %v7706
        %v7708 = vpop.f32.mrf.mxu0
        %v7709 = vadd.f32 %v7660, %v7708
        %7710 = vdwg.mxu0
        %7711 = vmatpush.bf16.msra.mxu0 %v7246
        %7712 = vmatpush.bf16.msra.mxu0 %v7243
        %7713 = vmatpush.bf16.msra.mxu0 %v7240
        %7714 = vmatpush.bf16.msra.mxu0 %v7237
        %7715 = vmatpush.bf16.msra.mxu0 %v7234
        %7716 = vmatpush.bf16.msra.mxu0 %v7231
        %7717 = vmatpush.bf16.msra.mxu0 %v7228
        %7718 = vmatpush.bf16.msra.mxu0 %v7225
        %7719 = vmatmul.bf16.gmra.mxu0 %v6889
        %v7720 = vpop.f32.mrf.mxu0
        %v7721 = vadd.f32 %v7672, %v7720
        %v7722 = vpop.f32.mrf.mxu0
        %v7723 = vadd.f32 %v7674, %v7722
        %7724 = vmatmul.bf16.gmra.mxu0 %v6892
        %v7725 = vpop.f32.mrf.mxu0
        %v7726 = vadd.f32 %v7677, %v7725
        %v7727 = vpop.f32.mrf.mxu0
        %v7728 = vadd.f32 %v7679, %v7727
        %7729 = vmatmul.bf16.gmra.mxu0 %v6895
        %v7730 = vpop.f32.mrf.mxu0
        %v7731 = vadd.f32 %v7682, %v7730
        %v7732 = vpop.f32.mrf.mxu0
        %v7733 = vadd.f32 %v7684, %v7732
        %7734 = vmatmul.bf16.gmra.mxu0 %v6898
        %v7735 = vpop.f32.mrf.mxu0
        %v7736 = vadd.f32 %v7687, %v7735
        %v7737 = vpop.f32.mrf.mxu0
        %v7738 = vadd.f32 %v7689, %v7737
        %7739 = vmatmul.bf16.gmra.mxu0 %v6901
        %v7740 = vpop.f32.mrf.mxu0
        %v7741 = vadd.f32 %v7692, %v7740
        %v7742 = vpop.f32.mrf.mxu0
        %v7743 = vadd.f32 %v7694, %v7742
        %7744 = vmatmul.bf16.gmra.mxu0 %v6904
        %v7745 = vpop.f32.mrf.mxu0
        %v7746 = vadd.f32 %v7697, %v7745
        %v7747 = vpop.f32.mrf.mxu0
        %v7748 = vadd.f32 %v7699, %v7747
        %7749 = vmatmul.bf16.gmra.mxu0 %v6907
        %v7750 = vpop.f32.mrf.mxu0
        %v7751 = vadd.f32 %v7702, %v7750
        %v7752 = vpop.f32.mrf.mxu0
        %v7753 = vadd.f32 %v7704, %v7752
        %7754 = vmatmul.bf16.gmra.mxu0 %v6910
        %v7755 = vpop.f32.mrf.mxu0
        %v7756 = vadd.f32 %v7707, %v7755
        %v7757 = vpop.f32.mrf.mxu0
        %v7758 = vadd.f32 %v7709, %v7757
        %7759 = vdwg.mxu0
        %7760 = vst [vmem:[%s265] sm:$0xff] %v7427
        %7761 = vst [vmem:[%s265 + $0x8] sm:$0xff] %v7574
        %7762 = vst [vmem:[%s265 + $0x10] sm:$0xff] %v7721
        %7763 = vst [vmem:[%s265 + $0x18] sm:$0xff] %v7429
        %7764 = vst [vmem:[%s265 + $0x20] sm:$0xff] %v7576
        %7765 = vst [vmem:[%s265 + $0x28] sm:$0xff] %v7723
        %7766 = vst [vmem:[%s265 + $0x30] sm:$0xff] %v7432
        %7767 = vst [vmem:[%s265 + $0x38] sm:$0xff] %v7579
        %7768 = vst [vmem:[%s265 + $0x40] sm:$0xff] %v7726
        %7769 = vst [vmem:[%s265 + $0x48] sm:$0xff] %v7434
        %7770 = vst [vmem:[%s265 + $0x50] sm:$0xff] %v7581
        %7771 = vst [vmem:[%s265 + $0x58] sm:$0xff] %v7728
        %7772 = vst [vmem:[%s265 + $0x60] sm:$0xff] %v7437
        %7773 = vst [vmem:[%s265 + $0x68] sm:$0xff] %v7584
        %7774 = vst [vmem:[%s265 + $0x70] sm:$0xff] %v7731
        %7775 = vst [vmem:[%s265 + $0x78] sm:$0xff] %v7439
        %7776 = vst [vmem:[%s265 + $0x80] sm:$0xff] %v7586
        %7777 = vst [vmem:[%s265 + $0x88] sm:$0xff] %v7733
        %7778 = vst [vmem:[%s265 + $0x90] sm:$0xff] %v7442
        %7779 = vst [vmem:[%s265 + $0x98] sm:$0xff] %v7589
        %7780 = vst [vmem:[%s265 + $0xa0] sm:$0xff] %v7736
        %7781 = vst [vmem:[%s265 + $0xa8] sm:$0xff] %v7444
        %7782 = vst [vmem:[%s265 + $0xb0] sm:$0xff] %v7591
        %7783 = vst [vmem:[%s265 + $0xb8] sm:$0xff] %v7738
        %7784 = vst [vmem:[%s265 + $0xc0] sm:$0xff] %v7447
        %7785 = vst [vmem:[%s265 + $0xc8] sm:$0xff] %v7594
        %7786 = vst [vmem:[%s265 + $0xd0] sm:$0xff] %v7741
        %7787 = vst [vmem:[%s265 + $0xd8] sm:$0xff] %v7449
        %7788 = vst [vmem:[%s265 + $0xe0] sm:$0xff] %v7596
        %7789 = vst [vmem:[%s265 + $0xe8] sm:$0xff] %v7743
        %7790 = vst [vmem:[%s265 + $0xf0] sm:$0xff] %v7452
        %7791 = vst [vmem:[%s265 + $0xf8] sm:$0xff] %v7599
        %7792 = vst [vmem:[%s265 + $0x100] sm:$0xff] %v7746
        %7793 = vst [vmem:[%s265 + $0x108] sm:$0xff] %v7454
        %7794 = vst [vmem:[%s265 + $0x110] sm:$0xff] %v7601
        %7795 = vst [vmem:[%s265 + $0x118] sm:$0xff] %v7748
        %7796 = vst [vmem:[%s265 + $0x120] sm:$0xff] %v7457
        %7797 = vst [vmem:[%s265 + $0x128] sm:$0xff] %v7604
        %7798 = vst [vmem:[%s265 + $0x130] sm:$0xff] %v7751
        %7799 = vst [vmem:[%s265 + $0x138] sm:$0xff] %v7459
        %7800 = vst [vmem:[%s265 + $0x140] sm:$0xff] %v7606
        %7801 = vst [vmem:[%s265 + $0x148] sm:$0xff] %v7753
        %7802 = vst [vmem:[%s265 + $0x150] sm:$0xff] %v7462
        %7803 = vst [vmem:[%s265 + $0x158] sm:$0xff] %v7609
        %7804 = vst [vmem:[%s265 + $0x160] sm:$0xff] %v7756
        %7805 = vst [vmem:[%s265 + $0x168] sm:$0xff] %v7464
        %7806 = vst [vmem:[%s265 + $0x170] sm:$0xff] %v7611
        %7807 = vst [vmem:[%s265 + $0x178] sm:$0xff] %v7758
        %s7808 = sand.u32 %s120, 1
        %s7809 = scalar_lea.sflag [#allocation6], %s7808
        %s7810 = sand.u32 %s120, 1
        %s7811 = smul.addr %s7810, 384
        %s7812 = scalar_lea.vmem [#allocation12], %s7811
        // Predicated region
        $region53: #{tpu_custom_call.1} parent=35 // pred_check
          %p7813 = pneg %p130
        $region54: #{tpu_custom_call.1} parent=35 // pred_check_branch
          %7815 = sbr.rel (%p7813) target = $region56
        $region55: #{tpu_custom_call.1} parent=35 // pred_region
          %7817 = vsyncadd %s7809, 0
          %s7818 = smul.addr %s23, 48
          %s7819 = smul.addr %s7818, 8
          %s7820 = scalar_lea.hbm %s4, %s7819
          %s7821 = sshll.u32 %s7812, 4
          %s7822 = int_to_ptr.vmem [resolvable:$true] %s7821
          %s7823 = sshll.u32 %s7820, 4
          %s7824 = int_to_ptr.hbm [resolvable:$true] %s7823
          %7829 = dma.vmem_to_hbm [thread:$0]  %s7822, 6144, %s7824, %s7809, 384, 384, 24
        $region56: #{tpu_custom_call.1} parent=35 // pred_fallthru
          _
      $region36: #{tpu_custom_call.1} parent=5 // pred_fallthru
        _
      %p7830 = scmp.le.s32.totalorder 2, %s18
      // Predicated region
      $region57: #{tpu_custom_call.1} parent=5 // pred_check
        %p7831 = pneg %p7830
      $region58: #{tpu_custom_call.1} parent=5 // pred_check_branch
        %7833 = sbr.rel (%p7831) target = $region60
      $region59: #{tpu_custom_call.1} parent=5 // pred_region
        %s7834 = ssub.s32 %s18, 2
        // Predicated region
        $region61: #{tpu_custom_call.1} parent=59 // pred_check
          %p7835 = pneg %p136
        $region62: #{tpu_custom_call.1} parent=59 // pred_check_branch
          %7837 = sbr.rel (%p7835) target = $region64
        $region63: #{tpu_custom_call.1} parent=59 // pred_region
          %s7838 = sand.u32 %s121, 1
          %s7839 = scalar_lea.sflag [#allocation6], %s7838
          %s7840 = sand.u32 %s121, 1
          %s7841 = smul.addr %s7840, 384
          %s7842 = scalar_lea.vmem [#allocation12], %s7841
          %7844 = dma.done %s7839, 6144
        $region64: #{tpu_custom_call.1} parent=59 // pred_fallthru
          _
      $region60: #{tpu_custom_call.1} parent=5 // pred_fallthru
        _
    $region6: #{tpu_custom_call.1} parent=1 // loop_footer
      %s22 = sadd.s32 1, %s18
    $region7: #{tpu_custom_call.1} parent=1 // loop_footer_branch
      %17 = sbr.rel target = $region3
    $region8: #{tpu_custom_call.1} parent=1 // loop_exit
      _
    %7845 = vsyncpa [#allocation5], 1
    %s7846 = scalar_lea.sflag [#allocation5], 1
    %7847 = vsyncpa %s7846, 1
    %7848 = vsyncpa [#allocation8], 1
    %7849 = vsyncpa [#allocation11], 1
    %7850 = vsyncpa [#allocation6], 1
    %s7851 = scalar_lea.sflag [#allocation6], 1
    %7852 = vsyncpa %s7851, 1

</llo_original>
